<compile_context>
chip_gen: v6e
topology: v6e:2x2x1
jax: 0.10.0
libtpu: 0.0.40
codegen_flags: <defaults>
</compile_context>

<pallas_src>
import functools

import jax
import jax.numpy as jnp
import numpy as np
from jax import lax
from jax.experimental import pallas as pl
from jax.experimental.pallas import tpu as pltpu


C1, C5, C3, CP = 16, 24, 24, 24          # branch output channels (torch.cat order)
C_TOTAL = C1 + C5 + C3 + CP              # 88


# ----------------------------------------------------------------------------
# Fused kernel (one grid step == one image)
# ----------------------------------------------------------------------------
def _inception_kernel(x_ref, wf_ref, bf_ref,
                      w5_ref, b5_ref, w32_ref, b32_ref, w33_ref, b33_ref,
                      bp_ref, o_ref,
                      pad5_ref, pad3a_ref, pad3b_ref, padp_ref,
                      *, H, W):
    HW = H * W

    def pad_into(ref, vals, p):
        # ref: (H+2p, W+2p, c) VMEM scratch. Zero only the border frame; the interior is
        # fully overwritten below (scratch persists across steps, so re-zero each step).
        Hp, Wp, c = ref.shape
        zrow = jnp.zeros((p, Wp, c), jnp.float32)
        zcol = jnp.zeros((H, p, c), jnp.float32)
        ref[0:p, :, :] = zrow
        ref[p + H:Hp, :, :] = zrow
        ref[p:p + H, 0:p, :] = zcol
        ref[p:p + H, p + W:Wp, :] = zcol
        ref[p:p + H, p:p + W, :] = vals.reshape(H, W, c)

    def conv_kxk(slab_ref, wst_ref, b_ref, K):
        # slab_ref: (H+2p, W+2p, cin) zero-padded, channels-last.
        # wst_ref : (K, cin, K*cout) with wst[kw][ci, kh*cout + co] = w_oihw[co, ci, kh, kw].
        # One dot per dx(=kw) with all K dy-weights stacked along output lanes; sum the dx
        # partials on the VPU, then fold dy with K shifted lane-slice adds.
        Hp, Wp, cin = slab_ref.shape
        cout = b_ref.shape[-1]
        res = None
        for dx in range(K):                                    # K sublane-shifted taps
            lhs = slab_ref[:, dx:dx + W, :].reshape(Hp * W, cin)
            d = jnp.dot(lhs, wst_ref[dx], preferred_element_type=jnp.float32)
            res = d if res is None else res + d
        res3 = res.reshape(Hp, W, K * cout)
        acc = jnp.broadcast_to(b_ref[...], (HW, cout))         # bias-initialized accumulator
        for dy in range(K):                                    # dy fold: row + lane slice adds
            acc = acc + res3[dy:dy + H, :, dy * cout:(dy + 1) * cout].reshape(HW, cout)
        return acc

    def write_branch(vals, c0):
        # vals: (HW, c) -> channel-major, 8-aligned sublane offset, 256-lane unmasked store.
        o_ref[0, c0:c0 + vals.shape[-1], :] = vals.T

    # ---- fused 1x1 stage: branch1x1 + 5x5_1 + 3x3dbl_1 + pool 1x1 (pre-pool), channel-major
    xcm = x_ref[0]                                                        # (Cin, HW)
    y = jnp.dot(wf_ref[...], xcm, preferred_element_type=jnp.float32) + bf_ref[...]   # (72, HW)
    o_ref[0, 0:C1, :] = y[0:C1, :]                                        # branch1x1: no transpose
    t5 = y[C1:2 * C1, :].T                                                # (HW, 16)
    t3 = y[2 * C1:3 * C1, :].T                                            # (HW, 16)
    zp = y[3 * C1:3 * C1 + CP, :].T                                       # (HW, 24), already /9

    # ---- branch 5x5 -----------------------------------------------------------
    pad_into(pad5_ref, t5, 2)
    b5 = conv_kxk(pad5_ref, w5_ref, b5_ref, 5)
    write_branch(b5, C1)

    # ---- branch 3x3 double ----------------------------------------------------
    pad_into(pad3a_ref, t3, 1)
    t3b = conv_kxk(pad3a_ref, w32_ref, b32_ref, 3)
    pad_into(pad3b_ref, t3b, 1)
    b3 = conv_kxk(pad3b_ref, w33_ref, b33_ref, 3)
    write_branch(b3, C1 + C5)

    # ---- pool branch: avg_pool AFTER its 1x1 (they commute); bias added post-pool ----
    pad_into(padp_ref, zp, 1)
    rows = padp_ref[0:H, :, :] + padp_ref[1:H + 1, :, :] + padp_ref[2:H + 2, :, :]
    pooled = rows[:, 0:W, :] + rows[:, 1:W + 1, :] + rows[:, 2:W + 2, :]
    bp = pooled.reshape(HW, CP) + bp_ref[...]
    write_branch(bp, C1 + C5 + C3)


# ----------------------------------------------------------------------------
# Host-side weight packing
# ----------------------------------------------------------------------------
def _prep_kxk(w, b):
    # OIHW (cout, cin, K, K) -> (K, cin, K*cout): wst[kw][ci, kh*cout + co] = w[co, ci, kh, kw]
    cout, cin, K, _ = w.shape
    wst = jnp.transpose(w, (3, 1, 2, 0)).reshape(K, cin, K * cout)
    return wst, b.reshape(1, -1)


def _prep_fused_1x1(params):
    # Stack the four 1x1 convs that consume x into one (72, Cin) channel-major weight.
    # The pool-branch weight carries the folded 1/9 avg-pool normalization; its bias is
    # added after pooling (count_include_pad), so the fused bias holds zeros there.
    w1, b1 = params["branch1x1"]
    w51, b51 = params["branch5x5_1"]
    w31, b31 = params["branch3x3dbl_1"]
    wp, bp = params["branch_pool"]
    wf = jnp.concatenate([w1[:, :, 0, 0], w51[:, :, 0, 0], w31[:, :, 0, 0],
                          wp[:, :, 0, 0] * (1.0 / 9.0)], axis=0)          # (72, Cin)
    bf = jnp.concatenate([b1, b51, b31, jnp.zeros_like(bp)]).reshape(-1, 1)  # (72, 1)
    return wf, bf, bp.reshape(1, -1)


# ----------------------------------------------------------------------------
# Wrapper
# ----------------------------------------------------------------------------
def inception_a_forward(x_nchw, params):
    N, Cin, H, W = x_nchw.shape
    HW = H * W

    x_ncs = x_nchw.reshape(N, Cin, HW)            # channel-major: free reshape of NCHW

    wf, bf, bp = _prep_fused_1x1(params)
    w5, b5 = _prep_kxk(*params["branch5x5_2"])
    w32, b32 = _prep_kxk(*params["branch3x3dbl_2"])
    w33, b33 = _prep_kxk(*params["branch3x3dbl_3"])

    kernel = functools.partial(_inception_kernel, H=H, W=W)
    grid_spec = pltpu.PrefetchScalarGridSpec(
        num_scalar_prefetch=0,
        grid=(N,),
        in_specs=[
            pl.BlockSpec((1, Cin, HW), lambda n: (n, 0, 0)),     # x: one image per step
            pl.BlockSpec(wf.shape, lambda n: (0, 0)),            # weights stay resident
            pl.BlockSpec(bf.shape, lambda n: (0, 0)),
            pl.BlockSpec(w5.shape, lambda n: (0, 0, 0)),
            pl.BlockSpec(b5.shape, lambda n: (0, 0)),
            pl.BlockSpec(w32.shape, lambda n: (0, 0, 0)),
            pl.BlockSpec(b32.shape, lambda n: (0, 0)),
            pl.BlockSpec(w33.shape, lambda n: (0, 0, 0)),
            pl.BlockSpec(b33.shape, lambda n: (0, 0)),
            pl.BlockSpec(bp.shape, lambda n: (0, 0)),
        ],
        out_specs=pl.BlockSpec((1, C_TOTAL, HW), lambda n: (n, 0, 0)),
        scratch_shapes=[
            pltpu.VMEM((H + 4, W + 4, C1), jnp.float32),    # padded t5   (pad=2)
            pltpu.VMEM((H + 2, W + 2, C1), jnp.float32),    # padded t3_1 (pad=1)
            pltpu.VMEM((H + 2, W + 2, C3), jnp.float32),    # padded t3_2 (pad=1)
            pltpu.VMEM((H + 2, W + 2, CP), jnp.float32),    # padded pool-branch pre-pool
        ],
    )
    out = pl.pallas_call(
        kernel,
        out_shape=jax.ShapeDtypeStruct((N, C_TOTAL, HW), jnp.float32),
        grid_spec=grid_spec,
        compiler_params=pltpu.CompilerParams(dimension_semantics=("parallel",)),
    )(x_ncs, wf, bf, w5, b5, w32, b32, w33, b33, bp)

    return out.reshape(N, C_TOTAL, H, W)                      # NCHW, free reshape


# ----------------------------------------------------------------------------
# Synthetic params (match nn.Conv2d shapes, OIHW weights)
# ----------------------------------------------------------------------------
def init_params(in_channels, key):
    ks = jax.random.split(key, 14)
    def w(k, cout, cin, kk):
        return (jax.random.normal(k, (cout, cin, kk, kk), jnp.float32)
                * (1.0 / np.sqrt(cin * kk * kk)))
    def bz(k, cout):
        return jax.random.normal(k, (cout,), jnp.float32) * 0.01
    return {
        "branch1x1":      (w(ks[0], 16, in_channels, 1), bz(ks[1], 16)),
        "branch5x5_1":    (w(ks[2], 16, in_channels, 1), bz(ks[3], 16)),
        "branch5x5_2":    (w(ks[4], 24, 16, 5),          bz(ks[5], 24)),
        "branch3x3dbl_1": (w(ks[6], 16, in_channels, 1), bz(ks[7], 16)),
        "branch3x3dbl_2": (w(ks[8], 24, 16, 3),          bz(ks[9], 24)),
        "branch3x3dbl_3": (w(ks[10], 24, 24, 3),         bz(ks[11], 24)),
        "branch_pool":    (w(ks[12], 24, in_channels, 1), bz(ks[13], 24)),
    }


# ----------------------------------------------------------------------------
# Pure-JAX reference (correctness check)
# ----------------------------------------------------------------------------
def _ref_conv(x_nhwc, w_oihw, b, pad):
    w_hwio = jnp.transpose(w_oihw, (2, 3, 1, 0))
    y = lax.conv_general_dilated(
        x_nhwc, w_hwio, window_strides=(1, 1),
        padding=[(pad, pad), (pad, pad)],
        dimension_numbers=("NHWC", "HWIO", "NHWC"))
    return y + b[None, None, None, :]


def _ref_forward(x_nchw, params):
    x = jnp.transpose(x_nchw, (0, 2, 3, 1))
    b1 = _ref_conv(x, *params["branch1x1"], pad=0)
    t5 = _ref_conv(x, *params["branch5x5_1"], pad=0)
    b5 = _ref_conv(t5, *params["branch5x5_2"], pad=2)
    t3 = _ref_conv(x, *params["branch3x3dbl_1"], pad=0)
    t3 = _ref_conv(t3, *params["branch3x3dbl_2"], pad=1)
    b3 = _ref_conv(t3, *params["branch3x3dbl_3"], pad=1)
    xp = jnp.pad(x, ((0, 0), (1, 1), (1, 1), (0, 0)))
    pooled = lax.reduce_window(xp, 0.0, lax.add, (1, 3, 3, 1), (1, 1, 1, 1),
                               "VALID") / 9.0   # count_include_pad=True
    bp = _ref_conv(pooled, *params["branch_pool"], pad=0)
    out = jnp.concatenate([b1, b5, b3, bp], axis=-1)
    return jnp.transpose(out, (0, 3, 1, 2))


# ----------------------------------------------------------------------------
if __name__ == "__main__":
    key = jax.random.PRNGKey(0)
    kx, kp = jax.random.split(key)

    N, C, H, W = 2, 4, 16, 16
    x = jax.random.normal(kx, (N, C, H, W), jnp.float32)
    params = init_params(C, kp)

    fwd = jax.jit(inception_a_forward)
    out = jax.block_until_ready(fwd(x, params))
    assert out.shape == (N, C_TOTAL, H, W), out.shape

    ref = jax.block_until_ready(_ref_forward(x, params))
    np.testing.assert_allclose(np.asarray(out), np.asarray(ref),
                               rtol=1e-4, atol=1e-4)

    print("KERNEL_OK")
</pallas_src>

<mosaic_0001>
module attributes {stable_mosaic.version = 11 : i64} {
  func.func @_inception_kernel(%arg0: i32, %arg1: memref<1x4x256xf32, #tpu.memory_space<vmem>>, %arg2: memref<72x4xf32, #tpu.memory_space<vmem>>, %arg3: memref<72x1xf32, #tpu.memory_space<vmem>>, %arg4: memref<5x16x120xf32, #tpu.memory_space<vmem>>, %arg5: memref<1x24xf32, #tpu.memory_space<vmem>>, %arg6: memref<3x16x72xf32, #tpu.memory_space<vmem>>, %arg7: memref<1x24xf32, #tpu.memory_space<vmem>>, %arg8: memref<3x24x72xf32, #tpu.memory_space<vmem>>, %arg9: memref<1x24xf32, #tpu.memory_space<vmem>>, %arg10: memref<1x24xf32, #tpu.memory_space<vmem>>, %arg11: memref<1x88x256xf32, #tpu.memory_space<vmem>>, %arg12: memref<20x20x16xf32, #tpu.memory_space<vmem>>, %arg13: memref<18x18x16xf32, #tpu.memory_space<vmem>>, %arg14: memref<18x18x24xf32, #tpu.memory_space<vmem>>, %arg15: memref<18x18x24xf32, #tpu.memory_space<vmem>>) attributes {dimension_semantics = [#tpu.dimension_semantics<parallel>], iteration_bounds = array<i64: 2>, scalar_prefetch = 0 : i64, scratch_operands = 4 : i64, tpu.core_type = #tpu.core_type<tc>, window_params = [{transform_indices = @transform_0, window_bounds = array<i64: 1, 4, 256>}, {pipeline_mode = #tpu.pipeline_mode<synchronous>, transform_indices = @transform_1, window_bounds = array<i64: 72, 4>}, {pipeline_mode = #tpu.pipeline_mode<synchronous>, transform_indices = @transform_2, window_bounds = array<i64: 72, 1>}, {pipeline_mode = #tpu.pipeline_mode<synchronous>, transform_indices = @transform_3, window_bounds = array<i64: 5, 16, 120>}, {pipeline_mode = #tpu.pipeline_mode<synchronous>, transform_indices = @transform_4, window_bounds = array<i64: 1, 24>}, {pipeline_mode = #tpu.pipeline_mode<synchronous>, transform_indices = @transform_5, window_bounds = array<i64: 3, 16, 72>}, {pipeline_mode = #tpu.pipeline_mode<synchronous>, transform_indices = @transform_6, window_bounds = array<i64: 1, 24>}, {pipeline_mode = #tpu.pipeline_mode<synchronous>, transform_indices = @transform_7, window_bounds = array<i64: 3, 24, 72>}, {pipeline_mode = #tpu.pipeline_mode<synchronous>, transform_indices = @transform_8, window_bounds = array<i64: 1, 24>}, {pipeline_mode = #tpu.pipeline_mode<synchronous>, transform_indices = @transform_9, window_bounds = array<i64: 1, 24>}, {transform_indices = @transform_10, window_bounds = array<i64: 1, 88, 256>}]} {
    %c0 = arith.constant 0 : index
    %c0_0 = arith.constant 0 : index
    %c0_1 = arith.constant 0 : index
    %0 = vector.load %arg1[%c0, %c0_0, %c0_1] : memref<1x4x256xf32, #tpu.memory_space<vmem>>, vector<1x4x256xf32>
    %1 = vector.shape_cast %0 : vector<1x4x256xf32> to vector<4x256xf32>
    %c0_2 = arith.constant 0 : index
    %c0_3 = arith.constant 0 : index
    %2 = vector.load %arg2[%c0_2, %c0_3] : memref<72x4xf32, #tpu.memory_space<vmem>>, vector<72x4xf32>
    %cst = arith.constant dense<0.000000e+00> : vector<72x256xf32>
    %3 = tpu.matmul %2, %1, %cst {dimension_numbers = #tpu.dot_dimension_numbers<[1], [0], [0], [1], [0, 0, 1, 1], [], []>} : vector<72x4xf32>, vector<4x256xf32>, vector<72x256xf32> -> vector<72x256xf32>
    %c0_4 = arith.constant 0 : index
    %c0_5 = arith.constant 0 : index
    %4 = vector.load %arg3[%c0_4, %c0_5] : memref<72x1xf32, #tpu.memory_space<vmem>>, vector<72x1xf32>
    %5 = vector.broadcast %4 : vector<72x1xf32> to vector<72x256xf32>
    %6 = arith.addf %3, %5 : vector<72x256xf32>
    %7 = vector.extract_strided_slice %6 {offsets = [0, 0], sizes = [16, 256], strides = [1, 1]} : vector<72x256xf32> to vector<16x256xf32>
    %c0_6 = arith.constant 0 : index
    %c0_7 = arith.constant 0 : index
    %c0_8 = arith.constant 0 : index
    %8 = vector.load %arg11[%c0_6, %c0_7, %c0_8] : memref<1x88x256xf32, #tpu.memory_space<vmem>>, vector<1x16x256xf32>
    %9 = vector.shape_cast %8 : vector<1x16x256xf32> to vector<16x256xf32>
    %10 = vector.shape_cast %7 : vector<16x256xf32> to vector<1x16x256xf32>
    tpu.vector_store %arg11[%c0_6, %c0_7, %c0_8], %10 {strides = array<i32>} : memref<1x88x256xf32, #tpu.memory_space<vmem>>, vector<1x16x256xf32>,
    %11 = vector.extract_strided_slice %6 {offsets = [16, 0], sizes = [16, 256], strides = [1, 1]} : vector<72x256xf32> to vector<16x256xf32>
    %12 = tpu.transpose %11, [1, 0] : vector<16x256xf32> -> vector<256x16xf32>
    %13 = vector.extract_strided_slice %6 {offsets = [32, 0], sizes = [16, 256], strides = [1, 1]} : vector<72x256xf32> to vector<16x256xf32>
    %14 = tpu.transpose %13, [1, 0] : vector<16x256xf32> -> vector<256x16xf32>
    %15 = vector.extract_strided_slice %6 {offsets = [48, 0], sizes = [24, 256], strides = [1, 1]} : vector<72x256xf32> to vector<24x256xf32>
    %16 = tpu.transpose %15, [1, 0] : vector<24x256xf32> -> vector<256x24xf32>
    %cst_9 = arith.constant 0.000000e+00 : f32
    %17 = vector.broadcast %cst_9 : f32 to vector<2x20x16xf32>
    %cst_10 = arith.constant 0.000000e+00 : f32
    %18 = vector.broadcast %cst_10 : f32 to vector<16x2x16xf32>
    %c0_11 = arith.constant 0 : index
    %c0_12 = arith.constant 0 : index
    %c0_13 = arith.constant 0 : index
    %19 = vector.load %arg12[%c0_11, %c0_12, %c0_13] : memref<20x20x16xf32, #tpu.memory_space<vmem>>, vector<2x20x16xf32>
    tpu.vector_store %arg12[%c0_11, %c0_12, %c0_13], %17 {strides = array<i32>} : memref<20x20x16xf32, #tpu.memory_space<vmem>>, vector<2x20x16xf32>,
    %c18 = arith.constant 18 : index
    %c0_14 = arith.constant 0 : index
    %c0_15 = arith.constant 0 : index
    %20 = vector.load %arg12[%c18, %c0_14, %c0_15] : memref<20x20x16xf32, #tpu.memory_space<vmem>>, vector<2x20x16xf32>
    tpu.vector_store %arg12[%c18, %c0_14, %c0_15], %17 {strides = array<i32>} : memref<20x20x16xf32, #tpu.memory_space<vmem>>, vector<2x20x16xf32>,
    %c2 = arith.constant 2 : index
    %c0_16 = arith.constant 0 : index
    %c0_17 = arith.constant 0 : index
    %21 = vector.load %arg12[%c2, %c0_16, %c0_17] : memref<20x20x16xf32, #tpu.memory_space<vmem>>, vector<16x2x16xf32>
    tpu.vector_store %arg12[%c2, %c0_16, %c0_17], %18 {strides = array<i32>} : memref<20x20x16xf32, #tpu.memory_space<vmem>>, vector<16x2x16xf32>,
    %c2_18 = arith.constant 2 : index
    %c18_19 = arith.constant 18 : index
    %c0_20 = arith.constant 0 : index
    %22 = vector.load %arg12[%c2_18, %c18_19, %c0_20] : memref<20x20x16xf32, #tpu.memory_space<vmem>>, vector<16x2x16xf32>
    tpu.vector_store %arg12[%c2_18, %c18_19, %c0_20], %18 {strides = array<i32>} : memref<20x20x16xf32, #tpu.memory_space<vmem>>, vector<16x2x16xf32>,
    %23 = vector.shape_cast %12 : vector<256x16xf32> to vector<16x16x16xf32>
    %c2_21 = arith.constant 2 : index
    %c2_22 = arith.constant 2 : index
    %c0_23 = arith.constant 0 : index
    %24 = vector.load %arg12[%c2_21, %c2_22, %c0_23] : memref<20x20x16xf32, #tpu.memory_space<vmem>>, vector<16x16x16xf32>
    tpu.vector_store %arg12[%c2_21, %c2_22, %c0_23], %23 {strides = array<i32>} : memref<20x20x16xf32, #tpu.memory_space<vmem>>, vector<16x16x16xf32>,
    %c0_24 = arith.constant 0 : index
    %c0_25 = arith.constant 0 : index
    %c0_26 = arith.constant 0 : index
    %25 = vector.load %arg12[%c0_24, %c0_25, %c0_26] : memref<20x20x16xf32, #tpu.memory_space<vmem>>, vector<20x16x16xf32>
    %26 = vector.shape_cast %25 : vector<20x16x16xf32> to vector<320x16xf32>
    %c0_27 = arith.constant 0 : index
    %c0_28 = arith.constant 0 : index
    %c0_29 = arith.constant 0 : index
    %27 = vector.load %arg4[%c0_27, %c0_28, %c0_29] : memref<5x16x120xf32, #tpu.memory_space<vmem>>, vector<1x16x120xf32>
    %28 = vector.shape_cast %27 : vector<1x16x120xf32> to vector<16x120xf32>
    %cst_30 = arith.constant dense<0.000000e+00> : vector<320x120xf32>
    %29 = tpu.matmul %26, %28, %cst_30 {dimension_numbers = #tpu.dot_dimension_numbers<[1], [0], [0], [1], [0, 0, 1, 1], [], []>} : vector<320x16xf32>, vector<16x120xf32>, vector<320x120xf32> -> vector<320x120xf32>
    %c0_31 = arith.constant 0 : index
    %c1 = arith.constant 1 : index
    %c0_32 = arith.constant 0 : index
    %30 = vector.load %arg12[%c0_31, %c1, %c0_32] : memref<20x20x16xf32, #tpu.memory_space<vmem>>, vector<20x16x16xf32>
    %31 = vector.shape_cast %30 : vector<20x16x16xf32> to vector<320x16xf32>
    %c1_33 = arith.constant 1 : index
    %c0_34 = arith.constant 0 : index
    %c0_35 = arith.constant 0 : index
    %32 = vector.load %arg4[%c1_33, %c0_34, %c0_35] : memref<5x16x120xf32, #tpu.memory_space<vmem>>, vector<1x16x120xf32>
    %33 = vector.shape_cast %32 : vector<1x16x120xf32> to vector<16x120xf32>
    %cst_36 = arith.constant dense<0.000000e+00> : vector<320x120xf32>
    %34 = tpu.matmul %31, %33, %cst_36 {dimension_numbers = #tpu.dot_dimension_numbers<[1], [0], [0], [1], [0, 0, 1, 1], [], []>} : vector<320x16xf32>, vector<16x120xf32>, vector<320x120xf32> -> vector<320x120xf32>
    %35 = arith.addf %29, %34 : vector<320x120xf32>
    %c0_37 = arith.constant 0 : index
    %c2_38 = arith.constant 2 : index
    %c0_39 = arith.constant 0 : index
    %36 = vector.load %arg12[%c0_37, %c2_38, %c0_39] : memref<20x20x16xf32, #tpu.memory_space<vmem>>, vector<20x16x16xf32>
    %37 = vector.shape_cast %36 : vector<20x16x16xf32> to vector<320x16xf32>
    %c2_40 = arith.constant 2 : index
    %c0_41 = arith.constant 0 : index
    %c0_42 = arith.constant 0 : index
    %38 = vector.load %arg4[%c2_40, %c0_41, %c0_42] : memref<5x16x120xf32, #tpu.memory_space<vmem>>, vector<1x16x120xf32>
    %39 = vector.shape_cast %38 : vector<1x16x120xf32> to vector<16x120xf32>
    %cst_43 = arith.constant dense<0.000000e+00> : vector<320x120xf32>
    %40 = tpu.matmul %37, %39, %cst_43 {dimension_numbers = #tpu.dot_dimension_numbers<[1], [0], [0], [1], [0, 0, 1, 1], [], []>} : vector<320x16xf32>, vector<16x120xf32>, vector<320x120xf32> -> vector<320x120xf32>
    %41 = arith.addf %35, %40 : vector<320x120xf32>
    %c0_44 = arith.constant 0 : index
    %c3 = arith.constant 3 : index
    %c0_45 = arith.constant 0 : index
    %42 = vector.load %arg12[%c0_44, %c3, %c0_45] : memref<20x20x16xf32, #tpu.memory_space<vmem>>, vector<20x16x16xf32>
    %43 = vector.shape_cast %42 : vector<20x16x16xf32> to vector<320x16xf32>
    %c3_46 = arith.constant 3 : index
    %c0_47 = arith.constant 0 : index
    %c0_48 = arith.constant 0 : index
    %44 = vector.load %arg4[%c3_46, %c0_47, %c0_48] : memref<5x16x120xf32, #tpu.memory_space<vmem>>, vector<1x16x120xf32>
    %45 = vector.shape_cast %44 : vector<1x16x120xf32> to vector<16x120xf32>
    %cst_49 = arith.constant dense<0.000000e+00> : vector<320x120xf32>
    %46 = tpu.matmul %43, %45, %cst_49 {dimension_numbers = #tpu.dot_dimension_numbers<[1], [0], [0], [1], [0, 0, 1, 1], [], []>} : vector<320x16xf32>, vector<16x120xf32>, vector<320x120xf32> -> vector<320x120xf32>
    %47 = arith.addf %41, %46 : vector<320x120xf32>
    %c0_50 = arith.constant 0 : index
    %c4 = arith.constant 4 : index
    %c0_51 = arith.constant 0 : index
    %48 = vector.load %arg12[%c0_50, %c4, %c0_51] : memref<20x20x16xf32, #tpu.memory_space<vmem>>, vector<20x16x16xf32>
    %49 = vector.shape_cast %48 : vector<20x16x16xf32> to vector<320x16xf32>
    %c4_52 = arith.constant 4 : index
    %c0_53 = arith.constant 0 : index
    %c0_54 = arith.constant 0 : index
    %50 = vector.load %arg4[%c4_52, %c0_53, %c0_54] : memref<5x16x120xf32, #tpu.memory_space<vmem>>, vector<1x16x120xf32>
    %51 = vector.shape_cast %50 : vector<1x16x120xf32> to vector<16x120xf32>
    %cst_55 = arith.constant dense<0.000000e+00> : vector<320x120xf32>
    %52 = tpu.matmul %49, %51, %cst_55 {dimension_numbers = #tpu.dot_dimension_numbers<[1], [0], [0], [1], [0, 0, 1, 1], [], []>} : vector<320x16xf32>, vector<16x120xf32>, vector<320x120xf32> -> vector<320x120xf32>
    %53 = arith.addf %47, %52 : vector<320x120xf32>
    %54 = vector.shape_cast %53 : vector<320x120xf32> to vector<20x16x120xf32>
    %c0_56 = arith.constant 0 : index
    %c0_57 = arith.constant 0 : index
    %55 = vector.load %arg5[%c0_56, %c0_57] : memref<1x24xf32, #tpu.memory_space<vmem>>, vector<1x24xf32>
    %56 = vector.shape_cast %55 : vector<1x24xf32> to vector<1x24xf32>
    %57 = vector.broadcast %56 : vector<1x24xf32> to vector<256x24xf32>
    %58 = vector.extract_strided_slice %54 {offsets = [0, 0, 0], sizes = [16, 16, 24], strides = [1, 1, 1]} : vector<20x16x120xf32> to vector<16x16x24xf32>
    %59 = vector.shape_cast %58 : vector<16x16x24xf32> to vector<256x24xf32>
    %60 = arith.addf %57, %59 : vector<256x24xf32>
    %61 = vector.extract_strided_slice %54 {offsets = [1, 0, 24], sizes = [16, 16, 24], strides = [1, 1, 1]} : vector<20x16x120xf32> to vector<16x16x24xf32>
    %62 = vector.shape_cast %61 : vector<16x16x24xf32> to vector<256x24xf32>
    %63 = arith.addf %60, %62 : vector<256x24xf32>
    %64 = vector.extract_strided_slice %54 {offsets = [2, 0, 48], sizes = [16, 16, 24], strides = [1, 1, 1]} : vector<20x16x120xf32> to vector<16x16x24xf32>
    %65 = vector.shape_cast %64 : vector<16x16x24xf32> to vector<256x24xf32>
    %66 = arith.addf %63, %65 : vector<256x24xf32>
    %67 = vector.extract_strided_slice %54 {offsets = [3, 0, 72], sizes = [16, 16, 24], strides = [1, 1, 1]} : vector<20x16x120xf32> to vector<16x16x24xf32>
    %68 = vector.shape_cast %67 : vector<16x16x24xf32> to vector<256x24xf32>
    %69 = arith.addf %66, %68 : vector<256x24xf32>
    %70 = vector.extract_strided_slice %54 {offsets = [4, 0, 96], sizes = [16, 16, 24], strides = [1, 1, 1]} : vector<20x16x120xf32> to vector<16x16x24xf32>
    %71 = vector.shape_cast %70 : vector<16x16x24xf32> to vector<256x24xf32>
    %72 = arith.addf %69, %71 : vector<256x24xf32>
    %73 = tpu.transpose %72, [1, 0] : vector<256x24xf32> -> vector<24x256xf32>
    %c0_58 = arith.constant 0 : index
    %c16 = arith.constant 16 : index
    %c0_59 = arith.constant 0 : index
    %74 = vector.load %arg11[%c0_58, %c16, %c0_59] : memref<1x88x256xf32, #tpu.memory_space<vmem>>, vector<1x24x256xf32>
    %75 = vector.shape_cast %74 : vector<1x24x256xf32> to vector<24x256xf32>
    %76 = vector.shape_cast %73 : vector<24x256xf32> to vector<1x24x256xf32>
    tpu.vector_store %arg11[%c0_58, %c16, %c0_59], %76 {strides = array<i32>} : memref<1x88x256xf32, #tpu.memory_space<vmem>>, vector<1x24x256xf32>,
    %cst_60 = arith.constant 0.000000e+00 : f32
    %77 = vector.broadcast %cst_60 : f32 to vector<1x18x16xf32>
    %cst_61 = arith.constant 0.000000e+00 : f32
    %78 = vector.broadcast %cst_61 : f32 to vector<16x1x16xf32>
    %c0_62 = arith.constant 0 : index
    %c0_63 = arith.constant 0 : index
    %c0_64 = arith.constant 0 : index
    %79 = vector.load %arg13[%c0_62, %c0_63, %c0_64] : memref<18x18x16xf32, #tpu.memory_space<vmem>>, vector<1x18x16xf32>
    tpu.vector_store %arg13[%c0_62, %c0_63, %c0_64], %77 {strides = array<i32>} : memref<18x18x16xf32, #tpu.memory_space<vmem>>, vector<1x18x16xf32>,
    %c17 = arith.constant 17 : index
    %c0_65 = arith.constant 0 : index
    %c0_66 = arith.constant 0 : index
    %80 = vector.load %arg13[%c17, %c0_65, %c0_66] : memref<18x18x16xf32, #tpu.memory_space<vmem>>, vector<1x18x16xf32>
    tpu.vector_store %arg13[%c17, %c0_65, %c0_66], %77 {strides = array<i32>} : memref<18x18x16xf32, #tpu.memory_space<vmem>>, vector<1x18x16xf32>,
    %c1_67 = arith.constant 1 : index
    %c0_68 = arith.constant 0 : index
    %c0_69 = arith.constant 0 : index
    %81 = vector.load %arg13[%c1_67, %c0_68, %c0_69] : memref<18x18x16xf32, #tpu.memory_space<vmem>>, vector<16x1x16xf32>
    tpu.vector_store %arg13[%c1_67, %c0_68, %c0_69], %78 {strides = array<i32>} : memref<18x18x16xf32, #tpu.memory_space<vmem>>, vector<16x1x16xf32>,
    %c1_70 = arith.constant 1 : index
    %c17_71 = arith.constant 17 : index
    %c0_72 = arith.constant 0 : index
    %82 = vector.load %arg13[%c1_70, %c17_71, %c0_72] : memref<18x18x16xf32, #tpu.memory_space<vmem>>, vector<16x1x16xf32>
    tpu.vector_store %arg13[%c1_70, %c17_71, %c0_72], %78 {strides = array<i32>} : memref<18x18x16xf32, #tpu.memory_space<vmem>>, vector<16x1x16xf32>,
    %83 = vector.shape_cast %14 : vector<256x16xf32> to vector<16x16x16xf32>
    %c1_73 = arith.constant 1 : index
    %c1_74 = arith.constant 1 : index
    %c0_75 = arith.constant 0 : index
    %84 = vector.load %arg13[%c1_73, %c1_74, %c0_75] : memref<18x18x16xf32, #tpu.memory_space<vmem>>, vector<16x16x16xf32>
    tpu.vector_store %arg13[%c1_73, %c1_74, %c0_75], %83 {strides = array<i32>} : memref<18x18x16xf32, #tpu.memory_space<vmem>>, vector<16x16x16xf32>,
    %c0_76 = arith.constant 0 : index
    %c0_77 = arith.constant 0 : index
    %c0_78 = arith.constant 0 : index
    %85 = vector.load %arg13[%c0_76, %c0_77, %c0_78] : memref<18x18x16xf32, #tpu.memory_space<vmem>>, vector<18x16x16xf32>
    %86 = vector.shape_cast %85 : vector<18x16x16xf32> to vector<288x16xf32>
    %c0_79 = arith.constant 0 : index
    %c0_80 = arith.constant 0 : index
    %c0_81 = arith.constant 0 : index
    %87 = vector.load %arg6[%c0_79, %c0_80, %c0_81] : memref<3x16x72xf32, #tpu.memory_space<vmem>>, vector<1x16x72xf32>
    %88 = vector.shape_cast %87 : vector<1x16x72xf32> to vector<16x72xf32>
    %cst_82 = arith.constant dense<0.000000e+00> : vector<288x72xf32>
    %89 = tpu.matmul %86, %88, %cst_82 {dimension_numbers = #tpu.dot_dimension_numbers<[1], [0], [0], [1], [0, 0, 1, 1], [], []>} : vector<288x16xf32>, vector<16x72xf32>, vector<288x72xf32> -> vector<288x72xf32>
    %c0_83 = arith.constant 0 : index
    %c1_84 = arith.constant 1 : index
    %c0_85 = arith.constant 0 : index
    %90 = vector.load %arg13[%c0_83, %c1_84, %c0_85] : memref<18x18x16xf32, #tpu.memory_space<vmem>>, vector<18x16x16xf32>
    %91 = vector.shape_cast %90 : vector<18x16x16xf32> to vector<288x16xf32>
    %c1_86 = arith.constant 1 : index
    %c0_87 = arith.constant 0 : index
    %c0_88 = arith.constant 0 : index
    %92 = vector.load %arg6[%c1_86, %c0_87, %c0_88] : memref<3x16x72xf32, #tpu.memory_space<vmem>>, vector<1x16x72xf32>
    %93 = vector.shape_cast %92 : vector<1x16x72xf32> to vector<16x72xf32>
    %cst_89 = arith.constant dense<0.000000e+00> : vector<288x72xf32>
    %94 = tpu.matmul %91, %93, %cst_89 {dimension_numbers = #tpu.dot_dimension_numbers<[1], [0], [0], [1], [0, 0, 1, 1], [], []>} : vector<288x16xf32>, vector<16x72xf32>, vector<288x72xf32> -> vector<288x72xf32>
    %95 = arith.addf %89, %94 : vector<288x72xf32>
    %c0_90 = arith.constant 0 : index
    %c2_91 = arith.constant 2 : index
    %c0_92 = arith.constant 0 : index
    %96 = vector.load %arg13[%c0_90, %c2_91, %c0_92] : memref<18x18x16xf32, #tpu.memory_space<vmem>>, vector<18x16x16xf32>
    %97 = vector.shape_cast %96 : vector<18x16x16xf32> to vector<288x16xf32>
    %c2_93 = arith.constant 2 : index
    %c0_94 = arith.constant 0 : index
    %c0_95 = arith.constant 0 : index
    %98 = vector.load %arg6[%c2_93, %c0_94, %c0_95] : memref<3x16x72xf32, #tpu.memory_space<vmem>>, vector<1x16x72xf32>
    %99 = vector.shape_cast %98 : vector<1x16x72xf32> to vector<16x72xf32>
    %cst_96 = arith.constant dense<0.000000e+00> : vector<288x72xf32>
    %100 = tpu.matmul %97, %99, %cst_96 {dimension_numbers = #tpu.dot_dimension_numbers<[1], [0], [0], [1], [0, 0, 1, 1], [], []>} : vector<288x16xf32>, vector<16x72xf32>, vector<288x72xf32> -> vector<288x72xf32>
    %101 = arith.addf %95, %100 : vector<288x72xf32>
    %102 = vector.shape_cast %101 : vector<288x72xf32> to vector<18x16x72xf32>
    %c0_97 = arith.constant 0 : index
    %c0_98 = arith.constant 0 : index
    %103 = vector.load %arg7[%c0_97, %c0_98] : memref<1x24xf32, #tpu.memory_space<vmem>>, vector<1x24xf32>
    %104 = vector.shape_cast %103 : vector<1x24xf32> to vector<1x24xf32>
    %105 = vector.broadcast %104 : vector<1x24xf32> to vector<256x24xf32>
    %106 = vector.extract_strided_slice %102 {offsets = [0, 0, 0], sizes = [16, 16, 24], strides = [1, 1, 1]} : vector<18x16x72xf32> to vector<16x16x24xf32>
    %107 = vector.shape_cast %106 : vector<16x16x24xf32> to vector<256x24xf32>
    %108 = arith.addf %105, %107 : vector<256x24xf32>
    %109 = vector.extract_strided_slice %102 {offsets = [1, 0, 24], sizes = [16, 16, 24], strides = [1, 1, 1]} : vector<18x16x72xf32> to vector<16x16x24xf32>
    %110 = vector.shape_cast %109 : vector<16x16x24xf32> to vector<256x24xf32>
    %111 = arith.addf %108, %110 : vector<256x24xf32>
    %112 = vector.extract_strided_slice %102 {offsets = [2, 0, 48], sizes = [16, 16, 24], strides = [1, 1, 1]} : vector<18x16x72xf32> to vector<16x16x24xf32>
    %113 = vector.shape_cast %112 : vector<16x16x24xf32> to vector<256x24xf32>
    %114 = arith.addf %111, %113 : vector<256x24xf32>
    %cst_99 = arith.constant 0.000000e+00 : f32
    %115 = vector.broadcast %cst_99 : f32 to vector<1x18x24xf32>
    %cst_100 = arith.constant 0.000000e+00 : f32
    %116 = vector.broadcast %cst_100 : f32 to vector<16x1x24xf32>
    %c0_101 = arith.constant 0 : index
    %c0_102 = arith.constant 0 : index
    %c0_103 = arith.constant 0 : index
    %117 = vector.load %arg14[%c0_101, %c0_102, %c0_103] : memref<18x18x24xf32, #tpu.memory_space<vmem>>, vector<1x18x24xf32>
    tpu.vector_store %arg14[%c0_101, %c0_102, %c0_103], %115 {strides = array<i32>} : memref<18x18x24xf32, #tpu.memory_space<vmem>>, vector<1x18x24xf32>,
    %c17_104 = arith.constant 17 : index
    %c0_105 = arith.constant 0 : index
    %c0_106 = arith.constant 0 : index
    %118 = vector.load %arg14[%c17_104, %c0_105, %c0_106] : memref<18x18x24xf32, #tpu.memory_space<vmem>>, vector<1x18x24xf32>
    tpu.vector_store %arg14[%c17_104, %c0_105, %c0_106], %115 {strides = array<i32>} : memref<18x18x24xf32, #tpu.memory_space<vmem>>, vector<1x18x24xf32>,
    %c1_107 = arith.constant 1 : index
    %c0_108 = arith.constant 0 : index
    %c0_109 = arith.constant 0 : index
    %119 = vector.load %arg14[%c1_107, %c0_108, %c0_109] : memref<18x18x24xf32, #tpu.memory_space<vmem>>, vector<16x1x24xf32>
    tpu.vector_store %arg14[%c1_107, %c0_108, %c0_109], %116 {strides = array<i32>} : memref<18x18x24xf32, #tpu.memory_space<vmem>>, vector<16x1x24xf32>,
    %c1_110 = arith.constant 1 : index
    %c17_111 = arith.constant 17 : index
    %c0_112 = arith.constant 0 : index
    %120 = vector.load %arg14[%c1_110, %c17_111, %c0_112] : memref<18x18x24xf32, #tpu.memory_space<vmem>>, vector<16x1x24xf32>
    tpu.vector_store %arg14[%c1_110, %c17_111, %c0_112], %116 {strides = array<i32>} : memref<18x18x24xf32, #tpu.memory_space<vmem>>, vector<16x1x24xf32>,
    %121 = vector.shape_cast %114 : vector<256x24xf32> to vector<16x16x24xf32>
    %c1_113 = arith.constant 1 : index
    %c1_114 = arith.constant 1 : index
    %c0_115 = arith.constant 0 : index
    %122 = vector.load %arg14[%c1_113, %c1_114, %c0_115] : memref<18x18x24xf32, #tpu.memory_space<vmem>>, vector<16x16x24xf32>
    tpu.vector_store %arg14[%c1_113, %c1_114, %c0_115], %121 {strides = array<i32>} : memref<18x18x24xf32, #tpu.memory_space<vmem>>, vector<16x16x24xf32>,
    %c0_116 = arith.constant 0 : index
    %c0_117 = arith.constant 0 : index
    %c0_118 = arith.constant 0 : index
    %123 = vector.load %arg14[%c0_116, %c0_117, %c0_118] : memref<18x18x24xf32, #tpu.memory_space<vmem>>, vector<18x16x24xf32>
    %124 = vector.shape_cast %123 : vector<18x16x24xf32> to vector<288x24xf32>
    %c0_119 = arith.constant 0 : index
    %c0_120 = arith.constant 0 : index
    %c0_121 = arith.constant 0 : index
    %125 = vector.load %arg8[%c0_119, %c0_120, %c0_121] : memref<3x24x72xf32, #tpu.memory_space<vmem>>, vector<1x24x72xf32>
    %126 = vector.shape_cast %125 : vector<1x24x72xf32> to vector<24x72xf32>
    %cst_122 = arith.constant dense<0.000000e+00> : vector<288x72xf32>
    %127 = tpu.matmul %124, %126, %cst_122 {dimension_numbers = #tpu.dot_dimension_numbers<[1], [0], [0], [1], [0, 0, 1, 1], [], []>} : vector<288x24xf32>, vector<24x72xf32>, vector<288x72xf32> -> vector<288x72xf32>
    %c0_123 = arith.constant 0 : index
    %c1_124 = arith.constant 1 : index
    %c0_125 = arith.constant 0 : index
    %128 = vector.load %arg14[%c0_123, %c1_124, %c0_125] : memref<18x18x24xf32, #tpu.memory_space<vmem>>, vector<18x16x24xf32>
    %129 = vector.shape_cast %128 : vector<18x16x24xf32> to vector<288x24xf32>
    %c1_126 = arith.constant 1 : index
    %c0_127 = arith.constant 0 : index
    %c0_128 = arith.constant 0 : index
    %130 = vector.load %arg8[%c1_126, %c0_127, %c0_128] : memref<3x24x72xf32, #tpu.memory_space<vmem>>, vector<1x24x72xf32>
    %131 = vector.shape_cast %130 : vector<1x24x72xf32> to vector<24x72xf32>
    %cst_129 = arith.constant dense<0.000000e+00> : vector<288x72xf32>
    %132 = tpu.matmul %129, %131, %cst_129 {dimension_numbers = #tpu.dot_dimension_numbers<[1], [0], [0], [1], [0, 0, 1, 1], [], []>} : vector<288x24xf32>, vector<24x72xf32>, vector<288x72xf32> -> vector<288x72xf32>
    %133 = arith.addf %127, %132 : vector<288x72xf32>
    %c0_130 = arith.constant 0 : index
    %c2_131 = arith.constant 2 : index
    %c0_132 = arith.constant 0 : index
    %134 = vector.load %arg14[%c0_130, %c2_131, %c0_132] : memref<18x18x24xf32, #tpu.memory_space<vmem>>, vector<18x16x24xf32>
    %135 = vector.shape_cast %134 : vector<18x16x24xf32> to vector<288x24xf32>
    %c2_133 = arith.constant 2 : index
    %c0_134 = arith.constant 0 : index
    %c0_135 = arith.constant 0 : index
    %136 = vector.load %arg8[%c2_133, %c0_134, %c0_135] : memref<3x24x72xf32, #tpu.memory_space<vmem>>, vector<1x24x72xf32>
    %137 = vector.shape_cast %136 : vector<1x24x72xf32> to vector<24x72xf32>
    %cst_136 = arith.constant dense<0.000000e+00> : vector<288x72xf32>
    %138 = tpu.matmul %135, %137, %cst_136 {dimension_numbers = #tpu.dot_dimension_numbers<[1], [0], [0], [1], [0, 0, 1, 1], [], []>} : vector<288x24xf32>, vector<24x72xf32>, vector<288x72xf32> -> vector<288x72xf32>
    %139 = arith.addf %133, %138 : vector<288x72xf32>
    %140 = vector.shape_cast %139 : vector<288x72xf32> to vector<18x16x72xf32>
    %c0_137 = arith.constant 0 : index
    %c0_138 = arith.constant 0 : index
    %141 = vector.load %arg9[%c0_137, %c0_138] : memref<1x24xf32, #tpu.memory_space<vmem>>, vector<1x24xf32>
    %142 = vector.shape_cast %141 : vector<1x24xf32> to vector<1x24xf32>
    %143 = vector.broadcast %142 : vector<1x24xf32> to vector<256x24xf32>
    %144 = vector.extract_strided_slice %140 {offsets = [0, 0, 0], sizes = [16, 16, 24], strides = [1, 1, 1]} : vector<18x16x72xf32> to vector<16x16x24xf32>
    %145 = vector.shape_cast %144 : vector<16x16x24xf32> to vector<256x24xf32>
    %146 = arith.addf %143, %145 : vector<256x24xf32>
    %147 = vector.extract_strided_slice %140 {offsets = [1, 0, 24], sizes = [16, 16, 24], strides = [1, 1, 1]} : vector<18x16x72xf32> to vector<16x16x24xf32>
    %148 = vector.shape_cast %147 : vector<16x16x24xf32> to vector<256x24xf32>
    %149 = arith.addf %146, %148 : vector<256x24xf32>
    %150 = vector.extract_strided_slice %140 {offsets = [2, 0, 48], sizes = [16, 16, 24], strides = [1, 1, 1]} : vector<18x16x72xf32> to vector<16x16x24xf32>
    %151 = vector.shape_cast %150 : vector<16x16x24xf32> to vector<256x24xf32>
    %152 = arith.addf %149, %151 : vector<256x24xf32>
    %153 = tpu.transpose %152, [1, 0] : vector<256x24xf32> -> vector<24x256xf32>
    %c0_139 = arith.constant 0 : index
    %c40 = arith.constant 40 : index
    %c0_140 = arith.constant 0 : index
    %154 = vector.load %arg11[%c0_139, %c40, %c0_140] : memref<1x88x256xf32, #tpu.memory_space<vmem>>, vector<1x24x256xf32>
    %155 = vector.shape_cast %154 : vector<1x24x256xf32> to vector<24x256xf32>
    %156 = vector.shape_cast %153 : vector<24x256xf32> to vector<1x24x256xf32>
    tpu.vector_store %arg11[%c0_139, %c40, %c0_140], %156 {strides = array<i32>} : memref<1x88x256xf32, #tpu.memory_space<vmem>>, vector<1x24x256xf32>,
    %cst_141 = arith.constant 0.000000e+00 : f32
    %157 = vector.broadcast %cst_141 : f32 to vector<1x18x24xf32>
    %cst_142 = arith.constant 0.000000e+00 : f32
    %158 = vector.broadcast %cst_142 : f32 to vector<16x1x24xf32>
    %c0_143 = arith.constant 0 : index
    %c0_144 = arith.constant 0 : index
    %c0_145 = arith.constant 0 : index
    %159 = vector.load %arg15[%c0_143, %c0_144, %c0_145] : memref<18x18x24xf32, #tpu.memory_space<vmem>>, vector<1x18x24xf32>
    tpu.vector_store %arg15[%c0_143, %c0_144, %c0_145], %157 {strides = array<i32>} : memref<18x18x24xf32, #tpu.memory_space<vmem>>, vector<1x18x24xf32>,
    %c17_146 = arith.constant 17 : index
    %c0_147 = arith.constant 0 : index
    %c0_148 = arith.constant 0 : index
    %160 = vector.load %arg15[%c17_146, %c0_147, %c0_148] : memref<18x18x24xf32, #tpu.memory_space<vmem>>, vector<1x18x24xf32>
    tpu.vector_store %arg15[%c17_146, %c0_147, %c0_148], %157 {strides = array<i32>} : memref<18x18x24xf32, #tpu.memory_space<vmem>>, vector<1x18x24xf32>,
    %c1_149 = arith.constant 1 : index
    %c0_150 = arith.constant 0 : index
    %c0_151 = arith.constant 0 : index
    %161 = vector.load %arg15[%c1_149, %c0_150, %c0_151] : memref<18x18x24xf32, #tpu.memory_space<vmem>>, vector<16x1x24xf32>
    tpu.vector_store %arg15[%c1_149, %c0_150, %c0_151], %158 {strides = array<i32>} : memref<18x18x24xf32, #tpu.memory_space<vmem>>, vector<16x1x24xf32>,
    %c1_152 = arith.constant 1 : index
    %c17_153 = arith.constant 17 : index
    %c0_154 = arith.constant 0 : index
    %162 = vector.load %arg15[%c1_152, %c17_153, %c0_154] : memref<18x18x24xf32, #tpu.memory_space<vmem>>, vector<16x1x24xf32>
    tpu.vector_store %arg15[%c1_152, %c17_153, %c0_154], %158 {strides = array<i32>} : memref<18x18x24xf32, #tpu.memory_space<vmem>>, vector<16x1x24xf32>,
    %163 = vector.shape_cast %16 : vector<256x24xf32> to vector<16x16x24xf32>
    %c1_155 = arith.constant 1 : index
    %c1_156 = arith.constant 1 : index
    %c0_157 = arith.constant 0 : index
    %164 = vector.load %arg15[%c1_155, %c1_156, %c0_157] : memref<18x18x24xf32, #tpu.memory_space<vmem>>, vector<16x16x24xf32>
    tpu.vector_store %arg15[%c1_155, %c1_156, %c0_157], %163 {strides = array<i32>} : memref<18x18x24xf32, #tpu.memory_space<vmem>>, vector<16x16x24xf32>,
    %c0_158 = arith.constant 0 : index
    %c0_159 = arith.constant 0 : index
    %c0_160 = arith.constant 0 : index
    %165 = vector.load %arg15[%c0_158, %c0_159, %c0_160] : memref<18x18x24xf32, #tpu.memory_space<vmem>>, vector<16x18x24xf32>
    %c1_161 = arith.constant 1 : index
    %c0_162 = arith.constant 0 : index
    %c0_163 = arith.constant 0 : index
    %166 = vector.load %arg15[%c1_161, %c0_162, %c0_163] : memref<18x18x24xf32, #tpu.memory_space<vmem>>, vector<16x18x24xf32>
    %167 = arith.addf %165, %166 : vector<16x18x24xf32>
    %c2_164 = arith.constant 2 : index
    %c0_165 = arith.constant 0 : index
    %c0_166 = arith.constant 0 : index
    %168 = vector.load %arg15[%c2_164, %c0_165, %c0_166] : memref<18x18x24xf32, #tpu.memory_space<vmem>>, vector<16x18x24xf32>
    %169 = arith.addf %167, %168 : vector<16x18x24xf32>
    %170 = vector.extract_strided_slice %169 {offsets = [0, 0, 0], sizes = [16, 16, 24], strides = [1, 1, 1]} : vector<16x18x24xf32> to vector<16x16x24xf32>
    %171 = vector.extract_strided_slice %169 {offsets = [0, 1, 0], sizes = [16, 16, 24], strides = [1, 1, 1]} : vector<16x18x24xf32> to vector<16x16x24xf32>
    %172 = arith.addf %170, %171 : vector<16x16x24xf32>
    %173 = vector.extract_strided_slice %169 {offsets = [0, 2, 0], sizes = [16, 16, 24], strides = [1, 1, 1]} : vector<16x18x24xf32> to vector<16x16x24xf32>
    %174 = arith.addf %172, %173 : vector<16x16x24xf32>
    %175 = vector.shape_cast %174 : vector<16x16x24xf32> to vector<256x24xf32>
    %c0_167 = arith.constant 0 : index
    %c0_168 = arith.constant 0 : index
    %176 = vector.load %arg10[%c0_167, %c0_168] : memref<1x24xf32, #tpu.memory_space<vmem>>, vector<1x24xf32>
    %177 = vector.broadcast %176 : vector<1x24xf32> to vector<256x24xf32>
    %178 = arith.addf %175, %177 : vector<256x24xf32>
    %179 = tpu.transpose %178, [1, 0] : vector<256x24xf32> -> vector<24x256xf32>
    %c0_169 = arith.constant 0 : index
    %c64 = arith.constant 64 : index
    %c0_170 = arith.constant 0 : index
    %180 = vector.load %arg11[%c0_169, %c64, %c0_170] : memref<1x88x256xf32, #tpu.memory_space<vmem>>, vector<1x24x256xf32>
    %181 = vector.shape_cast %180 : vector<1x24x256xf32> to vector<24x256xf32>
    %182 = vector.shape_cast %179 : vector<24x256xf32> to vector<1x24x256xf32>
    tpu.vector_store %arg11[%c0_169, %c64, %c0_170], %182 {strides = array<i32>} : memref<1x88x256xf32, #tpu.memory_space<vmem>>, vector<1x24x256xf32>,
    return
  }
  func.func @transform_0(%arg0: i32) -> (i32, i32, i32) {
    %c0_i32 = arith.constant 0 : i32
    %c0_i32_0 = arith.constant 0 : i32
    %c0_i32_1 = arith.constant 0 : i32
    return %arg0, %c0_i32, %c0_i32_0 : i32, i32, i32
  }
  func.func @transform_1(%arg0: i32) -> (i32, i32) {
    %c0_i32 = arith.constant 0 : i32
    %c0_i32_0 = arith.constant 0 : i32
    %c0_i32_1 = arith.constant 0 : i32
    return %c0_i32, %c0_i32_0 : i32, i32
  }
  func.func @transform_2(%arg0: i32) -> (i32, i32) {
    %c0_i32 = arith.constant 0 : i32
    %c0_i32_0 = arith.constant 0 : i32
    %c0_i32_1 = arith.constant 0 : i32
    return %c0_i32, %c0_i32_0 : i32, i32
  }
  func.func @transform_3(%arg0: i32) -> (i32, i32, i32) {
    %c0_i32 = arith.constant 0 : i32
    %c0_i32_0 = arith.constant 0 : i32
    %c0_i32_1 = arith.constant 0 : i32
    %c0_i32_2 = arith.constant 0 : i32
    return %c0_i32, %c0_i32_0, %c0_i32_1 : i32, i32, i32
  }
  func.func @transform_4(%arg0: i32) -> (i32, i32) {
    %c0_i32 = arith.constant 0 : i32
    %c0_i32_0 = arith.constant 0 : i32
    %c0_i32_1 = arith.constant 0 : i32
    return %c0_i32, %c0_i32_0 : i32, i32
  }
  func.func @transform_5(%arg0: i32) -> (i32, i32, i32) {
    %c0_i32 = arith.constant 0 : i32
    %c0_i32_0 = arith.constant 0 : i32
    %c0_i32_1 = arith.constant 0 : i32
    %c0_i32_2 = arith.constant 0 : i32
    return %c0_i32, %c0_i32_0, %c0_i32_1 : i32, i32, i32
  }
  func.func @transform_6(%arg0: i32) -> (i32, i32) {
    %c0_i32 = arith.constant 0 : i32
    %c0_i32_0 = arith.constant 0 : i32
    %c0_i32_1 = arith.constant 0 : i32
    return %c0_i32, %c0_i32_0 : i32, i32
  }
  func.func @transform_7(%arg0: i32) -> (i32, i32, i32) {
    %c0_i32 = arith.constant 0 : i32
    %c0_i32_0 = arith.constant 0 : i32
    %c0_i32_1 = arith.constant 0 : i32
    %c0_i32_2 = arith.constant 0 : i32
    return %c0_i32, %c0_i32_0, %c0_i32_1 : i32, i32, i32
  }
  func.func @transform_8(%arg0: i32) -> (i32, i32) {
    %c0_i32 = arith.constant 0 : i32
    %c0_i32_0 = arith.constant 0 : i32
    %c0_i32_1 = arith.constant 0 : i32
    return %c0_i32, %c0_i32_0 : i32, i32
  }
  func.func @transform_9(%arg0: i32) -> (i32, i32) {
    %c0_i32 = arith.constant 0 : i32
    %c0_i32_0 = arith.constant 0 : i32
    %c0_i32_1 = arith.constant 0 : i32
    return %c0_i32, %c0_i32_0 : i32, i32
  }
  func.func @transform_10(%arg0: i32) -> (i32, i32, i32) {
    %c0_i32 = arith.constant 0 : i32
    %c0_i32_0 = arith.constant 0 : i32
    %c0_i32_1 = arith.constant 0 : i32
    return %arg0, %c0_i32, %c0_i32_0 : i32, i32, i32
  }
}

</mosaic_0001>

<llo_original>
// kernel: inception_a_forward.1
$region0: #{inception_a_forward.1}
  #allocation0 [shape = 'u32[]', space=smem, size = 0x4, offset = 0x4, fixed_abs, tag = 'smem constant byte address 0x4 - core index']
  #allocation1 [shape = 'u32[144,128]{1,0:T(1,128)}', space=vmem, size = 0x12000, scoped, tag = 'internal scratch']
  #allocation2 [shape = 'f32[20,20,16]{2,1,0:T(8,128)}', space=vmem, size = 0x3c000, scoped, tag = 'scratch operand']
  #allocation3 [shape = 'f32[18,18,16]{2,1,0:T(8,128)}', space=vmem, size = 0x36000, scoped, tag = 'scratch operand']
  #allocation4 [shape = 'f32[18,18,24]{2,1,0:T(8,128)}', space=vmem, size = 0x36000, scoped, tag = 'scratch operand']
  #allocation5 [shape = 'f32[18,18,24]{2,1,0:T(8,128)}', space=vmem, size = 0x36000, scoped, tag = 'scratch operand']
  %s0 = inlined_call_operand.vmem [shape: f32[2,4,256], index: 0, kind: input, shape index: {}]
  %s1 = inlined_call_operand.vmem [shape: f32[72,4], index: 1, kind: input, shape index: {}]
  %s2 = inlined_call_operand.vmem [shape: f32[72,1], index: 2, kind: input, shape index: {}]
  %s3 = inlined_call_operand.vmem [shape: f32[5,16,120], index: 3, kind: input, shape index: {}]
  %s4 = inlined_call_operand.vmem [shape: f32[1,24], index: 4, kind: input, shape index: {}]
  %s5 = inlined_call_operand.vmem [shape: f32[3,16,72], index: 5, kind: input, shape index: {}]
  %s6 = inlined_call_operand.vmem [shape: f32[1,24], index: 6, kind: input, shape index: {}]
  %s7 = inlined_call_operand.vmem [shape: f32[3,24,72], index: 7, kind: input, shape index: {}]
  %s8 = inlined_call_operand.vmem [shape: f32[1,24], index: 8, kind: input, shape index: {}]
  %s9 = inlined_call_operand.vmem [shape: f32[1,24], index: 9, kind: input, shape index: {}]
  %s10 = inlined_call_operand.vmem [shape: f32[2,88,256], index: 10, kind: output, shape index: {}]
  %s11 = sld [smem:[#allocation0]]
  $region73: #{inception_a_forward.1} parent=0
    _
  %s13 = ssub.s32 1, %s11
  %s14 = scalar_select 0, %s13, %s11
  loop: start=0, step=1, limit=4
  $region2: #{inception_a_forward.1} parent=0 // loop_pre_header
    _
  $region3: #{inception_a_forward.1} parent=0 // loop_header
    %s16 = sphi 0, %s20
    %p17 = scmp.ge.s32.totalorder %s16, 4
    %s26 = sphi 0, %s28
    %s29 = sphi 0, %s26
    %s30 = sphi 0, %s29
    %s46 = sphi 0, %s30
    %s50 = sphi 0, %s50
    %s52 = sphi 0, %s50
    %s53 = sphi 0, %s52
    %s67 = sphi 0, %s53
    %s71 = sphi 0, %s71
    %s73 = sphi 0, %s71
    %s74 = sphi 0, %s73
    %s88 = sphi 0, %s74
    %s92 = sphi 0, %s92
    %s94 = sphi 0, %s92
    %s95 = sphi 0, %s94
    %s109 = sphi 0, %s95
    %s113 = sphi 0, %s113
    %s115 = sphi 0, %s113
    %s116 = sphi 0, %s115
    %s130 = sphi 0, %s116
    %s134 = sphi 0, %s134
    %s136 = sphi 0, %s134
    %s137 = sphi 0, %s136
    %s151 = sphi 0, %s137
    %s155 = sphi 0, %s155
    %s157 = sphi 0, %s155
    %s158 = sphi 0, %s157
    %s172 = sphi 0, %s158
    %s176 = sphi 0, %s176
    %s178 = sphi 0, %s176
    %s179 = sphi 0, %s178
    %s193 = sphi 0, %s179
    %s197 = sphi 0, %s197
    %s199 = sphi 0, %s197
    %s200 = sphi 0, %s199
    %s214 = sphi 0, %s200
    %s218 = sphi 0, %s218
    %s220 = sphi 0, %s218
    %s221 = sphi 0, %s220
    %s235 = sphi 0, %s221
    %s241 = sphi 0, %s243
    %s244 = sphi 0, %s241
    %s245 = sphi 0, %s244
    %s261 = sphi 0, %s245
  $region4: #{inception_a_forward.1} parent=0 // loop_header_branch
    %19 = sbr.rel (%p17) target = $region8
  $region5: #{inception_a_forward.1} parent=0 // loop_body
    %s21 = ssub.s32 %s16, 1
    %s22 = ssub.s32 %s16, 2
    %s23 = sadd.s32 %s16, 1
    %s24 = ssub.s32 %s16, %s23
    %p25 = scmp.eq.s32.totalorder %s24, 0
    %s27 = sadd.s32 %s26, 1
    %s28 = scalar_select %p25, %s26, %s27
    %p31 = pneg %p25
    %p32 = scmp.eq.s32.totalorder %s16, 1
    %p33 = por %p31, %p32
    %p34 = scmp.ne.s32.totalorder %s26, %s29
    %p35 = scmp.eq.s32.totalorder %s16, 0
    %p36 = por %p34, %p35
    %p37 = scmp.ne.s32.totalorder %s26, %s29
    %p38 = scmp.eq.s32.totalorder %s21, 1
    %p39 = por %p37, %p38
    %p40 = scmp.ne.s32.totalorder %s29, %s30
    %p41 = scmp.eq.s32.totalorder %s21, 0
    %p42 = por %p40, %p41
    %p43 = scmp.ne.s32.totalorder %s29, %s30
    %p44 = scmp.eq.s32.totalorder %s22, 1
    %p45 = por %p43, %p44
    %p47 = scmp.ne.s32.totalorder %s30, %s46
    %p48 = scmp.eq.s32.totalorder %s22, 0
    %p49 = por %p47, %p48
    %s51 = sadd.s32 %s50, 1
    %p54 = scmp.eq.s32.totalorder %s16, 1
    %p55 = scmp.ne.s32.totalorder %s50, %s52
    %p56 = scmp.eq.s32.totalorder %s16, 0
    %p57 = por %p55, %p56
    %p58 = scmp.ne.s32.totalorder %s50, %s52
    %p59 = scmp.eq.s32.totalorder %s21, 1
    %p60 = por %p58, %p59
    %p61 = scmp.ne.s32.totalorder %s52, %s53
    %p62 = scmp.eq.s32.totalorder %s21, 0
    %p63 = por %p61, %p62
    %p64 = scmp.ne.s32.totalorder %s52, %s53
    %p65 = scmp.eq.s32.totalorder %s22, 1
    %p66 = por %p64, %p65
    %p68 = scmp.ne.s32.totalorder %s53, %s67
    %p69 = scmp.eq.s32.totalorder %s22, 0
    %p70 = por %p68, %p69
    %s72 = sadd.s32 %s71, 1
    %p75 = scmp.eq.s32.totalorder %s16, 1
    %p76 = scmp.ne.s32.totalorder %s71, %s73
    %p77 = scmp.eq.s32.totalorder %s16, 0
    %p78 = por %p76, %p77
    %p79 = scmp.ne.s32.totalorder %s71, %s73
    %p80 = scmp.eq.s32.totalorder %s21, 1
    %p81 = por %p79, %p80
    %p82 = scmp.ne.s32.totalorder %s73, %s74
    %p83 = scmp.eq.s32.totalorder %s21, 0
    %p84 = por %p82, %p83
    %p85 = scmp.ne.s32.totalorder %s73, %s74
    %p86 = scmp.eq.s32.totalorder %s22, 1
    %p87 = por %p85, %p86
    %p89 = scmp.ne.s32.totalorder %s74, %s88
    %p90 = scmp.eq.s32.totalorder %s22, 0
    %p91 = por %p89, %p90
    %s93 = sadd.s32 %s92, 1
    %p96 = scmp.eq.s32.totalorder %s16, 1
    %p97 = scmp.ne.s32.totalorder %s92, %s94
    %p98 = scmp.eq.s32.totalorder %s16, 0
    %p99 = por %p97, %p98
    %p100 = scmp.ne.s32.totalorder %s92, %s94
    %p101 = scmp.eq.s32.totalorder %s21, 1
    %p102 = por %p100, %p101
    %p103 = scmp.ne.s32.totalorder %s94, %s95
    %p104 = scmp.eq.s32.totalorder %s21, 0
    %p105 = por %p103, %p104
    %p106 = scmp.ne.s32.totalorder %s94, %s95
    %p107 = scmp.eq.s32.totalorder %s22, 1
    %p108 = por %p106, %p107
    %p110 = scmp.ne.s32.totalorder %s95, %s109
    %p111 = scmp.eq.s32.totalorder %s22, 0
    %p112 = por %p110, %p111
    %s114 = sadd.s32 %s113, 1
    %p117 = scmp.eq.s32.totalorder %s16, 1
    %p118 = scmp.ne.s32.totalorder %s113, %s115
    %p119 = scmp.eq.s32.totalorder %s16, 0
    %p120 = por %p118, %p119
    %p121 = scmp.ne.s32.totalorder %s113, %s115
    %p122 = scmp.eq.s32.totalorder %s21, 1
    %p123 = por %p121, %p122
    %p124 = scmp.ne.s32.totalorder %s115, %s116
    %p125 = scmp.eq.s32.totalorder %s21, 0
    %p126 = por %p124, %p125
    %p127 = scmp.ne.s32.totalorder %s115, %s116
    %p128 = scmp.eq.s32.totalorder %s22, 1
    %p129 = por %p127, %p128
    %p131 = scmp.ne.s32.totalorder %s116, %s130
    %p132 = scmp.eq.s32.totalorder %s22, 0
    %p133 = por %p131, %p132
    %s135 = sadd.s32 %s134, 1
    %p138 = scmp.eq.s32.totalorder %s16, 1
    %p139 = scmp.ne.s32.totalorder %s134, %s136
    %p140 = scmp.eq.s32.totalorder %s16, 0
    %p141 = por %p139, %p140
    %p142 = scmp.ne.s32.totalorder %s134, %s136
    %p143 = scmp.eq.s32.totalorder %s21, 1
    %p144 = por %p142, %p143
    %p145 = scmp.ne.s32.totalorder %s136, %s137
    %p146 = scmp.eq.s32.totalorder %s21, 0
    %p147 = por %p145, %p146
    %p148 = scmp.ne.s32.totalorder %s136, %s137
    %p149 = scmp.eq.s32.totalorder %s22, 1
    %p150 = por %p148, %p149
    %p152 = scmp.ne.s32.totalorder %s137, %s151
    %p153 = scmp.eq.s32.totalorder %s22, 0
    %p154 = por %p152, %p153
    %s156 = sadd.s32 %s155, 1
    %p159 = scmp.eq.s32.totalorder %s16, 1
    %p160 = scmp.ne.s32.totalorder %s155, %s157
    %p161 = scmp.eq.s32.totalorder %s16, 0
    %p162 = por %p160, %p161
    %p163 = scmp.ne.s32.totalorder %s155, %s157
    %p164 = scmp.eq.s32.totalorder %s21, 1
    %p165 = por %p163, %p164
    %p166 = scmp.ne.s32.totalorder %s157, %s158
    %p167 = scmp.eq.s32.totalorder %s21, 0
    %p168 = por %p166, %p167
    %p169 = scmp.ne.s32.totalorder %s157, %s158
    %p170 = scmp.eq.s32.totalorder %s22, 1
    %p171 = por %p169, %p170
    %p173 = scmp.ne.s32.totalorder %s158, %s172
    %p174 = scmp.eq.s32.totalorder %s22, 0
    %p175 = por %p173, %p174
    %s177 = sadd.s32 %s176, 1
    %p180 = scmp.eq.s32.totalorder %s16, 1
    %p181 = scmp.ne.s32.totalorder %s176, %s178
    %p182 = scmp.eq.s32.totalorder %s16, 0
    %p183 = por %p181, %p182
    %p184 = scmp.ne.s32.totalorder %s176, %s178
    %p185 = scmp.eq.s32.totalorder %s21, 1
    %p186 = por %p184, %p185
    %p187 = scmp.ne.s32.totalorder %s178, %s179
    %p188 = scmp.eq.s32.totalorder %s21, 0
    %p189 = por %p187, %p188
    %p190 = scmp.ne.s32.totalorder %s178, %s179
    %p191 = scmp.eq.s32.totalorder %s22, 1
    %p192 = por %p190, %p191
    %p194 = scmp.ne.s32.totalorder %s179, %s193
    %p195 = scmp.eq.s32.totalorder %s22, 0
    %p196 = por %p194, %p195
    %s198 = sadd.s32 %s197, 1
    %p201 = scmp.eq.s32.totalorder %s16, 1
    %p202 = scmp.ne.s32.totalorder %s197, %s199
    %p203 = scmp.eq.s32.totalorder %s16, 0
    %p204 = por %p202, %p203
    %p205 = scmp.ne.s32.totalorder %s197, %s199
    %p206 = scmp.eq.s32.totalorder %s21, 1
    %p207 = por %p205, %p206
    %p208 = scmp.ne.s32.totalorder %s199, %s200
    %p209 = scmp.eq.s32.totalorder %s21, 0
    %p210 = por %p208, %p209
    %p211 = scmp.ne.s32.totalorder %s199, %s200
    %p212 = scmp.eq.s32.totalorder %s22, 1
    %p213 = por %p211, %p212
    %p215 = scmp.ne.s32.totalorder %s200, %s214
    %p216 = scmp.eq.s32.totalorder %s22, 0
    %p217 = por %p215, %p216
    %s219 = sadd.s32 %s218, 1
    %p222 = scmp.eq.s32.totalorder %s16, 1
    %p223 = scmp.ne.s32.totalorder %s218, %s220
    %p224 = scmp.eq.s32.totalorder %s16, 0
    %p225 = por %p223, %p224
    %p226 = scmp.ne.s32.totalorder %s218, %s220
    %p227 = scmp.eq.s32.totalorder %s21, 1
    %p228 = por %p226, %p227
    %p229 = scmp.ne.s32.totalorder %s220, %s221
    %p230 = scmp.eq.s32.totalorder %s21, 0
    %p231 = por %p229, %p230
    %p232 = scmp.ne.s32.totalorder %s220, %s221
    %p233 = scmp.eq.s32.totalorder %s22, 1
    %p234 = por %p232, %p233
    %p236 = scmp.ne.s32.totalorder %s221, %s235
    %p237 = scmp.eq.s32.totalorder %s22, 0
    %p238 = por %p236, %p237
    %s239 = ssub.s32 %s16, %s23
    %p240 = scmp.eq.s32.totalorder %s239, 0
    %s242 = sadd.s32 %s241, 1
    %s243 = scalar_select %p240, %s241, %s242
    %p246 = pneg %p240
    %p247 = scmp.eq.s32.totalorder %s16, 1
    %p248 = por %p246, %p247
    %p249 = scmp.ne.s32.totalorder %s241, %s244
    %p250 = scmp.eq.s32.totalorder %s16, 0
    %p251 = por %p249, %p250
    %p252 = scmp.ne.s32.totalorder %s241, %s244
    %p253 = scmp.eq.s32.totalorder %s21, 1
    %p254 = por %p252, %p253
    %p255 = scmp.ne.s32.totalorder %s244, %s245
    %p256 = scmp.eq.s32.totalorder %s21, 0
    %p257 = por %p255, %p256
    %p258 = scmp.ne.s32.totalorder %s244, %s245
    %p259 = scmp.eq.s32.totalorder %s22, 1
    %p260 = por %p258, %p259
    %p262 = scmp.ne.s32.totalorder %s245, %s261
    %p263 = scmp.eq.s32.totalorder %s22, 0
    %p264 = por %p262, %p263
    %p265 = scmp.le.s32.totalorder 1, %s16
    %p266 = scmp.lt.s32.totalorder %s16, 3
    %p267 = pnand %p265, %p266
    %p268 = pneg %p267
    // Predicated region
    $region9: #{inception_a_forward.1} parent=5 // pred_check
      _
    $region10: #{inception_a_forward.1} parent=5 // pred_check_branch
      %270 = sbr.rel (%p267) target = $region12
    $region11: #{inception_a_forward.1} parent=5 // pred_region
      %s271 = ssub.s32 %s16, 1
      // Predicated region
      $region13: #{inception_a_forward.1} parent=11 // pred_check
        %p272 = pneg %p63
      $region14: #{inception_a_forward.1} parent=11 // pred_check_branch
        %274 = sbr.rel (%p272) target = $region16
      $region15: #{inception_a_forward.1} parent=11 // pred_region
        _
      $region16: #{inception_a_forward.1} parent=11 // pred_fallthru
        _
      // Predicated region
      $region17: #{inception_a_forward.1} parent=11 // pred_check
        %p275 = pneg %p84
      $region18: #{inception_a_forward.1} parent=11 // pred_check_branch
        %277 = sbr.rel (%p275) target = $region20
      $region19: #{inception_a_forward.1} parent=11 // pred_region
        _
      $region20: #{inception_a_forward.1} parent=11 // pred_fallthru
        _
      // Predicated region
      $region21: #{inception_a_forward.1} parent=11 // pred_check
        %p278 = pneg %p105
      $region22: #{inception_a_forward.1} parent=11 // pred_check_branch
        %280 = sbr.rel (%p278) target = $region24
      $region23: #{inception_a_forward.1} parent=11 // pred_region
        _
      $region24: #{inception_a_forward.1} parent=11 // pred_fallthru
        _
      // Predicated region
      $region25: #{inception_a_forward.1} parent=11 // pred_check
        %p281 = pneg %p126
      $region26: #{inception_a_forward.1} parent=11 // pred_check_branch
        %283 = sbr.rel (%p281) target = $region28
      $region27: #{inception_a_forward.1} parent=11 // pred_region
        _
      $region28: #{inception_a_forward.1} parent=11 // pred_fallthru
        _
      // Predicated region
      $region29: #{inception_a_forward.1} parent=11 // pred_check
        %p284 = pneg %p147
      $region30: #{inception_a_forward.1} parent=11 // pred_check_branch
        %286 = sbr.rel (%p284) target = $region32
      $region31: #{inception_a_forward.1} parent=11 // pred_region
        _
      $region32: #{inception_a_forward.1} parent=11 // pred_fallthru
        _
      // Predicated region
      $region33: #{inception_a_forward.1} parent=11 // pred_check
        %p287 = pneg %p168
      $region34: #{inception_a_forward.1} parent=11 // pred_check_branch
        %289 = sbr.rel (%p287) target = $region36
      $region35: #{inception_a_forward.1} parent=11 // pred_region
        _
      $region36: #{inception_a_forward.1} parent=11 // pred_fallthru
        _
      // Predicated region
      $region37: #{inception_a_forward.1} parent=11 // pred_check
        %p290 = pneg %p189
      $region38: #{inception_a_forward.1} parent=11 // pred_check_branch
        %292 = sbr.rel (%p290) target = $region40
      $region39: #{inception_a_forward.1} parent=11 // pred_region
        _
      $region40: #{inception_a_forward.1} parent=11 // pred_fallthru
        _
      // Predicated region
      $region41: #{inception_a_forward.1} parent=11 // pred_check
        %p293 = pneg %p210
      $region42: #{inception_a_forward.1} parent=11 // pred_check_branch
        %295 = sbr.rel (%p293) target = $region44
      $region43: #{inception_a_forward.1} parent=11 // pred_region
        _
      $region44: #{inception_a_forward.1} parent=11 // pred_fallthru
        _
      // Predicated region
      $region45: #{inception_a_forward.1} parent=11 // pred_check
        %p296 = pneg %p231
      $region46: #{inception_a_forward.1} parent=11 // pred_check_branch
        %298 = sbr.rel (%p296) target = $region48
      $region47: #{inception_a_forward.1} parent=11 // pred_region
        _
      $region48: #{inception_a_forward.1} parent=11 // pred_fallthru
        _
    $region12: #{inception_a_forward.1} parent=5 // pred_fallthru
      _
    %p299 = scmp.lt.s32.totalorder %s16, 2
    // Predicated region
    $region49: #{inception_a_forward.1} parent=5 // pred_check
      %p300 = pneg %p299
    $region50: #{inception_a_forward.1} parent=5 // pred_check_branch
      %302 = sbr.rel (%p300) target = $region52
    $region51: #{inception_a_forward.1} parent=5 // pred_region
      // Predicated region
      $region53: #{inception_a_forward.1} parent=51 // pred_check
        %p303 = pneg %p36
      $region54: #{inception_a_forward.1} parent=51 // pred_check_branch
        %305 = sbr.rel (%p303) target = $region56
      $region55: #{inception_a_forward.1} parent=51 // pred_region
        %p306 = scmp.lt.s32.totalorder %s16, 1
        %s307 = scalar_select %p306, %s16, 1
        %s308 = smul.addr %s307, 2
        %s309 = smul.addr %s308, 4
        %s310 = scalar_lea.vmem %s0, %s309
      $region56: #{inception_a_forward.1} parent=51 // pred_fallthru
        _
    $region52: #{inception_a_forward.1} parent=5 // pred_fallthru
      _
    %p311 = scmp.le.s32.totalorder 1, %s16
    %p312 = scmp.lt.s32.totalorder %s16, 3
    %p313 = pnand %p311, %p312
    %p314 = pneg %p313
    // Predicated region
    $region57: #{inception_a_forward.1} parent=5 // pred_check
      _
    $region58: #{inception_a_forward.1} parent=5 // pred_check_branch
      %316 = sbr.rel (%p313) target = $region60
    $region59: #{inception_a_forward.1} parent=5 // pred_region
      %s317 = ssub.s32 %s16, 1
      %p318 = scmp.lt.s32.totalorder %s21, 1
      %s319 = scalar_select %p318, %s21, 1
      %s320 = smul.addr %s319, 2
      %s321 = smul.addr %s320, 4
      %s322 = scalar_lea.vmem %s0, %s321
      %p323 = pneg %p42
      %p324 = pneg %p39
      %p325 = pneg %p63
      %p326 = pneg %p60
      %p327 = pneg %p84
      %p328 = pneg %p81
      %p329 = pneg %p105
      %p330 = pneg %p102
      %p331 = pneg %p126
      %p332 = pneg %p123
      %p333 = pneg %p147
      %p334 = pneg %p144
      %p335 = pneg %p168
      %p336 = pneg %p165
      %p337 = pneg %p189
      %p338 = pneg %p186
      %p339 = pneg %p210
      %p340 = pneg %p207
      %p341 = pneg %p231
      %p342 = pneg %p228
      %p343 = pneg %p257
      %p344 = pneg %p254
      %p345 = scmp.lt.s32.totalorder %s21, 1
      %s346 = scalar_select %p345, %s21, 1
      %s347 = smul.addr %s346, 22
      %s348 = smul.addr %s347, 8
      %s349 = scalar_lea.vmem %s10, %s348
      %p350 = scmp.lt.s32.totalorder %s21, 1
      %s351 = scalar_select %p350, %s21, 1
      %s352 = smul.addr %s351, 2
      %s353 = smul.addr %s352, 4
      %s354 = scalar_lea.vmem %s0, %s353
      %p355 = scmp.lt.s32.totalorder %s21, 1
      %s356 = scalar_select %p355, %s21, 1
      %s357 = smul.addr %s356, 22
      %s358 = smul.addr %s357, 8
      %s359 = scalar_lea.vmem %s10, %s358
      %v360 = vld [vmem:[%s354] sm:$0xff]
      %v361 = vld [vmem:[%s1] sm:$0xff]
      %v362 = vld [vmem:[%s1 + $0x8] sm:$0xff]
      %v363 = vld [vmem:[%s1 + $0x10] sm:$0xff]
      %v364 = vld [vmem:[%s1 + $0x18] sm:$0xff]
      %v365 = vld [vmem:[%s1 + $0x20] sm:$0xff]
      %v366 = vld [vmem:[%s1 + $0x28] sm:$0xff]
      %v367 = vld [vmem:[%s1 + $0x30] sm:$0xff]
      %v368 = vld [vmem:[%s1 + $0x38] sm:$0xff]
      %v369 = vld [vmem:[%s1 + $0x40] sm:$0xff]
      %v370 = vld [vmem:[%s2] sm:$0xff]
      %v371 = vld [vmem:[%s2 + $0x8] sm:$0xff]
      %v372 = vld [vmem:[%s2 + $0x10] sm:$0xff]
      %v373 = vld [vmem:[%s2 + $0x18] sm:$0xff]
      %v374 = vld [vmem:[%s2 + $0x20] sm:$0xff]
      %v375 = vld [vmem:[%s2 + $0x28] sm:$0xff]
      %v376 = vld [vmem:[%s2 + $0x30] sm:$0xff]
      %v377 = vld [vmem:[%s2 + $0x38] sm:$0xff]
      %v378 = vld [vmem:[%s2 + $0x40] sm:$0xff]
      %380 = vset.pattern.permute.xlu0 0
      %381 = vperm.xlu0 %380, %v370
      %v382 = vpop.permute.xlu0 %381
      %385 = vset.pattern.permute.xlu0 0
      %386 = vperm.xlu0 %385, %v371
      %v387 = vpop.permute.xlu0 %386
      %390 = vset.pattern.permute.xlu0 0
      %391 = vperm.xlu0 %390, %v372
      %v392 = vpop.permute.xlu0 %391
      %395 = vset.pattern.permute.xlu0 0
      %396 = vperm.xlu0 %395, %v373
      %v397 = vpop.permute.xlu0 %396
      %400 = vset.pattern.permute.xlu0 0
      %401 = vperm.xlu0 %400, %v374
      %v402 = vpop.permute.xlu0 %401
      %405 = vset.pattern.permute.xlu0 0
      %406 = vperm.xlu0 %405, %v375
      %v407 = vpop.permute.xlu0 %406
      %410 = vset.pattern.permute.xlu0 0
      %411 = vperm.xlu0 %410, %v376
      %v412 = vpop.permute.xlu0 %411
      %415 = vset.pattern.permute.xlu0 0
      %416 = vperm.xlu0 %415, %v377
      %v417 = vpop.permute.xlu0 %416
      %420 = vset.pattern.permute.xlu0 0
      %421 = vperm.xlu0 %420, %v378
      %v422 = vpop.permute.xlu0 %421
      %v425 = vcombine.high %v360, %v360
      %vm426 = vcmask 31744
      %v428 = vsel %vm426, %v361, 0
      %v431 = vsel %vm426, %v362, 0
      %v434 = vsel %vm426, %v363, 0
      %v437 = vsel %vm426, %v364, 0
      %v440 = vsel %vm426, %v365, 0
      %v443 = vsel %vm426, %v366, 0
      %v446 = vsel %vm426, %v367, 0
      %v449 = vsel %vm426, %v368, 0
      %v452 = vsel %vm426, %v369, 0
      %vm454 = vcmask 1043456
      %v455 = vsel %vm454, %v360, 0
      %v457 = vsel %vm454, %v425, 0
      %459 = vmatprep.subr.mxu0 0.0
      %460 = vmatpush1.msra.mxu0 0.0
      %461 = vmatprep.subr.mxu0 0.0
      %462 = vmatpush1.msra.mxu0 0.0
      %463 = vmatprep.subr.mxu0 0.0
      %464 = vmatpush1.msra.mxu0 0.0
      %465 = vmatprep.subr.mxu0 0.0
      %466 = vmatpush1.msra.mxu0 0.0
      %467 = vmatprep.subr.mxu0 0.0
      %468 = vmatpush1.msra.mxu0 0.0
      %469 = vmatprep.subr.mxu0 0.0
      %470 = vmatpush1.msra.mxu0 0.0
      %471 = vmatprep.subr.mxu0 0.0
      %472 = vmatpush1.msra.mxu0 0.0
      %473 = vmatprep.subr.mxu0 0.0
      %474 = vmatpush1.msra.mxu0 0.0
      %475 = vmatprep.subr.mxu0 0.0
      %476 = vmatpush1.msra.mxu0 0.0
      %477 = vmatprep.subr.mxu0 0.0
      %478 = vmatpush1.msra.mxu0 0.0
      %479 = vmatprep.subr.mxu0 0.0
      %480 = vmatpush1.msra.mxu0 0.0
      %481 = vmatprep.subr.mxu0 0.0
      %482 = vmatpush1.msra.mxu0 0.0
      %483 = vmatprep.subr.mxu0 0.0
      %484 = vmatpush1.msra.mxu0 0.0
      %485 = vmatprep.subr.mxu0 0.0
      %486 = vmatpush1.msra.mxu0 0.0
      %487 = vmatprep.subr.mxu0 0.0
      %488 = vmatpush1.msra.mxu0 0.0
      %489 = vmatprep.subr.mxu0 %v457
      %490 = vmatpush1.msra.mxu0 %v455
      %491 = vmatprep.subr.mxu0 0.0
      %492 = vmatpush2.msra.mxu0 0.0
      %493 = vmatprep.subr.mxu0 0.0
      %494 = vmatpush2.msra.mxu0 0.0
      %495 = vmatprep.subr.mxu0 0.0
      %496 = vmatpush2.msra.mxu0 0.0
      %497 = vmatprep.subr.mxu0 0.0
      %498 = vmatpush2.msra.mxu0 0.0
      %499 = vmatprep.subr.mxu0 0.0
      %500 = vmatpush2.msra.mxu0 0.0
      %501 = vmatprep.subr.mxu0 0.0
      %502 = vmatpush2.msra.mxu0 0.0
      %503 = vmatprep.subr.mxu0 0.0
      %504 = vmatpush2.msra.mxu0 0.0
      %505 = vmatprep.subr.mxu0 0.0
      %506 = vmatpush2.msra.mxu0 0.0
      %507 = vmatprep.subr.mxu0 0.0
      %508 = vmatpush2.msra.mxu0 0.0
      %509 = vmatprep.subr.mxu0 0.0
      %510 = vmatpush2.msra.mxu0 0.0
      %511 = vmatprep.subr.mxu0 0.0
      %512 = vmatpush2.msra.mxu0 0.0
      %513 = vmatprep.subr.mxu0 0.0
      %514 = vmatpush2.msra.mxu0 0.0
      %515 = vmatprep.subr.mxu0 0.0
      %516 = vmatpush2.msra.mxu0 0.0
      %517 = vmatprep.subr.mxu0 0.0
      %518 = vmatpush2.msra.mxu0 0.0
      %519 = vmatprep.subr.mxu0 0.0
      %520 = vmatpush2.msra.mxu0 0.0
      %521 = vmatprep.subr.mxu0 0.0
      %522 = vmatpush2.msra.mxu0 0.0
      %523 = vmatprep.mubr.f32.mxu0 0.0
      %524 = vmatmul.mubr.f32.gmra.mxu0 %v428
      %v525 = vpop.f32.mrf.mxu0
      %v526 = vadd.f32 %v382, %v525
      %v527 = vpop.f32.mrf.mxu0
      %v528 = vadd.f32 %v382, %v527
      %529 = vmatprep.mubr.f32.mxu0 0.0
      %530 = vmatmul.mubr.f32.gmra.mxu0 %v431
      %v531 = vpop.f32.mrf.mxu0
      %v532 = vadd.f32 %v387, %v531
      %v533 = vpop.f32.mrf.mxu0
      %v534 = vadd.f32 %v387, %v533
      %535 = vmatprep.mubr.f32.mxu0 0.0
      %536 = vmatmul.mubr.f32.gmra.mxu0 %v434
      %v537 = vpop.f32.mrf.mxu0
      %v538 = vadd.f32 %v392, %v537
      %v539 = vpop.f32.mrf.mxu0
      %v540 = vadd.f32 %v392, %v539
      %541 = vmatprep.mubr.f32.mxu0 0.0
      %542 = vmatmul.mubr.f32.gmra.mxu0 %v437
      %v543 = vpop.f32.mrf.mxu0
      %v544 = vadd.f32 %v397, %v543
      %v545 = vpop.f32.mrf.mxu0
      %v546 = vadd.f32 %v397, %v545
      %547 = vmatprep.mubr.f32.mxu0 0.0
      %548 = vmatmul.mubr.f32.gmra.mxu0 %v440
      %v549 = vpop.f32.mrf.mxu0
      %v550 = vadd.f32 %v402, %v549
      %v551 = vpop.f32.mrf.mxu0
      %v552 = vadd.f32 %v402, %v551
      %553 = vmatprep.mubr.f32.mxu0 0.0
      %554 = vmatmul.mubr.f32.gmra.mxu0 %v443
      %v555 = vpop.f32.mrf.mxu0
      %v556 = vadd.f32 %v407, %v555
      %v557 = vpop.f32.mrf.mxu0
      %v558 = vadd.f32 %v407, %v557
      %559 = vmatprep.mubr.f32.mxu0 0.0
      %560 = vmatmul.mubr.f32.gmra.mxu0 %v446
      %v561 = vpop.f32.mrf.mxu0
      %v562 = vadd.f32 %v412, %v561
      %v563 = vpop.f32.mrf.mxu0
      %v564 = vadd.f32 %v412, %v563
      %565 = vmatprep.mubr.f32.mxu0 0.0
      %566 = vmatmul.mubr.f32.gmra.mxu0 %v449
      %v567 = vpop.f32.mrf.mxu0
      %v568 = vadd.f32 %v417, %v567
      %v569 = vpop.f32.mrf.mxu0
      %v570 = vadd.f32 %v417, %v569
      %571 = vmatprep.mubr.f32.mxu0 0.0
      %572 = vmatmul.mubr.f32.gmra.mxu0 %v452
      %v573 = vpop.f32.mrf.mxu0
      %v574 = vadd.f32 %v422, %v573
      %v575 = vpop.f32.mrf.mxu0
      %v576 = vadd.f32 %v422, %v575
      %577 = vdwg.mxu0
      %578 = vst [vmem:[%s359] sm:$0xff] %v526
      %579 = vst [vmem:[%s359 + $0x8] sm:$0xff] %v528
      %580 = vst [vmem:[%s359 + $0x10] sm:$0xff] %v532
      %581 = vst [vmem:[%s359 + $0x18] sm:$0xff] %v534
      %582 = vxpose.xlu0.b32.start [1/16] %v538, 128
      %583 = vxpose.xlu0.b32.cont [2/16] %v544, 128
      %584 = vxpose.xlu0.b32.cont [3/16] 0.0, 128
      %585 = vxpose.xlu0.b32.cont [4/16] 0.0, 128
      %586 = vxpose.xlu0.b32.cont [5/16] 0.0, 128
      %587 = vxpose.xlu0.b32.cont [6/16] 0.0, 128
      %588 = vxpose.xlu0.b32.cont [7/16] 0.0, 128
      %589 = vxpose.xlu0.b32.cont [8/16] 0.0, 128
      %590 = vxpose.xlu0.b32.cont [9/16] 0.0, 128
      %591 = vxpose.xlu0.b32.cont [10/16] 0.0, 128
      %592 = vxpose.xlu0.b32.cont [11/16] 0.0, 128
      %593 = vxpose.xlu0.b32.cont [12/16] 0.0, 128
      %594 = vxpose.xlu0.b32.cont [13/16] 0.0, 128
      %595 = vxpose.xlu0.b32.cont [14/16] 0.0, 128
      %596 = vxpose.xlu0.b32.cont [15/16] 0.0, 128
      %597 = vxpose.xlu0.b32.end [16/16] 0.0, 128
      %v598 = vpop.trf.xlu0
      %v599 = vpop.trf.xlu0
      %v600 = vpop.trf.xlu0
      %v601 = vpop.trf.xlu0
      %v602 = vpop.trf.xlu0
      %v603 = vpop.trf.xlu0
      %v604 = vpop.trf.xlu0
      %v605 = vpop.trf.xlu0
      %v606 = vpop.trf.xlu0
      %v607 = vpop.trf.xlu0
      %v608 = vpop.trf.xlu0
      %v609 = vpop.trf.xlu0
      %v610 = vpop.trf.xlu0
      %v611 = vpop.trf.xlu0
      %v612 = vpop.trf.xlu0
      %v613 = vpop.trf.xlu0
      %614 = vxpose.xlu0.b32.start [1/16] %v540, 128
      %615 = vxpose.xlu0.b32.cont [2/16] %v546, 128
      %616 = vxpose.xlu0.b32.cont [3/16] 0.0, 128
      %617 = vxpose.xlu0.b32.cont [4/16] 0.0, 128
      %618 = vxpose.xlu0.b32.cont [5/16] 0.0, 128
      %619 = vxpose.xlu0.b32.cont [6/16] 0.0, 128
      %620 = vxpose.xlu0.b32.cont [7/16] 0.0, 128
      %621 = vxpose.xlu0.b32.cont [8/16] 0.0, 128
      %622 = vxpose.xlu0.b32.cont [9/16] 0.0, 128
      %623 = vxpose.xlu0.b32.cont [10/16] 0.0, 128
      %624 = vxpose.xlu0.b32.cont [11/16] 0.0, 128
      %625 = vxpose.xlu0.b32.cont [12/16] 0.0, 128
      %626 = vxpose.xlu0.b32.cont [13/16] 0.0, 128
      %627 = vxpose.xlu0.b32.cont [14/16] 0.0, 128
      %628 = vxpose.xlu0.b32.cont [15/16] 0.0, 128
      %629 = vxpose.xlu0.b32.end [16/16] 0.0, 128
      %v630 = vpop.trf.xlu0
      %v631 = vpop.trf.xlu0
      %v632 = vpop.trf.xlu0
      %v633 = vpop.trf.xlu0
      %v634 = vpop.trf.xlu0
      %v635 = vpop.trf.xlu0
      %v636 = vpop.trf.xlu0
      %v637 = vpop.trf.xlu0
      %v638 = vpop.trf.xlu0
      %v639 = vpop.trf.xlu0
      %v640 = vpop.trf.xlu0
      %v641 = vpop.trf.xlu0
      %v642 = vpop.trf.xlu0
      %v643 = vpop.trf.xlu0
      %v644 = vpop.trf.xlu0
      %v645 = vpop.trf.xlu0
      %646 = vxpose.xlu0.b32.start [1/16] %v550, 128
      %647 = vxpose.xlu0.b32.cont [2/16] %v556, 128
      %648 = vxpose.xlu0.b32.cont [3/16] 0.0, 128
      %649 = vxpose.xlu0.b32.cont [4/16] 0.0, 128
      %650 = vxpose.xlu0.b32.cont [5/16] 0.0, 128
      %651 = vxpose.xlu0.b32.cont [6/16] 0.0, 128
      %652 = vxpose.xlu0.b32.cont [7/16] 0.0, 128
      %653 = vxpose.xlu0.b32.cont [8/16] 0.0, 128
      %654 = vxpose.xlu0.b32.cont [9/16] 0.0, 128
      %655 = vxpose.xlu0.b32.cont [10/16] 0.0, 128
      %656 = vxpose.xlu0.b32.cont [11/16] 0.0, 128
      %657 = vxpose.xlu0.b32.cont [12/16] 0.0, 128
      %658 = vxpose.xlu0.b32.cont [13/16] 0.0, 128
      %659 = vxpose.xlu0.b32.cont [14/16] 0.0, 128
      %660 = vxpose.xlu0.b32.cont [15/16] 0.0, 128
      %661 = vxpose.xlu0.b32.end [16/16] 0.0, 128
      %v662 = vpop.trf.xlu0
      %v663 = vpop.trf.xlu0
      %v664 = vpop.trf.xlu0
      %v665 = vpop.trf.xlu0
      %v666 = vpop.trf.xlu0
      %v667 = vpop.trf.xlu0
      %v668 = vpop.trf.xlu0
      %v669 = vpop.trf.xlu0
      %v670 = vpop.trf.xlu0
      %v671 = vpop.trf.xlu0
      %v672 = vpop.trf.xlu0
      %v673 = vpop.trf.xlu0
      %v674 = vpop.trf.xlu0
      %v675 = vpop.trf.xlu0
      %v676 = vpop.trf.xlu0
      %v677 = vpop.trf.xlu0
      %678 = vxpose.xlu0.b32.start [1/16] %v552, 128
      %679 = vxpose.xlu0.b32.cont [2/16] %v558, 128
      %680 = vxpose.xlu0.b32.cont [3/16] 0.0, 128
      %681 = vxpose.xlu0.b32.cont [4/16] 0.0, 128
      %682 = vxpose.xlu0.b32.cont [5/16] 0.0, 128
      %683 = vxpose.xlu0.b32.cont [6/16] 0.0, 128
      %684 = vxpose.xlu0.b32.cont [7/16] 0.0, 128
      %685 = vxpose.xlu0.b32.cont [8/16] 0.0, 128
      %686 = vxpose.xlu0.b32.cont [9/16] 0.0, 128
      %687 = vxpose.xlu0.b32.cont [10/16] 0.0, 128
      %688 = vxpose.xlu0.b32.cont [11/16] 0.0, 128
      %689 = vxpose.xlu0.b32.cont [12/16] 0.0, 128
      %690 = vxpose.xlu0.b32.cont [13/16] 0.0, 128
      %691 = vxpose.xlu0.b32.cont [14/16] 0.0, 128
      %692 = vxpose.xlu0.b32.cont [15/16] 0.0, 128
      %693 = vxpose.xlu0.b32.end [16/16] 0.0, 128
      %v694 = vpop.trf.xlu0
      %v695 = vpop.trf.xlu0
      %v696 = vpop.trf.xlu0
      %v697 = vpop.trf.xlu0
      %v698 = vpop.trf.xlu0
      %v699 = vpop.trf.xlu0
      %v700 = vpop.trf.xlu0
      %v701 = vpop.trf.xlu0
      %v702 = vpop.trf.xlu0
      %v703 = vpop.trf.xlu0
      %v704 = vpop.trf.xlu0
      %v705 = vpop.trf.xlu0
      %v706 = vpop.trf.xlu0
      %v707 = vpop.trf.xlu0
      %v708 = vpop.trf.xlu0
      %v709 = vpop.trf.xlu0
      %710 = vxpose.xlu0.b32.start [1/16] %v562, 128
      %711 = vxpose.xlu0.b32.cont [2/16] %v568, 128
      %712 = vxpose.xlu0.b32.cont [3/16] %v574, 128
      %713 = vxpose.xlu0.b32.cont [4/16] 0.0, 128
      %714 = vxpose.xlu0.b32.cont [5/16] 0.0, 128
      %715 = vxpose.xlu0.b32.cont [6/16] 0.0, 128
      %716 = vxpose.xlu0.b32.cont [7/16] 0.0, 128
      %717 = vxpose.xlu0.b32.cont [8/16] 0.0, 128
      %718 = vxpose.xlu0.b32.cont [9/16] 0.0, 128
      %719 = vxpose.xlu0.b32.cont [10/16] 0.0, 128
      %720 = vxpose.xlu0.b32.cont [11/16] 0.0, 128
      %721 = vxpose.xlu0.b32.cont [12/16] 0.0, 128
      %722 = vxpose.xlu0.b32.cont [13/16] 0.0, 128
      %723 = vxpose.xlu0.b32.cont [14/16] 0.0, 128
      %724 = vxpose.xlu0.b32.cont [15/16] 0.0, 128
      %725 = vxpose.xlu0.b32.end [16/16] 0.0, 128
      %v726 = vpop.trf.xlu0
      %v727 = vpop.trf.xlu0
      %v728 = vpop.trf.xlu0
      %v729 = vpop.trf.xlu0
      %v730 = vpop.trf.xlu0
      %v731 = vpop.trf.xlu0
      %v732 = vpop.trf.xlu0
      %v733 = vpop.trf.xlu0
      %v734 = vpop.trf.xlu0
      %v735 = vpop.trf.xlu0
      %v736 = vpop.trf.xlu0
      %v737 = vpop.trf.xlu0
      %v738 = vpop.trf.xlu0
      %v739 = vpop.trf.xlu0
      %v740 = vpop.trf.xlu0
      %v741 = vpop.trf.xlu0
      %742 = vxpose.xlu0.b32.start [1/16] %v564, 128
      %743 = vxpose.xlu0.b32.cont [2/16] %v570, 128
      %744 = vxpose.xlu0.b32.cont [3/16] %v576, 128
      %745 = vxpose.xlu0.b32.cont [4/16] 0.0, 128
      %746 = vxpose.xlu0.b32.cont [5/16] 0.0, 128
      %747 = vxpose.xlu0.b32.cont [6/16] 0.0, 128
      %748 = vxpose.xlu0.b32.cont [7/16] 0.0, 128
      %749 = vxpose.xlu0.b32.cont [8/16] 0.0, 128
      %750 = vxpose.xlu0.b32.cont [9/16] 0.0, 128
      %751 = vxpose.xlu0.b32.cont [10/16] 0.0, 128
      %752 = vxpose.xlu0.b32.cont [11/16] 0.0, 128
      %753 = vxpose.xlu0.b32.cont [12/16] 0.0, 128
      %754 = vxpose.xlu0.b32.cont [13/16] 0.0, 128
      %755 = vxpose.xlu0.b32.cont [14/16] 0.0, 128
      %756 = vxpose.xlu0.b32.cont [15/16] 0.0, 128
      %757 = vxpose.xlu0.b32.end [16/16] 0.0, 128
      %v758 = vpop.trf.xlu0
      %v759 = vpop.trf.xlu0
      %v760 = vpop.trf.xlu0
      %v761 = vpop.trf.xlu0
      %v762 = vpop.trf.xlu0
      %v763 = vpop.trf.xlu0
      %v764 = vpop.trf.xlu0
      %v765 = vpop.trf.xlu0
      %v766 = vpop.trf.xlu0
      %v767 = vpop.trf.xlu0
      %v768 = vpop.trf.xlu0
      %v769 = vpop.trf.xlu0
      %v770 = vpop.trf.xlu0
      %v771 = vpop.trf.xlu0
      %v772 = vpop.trf.xlu0
      %v773 = vpop.trf.xlu0
      %vm774 = vcmask 130048
      %775 = vst.msk [vmem:[#allocation2] sm:$0xff] %vm774, 0.0
      %776 = vst.msk [vmem:[#allocation2 + $0x8] sm:$0xff] %vm774, 0.0
      %vm777 = vcmask 125952
      %778 = vst.msk [vmem:[#allocation2 + $0x10] sm:$0xf] %vm777, 0.0
      %779 = vst.msk [vmem:[#allocation2 + $0x18] sm:$0xff] %vm774, 0.0
      %780 = vst.msk [vmem:[#allocation2 + $0x20] sm:$0xff] %vm774, 0.0
      %781 = vst.msk [vmem:[#allocation2 + $0x28] sm:$0xf] %vm777, 0.0
      %s782 = scalar_lea.vmem [#allocation2], 432
      %783 = vst.msk [vmem:[%s782] sm:$0xff] %vm774, 0.0
      %784 = vst.msk [vmem:[%s782 + $0x8] sm:$0xff] %vm774, 0.0
      %785 = vst.msk [vmem:[%s782 + $0x10] sm:$0xf] %vm777, 0.0
      %786 = vst.msk [vmem:[%s782 + $0x18] sm:$0xff] %vm774, 0.0
      %787 = vst.msk [vmem:[%s782 + $0x20] sm:$0xff] %vm774, 0.0
      %788 = vst.msk [vmem:[%s782 + $0x28] sm:$0xf] %vm777, 0.0
      %s789 = scalar_lea.vmem [#allocation2], 48
      %vm790 = vcmask 123904
      %791 = vst.msk [vmem:[%s789] sm:$0x3] %vm790, 0.0
      %792 = vst.msk [vmem:[%s789 + $0x18] sm:$0x3] %vm790, 0.0
      %793 = vst.msk [vmem:[%s789 + $0x30] sm:$0x3] %vm790, 0.0
      %794 = vst.msk [vmem:[%s789 + $0x48] sm:$0x3] %vm790, 0.0
      %795 = vst.msk [vmem:[%s789 + $0x60] sm:$0x3] %vm790, 0.0
      %796 = vst.msk [vmem:[%s789 + $0x78] sm:$0x3] %vm790, 0.0
      %797 = vst.msk [vmem:[%s789 + $0x90] sm:$0x3] %vm790, 0.0
      %798 = vst.msk [vmem:[%s789 + $0xa8] sm:$0x3] %vm790, 0.0
      %799 = vst.msk [vmem:[%s789 + $0xc0] sm:$0x3] %vm790, 0.0
      %800 = vst.msk [vmem:[%s789 + $0xd8] sm:$0x3] %vm790, 0.0
      %801 = vst.msk [vmem:[%s789 + $0xf0] sm:$0x3] %vm790, 0.0
      %802 = vst.msk [vmem:[%s789 + $0x108] sm:$0x3] %vm790, 0.0
      %803 = vst.msk [vmem:[%s789 + $0x120] sm:$0x3] %vm790, 0.0
      %804 = vst.msk [vmem:[%s789 + $0x138] sm:$0x3] %vm790, 0.0
      %805 = vst.msk [vmem:[%s789 + $0x150] sm:$0x3] %vm790, 0.0
      %806 = vst.msk [vmem:[%s789 + $0x168] sm:$0x3] %vm790, 0.0
      %807 = vst.msk [vmem:[%s789 + $0x12] sm:$0x3] %vm790, 0.0
      %808 = vst.msk [vmem:[%s789 + $0x2a] sm:$0x3] %vm790, 0.0
      %809 = vst.msk [vmem:[%s789 + $0x42] sm:$0x3] %vm790, 0.0
      %810 = vst.msk [vmem:[%s789 + $0x5a] sm:$0x3] %vm790, 0.0
      %811 = vst.msk [vmem:[%s789 + $0x72] sm:$0x3] %vm790, 0.0
      %812 = vst.msk [vmem:[%s789 + $0x8a] sm:$0x3] %vm790, 0.0
      %813 = vst.msk [vmem:[%s789 + $0xa2] sm:$0x3] %vm790, 0.0
      %814 = vst.msk [vmem:[%s789 + $0xba] sm:$0x3] %vm790, 0.0
      %815 = vst.msk [vmem:[%s789 + $0xd2] sm:$0x3] %vm790, 0.0
      %816 = vst.msk [vmem:[%s789 + $0xea] sm:$0x3] %vm790, 0.0
      %817 = vst.msk [vmem:[%s789 + $0x102] sm:$0x3] %vm790, 0.0
      %818 = vst.msk [vmem:[%s789 + $0x11a] sm:$0x3] %vm790, 0.0
      %819 = vst.msk [vmem:[%s789 + $0x132] sm:$0x3] %vm790, 0.0
      %820 = vst.msk [vmem:[%s789 + $0x14a] sm:$0x3] %vm790, 0.0
      %821 = vst.msk [vmem:[%s789 + $0x162] sm:$0x3] %vm790, 0.0
      %822 = vst.msk [vmem:[%s789 + $0x17a] sm:$0x3] %vm790, 0.0
      %823 = vst.msk [vmem:[%s789 + $0x2] sm:$0xff] %vm774, %v598
      %824 = vst.msk [vmem:[%s789 + $0xa] sm:$0xff] %vm774, %v599
      %825 = vst.msk [vmem:[%s789 + $0x1a] sm:$0xff] %vm774, %v600
      %826 = vst.msk [vmem:[%s789 + $0x22] sm:$0xff] %vm774, %v601
      %827 = vst.msk [vmem:[%s789 + $0x32] sm:$0xff] %vm774, %v602
      %828 = vst.msk [vmem:[%s789 + $0x3a] sm:$0xff] %vm774, %v603
      %829 = vst.msk [vmem:[%s789 + $0x4a] sm:$0xff] %vm774, %v604
      %830 = vst.msk [vmem:[%s789 + $0x52] sm:$0xff] %vm774, %v605
      %831 = vst.msk [vmem:[%s789 + $0x62] sm:$0xff] %vm774, %v606
      %832 = vst.msk [vmem:[%s789 + $0x6a] sm:$0xff] %vm774, %v607
      %833 = vst.msk [vmem:[%s789 + $0x7a] sm:$0xff] %vm774, %v608
      %834 = vst.msk [vmem:[%s789 + $0x82] sm:$0xff] %vm774, %v609
      %835 = vst.msk [vmem:[%s789 + $0x92] sm:$0xff] %vm774, %v610
      %836 = vst.msk [vmem:[%s789 + $0x9a] sm:$0xff] %vm774, %v611
      %837 = vst.msk [vmem:[%s789 + $0xaa] sm:$0xff] %vm774, %v612
      %838 = vst.msk [vmem:[%s789 + $0xb2] sm:$0xff] %vm774, %v613
      %839 = vst.msk [vmem:[%s789 + $0xc2] sm:$0xff] %vm774, %v630
      %840 = vst.msk [vmem:[%s789 + $0xca] sm:$0xff] %vm774, %v631
      %841 = vst.msk [vmem:[%s789 + $0xda] sm:$0xff] %vm774, %v632
      %842 = vst.msk [vmem:[%s789 + $0xe2] sm:$0xff] %vm774, %v633
      %843 = vst.msk [vmem:[%s789 + $0xf2] sm:$0xff] %vm774, %v634
      %844 = vst.msk [vmem:[%s789 + $0xfa] sm:$0xff] %vm774, %v635
      %845 = vst.msk [vmem:[%s789 + $0x10a] sm:$0xff] %vm774, %v636
      %846 = vst.msk [vmem:[%s789 + $0x112] sm:$0xff] %vm774, %v637
      %847 = vst.msk [vmem:[%s789 + $0x122] sm:$0xff] %vm774, %v638
      %848 = vst.msk [vmem:[%s789 + $0x12a] sm:$0xff] %vm774, %v639
      %849 = vst.msk [vmem:[%s789 + $0x13a] sm:$0xff] %vm774, %v640
      %850 = vst.msk [vmem:[%s789 + $0x142] sm:$0xff] %vm774, %v641
      %851 = vst.msk [vmem:[%s789 + $0x152] sm:$0xff] %vm774, %v642
      %852 = vst.msk [vmem:[%s789 + $0x15a] sm:$0xff] %vm774, %v643
      %853 = vst.msk [vmem:[%s789 + $0x16a] sm:$0xff] %vm774, %v644
      %854 = vst.msk [vmem:[%s789 + $0x172] sm:$0xff] %vm774, %v645
      %v855 = vld [vmem:[#allocation2] sm:$0xff]
      %v856 = vld [vmem:[#allocation2 + $0x8] sm:$0xff]
      %v857 = vld [vmem:[#allocation2 + $0x18] sm:$0xff]
      %v858 = vld [vmem:[#allocation2 + $0x20] sm:$0xff]
      %v859 = vld [vmem:[#allocation2 + $0x30] sm:$0xff]
      %v860 = vld [vmem:[#allocation2 + $0x38] sm:$0xff]
      %v861 = vld [vmem:[#allocation2 + $0x48] sm:$0xff]
      %v862 = vld [vmem:[#allocation2 + $0x50] sm:$0xff]
      %v863 = vld [vmem:[#allocation2 + $0x60] sm:$0xff]
      %v864 = vld [vmem:[#allocation2 + $0x68] sm:$0xff]
      %v865 = vld [vmem:[#allocation2 + $0x78] sm:$0xff]
      %v866 = vld [vmem:[#allocation2 + $0x80] sm:$0xff]
      %v867 = vld [vmem:[#allocation2 + $0x90] sm:$0xff]
      %v868 = vld [vmem:[#allocation2 + $0x98] sm:$0xff]
      %v869 = vld [vmem:[#allocation2 + $0xa8] sm:$0xff]
      %v870 = vld [vmem:[#allocation2 + $0xb0] sm:$0xff]
      %v871 = vld [vmem:[#allocation2 + $0xc0] sm:$0xff]
      %v872 = vld [vmem:[#allocation2 + $0xc8] sm:$0xff]
      %v873 = vld [vmem:[#allocation2 + $0xd8] sm:$0xff]
      %v874 = vld [vmem:[#allocation2 + $0xe0] sm:$0xff]
      %v875 = vld [vmem:[#allocation2 + $0xf0] sm:$0xff]
      %v876 = vld [vmem:[#allocation2 + $0xf8] sm:$0xff]
      %v877 = vld [vmem:[#allocation2 + $0x108] sm:$0xff]
      %v878 = vld [vmem:[#allocation2 + $0x110] sm:$0xff]
      %v879 = vld [vmem:[#allocation2 + $0x120] sm:$0xff]
      %v880 = vld [vmem:[#allocation2 + $0x128] sm:$0xff]
      %v881 = vld [vmem:[#allocation2 + $0x138] sm:$0xff]
      %v882 = vld [vmem:[#allocation2 + $0x140] sm:$0xff]
      %v883 = vld [vmem:[#allocation2 + $0x150] sm:$0xff]
      %v884 = vld [vmem:[#allocation2 + $0x158] sm:$0xff]
      %v885 = vld [vmem:[#allocation2 + $0x168] sm:$0xff]
      %v886 = vld [vmem:[#allocation2 + $0x170] sm:$0xff]
      %v887 = vld [vmem:[#allocation2 + $0x180] sm:$0xff]
      %v888 = vld [vmem:[#allocation2 + $0x188] sm:$0xff]
      %v889 = vld [vmem:[#allocation2 + $0x198] sm:$0xff]
      %v890 = vld [vmem:[#allocation2 + $0x1a0] sm:$0xff]
      %v891 = vld [vmem:[#allocation2 + $0x1b0] sm:$0xff]
      %v892 = vld [vmem:[#allocation2 + $0x1b8] sm:$0xff]
      %v893 = vld [vmem:[#allocation2 + $0x1c8] sm:$0xff]
      %v894 = vld [vmem:[#allocation2 + $0x1d0] sm:$0xff]
      %v895 = vld [vmem:[%s3] sm:$0xff]
      %v896 = vld [vmem:[%s3 + $0x8] sm:$0xff]
      %v897 = vld [vmem:[#allocation2 + $0x1] sm:$0xff]
      %v898 = vld [vmem:[#allocation2 + $0x9] sm:$0xff]
      %v899 = vld [vmem:[#allocation2 + $0x19] sm:$0xff]
      %v900 = vld [vmem:[#allocation2 + $0x21] sm:$0xff]
      %v901 = vld [vmem:[#allocation2 + $0x31] sm:$0xff]
      %v902 = vld [vmem:[#allocation2 + $0x39] sm:$0xff]
      %v903 = vld [vmem:[#allocation2 + $0x49] sm:$0xff]
      %v904 = vld [vmem:[#allocation2 + $0x51] sm:$0xff]
      %v905 = vld [vmem:[#allocation2 + $0x61] sm:$0xff]
      %v906 = vld [vmem:[#allocation2 + $0x69] sm:$0xff]
      %v907 = vld [vmem:[#allocation2 + $0x79] sm:$0xff]
      %v908 = vld [vmem:[#allocation2 + $0x81] sm:$0xff]
      %v909 = vld [vmem:[#allocation2 + $0x91] sm:$0xff]
      %v910 = vld [vmem:[#allocation2 + $0x99] sm:$0xff]
      %v911 = vld [vmem:[#allocation2 + $0xa9] sm:$0xff]
      %v912 = vld [vmem:[#allocation2 + $0xb1] sm:$0xff]
      %v913 = vld [vmem:[#allocation2 + $0xc1] sm:$0xff]
      %v914 = vld [vmem:[#allocation2 + $0xc9] sm:$0xff]
      %v915 = vld [vmem:[#allocation2 + $0xd9] sm:$0xff]
      %v916 = vld [vmem:[#allocation2 + $0xe1] sm:$0xff]
      %v917 = vld [vmem:[#allocation2 + $0xf1] sm:$0xff]
      %v918 = vld [vmem:[#allocation2 + $0xf9] sm:$0xff]
      %v919 = vld [vmem:[#allocation2 + $0x109] sm:$0xff]
      %v920 = vld [vmem:[#allocation2 + $0x111] sm:$0xff]
      %v921 = vld [vmem:[#allocation2 + $0x121] sm:$0xff]
      %v922 = vld [vmem:[#allocation2 + $0x129] sm:$0xff]
      %v923 = vld [vmem:[#allocation2 + $0x139] sm:$0xff]
      %v924 = vld [vmem:[#allocation2 + $0x141] sm:$0xff]
      %v925 = vld [vmem:[#allocation2 + $0x151] sm:$0xff]
      %v926 = vld [vmem:[#allocation2 + $0x159] sm:$0xff]
      %v927 = vld [vmem:[#allocation2 + $0x169] sm:$0xff]
      %v928 = vld [vmem:[#allocation2 + $0x171] sm:$0xff]
      %v929 = vld [vmem:[#allocation2 + $0x181] sm:$0xff]
      %v930 = vld [vmem:[#allocation2 + $0x189] sm:$0xff]
      %v931 = vld [vmem:[#allocation2 + $0x199] sm:$0xff]
      %v932 = vld [vmem:[#allocation2 + $0x1a1] sm:$0xff]
      %v933 = vld [vmem:[#allocation2 + $0x1b1] sm:$0xff]
      %v934 = vld [vmem:[#allocation2 + $0x1b9] sm:$0xff]
      %v935 = vld [vmem:[#allocation2 + $0x1c9] sm:$0xff]
      %v936 = vld [vmem:[#allocation2 + $0x1d1] sm:$0xff]
      %s937 = scalar_lea.vmem %s3, 16
      %v938 = vld [vmem:[%s937] sm:$0xff]
      %v939 = vld [vmem:[%s937 + $0x8] sm:$0xff]
      %v941 = vsel %vm774, %v897, 0
      %v944 = vsel %vm774, %v898, 0
      %v947 = vsel %vm774, %v899, 0
      %v950 = vsel %vm774, %v900, 0
      %v953 = vsel %vm774, %v901, 0
      %v956 = vsel %vm774, %v902, 0
      %v959 = vsel %vm774, %v903, 0
      %v962 = vsel %vm774, %v904, 0
      %v965 = vsel %vm774, %v905, 0
      %v968 = vsel %vm774, %v906, 0
      %v971 = vsel %vm774, %v907, 0
      %v974 = vsel %vm774, %v908, 0
      %v977 = vsel %vm774, %v909, 0
      %v980 = vsel %vm774, %v910, 0
      %v983 = vsel %vm774, %v911, 0
      %v986 = vsel %vm774, %v912, 0
      %v989 = vsel %vm774, %v913, 0
      %v992 = vsel %vm774, %v914, 0
      %v995 = vsel %vm774, %v915, 0
      %v998 = vsel %vm774, %v916, 0
      %v1001 = vsel %vm774, %v917, 0
      %v1004 = vsel %vm774, %v918, 0
      %v1007 = vsel %vm774, %v919, 0
      %v1010 = vsel %vm774, %v920, 0
      %v1013 = vsel %vm774, %v921, 0
      %v1016 = vsel %vm774, %v922, 0
      %v1019 = vsel %vm774, %v923, 0
      %v1022 = vsel %vm774, %v924, 0
      %v1025 = vsel %vm774, %v925, 0
      %v1028 = vsel %vm774, %v926, 0
      %v1031 = vsel %vm774, %v927, 0
      %v1034 = vsel %vm774, %v928, 0
      %v1037 = vsel %vm774, %v929, 0
      %v1040 = vsel %vm774, %v930, 0
      %v1043 = vsel %vm774, %v931, 0
      %v1046 = vsel %vm774, %v932, 0
      %v1049 = vsel %vm774, %v933, 0
      %v1052 = vsel %vm774, %v934, 0
      %v1055 = vsel %vm774, %v935, 0
      %v1058 = vsel %vm774, %v936, 0
      %1060 = vmatprep.subr.mxu0 0.0
      %1061 = vmatpush1.msra.mxu0 0.0
      %1062 = vmatprep.subr.mxu0 0.0
      %1063 = vmatpush1.msra.mxu0 0.0
      %1064 = vmatprep.subr.mxu0 0.0
      %1065 = vmatpush1.msra.mxu0 0.0
      %1066 = vmatprep.subr.mxu0 0.0
      %1067 = vmatpush1.msra.mxu0 0.0
      %1068 = vmatprep.subr.mxu0 0.0
      %1069 = vmatpush1.msra.mxu0 0.0
      %1070 = vmatprep.subr.mxu0 0.0
      %1071 = vmatpush1.msra.mxu0 0.0
      %1072 = vmatprep.subr.mxu0 0.0
      %1073 = vmatpush1.msra.mxu0 0.0
      %1074 = vmatprep.subr.mxu0 0.0
      %1075 = vmatpush1.msra.mxu0 0.0
      %1076 = vmatprep.subr.mxu0 0.0
      %1077 = vmatpush1.msra.mxu0 0.0
      %1078 = vmatprep.subr.mxu0 0.0
      %1079 = vmatpush1.msra.mxu0 0.0
      %1080 = vmatprep.subr.mxu0 0.0
      %1081 = vmatpush1.msra.mxu0 0.0
      %1082 = vmatprep.subr.mxu0 0.0
      %1083 = vmatpush1.msra.mxu0 0.0
      %1084 = vmatprep.subr.mxu0 0.0
      %1085 = vmatpush1.msra.mxu0 0.0
      %1086 = vmatprep.subr.mxu0 0.0
      %1087 = vmatpush1.msra.mxu0 0.0
      %1088 = vmatprep.subr.mxu0 0.0
      %1089 = vmatpush1.msra.mxu0 %v939
      %1090 = vmatprep.subr.mxu0 0.0
      %1091 = vmatpush1.msra.mxu0 %v938
      %1092 = vmatprep.subr.mxu0 0.0
      %1093 = vmatpush2.msra.mxu0 0.0
      %1094 = vmatprep.subr.mxu0 0.0
      %1095 = vmatpush2.msra.mxu0 0.0
      %1096 = vmatprep.subr.mxu0 0.0
      %1097 = vmatpush2.msra.mxu0 0.0
      %1098 = vmatprep.subr.mxu0 0.0
      %1099 = vmatpush2.msra.mxu0 0.0
      %1100 = vmatprep.subr.mxu0 0.0
      %1101 = vmatpush2.msra.mxu0 0.0
      %1102 = vmatprep.subr.mxu0 0.0
      %1103 = vmatpush2.msra.mxu0 0.0
      %1104 = vmatprep.subr.mxu0 0.0
      %1105 = vmatpush2.msra.mxu0 0.0
      %1106 = vmatprep.subr.mxu0 0.0
      %1107 = vmatpush2.msra.mxu0 0.0
      %1108 = vmatprep.subr.mxu0 0.0
      %1109 = vmatpush2.msra.mxu0 0.0
      %1110 = vmatprep.subr.mxu0 0.0
      %1111 = vmatpush2.msra.mxu0 0.0
      %1112 = vmatprep.subr.mxu0 0.0
      %1113 = vmatpush2.msra.mxu0 0.0
      %1114 = vmatprep.subr.mxu0 0.0
      %1115 = vmatpush2.msra.mxu0 0.0
      %1116 = vmatprep.subr.mxu0 0.0
      %1117 = vmatpush2.msra.mxu0 0.0
      %1118 = vmatprep.subr.mxu0 0.0
      %1119 = vmatpush2.msra.mxu0 0.0
      %1120 = vmatprep.subr.mxu0 0.0
      %1121 = vmatpush2.msra.mxu0 0.0
      %1122 = vmatprep.subr.mxu0 0.0
      %1123 = vmatpush2.msra.mxu0 0.0
      %1124 = vmatprep.mubr.f32.mxu0 0.0
      %1125 = vmatmul.mubr.f32.gmra.mxu0 %v941
      %v1126 = vpop.f32.mrf.mxu0
      %v1127 = vadd.f32 0.0, %v1126
      %v1128 = vpop.f32.mrf.mxu0
      %1129 = vmatprep.mubr.f32.mxu0 0.0
      %1130 = vmatmul.mubr.f32.gmra.mxu0 %v944
      %v1131 = vpop.f32.mrf.mxu0
      %v1132 = vadd.f32 0.0, %v1131
      %v1133 = vpop.f32.mrf.mxu0
      %1134 = vmatprep.mubr.f32.mxu0 0.0
      %1135 = vmatmul.mubr.f32.gmra.mxu0 %v947
      %v1136 = vpop.f32.mrf.mxu0
      %v1137 = vadd.f32 0.0, %v1136
      %v1138 = vpop.f32.mrf.mxu0
      %1139 = vmatprep.mubr.f32.mxu0 0.0
      %1140 = vmatmul.mubr.f32.gmra.mxu0 %v950
      %v1141 = vpop.f32.mrf.mxu0
      %v1142 = vadd.f32 0.0, %v1141
      %v1143 = vpop.f32.mrf.mxu0
      %1144 = vmatprep.mubr.f32.mxu0 0.0
      %1145 = vmatmul.mubr.f32.gmra.mxu0 %v953
      %v1146 = vpop.f32.mrf.mxu0
      %v1147 = vadd.f32 0.0, %v1146
      %v1148 = vpop.f32.mrf.mxu0
      %1149 = vmatprep.mubr.f32.mxu0 0.0
      %1150 = vmatmul.mubr.f32.gmra.mxu0 %v956
      %v1151 = vpop.f32.mrf.mxu0
      %v1152 = vadd.f32 0.0, %v1151
      %v1153 = vpop.f32.mrf.mxu0
      %1154 = vmatprep.mubr.f32.mxu0 0.0
      %1155 = vmatmul.mubr.f32.gmra.mxu0 %v959
      %v1156 = vpop.f32.mrf.mxu0
      %v1157 = vadd.f32 0.0, %v1156
      %v1158 = vpop.f32.mrf.mxu0
      %1159 = vmatprep.mubr.f32.mxu0 0.0
      %1160 = vmatmul.mubr.f32.gmra.mxu0 %v962
      %v1161 = vpop.f32.mrf.mxu0
      %v1162 = vadd.f32 0.0, %v1161
      %v1163 = vpop.f32.mrf.mxu0
      %1164 = vmatprep.mubr.f32.mxu0 0.0
      %1165 = vmatmul.mubr.f32.gmra.mxu0 %v965
      %v1166 = vpop.f32.mrf.mxu0
      %v1167 = vadd.f32 0.0, %v1166
      %v1168 = vpop.f32.mrf.mxu0
      %1169 = vmatprep.mubr.f32.mxu0 0.0
      %1170 = vmatmul.mubr.f32.gmra.mxu0 %v968
      %v1171 = vpop.f32.mrf.mxu0
      %v1172 = vadd.f32 0.0, %v1171
      %v1173 = vpop.f32.mrf.mxu0
      %1174 = vmatprep.mubr.f32.mxu0 0.0
      %1175 = vmatmul.mubr.f32.gmra.mxu0 %v971
      %v1176 = vpop.f32.mrf.mxu0
      %v1177 = vadd.f32 0.0, %v1176
      %v1178 = vpop.f32.mrf.mxu0
      %1179 = vmatprep.mubr.f32.mxu0 0.0
      %1180 = vmatmul.mubr.f32.gmra.mxu0 %v974
      %v1181 = vpop.f32.mrf.mxu0
      %v1182 = vadd.f32 0.0, %v1181
      %v1183 = vpop.f32.mrf.mxu0
      %1184 = vmatprep.mubr.f32.mxu0 0.0
      %1185 = vmatmul.mubr.f32.gmra.mxu0 %v977
      %v1186 = vpop.f32.mrf.mxu0
      %v1187 = vadd.f32 0.0, %v1186
      %v1188 = vpop.f32.mrf.mxu0
      %1189 = vmatprep.mubr.f32.mxu0 0.0
      %1190 = vmatmul.mubr.f32.gmra.mxu0 %v980
      %v1191 = vpop.f32.mrf.mxu0
      %v1192 = vadd.f32 0.0, %v1191
      %v1193 = vpop.f32.mrf.mxu0
      %1194 = vmatprep.mubr.f32.mxu0 0.0
      %1195 = vmatmul.mubr.f32.gmra.mxu0 %v983
      %v1196 = vpop.f32.mrf.mxu0
      %v1197 = vadd.f32 0.0, %v1196
      %v1198 = vpop.f32.mrf.mxu0
      %1199 = vmatprep.mubr.f32.mxu0 0.0
      %1200 = vmatmul.mubr.f32.gmra.mxu0 %v986
      %v1201 = vpop.f32.mrf.mxu0
      %v1202 = vadd.f32 0.0, %v1201
      %v1203 = vpop.f32.mrf.mxu0
      %1204 = vmatprep.mubr.f32.mxu0 0.0
      %1205 = vmatmul.mubr.f32.gmra.mxu0 %v989
      %v1206 = vpop.f32.mrf.mxu0
      %v1207 = vadd.f32 0.0, %v1206
      %v1208 = vpop.f32.mrf.mxu0
      %1209 = vmatprep.mubr.f32.mxu0 0.0
      %1210 = vmatmul.mubr.f32.gmra.mxu0 %v992
      %v1211 = vpop.f32.mrf.mxu0
      %v1212 = vadd.f32 0.0, %v1211
      %v1213 = vpop.f32.mrf.mxu0
      %1214 = vmatprep.mubr.f32.mxu0 0.0
      %1215 = vmatmul.mubr.f32.gmra.mxu0 %v995
      %v1216 = vpop.f32.mrf.mxu0
      %v1217 = vadd.f32 0.0, %v1216
      %v1218 = vpop.f32.mrf.mxu0
      %1219 = vmatprep.mubr.f32.mxu0 0.0
      %1220 = vmatmul.mubr.f32.gmra.mxu0 %v998
      %v1221 = vpop.f32.mrf.mxu0
      %v1222 = vadd.f32 0.0, %v1221
      %v1223 = vpop.f32.mrf.mxu0
      %1224 = vmatprep.mubr.f32.mxu0 0.0
      %1225 = vmatmul.mubr.f32.gmra.mxu0 %v1001
      %v1226 = vpop.f32.mrf.mxu0
      %v1227 = vadd.f32 0.0, %v1226
      %v1228 = vpop.f32.mrf.mxu0
      %1229 = vmatprep.mubr.f32.mxu0 0.0
      %1230 = vmatmul.mubr.f32.gmra.mxu0 %v1004
      %v1231 = vpop.f32.mrf.mxu0
      %v1232 = vadd.f32 0.0, %v1231
      %v1233 = vpop.f32.mrf.mxu0
      %1234 = vmatprep.mubr.f32.mxu0 0.0
      %1235 = vmatmul.mubr.f32.gmra.mxu0 %v1007
      %v1236 = vpop.f32.mrf.mxu0
      %v1237 = vadd.f32 0.0, %v1236
      %v1238 = vpop.f32.mrf.mxu0
      %1239 = vmatprep.mubr.f32.mxu0 0.0
      %1240 = vmatmul.mubr.f32.gmra.mxu0 %v1010
      %v1241 = vpop.f32.mrf.mxu0
      %v1242 = vadd.f32 0.0, %v1241
      %v1243 = vpop.f32.mrf.mxu0
      %1244 = vmatprep.mubr.f32.mxu0 0.0
      %1245 = vmatmul.mubr.f32.gmra.mxu0 %v1013
      %v1246 = vpop.f32.mrf.mxu0
      %v1247 = vadd.f32 0.0, %v1246
      %v1248 = vpop.f32.mrf.mxu0
      %1249 = vmatprep.mubr.f32.mxu0 0.0
      %1250 = vmatmul.mubr.f32.gmra.mxu0 %v1016
      %v1251 = vpop.f32.mrf.mxu0
      %v1252 = vadd.f32 0.0, %v1251
      %v1253 = vpop.f32.mrf.mxu0
      %1254 = vmatprep.mubr.f32.mxu0 0.0
      %1255 = vmatmul.mubr.f32.gmra.mxu0 %v1019
      %v1256 = vpop.f32.mrf.mxu0
      %v1257 = vadd.f32 0.0, %v1256
      %v1258 = vpop.f32.mrf.mxu0
      %1259 = vmatprep.mubr.f32.mxu0 0.0
      %1260 = vmatmul.mubr.f32.gmra.mxu0 %v1022
      %v1261 = vpop.f32.mrf.mxu0
      %v1262 = vadd.f32 0.0, %v1261
      %v1263 = vpop.f32.mrf.mxu0
      %1264 = vmatprep.mubr.f32.mxu0 0.0
      %1265 = vmatmul.mubr.f32.gmra.mxu0 %v1025
      %v1266 = vpop.f32.mrf.mxu0
      %v1267 = vadd.f32 0.0, %v1266
      %v1268 = vpop.f32.mrf.mxu0
      %1269 = vmatprep.mubr.f32.mxu0 0.0
      %1270 = vmatmul.mubr.f32.gmra.mxu0 %v1028
      %v1271 = vpop.f32.mrf.mxu0
      %v1272 = vadd.f32 0.0, %v1271
      %v1273 = vpop.f32.mrf.mxu0
      %1274 = vmatprep.mubr.f32.mxu0 0.0
      %1275 = vmatmul.mubr.f32.gmra.mxu0 %v1031
      %v1276 = vpop.f32.mrf.mxu0
      %v1277 = vadd.f32 0.0, %v1276
      %v1278 = vpop.f32.mrf.mxu0
      %1279 = vmatprep.mubr.f32.mxu0 0.0
      %1280 = vmatmul.mubr.f32.gmra.mxu0 %v1034
      %v1281 = vpop.f32.mrf.mxu0
      %v1282 = vadd.f32 0.0, %v1281
      %v1283 = vpop.f32.mrf.mxu0
      %1284 = vmatprep.mubr.f32.mxu0 0.0
      %1285 = vmatmul.mubr.f32.gmra.mxu0 %v1037
      %v1286 = vpop.f32.mrf.mxu0
      %v1287 = vadd.f32 0.0, %v1286
      %v1288 = vpop.f32.mrf.mxu0
      %1289 = vmatprep.mubr.f32.mxu0 0.0
      %1290 = vmatmul.mubr.f32.gmra.mxu0 %v1040
      %v1291 = vpop.f32.mrf.mxu0
      %v1292 = vadd.f32 0.0, %v1291
      %v1293 = vpop.f32.mrf.mxu0
      %1294 = vmatprep.mubr.f32.mxu0 0.0
      %1295 = vmatmul.mubr.f32.gmra.mxu0 %v1043
      %v1296 = vpop.f32.mrf.mxu0
      %v1297 = vadd.f32 0.0, %v1296
      %v1298 = vpop.f32.mrf.mxu0
      %1299 = vmatprep.mubr.f32.mxu0 0.0
      %1300 = vmatmul.mubr.f32.gmra.mxu0 %v1046
      %v1301 = vpop.f32.mrf.mxu0
      %v1302 = vadd.f32 0.0, %v1301
      %v1303 = vpop.f32.mrf.mxu0
      %1304 = vmatprep.mubr.f32.mxu0 0.0
      %1305 = vmatmul.mubr.f32.gmra.mxu0 %v1049
      %v1306 = vpop.f32.mrf.mxu0
      %v1307 = vadd.f32 0.0, %v1306
      %v1308 = vpop.f32.mrf.mxu0
      %1309 = vmatprep.mubr.f32.mxu0 0.0
      %1310 = vmatmul.mubr.f32.gmra.mxu0 %v1052
      %v1311 = vpop.f32.mrf.mxu0
      %v1312 = vadd.f32 0.0, %v1311
      %v1313 = vpop.f32.mrf.mxu0
      %1314 = vmatprep.mubr.f32.mxu0 0.0
      %1315 = vmatmul.mubr.f32.gmra.mxu0 %v1055
      %v1316 = vpop.f32.mrf.mxu0
      %v1317 = vadd.f32 0.0, %v1316
      %v1318 = vpop.f32.mrf.mxu0
      %1319 = vmatprep.mubr.f32.mxu0 0.0
      %1320 = vmatmul.mubr.f32.gmra.mxu0 %v1058
      %v1321 = vpop.f32.mrf.mxu0
      %v1322 = vadd.f32 0.0, %v1321
      %v1323 = vpop.f32.mrf.mxu0
      %1324 = vdwg.mxu0
      %v1326 = vsel %vm774, %v855, 0
      %v1329 = vsel %vm774, %v856, 0
      %v1332 = vsel %vm774, %v857, 0
      %v1335 = vsel %vm774, %v858, 0
      %v1338 = vsel %vm774, %v859, 0
      %v1341 = vsel %vm774, %v860, 0
      %v1344 = vsel %vm774, %v861, 0
      %v1347 = vsel %vm774, %v862, 0
      %v1350 = vsel %vm774, %v863, 0
      %v1353 = vsel %vm774, %v864, 0
      %v1356 = vsel %vm774, %v865, 0
      %v1359 = vsel %vm774, %v866, 0
      %v1362 = vsel %vm774, %v867, 0
      %v1365 = vsel %vm774, %v868, 0
      %v1368 = vsel %vm774, %v869, 0
      %v1371 = vsel %vm774, %v870, 0
      %v1374 = vsel %vm774, %v871, 0
      %v1377 = vsel %vm774, %v872, 0
      %v1380 = vsel %vm774, %v873, 0
      %v1383 = vsel %vm774, %v874, 0
      %v1386 = vsel %vm774, %v875, 0
      %v1389 = vsel %vm774, %v876, 0
      %v1392 = vsel %vm774, %v877, 0
      %v1395 = vsel %vm774, %v878, 0
      %v1398 = vsel %vm774, %v879, 0
      %v1401 = vsel %vm774, %v880, 0
      %v1404 = vsel %vm774, %v881, 0
      %v1407 = vsel %vm774, %v882, 0
      %v1410 = vsel %vm774, %v883, 0
      %v1413 = vsel %vm774, %v884, 0
      %v1416 = vsel %vm774, %v885, 0
      %v1419 = vsel %vm774, %v886, 0
      %v1422 = vsel %vm774, %v887, 0
      %v1425 = vsel %vm774, %v888, 0
      %v1428 = vsel %vm774, %v889, 0
      %v1431 = vsel %vm774, %v890, 0
      %v1434 = vsel %vm774, %v891, 0
      %v1437 = vsel %vm774, %v892, 0
      %v1440 = vsel %vm774, %v893, 0
      %v1443 = vsel %vm774, %v894, 0
      %1445 = vmatprep.subr.mxu0 0.0
      %1446 = vmatpush1.msra.mxu0 0.0
      %1447 = vmatprep.subr.mxu0 0.0
      %1448 = vmatpush1.msra.mxu0 0.0
      %1449 = vmatprep.subr.mxu0 0.0
      %1450 = vmatpush1.msra.mxu0 0.0
      %1451 = vmatprep.subr.mxu0 0.0
      %1452 = vmatpush1.msra.mxu0 0.0
      %1453 = vmatprep.subr.mxu0 0.0
      %1454 = vmatpush1.msra.mxu0 0.0
      %1455 = vmatprep.subr.mxu0 0.0
      %1456 = vmatpush1.msra.mxu0 0.0
      %1457 = vmatprep.subr.mxu0 0.0
      %1458 = vmatpush1.msra.mxu0 0.0
      %1459 = vmatprep.subr.mxu0 0.0
      %1460 = vmatpush1.msra.mxu0 0.0
      %1461 = vmatprep.subr.mxu0 0.0
      %1462 = vmatpush1.msra.mxu0 0.0
      %1463 = vmatprep.subr.mxu0 0.0
      %1464 = vmatpush1.msra.mxu0 0.0
      %1465 = vmatprep.subr.mxu0 0.0
      %1466 = vmatpush1.msra.mxu0 0.0
      %1467 = vmatprep.subr.mxu0 0.0
      %1468 = vmatpush1.msra.mxu0 0.0
      %1469 = vmatprep.subr.mxu0 0.0
      %1470 = vmatpush1.msra.mxu0 0.0
      %1471 = vmatprep.subr.mxu0 0.0
      %1472 = vmatpush1.msra.mxu0 0.0
      %1473 = vmatprep.subr.mxu0 0.0
      %1474 = vmatpush1.msra.mxu0 %v896
      %1475 = vmatprep.subr.mxu0 0.0
      %1476 = vmatpush1.msra.mxu0 %v895
      %1477 = vmatprep.subr.mxu0 0.0
      %1478 = vmatpush2.msra.mxu0 0.0
      %1479 = vmatprep.subr.mxu0 0.0
      %1480 = vmatpush2.msra.mxu0 0.0
      %1481 = vmatprep.subr.mxu0 0.0
      %1482 = vmatpush2.msra.mxu0 0.0
      %1483 = vmatprep.subr.mxu0 0.0
      %1484 = vmatpush2.msra.mxu0 0.0
      %1485 = vmatprep.subr.mxu0 0.0
      %1486 = vmatpush2.msra.mxu0 0.0
      %1487 = vmatprep.subr.mxu0 0.0
      %1488 = vmatpush2.msra.mxu0 0.0
      %1489 = vmatprep.subr.mxu0 0.0
      %1490 = vmatpush2.msra.mxu0 0.0
      %1491 = vmatprep.subr.mxu0 0.0
      %1492 = vmatpush2.msra.mxu0 0.0
      %1493 = vmatprep.subr.mxu0 0.0
      %1494 = vmatpush2.msra.mxu0 0.0
      %1495 = vmatprep.subr.mxu0 0.0
      %1496 = vmatpush2.msra.mxu0 0.0
      %1497 = vmatprep.subr.mxu0 0.0
      %1498 = vmatpush2.msra.mxu0 0.0
      %1499 = vmatprep.subr.mxu0 0.0
      %1500 = vmatpush2.msra.mxu0 0.0
      %1501 = vmatprep.subr.mxu0 0.0
      %1502 = vmatpush2.msra.mxu0 0.0
      %1503 = vmatprep.subr.mxu0 0.0
      %1504 = vmatpush2.msra.mxu0 0.0
      %1505 = vmatprep.subr.mxu0 0.0
      %1506 = vmatpush2.msra.mxu0 0.0
      %1507 = vmatprep.subr.mxu0 0.0
      %1508 = vmatpush2.msra.mxu0 0.0
      %1509 = vmatprep.mubr.f32.mxu0 0.0
      %1510 = vmatmul.mubr.f32.gmra.mxu0 %v1326
      %v1511 = vpop.f32.mrf.mxu0
      %v1512 = vadd.f32 %v1127, %v1511
      %v1513 = vpop.f32.mrf.mxu0
      %1514 = vmatprep.mubr.f32.mxu0 0.0
      %1515 = vmatmul.mubr.f32.gmra.mxu0 %v1329
      %v1516 = vpop.f32.mrf.mxu0
      %v1517 = vadd.f32 %v1132, %v1516
      %v1518 = vpop.f32.mrf.mxu0
      %1519 = vmatprep.mubr.f32.mxu0 0.0
      %1520 = vmatmul.mubr.f32.gmra.mxu0 %v1332
      %v1521 = vpop.f32.mrf.mxu0
      %v1522 = vadd.f32 %v1137, %v1521
      %v1523 = vpop.f32.mrf.mxu0
      %1524 = vmatprep.mubr.f32.mxu0 0.0
      %1525 = vmatmul.mubr.f32.gmra.mxu0 %v1335
      %v1526 = vpop.f32.mrf.mxu0
      %v1527 = vadd.f32 %v1142, %v1526
      %v1528 = vpop.f32.mrf.mxu0
      %1529 = vmatprep.mubr.f32.mxu0 0.0
      %1530 = vmatmul.mubr.f32.gmra.mxu0 %v1338
      %v1531 = vpop.f32.mrf.mxu0
      %v1532 = vadd.f32 %v1147, %v1531
      %v1533 = vpop.f32.mrf.mxu0
      %1534 = vmatprep.mubr.f32.mxu0 0.0
      %1535 = vmatmul.mubr.f32.gmra.mxu0 %v1341
      %v1536 = vpop.f32.mrf.mxu0
      %v1537 = vadd.f32 %v1152, %v1536
      %v1538 = vpop.f32.mrf.mxu0
      %1539 = vmatprep.mubr.f32.mxu0 0.0
      %1540 = vmatmul.mubr.f32.gmra.mxu0 %v1344
      %v1541 = vpop.f32.mrf.mxu0
      %v1542 = vadd.f32 %v1157, %v1541
      %v1543 = vpop.f32.mrf.mxu0
      %1544 = vmatprep.mubr.f32.mxu0 0.0
      %1545 = vmatmul.mubr.f32.gmra.mxu0 %v1347
      %v1546 = vpop.f32.mrf.mxu0
      %v1547 = vadd.f32 %v1162, %v1546
      %v1548 = vpop.f32.mrf.mxu0
      %1549 = vmatprep.mubr.f32.mxu0 0.0
      %1550 = vmatmul.mubr.f32.gmra.mxu0 %v1350
      %v1551 = vpop.f32.mrf.mxu0
      %v1552 = vadd.f32 %v1167, %v1551
      %v1553 = vpop.f32.mrf.mxu0
      %1554 = vmatprep.mubr.f32.mxu0 0.0
      %1555 = vmatmul.mubr.f32.gmra.mxu0 %v1353
      %v1556 = vpop.f32.mrf.mxu0
      %v1557 = vadd.f32 %v1172, %v1556
      %v1558 = vpop.f32.mrf.mxu0
      %1559 = vmatprep.mubr.f32.mxu0 0.0
      %1560 = vmatmul.mubr.f32.gmra.mxu0 %v1356
      %v1561 = vpop.f32.mrf.mxu0
      %v1562 = vadd.f32 %v1177, %v1561
      %v1563 = vpop.f32.mrf.mxu0
      %1564 = vmatprep.mubr.f32.mxu0 0.0
      %1565 = vmatmul.mubr.f32.gmra.mxu0 %v1359
      %v1566 = vpop.f32.mrf.mxu0
      %v1567 = vadd.f32 %v1182, %v1566
      %v1568 = vpop.f32.mrf.mxu0
      %1569 = vmatprep.mubr.f32.mxu0 0.0
      %1570 = vmatmul.mubr.f32.gmra.mxu0 %v1362
      %v1571 = vpop.f32.mrf.mxu0
      %v1572 = vadd.f32 %v1187, %v1571
      %v1573 = vpop.f32.mrf.mxu0
      %1574 = vmatprep.mubr.f32.mxu0 0.0
      %1575 = vmatmul.mubr.f32.gmra.mxu0 %v1365
      %v1576 = vpop.f32.mrf.mxu0
      %v1577 = vadd.f32 %v1192, %v1576
      %v1578 = vpop.f32.mrf.mxu0
      %1579 = vmatprep.mubr.f32.mxu0 0.0
      %1580 = vmatmul.mubr.f32.gmra.mxu0 %v1368
      %v1581 = vpop.f32.mrf.mxu0
      %v1582 = vadd.f32 %v1197, %v1581
      %v1583 = vpop.f32.mrf.mxu0
      %1584 = vmatprep.mubr.f32.mxu0 0.0
      %1585 = vmatmul.mubr.f32.gmra.mxu0 %v1371
      %v1586 = vpop.f32.mrf.mxu0
      %v1587 = vadd.f32 %v1202, %v1586
      %v1588 = vpop.f32.mrf.mxu0
      %1589 = vmatprep.mubr.f32.mxu0 0.0
      %1590 = vmatmul.mubr.f32.gmra.mxu0 %v1374
      %v1591 = vpop.f32.mrf.mxu0
      %v1592 = vadd.f32 %v1207, %v1591
      %v1593 = vpop.f32.mrf.mxu0
      %1594 = vmatprep.mubr.f32.mxu0 0.0
      %1595 = vmatmul.mubr.f32.gmra.mxu0 %v1377
      %v1596 = vpop.f32.mrf.mxu0
      %v1597 = vadd.f32 %v1212, %v1596
      %v1598 = vpop.f32.mrf.mxu0
      %1599 = vmatprep.mubr.f32.mxu0 0.0
      %1600 = vmatmul.mubr.f32.gmra.mxu0 %v1380
      %v1601 = vpop.f32.mrf.mxu0
      %v1602 = vadd.f32 %v1217, %v1601
      %v1603 = vpop.f32.mrf.mxu0
      %1604 = vmatprep.mubr.f32.mxu0 0.0
      %1605 = vmatmul.mubr.f32.gmra.mxu0 %v1383
      %v1606 = vpop.f32.mrf.mxu0
      %v1607 = vadd.f32 %v1222, %v1606
      %v1608 = vpop.f32.mrf.mxu0
      %1609 = vmatprep.mubr.f32.mxu0 0.0
      %1610 = vmatmul.mubr.f32.gmra.mxu0 %v1386
      %v1611 = vpop.f32.mrf.mxu0
      %v1612 = vadd.f32 %v1227, %v1611
      %v1613 = vpop.f32.mrf.mxu0
      %1614 = vmatprep.mubr.f32.mxu0 0.0
      %1615 = vmatmul.mubr.f32.gmra.mxu0 %v1389
      %v1616 = vpop.f32.mrf.mxu0
      %v1617 = vadd.f32 %v1232, %v1616
      %v1618 = vpop.f32.mrf.mxu0
      %1619 = vmatprep.mubr.f32.mxu0 0.0
      %1620 = vmatmul.mubr.f32.gmra.mxu0 %v1392
      %v1621 = vpop.f32.mrf.mxu0
      %v1622 = vadd.f32 %v1237, %v1621
      %v1623 = vpop.f32.mrf.mxu0
      %1624 = vmatprep.mubr.f32.mxu0 0.0
      %1625 = vmatmul.mubr.f32.gmra.mxu0 %v1395
      %v1626 = vpop.f32.mrf.mxu0
      %v1627 = vadd.f32 %v1242, %v1626
      %v1628 = vpop.f32.mrf.mxu0
      %1629 = vmatprep.mubr.f32.mxu0 0.0
      %1630 = vmatmul.mubr.f32.gmra.mxu0 %v1398
      %v1631 = vpop.f32.mrf.mxu0
      %v1632 = vadd.f32 %v1247, %v1631
      %v1633 = vpop.f32.mrf.mxu0
      %1634 = vmatprep.mubr.f32.mxu0 0.0
      %1635 = vmatmul.mubr.f32.gmra.mxu0 %v1401
      %v1636 = vpop.f32.mrf.mxu0
      %v1637 = vadd.f32 %v1252, %v1636
      %v1638 = vpop.f32.mrf.mxu0
      %1639 = vmatprep.mubr.f32.mxu0 0.0
      %1640 = vmatmul.mubr.f32.gmra.mxu0 %v1404
      %v1641 = vpop.f32.mrf.mxu0
      %v1642 = vadd.f32 %v1257, %v1641
      %v1643 = vpop.f32.mrf.mxu0
      %1644 = vmatprep.mubr.f32.mxu0 0.0
      %1645 = vmatmul.mubr.f32.gmra.mxu0 %v1407
      %v1646 = vpop.f32.mrf.mxu0
      %v1647 = vadd.f32 %v1262, %v1646
      %v1648 = vpop.f32.mrf.mxu0
      %1649 = vmatprep.mubr.f32.mxu0 0.0
      %1650 = vmatmul.mubr.f32.gmra.mxu0 %v1410
      %v1651 = vpop.f32.mrf.mxu0
      %v1652 = vadd.f32 %v1267, %v1651
      %v1653 = vpop.f32.mrf.mxu0
      %1654 = vmatprep.mubr.f32.mxu0 0.0
      %1655 = vmatmul.mubr.f32.gmra.mxu0 %v1413
      %v1656 = vpop.f32.mrf.mxu0
      %v1657 = vadd.f32 %v1272, %v1656
      %v1658 = vpop.f32.mrf.mxu0
      %1659 = vmatprep.mubr.f32.mxu0 0.0
      %1660 = vmatmul.mubr.f32.gmra.mxu0 %v1416
      %v1661 = vpop.f32.mrf.mxu0
      %v1662 = vadd.f32 %v1277, %v1661
      %v1663 = vpop.f32.mrf.mxu0
      %1664 = vmatprep.mubr.f32.mxu0 0.0
      %1665 = vmatmul.mubr.f32.gmra.mxu0 %v1419
      %v1666 = vpop.f32.mrf.mxu0
      %v1667 = vadd.f32 %v1282, %v1666
      %v1668 = vpop.f32.mrf.mxu0
      %1669 = vmatprep.mubr.f32.mxu0 0.0
      %1670 = vmatmul.mubr.f32.gmra.mxu0 %v1422
      %v1671 = vpop.f32.mrf.mxu0
      %v1672 = vadd.f32 %v1287, %v1671
      %v1673 = vpop.f32.mrf.mxu0
      %1674 = vmatprep.mubr.f32.mxu0 0.0
      %1675 = vmatmul.mubr.f32.gmra.mxu0 %v1425
      %v1676 = vpop.f32.mrf.mxu0
      %v1677 = vadd.f32 %v1292, %v1676
      %v1678 = vpop.f32.mrf.mxu0
      %1679 = vmatprep.mubr.f32.mxu0 0.0
      %1680 = vmatmul.mubr.f32.gmra.mxu0 %v1428
      %v1681 = vpop.f32.mrf.mxu0
      %v1682 = vadd.f32 %v1297, %v1681
      %v1683 = vpop.f32.mrf.mxu0
      %1684 = vmatprep.mubr.f32.mxu0 0.0
      %1685 = vmatmul.mubr.f32.gmra.mxu0 %v1431
      %v1686 = vpop.f32.mrf.mxu0
      %v1687 = vadd.f32 %v1302, %v1686
      %v1688 = vpop.f32.mrf.mxu0
      %1689 = vmatprep.mubr.f32.mxu0 0.0
      %1690 = vmatmul.mubr.f32.gmra.mxu0 %v1434
      %v1691 = vpop.f32.mrf.mxu0
      %v1692 = vadd.f32 %v1307, %v1691
      %v1693 = vpop.f32.mrf.mxu0
      %1694 = vmatprep.mubr.f32.mxu0 0.0
      %1695 = vmatmul.mubr.f32.gmra.mxu0 %v1437
      %v1696 = vpop.f32.mrf.mxu0
      %v1697 = vadd.f32 %v1312, %v1696
      %v1698 = vpop.f32.mrf.mxu0
      %1699 = vmatprep.mubr.f32.mxu0 0.0
      %1700 = vmatmul.mubr.f32.gmra.mxu0 %v1440
      %v1701 = vpop.f32.mrf.mxu0
      %v1702 = vadd.f32 %v1317, %v1701
      %v1703 = vpop.f32.mrf.mxu0
      %1704 = vmatprep.mubr.f32.mxu0 0.0
      %1705 = vmatmul.mubr.f32.gmra.mxu0 %v1443
      %v1706 = vpop.f32.mrf.mxu0
      %v1707 = vadd.f32 %v1322, %v1706
      %v1708 = vpop.f32.mrf.mxu0
      %1709 = vdwg.mxu0
      %v1710 = vld [vmem:[#allocation2 + $0x2] sm:$0xff]
      %v1711 = vld [vmem:[#allocation2 + $0xa] sm:$0xff]
      %v1712 = vld [vmem:[#allocation2 + $0x1a] sm:$0xff]
      %v1713 = vld [vmem:[#allocation2 + $0x22] sm:$0xff]
      %v1714 = vld [vmem:[#allocation2 + $0x32] sm:$0xff]
      %v1715 = vld [vmem:[#allocation2 + $0x3a] sm:$0xff]
      %v1716 = vld [vmem:[#allocation2 + $0x4a] sm:$0xff]
      %v1717 = vld [vmem:[#allocation2 + $0x52] sm:$0xff]
      %v1718 = vld [vmem:[#allocation2 + $0x62] sm:$0xff]
      %v1719 = vld [vmem:[#allocation2 + $0x6a] sm:$0xff]
      %v1720 = vld [vmem:[#allocation2 + $0x7a] sm:$0xff]
      %v1721 = vld [vmem:[#allocation2 + $0x82] sm:$0xff]
      %v1722 = vld [vmem:[#allocation2 + $0x92] sm:$0xff]
      %v1723 = vld [vmem:[#allocation2 + $0x9a] sm:$0xff]
      %v1724 = vld [vmem:[#allocation2 + $0xaa] sm:$0xff]
      %v1725 = vld [vmem:[#allocation2 + $0xb2] sm:$0xff]
      %v1726 = vld [vmem:[#allocation2 + $0xc2] sm:$0xff]
      %v1727 = vld [vmem:[#allocation2 + $0xca] sm:$0xff]
      %v1728 = vld [vmem:[#allocation2 + $0xda] sm:$0xff]
      %v1729 = vld [vmem:[#allocation2 + $0xe2] sm:$0xff]
      %v1730 = vld [vmem:[#allocation2 + $0xf2] sm:$0xff]
      %v1731 = vld [vmem:[#allocation2 + $0xfa] sm:$0xff]
      %v1732 = vld [vmem:[#allocation2 + $0x10a] sm:$0xff]
      %v1733 = vld [vmem:[#allocation2 + $0x112] sm:$0xff]
      %v1734 = vld [vmem:[#allocation2 + $0x122] sm:$0xff]
      %v1735 = vld [vmem:[#allocation2 + $0x12a] sm:$0xff]
      %v1736 = vld [vmem:[#allocation2 + $0x13a] sm:$0xff]
      %v1737 = vld [vmem:[#allocation2 + $0x142] sm:$0xff]
      %v1738 = vld [vmem:[#allocation2 + $0x152] sm:$0xff]
      %v1739 = vld [vmem:[#allocation2 + $0x15a] sm:$0xff]
      %v1740 = vld [vmem:[#allocation2 + $0x16a] sm:$0xff]
      %v1741 = vld [vmem:[#allocation2 + $0x172] sm:$0xff]
      %v1742 = vld [vmem:[#allocation2 + $0x182] sm:$0xff]
      %v1743 = vld [vmem:[#allocation2 + $0x18a] sm:$0xff]
      %v1744 = vld [vmem:[#allocation2 + $0x19a] sm:$0xff]
      %v1745 = vld [vmem:[#allocation2 + $0x1a2] sm:$0xff]
      %v1746 = vld [vmem:[#allocation2 + $0x1b2] sm:$0xff]
      %v1747 = vld [vmem:[#allocation2 + $0x1ba] sm:$0xff]
      %v1748 = vld [vmem:[#allocation2 + $0x1ca] sm:$0xff]
      %v1749 = vld [vmem:[#allocation2 + $0x1d2] sm:$0xff]
      %s1750 = scalar_lea.vmem %s3, 32
      %v1751 = vld [vmem:[%s1750] sm:$0xff]
      %v1752 = vld [vmem:[%s1750 + $0x8] sm:$0xff]
      %v1754 = vsel %vm774, %v1710, 0
      %v1757 = vsel %vm774, %v1711, 0
      %v1760 = vsel %vm774, %v1712, 0
      %v1763 = vsel %vm774, %v1713, 0
      %v1766 = vsel %vm774, %v1714, 0
      %v1769 = vsel %vm774, %v1715, 0
      %v1772 = vsel %vm774, %v1716, 0
      %v1775 = vsel %vm774, %v1717, 0
      %v1778 = vsel %vm774, %v1718, 0
      %v1781 = vsel %vm774, %v1719, 0
      %v1784 = vsel %vm774, %v1720, 0
      %v1787 = vsel %vm774, %v1721, 0
      %v1790 = vsel %vm774, %v1722, 0
      %v1793 = vsel %vm774, %v1723, 0
      %v1796 = vsel %vm774, %v1724, 0
      %v1799 = vsel %vm774, %v1725, 0
      %v1802 = vsel %vm774, %v1726, 0
      %v1805 = vsel %vm774, %v1727, 0
      %v1808 = vsel %vm774, %v1728, 0
      %v1811 = vsel %vm774, %v1729, 0
      %v1814 = vsel %vm774, %v1730, 0
      %v1817 = vsel %vm774, %v1731, 0
      %v1820 = vsel %vm774, %v1732, 0
      %v1823 = vsel %vm774, %v1733, 0
      %v1826 = vsel %vm774, %v1734, 0
      %v1829 = vsel %vm774, %v1735, 0
      %v1832 = vsel %vm774, %v1736, 0
      %v1835 = vsel %vm774, %v1737, 0
      %v1838 = vsel %vm774, %v1738, 0
      %v1841 = vsel %vm774, %v1739, 0
      %v1844 = vsel %vm774, %v1740, 0
      %v1847 = vsel %vm774, %v1741, 0
      %v1850 = vsel %vm774, %v1742, 0
      %v1853 = vsel %vm774, %v1743, 0
      %v1856 = vsel %vm774, %v1744, 0
      %v1859 = vsel %vm774, %v1745, 0
      %v1862 = vsel %vm774, %v1746, 0
      %v1865 = vsel %vm774, %v1747, 0
      %v1868 = vsel %vm774, %v1748, 0
      %v1871 = vsel %vm774, %v1749, 0
      %1873 = vmatprep.subr.mxu0 0.0
      %1874 = vmatpush1.msra.mxu0 0.0
      %1875 = vmatprep.subr.mxu0 0.0
      %1876 = vmatpush1.msra.mxu0 0.0
      %1877 = vmatprep.subr.mxu0 0.0
      %1878 = vmatpush1.msra.mxu0 0.0
      %1879 = vmatprep.subr.mxu0 0.0
      %1880 = vmatpush1.msra.mxu0 0.0
      %1881 = vmatprep.subr.mxu0 0.0
      %1882 = vmatpush1.msra.mxu0 0.0
      %1883 = vmatprep.subr.mxu0 0.0
      %1884 = vmatpush1.msra.mxu0 0.0
      %1885 = vmatprep.subr.mxu0 0.0
      %1886 = vmatpush1.msra.mxu0 0.0
      %1887 = vmatprep.subr.mxu0 0.0
      %1888 = vmatpush1.msra.mxu0 0.0
      %1889 = vmatprep.subr.mxu0 0.0
      %1890 = vmatpush1.msra.mxu0 0.0
      %1891 = vmatprep.subr.mxu0 0.0
      %1892 = vmatpush1.msra.mxu0 0.0
      %1893 = vmatprep.subr.mxu0 0.0
      %1894 = vmatpush1.msra.mxu0 0.0
      %1895 = vmatprep.subr.mxu0 0.0
      %1896 = vmatpush1.msra.mxu0 0.0
      %1897 = vmatprep.subr.mxu0 0.0
      %1898 = vmatpush1.msra.mxu0 0.0
      %1899 = vmatprep.subr.mxu0 0.0
      %1900 = vmatpush1.msra.mxu0 0.0
      %1901 = vmatprep.subr.mxu0 0.0
      %1902 = vmatpush1.msra.mxu0 %v1752
      %1903 = vmatprep.subr.mxu0 0.0
      %1904 = vmatpush1.msra.mxu0 %v1751
      %1905 = vmatprep.subr.mxu0 0.0
      %1906 = vmatpush2.msra.mxu0 0.0
      %1907 = vmatprep.subr.mxu0 0.0
      %1908 = vmatpush2.msra.mxu0 0.0
      %1909 = vmatprep.subr.mxu0 0.0
      %1910 = vmatpush2.msra.mxu0 0.0
      %1911 = vmatprep.subr.mxu0 0.0
      %1912 = vmatpush2.msra.mxu0 0.0
      %1913 = vmatprep.subr.mxu0 0.0
      %1914 = vmatpush2.msra.mxu0 0.0
      %1915 = vmatprep.subr.mxu0 0.0
      %1916 = vmatpush2.msra.mxu0 0.0
      %1917 = vmatprep.subr.mxu0 0.0
      %1918 = vmatpush2.msra.mxu0 0.0
      %1919 = vmatprep.subr.mxu0 0.0
      %1920 = vmatpush2.msra.mxu0 0.0
      %1921 = vmatprep.subr.mxu0 0.0
      %1922 = vmatpush2.msra.mxu0 0.0
      %1923 = vmatprep.subr.mxu0 0.0
      %1924 = vmatpush2.msra.mxu0 0.0
      %1925 = vmatprep.subr.mxu0 0.0
      %1926 = vmatpush2.msra.mxu0 0.0
      %1927 = vmatprep.subr.mxu0 0.0
      %1928 = vmatpush2.msra.mxu0 0.0
      %1929 = vmatprep.subr.mxu0 0.0
      %1930 = vmatpush2.msra.mxu0 0.0
      %1931 = vmatprep.subr.mxu0 0.0
      %1932 = vmatpush2.msra.mxu0 0.0
      %1933 = vmatprep.subr.mxu0 0.0
      %1934 = vmatpush2.msra.mxu0 0.0
      %1935 = vmatprep.subr.mxu0 0.0
      %1936 = vmatpush2.msra.mxu0 0.0
      %1937 = vmatprep.mubr.f32.mxu0 0.0
      %1938 = vmatmul.mubr.f32.gmra.mxu0 %v1754
      %v1939 = vpop.f32.mrf.mxu0
      %v1940 = vadd.f32 0.0, %v1939
      %v1941 = vpop.f32.mrf.mxu0
      %1942 = vmatprep.mubr.f32.mxu0 0.0
      %1943 = vmatmul.mubr.f32.gmra.mxu0 %v1757
      %v1944 = vpop.f32.mrf.mxu0
      %v1945 = vadd.f32 0.0, %v1944
      %v1946 = vpop.f32.mrf.mxu0
      %1947 = vmatprep.mubr.f32.mxu0 0.0
      %1948 = vmatmul.mubr.f32.gmra.mxu0 %v1760
      %v1949 = vpop.f32.mrf.mxu0
      %v1950 = vadd.f32 0.0, %v1949
      %v1951 = vpop.f32.mrf.mxu0
      %1952 = vmatprep.mubr.f32.mxu0 0.0
      %1953 = vmatmul.mubr.f32.gmra.mxu0 %v1763
      %v1954 = vpop.f32.mrf.mxu0
      %v1955 = vadd.f32 0.0, %v1954
      %v1956 = vpop.f32.mrf.mxu0
      %1957 = vmatprep.mubr.f32.mxu0 0.0
      %1958 = vmatmul.mubr.f32.gmra.mxu0 %v1766
      %v1959 = vpop.f32.mrf.mxu0
      %v1960 = vadd.f32 0.0, %v1959
      %v1961 = vpop.f32.mrf.mxu0
      %1962 = vmatprep.mubr.f32.mxu0 0.0
      %1963 = vmatmul.mubr.f32.gmra.mxu0 %v1769
      %v1964 = vpop.f32.mrf.mxu0
      %v1965 = vadd.f32 0.0, %v1964
      %v1966 = vpop.f32.mrf.mxu0
      %1967 = vmatprep.mubr.f32.mxu0 0.0
      %1968 = vmatmul.mubr.f32.gmra.mxu0 %v1772
      %v1969 = vpop.f32.mrf.mxu0
      %v1970 = vadd.f32 0.0, %v1969
      %v1971 = vpop.f32.mrf.mxu0
      %1972 = vmatprep.mubr.f32.mxu0 0.0
      %1973 = vmatmul.mubr.f32.gmra.mxu0 %v1775
      %v1974 = vpop.f32.mrf.mxu0
      %v1975 = vadd.f32 0.0, %v1974
      %v1976 = vpop.f32.mrf.mxu0
      %1977 = vmatprep.mubr.f32.mxu0 0.0
      %1978 = vmatmul.mubr.f32.gmra.mxu0 %v1778
      %v1979 = vpop.f32.mrf.mxu0
      %v1980 = vadd.f32 0.0, %v1979
      %v1981 = vpop.f32.mrf.mxu0
      %1982 = vmatprep.mubr.f32.mxu0 0.0
      %1983 = vmatmul.mubr.f32.gmra.mxu0 %v1781
      %v1984 = vpop.f32.mrf.mxu0
      %v1985 = vadd.f32 0.0, %v1984
      %v1986 = vpop.f32.mrf.mxu0
      %1987 = vmatprep.mubr.f32.mxu0 0.0
      %1988 = vmatmul.mubr.f32.gmra.mxu0 %v1784
      %v1989 = vpop.f32.mrf.mxu0
      %v1990 = vadd.f32 0.0, %v1989
      %v1991 = vpop.f32.mrf.mxu0
      %1992 = vmatprep.mubr.f32.mxu0 0.0
      %1993 = vmatmul.mubr.f32.gmra.mxu0 %v1787
      %v1994 = vpop.f32.mrf.mxu0
      %v1995 = vadd.f32 0.0, %v1994
      %v1996 = vpop.f32.mrf.mxu0
      %1997 = vmatprep.mubr.f32.mxu0 0.0
      %1998 = vmatmul.mubr.f32.gmra.mxu0 %v1790
      %v1999 = vpop.f32.mrf.mxu0
      %v2000 = vadd.f32 0.0, %v1999
      %v2001 = vpop.f32.mrf.mxu0
      %2002 = vmatprep.mubr.f32.mxu0 0.0
      %2003 = vmatmul.mubr.f32.gmra.mxu0 %v1793
      %v2004 = vpop.f32.mrf.mxu0
      %v2005 = vadd.f32 0.0, %v2004
      %v2006 = vpop.f32.mrf.mxu0
      %2007 = vmatprep.mubr.f32.mxu0 0.0
      %2008 = vmatmul.mubr.f32.gmra.mxu0 %v1796
      %v2009 = vpop.f32.mrf.mxu0
      %v2010 = vadd.f32 0.0, %v2009
      %v2011 = vpop.f32.mrf.mxu0
      %2012 = vmatprep.mubr.f32.mxu0 0.0
      %2013 = vmatmul.mubr.f32.gmra.mxu0 %v1799
      %v2014 = vpop.f32.mrf.mxu0
      %v2015 = vadd.f32 0.0, %v2014
      %v2016 = vpop.f32.mrf.mxu0
      %2017 = vmatprep.mubr.f32.mxu0 0.0
      %2018 = vmatmul.mubr.f32.gmra.mxu0 %v1802
      %v2019 = vpop.f32.mrf.mxu0
      %v2020 = vadd.f32 0.0, %v2019
      %v2021 = vpop.f32.mrf.mxu0
      %2022 = vmatprep.mubr.f32.mxu0 0.0
      %2023 = vmatmul.mubr.f32.gmra.mxu0 %v1805
      %v2024 = vpop.f32.mrf.mxu0
      %v2025 = vadd.f32 0.0, %v2024
      %v2026 = vpop.f32.mrf.mxu0
      %2027 = vmatprep.mubr.f32.mxu0 0.0
      %2028 = vmatmul.mubr.f32.gmra.mxu0 %v1808
      %v2029 = vpop.f32.mrf.mxu0
      %v2030 = vadd.f32 0.0, %v2029
      %v2031 = vpop.f32.mrf.mxu0
      %2032 = vmatprep.mubr.f32.mxu0 0.0
      %2033 = vmatmul.mubr.f32.gmra.mxu0 %v1811
      %v2034 = vpop.f32.mrf.mxu0
      %v2035 = vadd.f32 0.0, %v2034
      %v2036 = vpop.f32.mrf.mxu0
      %2037 = vmatprep.mubr.f32.mxu0 0.0
      %2038 = vmatmul.mubr.f32.gmra.mxu0 %v1814
      %v2039 = vpop.f32.mrf.mxu0
      %v2040 = vadd.f32 0.0, %v2039
      %v2041 = vpop.f32.mrf.mxu0
      %2042 = vmatprep.mubr.f32.mxu0 0.0
      %2043 = vmatmul.mubr.f32.gmra.mxu0 %v1817
      %v2044 = vpop.f32.mrf.mxu0
      %v2045 = vadd.f32 0.0, %v2044
      %v2046 = vpop.f32.mrf.mxu0
      %2047 = vmatprep.mubr.f32.mxu0 0.0
      %2048 = vmatmul.mubr.f32.gmra.mxu0 %v1820
      %v2049 = vpop.f32.mrf.mxu0
      %v2050 = vadd.f32 0.0, %v2049
      %v2051 = vpop.f32.mrf.mxu0
      %2052 = vmatprep.mubr.f32.mxu0 0.0
      %2053 = vmatmul.mubr.f32.gmra.mxu0 %v1823
      %v2054 = vpop.f32.mrf.mxu0
      %v2055 = vadd.f32 0.0, %v2054
      %v2056 = vpop.f32.mrf.mxu0
      %2057 = vmatprep.mubr.f32.mxu0 0.0
      %2058 = vmatmul.mubr.f32.gmra.mxu0 %v1826
      %v2059 = vpop.f32.mrf.mxu0
      %v2060 = vadd.f32 0.0, %v2059
      %v2061 = vpop.f32.mrf.mxu0
      %2062 = vmatprep.mubr.f32.mxu0 0.0
      %2063 = vmatmul.mubr.f32.gmra.mxu0 %v1829
      %v2064 = vpop.f32.mrf.mxu0
      %v2065 = vadd.f32 0.0, %v2064
      %v2066 = vpop.f32.mrf.mxu0
      %2067 = vmatprep.mubr.f32.mxu0 0.0
      %2068 = vmatmul.mubr.f32.gmra.mxu0 %v1832
      %v2069 = vpop.f32.mrf.mxu0
      %v2070 = vadd.f32 0.0, %v2069
      %v2071 = vpop.f32.mrf.mxu0
      %2072 = vmatprep.mubr.f32.mxu0 0.0
      %2073 = vmatmul.mubr.f32.gmra.mxu0 %v1835
      %v2074 = vpop.f32.mrf.mxu0
      %v2075 = vadd.f32 0.0, %v2074
      %v2076 = vpop.f32.mrf.mxu0
      %2077 = vmatprep.mubr.f32.mxu0 0.0
      %2078 = vmatmul.mubr.f32.gmra.mxu0 %v1838
      %v2079 = vpop.f32.mrf.mxu0
      %v2080 = vadd.f32 0.0, %v2079
      %v2081 = vpop.f32.mrf.mxu0
      %2082 = vmatprep.mubr.f32.mxu0 0.0
      %2083 = vmatmul.mubr.f32.gmra.mxu0 %v1841
      %v2084 = vpop.f32.mrf.mxu0
      %v2085 = vadd.f32 0.0, %v2084
      %v2086 = vpop.f32.mrf.mxu0
      %2087 = vmatprep.mubr.f32.mxu0 0.0
      %2088 = vmatmul.mubr.f32.gmra.mxu0 %v1844
      %v2089 = vpop.f32.mrf.mxu0
      %v2090 = vadd.f32 0.0, %v2089
      %v2091 = vpop.f32.mrf.mxu0
      %2092 = vmatprep.mubr.f32.mxu0 0.0
      %2093 = vmatmul.mubr.f32.gmra.mxu0 %v1847
      %v2094 = vpop.f32.mrf.mxu0
      %v2095 = vadd.f32 0.0, %v2094
      %v2096 = vpop.f32.mrf.mxu0
      %2097 = vmatprep.mubr.f32.mxu0 0.0
      %2098 = vmatmul.mubr.f32.gmra.mxu0 %v1850
      %v2099 = vpop.f32.mrf.mxu0
      %v2100 = vadd.f32 0.0, %v2099
      %v2101 = vpop.f32.mrf.mxu0
      %2102 = vmatprep.mubr.f32.mxu0 0.0
      %2103 = vmatmul.mubr.f32.gmra.mxu0 %v1853
      %v2104 = vpop.f32.mrf.mxu0
      %v2105 = vadd.f32 0.0, %v2104
      %v2106 = vpop.f32.mrf.mxu0
      %2107 = vmatprep.mubr.f32.mxu0 0.0
      %2108 = vmatmul.mubr.f32.gmra.mxu0 %v1856
      %v2109 = vpop.f32.mrf.mxu0
      %v2110 = vadd.f32 0.0, %v2109
      %v2111 = vpop.f32.mrf.mxu0
      %2112 = vmatprep.mubr.f32.mxu0 0.0
      %2113 = vmatmul.mubr.f32.gmra.mxu0 %v1859
      %v2114 = vpop.f32.mrf.mxu0
      %v2115 = vadd.f32 0.0, %v2114
      %v2116 = vpop.f32.mrf.mxu0
      %2117 = vmatprep.mubr.f32.mxu0 0.0
      %2118 = vmatmul.mubr.f32.gmra.mxu0 %v1862
      %v2119 = vpop.f32.mrf.mxu0
      %v2120 = vadd.f32 0.0, %v2119
      %v2121 = vpop.f32.mrf.mxu0
      %2122 = vmatprep.mubr.f32.mxu0 0.0
      %2123 = vmatmul.mubr.f32.gmra.mxu0 %v1865
      %v2124 = vpop.f32.mrf.mxu0
      %v2125 = vadd.f32 0.0, %v2124
      %v2126 = vpop.f32.mrf.mxu0
      %2127 = vmatprep.mubr.f32.mxu0 0.0
      %2128 = vmatmul.mubr.f32.gmra.mxu0 %v1868
      %v2129 = vpop.f32.mrf.mxu0
      %v2130 = vadd.f32 0.0, %v2129
      %v2131 = vpop.f32.mrf.mxu0
      %2132 = vmatprep.mubr.f32.mxu0 0.0
      %2133 = vmatmul.mubr.f32.gmra.mxu0 %v1871
      %v2134 = vpop.f32.mrf.mxu0
      %v2135 = vadd.f32 0.0, %v2134
      %v2136 = vpop.f32.mrf.mxu0
      %2137 = vdwg.mxu0
      %v2138 = vadd.f32 %v1512, %v1940
      %v2139 = vadd.f32 %v1517, %v1945
      %v2140 = vadd.f32 %v1522, %v1950
      %v2141 = vadd.f32 %v1527, %v1955
      %v2142 = vadd.f32 %v1532, %v1960
      %v2143 = vadd.f32 %v1537, %v1965
      %v2144 = vadd.f32 %v1542, %v1970
      %v2145 = vadd.f32 %v1547, %v1975
      %v2146 = vadd.f32 %v1552, %v1980
      %v2147 = vadd.f32 %v1557, %v1985
      %v2148 = vadd.f32 %v1562, %v1990
      %v2149 = vadd.f32 %v1567, %v1995
      %v2150 = vadd.f32 %v1572, %v2000
      %v2151 = vadd.f32 %v1577, %v2005
      %v2152 = vadd.f32 %v1582, %v2010
      %v2153 = vadd.f32 %v1587, %v2015
      %v2154 = vadd.f32 %v1592, %v2020
      %v2155 = vadd.f32 %v1597, %v2025
      %v2156 = vadd.f32 %v1602, %v2030
      %v2157 = vadd.f32 %v1607, %v2035
      %v2158 = vadd.f32 %v1612, %v2040
      %v2159 = vadd.f32 %v1617, %v2045
      %v2160 = vadd.f32 %v1622, %v2050
      %v2161 = vadd.f32 %v1627, %v2055
      %v2162 = vadd.f32 %v1632, %v2060
      %v2163 = vadd.f32 %v1637, %v2065
      %v2164 = vadd.f32 %v1642, %v2070
      %v2165 = vadd.f32 %v1647, %v2075
      %v2166 = vadd.f32 %v1652, %v2080
      %v2167 = vadd.f32 %v1657, %v2085
      %v2168 = vadd.f32 %v1662, %v2090
      %v2169 = vadd.f32 %v1667, %v2095
      %v2170 = vadd.f32 %v1672, %v2100
      %v2171 = vadd.f32 %v1677, %v2105
      %v2172 = vadd.f32 %v1682, %v2110
      %v2173 = vadd.f32 %v1687, %v2115
      %v2174 = vadd.f32 %v1692, %v2120
      %v2175 = vadd.f32 %v1697, %v2125
      %v2176 = vadd.f32 %v1702, %v2130
      %v2177 = vadd.f32 %v1707, %v2135
      %v2178 = vld [vmem:[#allocation2 + $0x3] sm:$0xff]
      %v2179 = vld [vmem:[#allocation2 + $0xb] sm:$0xff]
      %v2180 = vld [vmem:[#allocation2 + $0x1b] sm:$0xff]
      %v2181 = vld [vmem:[#allocation2 + $0x23] sm:$0xff]
      %v2182 = vld [vmem:[#allocation2 + $0x33] sm:$0xff]
      %v2183 = vld [vmem:[#allocation2 + $0x3b] sm:$0xff]
      %v2184 = vld [vmem:[#allocation2 + $0x4b] sm:$0xff]
      %v2185 = vld [vmem:[#allocation2 + $0x53] sm:$0xff]
      %v2186 = vld [vmem:[#allocation2 + $0x63] sm:$0xff]
      %v2187 = vld [vmem:[#allocation2 + $0x6b] sm:$0xff]
      %v2188 = vld [vmem:[#allocation2 + $0x7b] sm:$0xff]
      %v2189 = vld [vmem:[#allocation2 + $0x83] sm:$0xff]
      %v2190 = vld [vmem:[#allocation2 + $0x93] sm:$0xff]
      %v2191 = vld [vmem:[#allocation2 + $0x9b] sm:$0xff]
      %v2192 = vld [vmem:[#allocation2 + $0xab] sm:$0xff]
      %v2193 = vld [vmem:[#allocation2 + $0xb3] sm:$0xff]
      %v2194 = vld [vmem:[#allocation2 + $0xc3] sm:$0xff]
      %v2195 = vld [vmem:[#allocation2 + $0xcb] sm:$0xff]
      %v2196 = vld [vmem:[#allocation2 + $0xdb] sm:$0xff]
      %v2197 = vld [vmem:[#allocation2 + $0xe3] sm:$0xff]
      %v2198 = vld [vmem:[#allocation2 + $0xf3] sm:$0xff]
      %v2199 = vld [vmem:[#allocation2 + $0xfb] sm:$0xff]
      %v2200 = vld [vmem:[#allocation2 + $0x10b] sm:$0xff]
      %v2201 = vld [vmem:[#allocation2 + $0x113] sm:$0xff]
      %v2202 = vld [vmem:[#allocation2 + $0x123] sm:$0xff]
      %v2203 = vld [vmem:[#allocation2 + $0x12b] sm:$0xff]
      %v2204 = vld [vmem:[#allocation2 + $0x13b] sm:$0xff]
      %v2205 = vld [vmem:[#allocation2 + $0x143] sm:$0xff]
      %v2206 = vld [vmem:[#allocation2 + $0x153] sm:$0xff]
      %v2207 = vld [vmem:[#allocation2 + $0x15b] sm:$0xff]
      %v2208 = vld [vmem:[#allocation2 + $0x16b] sm:$0xff]
      %v2209 = vld [vmem:[#allocation2 + $0x173] sm:$0xff]
      %v2210 = vld [vmem:[#allocation2 + $0x183] sm:$0xff]
      %v2211 = vld [vmem:[#allocation2 + $0x18b] sm:$0xff]
      %v2212 = vld [vmem:[#allocation2 + $0x19b] sm:$0xff]
      %v2213 = vld [vmem:[#allocation2 + $0x1a3] sm:$0xff]
      %v2214 = vld [vmem:[#allocation2 + $0x1b3] sm:$0xff]
      %v2215 = vld [vmem:[#allocation2 + $0x1bb] sm:$0xff]
      %v2216 = vld [vmem:[#allocation2 + $0x1cb] sm:$0xff]
      %v2217 = vld [vmem:[#allocation2 + $0x1d3] sm:$0xff]
      %s2218 = scalar_lea.vmem %s3, 48
      %v2219 = vld [vmem:[%s2218] sm:$0xff]
      %v2220 = vld [vmem:[%s2218 + $0x8] sm:$0xff]
      %v2222 = vsel %vm774, %v2178, 0
      %v2225 = vsel %vm774, %v2179, 0
      %v2228 = vsel %vm774, %v2180, 0
      %v2231 = vsel %vm774, %v2181, 0
      %v2234 = vsel %vm774, %v2182, 0
      %v2237 = vsel %vm774, %v2183, 0
      %v2240 = vsel %vm774, %v2184, 0
      %v2243 = vsel %vm774, %v2185, 0
      %v2246 = vsel %vm774, %v2186, 0
      %v2249 = vsel %vm774, %v2187, 0
      %v2252 = vsel %vm774, %v2188, 0
      %v2255 = vsel %vm774, %v2189, 0
      %v2258 = vsel %vm774, %v2190, 0
      %v2261 = vsel %vm774, %v2191, 0
      %v2264 = vsel %vm774, %v2192, 0
      %v2267 = vsel %vm774, %v2193, 0
      %v2270 = vsel %vm774, %v2194, 0
      %v2273 = vsel %vm774, %v2195, 0
      %v2276 = vsel %vm774, %v2196, 0
      %v2279 = vsel %vm774, %v2197, 0
      %v2282 = vsel %vm774, %v2198, 0
      %v2285 = vsel %vm774, %v2199, 0
      %v2288 = vsel %vm774, %v2200, 0
      %v2291 = vsel %vm774, %v2201, 0
      %v2294 = vsel %vm774, %v2202, 0
      %v2297 = vsel %vm774, %v2203, 0
      %v2300 = vsel %vm774, %v2204, 0
      %v2303 = vsel %vm774, %v2205, 0
      %v2306 = vsel %vm774, %v2206, 0
      %v2309 = vsel %vm774, %v2207, 0
      %v2312 = vsel %vm774, %v2208, 0
      %v2315 = vsel %vm774, %v2209, 0
      %v2318 = vsel %vm774, %v2210, 0
      %v2321 = vsel %vm774, %v2211, 0
      %v2324 = vsel %vm774, %v2212, 0
      %v2327 = vsel %vm774, %v2213, 0
      %v2330 = vsel %vm774, %v2214, 0
      %v2333 = vsel %vm774, %v2215, 0
      %v2336 = vsel %vm774, %v2216, 0
      %v2339 = vsel %vm774, %v2217, 0
      %2341 = vmatprep.subr.mxu0 0.0
      %2342 = vmatpush1.msra.mxu0 0.0
      %2343 = vmatprep.subr.mxu0 0.0
      %2344 = vmatpush1.msra.mxu0 0.0
      %2345 = vmatprep.subr.mxu0 0.0
      %2346 = vmatpush1.msra.mxu0 0.0
      %2347 = vmatprep.subr.mxu0 0.0
      %2348 = vmatpush1.msra.mxu0 0.0
      %2349 = vmatprep.subr.mxu0 0.0
      %2350 = vmatpush1.msra.mxu0 0.0
      %2351 = vmatprep.subr.mxu0 0.0
      %2352 = vmatpush1.msra.mxu0 0.0
      %2353 = vmatprep.subr.mxu0 0.0
      %2354 = vmatpush1.msra.mxu0 0.0
      %2355 = vmatprep.subr.mxu0 0.0
      %2356 = vmatpush1.msra.mxu0 0.0
      %2357 = vmatprep.subr.mxu0 0.0
      %2358 = vmatpush1.msra.mxu0 0.0
      %2359 = vmatprep.subr.mxu0 0.0
      %2360 = vmatpush1.msra.mxu0 0.0
      %2361 = vmatprep.subr.mxu0 0.0
      %2362 = vmatpush1.msra.mxu0 0.0
      %2363 = vmatprep.subr.mxu0 0.0
      %2364 = vmatpush1.msra.mxu0 0.0
      %2365 = vmatprep.subr.mxu0 0.0
      %2366 = vmatpush1.msra.mxu0 0.0
      %2367 = vmatprep.subr.mxu0 0.0
      %2368 = vmatpush1.msra.mxu0 0.0
      %2369 = vmatprep.subr.mxu0 0.0
      %2370 = vmatpush1.msra.mxu0 %v2220
      %2371 = vmatprep.subr.mxu0 0.0
      %2372 = vmatpush1.msra.mxu0 %v2219
      %2373 = vmatprep.subr.mxu0 0.0
      %2374 = vmatpush2.msra.mxu0 0.0
      %2375 = vmatprep.subr.mxu0 0.0
      %2376 = vmatpush2.msra.mxu0 0.0
      %2377 = vmatprep.subr.mxu0 0.0
      %2378 = vmatpush2.msra.mxu0 0.0
      %2379 = vmatprep.subr.mxu0 0.0
      %2380 = vmatpush2.msra.mxu0 0.0
      %2381 = vmatprep.subr.mxu0 0.0
      %2382 = vmatpush2.msra.mxu0 0.0
      %2383 = vmatprep.subr.mxu0 0.0
      %2384 = vmatpush2.msra.mxu0 0.0
      %2385 = vmatprep.subr.mxu0 0.0
      %2386 = vmatpush2.msra.mxu0 0.0
      %2387 = vmatprep.subr.mxu0 0.0
      %2388 = vmatpush2.msra.mxu0 0.0
      %2389 = vmatprep.subr.mxu0 0.0
      %2390 = vmatpush2.msra.mxu0 0.0
      %2391 = vmatprep.subr.mxu0 0.0
      %2392 = vmatpush2.msra.mxu0 0.0
      %2393 = vmatprep.subr.mxu0 0.0
      %2394 = vmatpush2.msra.mxu0 0.0
      %2395 = vmatprep.subr.mxu0 0.0
      %2396 = vmatpush2.msra.mxu0 0.0
      %2397 = vmatprep.subr.mxu0 0.0
      %2398 = vmatpush2.msra.mxu0 0.0
      %2399 = vmatprep.subr.mxu0 0.0
      %2400 = vmatpush2.msra.mxu0 0.0
      %2401 = vmatprep.subr.mxu0 0.0
      %2402 = vmatpush2.msra.mxu0 0.0
      %2403 = vmatprep.subr.mxu0 0.0
      %2404 = vmatpush2.msra.mxu0 0.0
      %2405 = vmatprep.mubr.f32.mxu0 0.0
      %2406 = vmatmul.mubr.f32.gmra.mxu0 %v2222
      %v2407 = vpop.f32.mrf.mxu0
      %v2408 = vadd.f32 0.0, %v2407
      %v2409 = vpop.f32.mrf.mxu0
      %2410 = vmatprep.mubr.f32.mxu0 0.0
      %2411 = vmatmul.mubr.f32.gmra.mxu0 %v2225
      %v2412 = vpop.f32.mrf.mxu0
      %v2413 = vadd.f32 0.0, %v2412
      %v2414 = vpop.f32.mrf.mxu0
      %2415 = vmatprep.mubr.f32.mxu0 0.0
      %2416 = vmatmul.mubr.f32.gmra.mxu0 %v2228
      %v2417 = vpop.f32.mrf.mxu0
      %v2418 = vadd.f32 0.0, %v2417
      %v2419 = vpop.f32.mrf.mxu0
      %2420 = vmatprep.mubr.f32.mxu0 0.0
      %2421 = vmatmul.mubr.f32.gmra.mxu0 %v2231
      %v2422 = vpop.f32.mrf.mxu0
      %v2423 = vadd.f32 0.0, %v2422
      %v2424 = vpop.f32.mrf.mxu0
      %2425 = vmatprep.mubr.f32.mxu0 0.0
      %2426 = vmatmul.mubr.f32.gmra.mxu0 %v2234
      %v2427 = vpop.f32.mrf.mxu0
      %v2428 = vadd.f32 0.0, %v2427
      %v2429 = vpop.f32.mrf.mxu0
      %2430 = vmatprep.mubr.f32.mxu0 0.0
      %2431 = vmatmul.mubr.f32.gmra.mxu0 %v2237
      %v2432 = vpop.f32.mrf.mxu0
      %v2433 = vadd.f32 0.0, %v2432
      %v2434 = vpop.f32.mrf.mxu0
      %2435 = vmatprep.mubr.f32.mxu0 0.0
      %2436 = vmatmul.mubr.f32.gmra.mxu0 %v2240
      %v2437 = vpop.f32.mrf.mxu0
      %v2438 = vadd.f32 0.0, %v2437
      %v2439 = vpop.f32.mrf.mxu0
      %2440 = vmatprep.mubr.f32.mxu0 0.0
      %2441 = vmatmul.mubr.f32.gmra.mxu0 %v2243
      %v2442 = vpop.f32.mrf.mxu0
      %v2443 = vadd.f32 0.0, %v2442
      %v2444 = vpop.f32.mrf.mxu0
      %2445 = vmatprep.mubr.f32.mxu0 0.0
      %2446 = vmatmul.mubr.f32.gmra.mxu0 %v2246
      %v2447 = vpop.f32.mrf.mxu0
      %v2448 = vadd.f32 0.0, %v2447
      %v2449 = vpop.f32.mrf.mxu0
      %2450 = vmatprep.mubr.f32.mxu0 0.0
      %2451 = vmatmul.mubr.f32.gmra.mxu0 %v2249
      %v2452 = vpop.f32.mrf.mxu0
      %v2453 = vadd.f32 0.0, %v2452
      %v2454 = vpop.f32.mrf.mxu0
      %2455 = vmatprep.mubr.f32.mxu0 0.0
      %2456 = vmatmul.mubr.f32.gmra.mxu0 %v2252
      %v2457 = vpop.f32.mrf.mxu0
      %v2458 = vadd.f32 0.0, %v2457
      %v2459 = vpop.f32.mrf.mxu0
      %2460 = vmatprep.mubr.f32.mxu0 0.0
      %2461 = vmatmul.mubr.f32.gmra.mxu0 %v2255
      %v2462 = vpop.f32.mrf.mxu0
      %v2463 = vadd.f32 0.0, %v2462
      %v2464 = vpop.f32.mrf.mxu0
      %2465 = vmatprep.mubr.f32.mxu0 0.0
      %2466 = vmatmul.mubr.f32.gmra.mxu0 %v2258
      %v2467 = vpop.f32.mrf.mxu0
      %v2468 = vadd.f32 0.0, %v2467
      %v2469 = vpop.f32.mrf.mxu0
      %2470 = vmatprep.mubr.f32.mxu0 0.0
      %2471 = vmatmul.mubr.f32.gmra.mxu0 %v2261
      %v2472 = vpop.f32.mrf.mxu0
      %v2473 = vadd.f32 0.0, %v2472
      %v2474 = vpop.f32.mrf.mxu0
      %2475 = vmatprep.mubr.f32.mxu0 0.0
      %2476 = vmatmul.mubr.f32.gmra.mxu0 %v2264
      %v2477 = vpop.f32.mrf.mxu0
      %v2478 = vadd.f32 0.0, %v2477
      %v2479 = vpop.f32.mrf.mxu0
      %2480 = vmatprep.mubr.f32.mxu0 0.0
      %2481 = vmatmul.mubr.f32.gmra.mxu0 %v2267
      %v2482 = vpop.f32.mrf.mxu0
      %v2483 = vadd.f32 0.0, %v2482
      %v2484 = vpop.f32.mrf.mxu0
      %2485 = vmatprep.mubr.f32.mxu0 0.0
      %2486 = vmatmul.mubr.f32.gmra.mxu0 %v2270
      %v2487 = vpop.f32.mrf.mxu0
      %v2488 = vadd.f32 0.0, %v2487
      %v2489 = vpop.f32.mrf.mxu0
      %2490 = vmatprep.mubr.f32.mxu0 0.0
      %2491 = vmatmul.mubr.f32.gmra.mxu0 %v2273
      %v2492 = vpop.f32.mrf.mxu0
      %v2493 = vadd.f32 0.0, %v2492
      %v2494 = vpop.f32.mrf.mxu0
      %2495 = vmatprep.mubr.f32.mxu0 0.0
      %2496 = vmatmul.mubr.f32.gmra.mxu0 %v2276
      %v2497 = vpop.f32.mrf.mxu0
      %v2498 = vadd.f32 0.0, %v2497
      %v2499 = vpop.f32.mrf.mxu0
      %2500 = vmatprep.mubr.f32.mxu0 0.0
      %2501 = vmatmul.mubr.f32.gmra.mxu0 %v2279
      %v2502 = vpop.f32.mrf.mxu0
      %v2503 = vadd.f32 0.0, %v2502
      %v2504 = vpop.f32.mrf.mxu0
      %2505 = vmatprep.mubr.f32.mxu0 0.0
      %2506 = vmatmul.mubr.f32.gmra.mxu0 %v2282
      %v2507 = vpop.f32.mrf.mxu0
      %v2508 = vadd.f32 0.0, %v2507
      %v2509 = vpop.f32.mrf.mxu0
      %2510 = vmatprep.mubr.f32.mxu0 0.0
      %2511 = vmatmul.mubr.f32.gmra.mxu0 %v2285
      %v2512 = vpop.f32.mrf.mxu0
      %v2513 = vadd.f32 0.0, %v2512
      %v2514 = vpop.f32.mrf.mxu0
      %2515 = vmatprep.mubr.f32.mxu0 0.0
      %2516 = vmatmul.mubr.f32.gmra.mxu0 %v2288
      %v2517 = vpop.f32.mrf.mxu0
      %v2518 = vadd.f32 0.0, %v2517
      %v2519 = vpop.f32.mrf.mxu0
      %2520 = vmatprep.mubr.f32.mxu0 0.0
      %2521 = vmatmul.mubr.f32.gmra.mxu0 %v2291
      %v2522 = vpop.f32.mrf.mxu0
      %v2523 = vadd.f32 0.0, %v2522
      %v2524 = vpop.f32.mrf.mxu0
      %2525 = vmatprep.mubr.f32.mxu0 0.0
      %2526 = vmatmul.mubr.f32.gmra.mxu0 %v2294
      %v2527 = vpop.f32.mrf.mxu0
      %v2528 = vadd.f32 0.0, %v2527
      %v2529 = vpop.f32.mrf.mxu0
      %2530 = vmatprep.mubr.f32.mxu0 0.0
      %2531 = vmatmul.mubr.f32.gmra.mxu0 %v2297
      %v2532 = vpop.f32.mrf.mxu0
      %v2533 = vadd.f32 0.0, %v2532
      %v2534 = vpop.f32.mrf.mxu0
      %2535 = vmatprep.mubr.f32.mxu0 0.0
      %2536 = vmatmul.mubr.f32.gmra.mxu0 %v2300
      %v2537 = vpop.f32.mrf.mxu0
      %v2538 = vadd.f32 0.0, %v2537
      %v2539 = vpop.f32.mrf.mxu0
      %2540 = vmatprep.mubr.f32.mxu0 0.0
      %2541 = vmatmul.mubr.f32.gmra.mxu0 %v2303
      %v2542 = vpop.f32.mrf.mxu0
      %v2543 = vadd.f32 0.0, %v2542
      %v2544 = vpop.f32.mrf.mxu0
      %2545 = vmatprep.mubr.f32.mxu0 0.0
      %2546 = vmatmul.mubr.f32.gmra.mxu0 %v2306
      %v2547 = vpop.f32.mrf.mxu0
      %v2548 = vadd.f32 0.0, %v2547
      %v2549 = vpop.f32.mrf.mxu0
      %2550 = vmatprep.mubr.f32.mxu0 0.0
      %2551 = vmatmul.mubr.f32.gmra.mxu0 %v2309
      %v2552 = vpop.f32.mrf.mxu0
      %v2553 = vadd.f32 0.0, %v2552
      %v2554 = vpop.f32.mrf.mxu0
      %2555 = vmatprep.mubr.f32.mxu0 0.0
      %2556 = vmatmul.mubr.f32.gmra.mxu0 %v2312
      %v2557 = vpop.f32.mrf.mxu0
      %v2558 = vadd.f32 0.0, %v2557
      %v2559 = vpop.f32.mrf.mxu0
      %2560 = vmatprep.mubr.f32.mxu0 0.0
      %2561 = vmatmul.mubr.f32.gmra.mxu0 %v2315
      %v2562 = vpop.f32.mrf.mxu0
      %v2563 = vadd.f32 0.0, %v2562
      %v2564 = vpop.f32.mrf.mxu0
      %2565 = vmatprep.mubr.f32.mxu0 0.0
      %2566 = vmatmul.mubr.f32.gmra.mxu0 %v2318
      %v2567 = vpop.f32.mrf.mxu0
      %v2568 = vadd.f32 0.0, %v2567
      %v2569 = vpop.f32.mrf.mxu0
      %2570 = vmatprep.mubr.f32.mxu0 0.0
      %2571 = vmatmul.mubr.f32.gmra.mxu0 %v2321
      %v2572 = vpop.f32.mrf.mxu0
      %v2573 = vadd.f32 0.0, %v2572
      %v2574 = vpop.f32.mrf.mxu0
      %2575 = vmatprep.mubr.f32.mxu0 0.0
      %2576 = vmatmul.mubr.f32.gmra.mxu0 %v2324
      %v2577 = vpop.f32.mrf.mxu0
      %v2578 = vadd.f32 0.0, %v2577
      %v2579 = vpop.f32.mrf.mxu0
      %2580 = vmatprep.mubr.f32.mxu0 0.0
      %2581 = vmatmul.mubr.f32.gmra.mxu0 %v2327
      %v2582 = vpop.f32.mrf.mxu0
      %v2583 = vadd.f32 0.0, %v2582
      %v2584 = vpop.f32.mrf.mxu0
      %2585 = vmatprep.mubr.f32.mxu0 0.0
      %2586 = vmatmul.mubr.f32.gmra.mxu0 %v2330
      %v2587 = vpop.f32.mrf.mxu0
      %v2588 = vadd.f32 0.0, %v2587
      %v2589 = vpop.f32.mrf.mxu0
      %2590 = vmatprep.mubr.f32.mxu0 0.0
      %2591 = vmatmul.mubr.f32.gmra.mxu0 %v2333
      %v2592 = vpop.f32.mrf.mxu0
      %v2593 = vadd.f32 0.0, %v2592
      %v2594 = vpop.f32.mrf.mxu0
      %2595 = vmatprep.mubr.f32.mxu0 0.0
      %2596 = vmatmul.mubr.f32.gmra.mxu0 %v2336
      %v2597 = vpop.f32.mrf.mxu0
      %v2598 = vadd.f32 0.0, %v2597
      %v2599 = vpop.f32.mrf.mxu0
      %2600 = vmatprep.mubr.f32.mxu0 0.0
      %2601 = vmatmul.mubr.f32.gmra.mxu0 %v2339
      %v2602 = vpop.f32.mrf.mxu0
      %v2603 = vadd.f32 0.0, %v2602
      %v2604 = vpop.f32.mrf.mxu0
      %2605 = vdwg.mxu0
      %v2606 = vadd.f32 %v2138, %v2408
      %v2607 = vadd.f32 %v2139, %v2413
      %v2608 = vadd.f32 %v2140, %v2418
      %v2609 = vadd.f32 %v2141, %v2423
      %v2610 = vadd.f32 %v2142, %v2428
      %v2611 = vadd.f32 %v2143, %v2433
      %v2612 = vadd.f32 %v2144, %v2438
      %v2613 = vadd.f32 %v2145, %v2443
      %v2614 = vadd.f32 %v2146, %v2448
      %v2615 = vadd.f32 %v2147, %v2453
      %v2616 = vadd.f32 %v2148, %v2458
      %v2617 = vadd.f32 %v2149, %v2463
      %v2618 = vadd.f32 %v2150, %v2468
      %v2619 = vadd.f32 %v2151, %v2473
      %v2620 = vadd.f32 %v2152, %v2478
      %v2621 = vadd.f32 %v2153, %v2483
      %v2622 = vadd.f32 %v2154, %v2488
      %v2623 = vadd.f32 %v2155, %v2493
      %v2624 = vadd.f32 %v2156, %v2498
      %v2625 = vadd.f32 %v2157, %v2503
      %v2626 = vadd.f32 %v2158, %v2508
      %v2627 = vadd.f32 %v2159, %v2513
      %v2628 = vadd.f32 %v2160, %v2518
      %v2629 = vadd.f32 %v2161, %v2523
      %v2630 = vadd.f32 %v2162, %v2528
      %v2631 = vadd.f32 %v2163, %v2533
      %v2632 = vadd.f32 %v2164, %v2538
      %v2633 = vadd.f32 %v2165, %v2543
      %v2634 = vadd.f32 %v2166, %v2548
      %v2635 = vadd.f32 %v2167, %v2553
      %v2636 = vadd.f32 %v2168, %v2558
      %v2637 = vadd.f32 %v2169, %v2563
      %v2638 = vadd.f32 %v2170, %v2568
      %v2639 = vadd.f32 %v2171, %v2573
      %v2640 = vadd.f32 %v2172, %v2578
      %v2641 = vadd.f32 %v2173, %v2583
      %v2642 = vadd.f32 %v2174, %v2588
      %v2643 = vadd.f32 %v2175, %v2593
      %v2644 = vadd.f32 %v2176, %v2598
      %v2645 = vadd.f32 %v2177, %v2603
      %v2646 = vld [vmem:[#allocation2 + $0x4] sm:$0xff]
      %v2647 = vld [vmem:[#allocation2 + $0xc] sm:$0xff]
      %v2648 = vld [vmem:[#allocation2 + $0x1c] sm:$0xff]
      %v2649 = vld [vmem:[#allocation2 + $0x24] sm:$0xff]
      %v2650 = vld [vmem:[#allocation2 + $0x34] sm:$0xff]
      %v2651 = vld [vmem:[#allocation2 + $0x3c] sm:$0xff]
      %v2652 = vld [vmem:[#allocation2 + $0x4c] sm:$0xff]
      %v2653 = vld [vmem:[#allocation2 + $0x54] sm:$0xff]
      %v2654 = vld [vmem:[#allocation2 + $0x64] sm:$0xff]
      %v2655 = vld [vmem:[#allocation2 + $0x6c] sm:$0xff]
      %v2656 = vld [vmem:[#allocation2 + $0x7c] sm:$0xff]
      %v2657 = vld [vmem:[#allocation2 + $0x84] sm:$0xff]
      %v2658 = vld [vmem:[#allocation2 + $0x94] sm:$0xff]
      %v2659 = vld [vmem:[#allocation2 + $0x9c] sm:$0xff]
      %v2660 = vld [vmem:[#allocation2 + $0xac] sm:$0xff]
      %v2661 = vld [vmem:[#allocation2 + $0xb4] sm:$0xff]
      %v2662 = vld [vmem:[#allocation2 + $0xc4] sm:$0xff]
      %v2663 = vld [vmem:[#allocation2 + $0xcc] sm:$0xff]
      %v2664 = vld [vmem:[#allocation2 + $0xdc] sm:$0xff]
      %v2665 = vld [vmem:[#allocation2 + $0xe4] sm:$0xff]
      %v2666 = vld [vmem:[#allocation2 + $0xf4] sm:$0xff]
      %v2667 = vld [vmem:[#allocation2 + $0xfc] sm:$0xff]
      %v2668 = vld [vmem:[#allocation2 + $0x10c] sm:$0xff]
      %v2669 = vld [vmem:[#allocation2 + $0x114] sm:$0xff]
      %v2670 = vld [vmem:[#allocation2 + $0x124] sm:$0xff]
      %v2671 = vld [vmem:[#allocation2 + $0x12c] sm:$0xff]
      %v2672 = vld [vmem:[#allocation2 + $0x13c] sm:$0xff]
      %v2673 = vld [vmem:[#allocation2 + $0x144] sm:$0xff]
      %v2674 = vld [vmem:[#allocation2 + $0x154] sm:$0xff]
      %v2675 = vld [vmem:[#allocation2 + $0x15c] sm:$0xff]
      %v2676 = vld [vmem:[#allocation2 + $0x16c] sm:$0xff]
      %v2677 = vld [vmem:[#allocation2 + $0x174] sm:$0xff]
      %v2678 = vld [vmem:[#allocation2 + $0x184] sm:$0xff]
      %v2679 = vld [vmem:[#allocation2 + $0x18c] sm:$0xff]
      %v2680 = vld [vmem:[#allocation2 + $0x19c] sm:$0xff]
      %v2681 = vld [vmem:[#allocation2 + $0x1a4] sm:$0xff]
      %v2682 = vld [vmem:[#allocation2 + $0x1b4] sm:$0xff]
      %v2683 = vld [vmem:[#allocation2 + $0x1bc] sm:$0xff]
      %v2684 = vld [vmem:[#allocation2 + $0x1cc] sm:$0xff]
      %v2685 = vld [vmem:[#allocation2 + $0x1d4] sm:$0xff]
      %s2686 = scalar_lea.vmem %s3, 64
      %v2687 = vld [vmem:[%s2686] sm:$0xff]
      %v2688 = vld [vmem:[%s2686 + $0x8] sm:$0xff]
      %v2690 = vsel %vm774, %v2646, 0
      %v2693 = vsel %vm774, %v2647, 0
      %v2696 = vsel %vm774, %v2648, 0
      %v2699 = vsel %vm774, %v2649, 0
      %v2702 = vsel %vm774, %v2650, 0
      %v2705 = vsel %vm774, %v2651, 0
      %v2708 = vsel %vm774, %v2652, 0
      %v2711 = vsel %vm774, %v2653, 0
      %v2714 = vsel %vm774, %v2654, 0
      %v2717 = vsel %vm774, %v2655, 0
      %v2720 = vsel %vm774, %v2656, 0
      %v2723 = vsel %vm774, %v2657, 0
      %v2726 = vsel %vm774, %v2658, 0
      %v2729 = vsel %vm774, %v2659, 0
      %v2732 = vsel %vm774, %v2660, 0
      %v2735 = vsel %vm774, %v2661, 0
      %v2738 = vsel %vm774, %v2662, 0
      %v2741 = vsel %vm774, %v2663, 0
      %v2744 = vsel %vm774, %v2664, 0
      %v2747 = vsel %vm774, %v2665, 0
      %v2750 = vsel %vm774, %v2666, 0
      %v2753 = vsel %vm774, %v2667, 0
      %v2756 = vsel %vm774, %v2668, 0
      %v2759 = vsel %vm774, %v2669, 0
      %v2762 = vsel %vm774, %v2670, 0
      %v2765 = vsel %vm774, %v2671, 0
      %v2768 = vsel %vm774, %v2672, 0
      %v2771 = vsel %vm774, %v2673, 0
      %v2774 = vsel %vm774, %v2674, 0
      %v2777 = vsel %vm774, %v2675, 0
      %v2780 = vsel %vm774, %v2676, 0
      %v2783 = vsel %vm774, %v2677, 0
      %v2786 = vsel %vm774, %v2678, 0
      %v2789 = vsel %vm774, %v2679, 0
      %v2792 = vsel %vm774, %v2680, 0
      %v2795 = vsel %vm774, %v2681, 0
      %v2798 = vsel %vm774, %v2682, 0
      %v2801 = vsel %vm774, %v2683, 0
      %v2804 = vsel %vm774, %v2684, 0
      %v2807 = vsel %vm774, %v2685, 0
      %2809 = vmatprep.subr.mxu0 0.0
      %2810 = vmatpush1.msra.mxu0 0.0
      %2811 = vmatprep.subr.mxu0 0.0
      %2812 = vmatpush1.msra.mxu0 0.0
      %2813 = vmatprep.subr.mxu0 0.0
      %2814 = vmatpush1.msra.mxu0 0.0
      %2815 = vmatprep.subr.mxu0 0.0
      %2816 = vmatpush1.msra.mxu0 0.0
      %2817 = vmatprep.subr.mxu0 0.0
      %2818 = vmatpush1.msra.mxu0 0.0
      %2819 = vmatprep.subr.mxu0 0.0
      %2820 = vmatpush1.msra.mxu0 0.0
      %2821 = vmatprep.subr.mxu0 0.0
      %2822 = vmatpush1.msra.mxu0 0.0
      %2823 = vmatprep.subr.mxu0 0.0
      %2824 = vmatpush1.msra.mxu0 0.0
      %2825 = vmatprep.subr.mxu0 0.0
      %2826 = vmatpush1.msra.mxu0 0.0
      %2827 = vmatprep.subr.mxu0 0.0
      %2828 = vmatpush1.msra.mxu0 0.0
      %2829 = vmatprep.subr.mxu0 0.0
      %2830 = vmatpush1.msra.mxu0 0.0
      %2831 = vmatprep.subr.mxu0 0.0
      %2832 = vmatpush1.msra.mxu0 0.0
      %2833 = vmatprep.subr.mxu0 0.0
      %2834 = vmatpush1.msra.mxu0 0.0
      %2835 = vmatprep.subr.mxu0 0.0
      %2836 = vmatpush1.msra.mxu0 0.0
      %2837 = vmatprep.subr.mxu0 0.0
      %2838 = vmatpush1.msra.mxu0 %v2688
      %2839 = vmatprep.subr.mxu0 0.0
      %2840 = vmatpush1.msra.mxu0 %v2687
      %2841 = vmatprep.subr.mxu0 0.0
      %2842 = vmatpush2.msra.mxu0 0.0
      %2843 = vmatprep.subr.mxu0 0.0
      %2844 = vmatpush2.msra.mxu0 0.0
      %2845 = vmatprep.subr.mxu0 0.0
      %2846 = vmatpush2.msra.mxu0 0.0
      %2847 = vmatprep.subr.mxu0 0.0
      %2848 = vmatpush2.msra.mxu0 0.0
      %2849 = vmatprep.subr.mxu0 0.0
      %2850 = vmatpush2.msra.mxu0 0.0
      %2851 = vmatprep.subr.mxu0 0.0
      %2852 = vmatpush2.msra.mxu0 0.0
      %2853 = vmatprep.subr.mxu0 0.0
      %2854 = vmatpush2.msra.mxu0 0.0
      %2855 = vmatprep.subr.mxu0 0.0
      %2856 = vmatpush2.msra.mxu0 0.0
      %2857 = vmatprep.subr.mxu0 0.0
      %2858 = vmatpush2.msra.mxu0 0.0
      %2859 = vmatprep.subr.mxu0 0.0
      %2860 = vmatpush2.msra.mxu0 0.0
      %2861 = vmatprep.subr.mxu0 0.0
      %2862 = vmatpush2.msra.mxu0 0.0
      %2863 = vmatprep.subr.mxu0 0.0
      %2864 = vmatpush2.msra.mxu0 0.0
      %2865 = vmatprep.subr.mxu0 0.0
      %2866 = vmatpush2.msra.mxu0 0.0
      %2867 = vmatprep.subr.mxu0 0.0
      %2868 = vmatpush2.msra.mxu0 0.0
      %2869 = vmatprep.subr.mxu0 0.0
      %2870 = vmatpush2.msra.mxu0 0.0
      %2871 = vmatprep.subr.mxu0 0.0
      %2872 = vmatpush2.msra.mxu0 0.0
      %2873 = vmatprep.mubr.f32.mxu0 0.0
      %2874 = vmatmul.mubr.f32.gmra.mxu0 %v2690
      %v2875 = vpop.f32.mrf.mxu0
      %v2876 = vadd.f32 0.0, %v2875
      %v2877 = vpop.f32.mrf.mxu0
      %2878 = vmatprep.mubr.f32.mxu0 0.0
      %2879 = vmatmul.mubr.f32.gmra.mxu0 %v2693
      %v2880 = vpop.f32.mrf.mxu0
      %v2881 = vadd.f32 0.0, %v2880
      %v2882 = vpop.f32.mrf.mxu0
      %2883 = vmatprep.mubr.f32.mxu0 0.0
      %2884 = vmatmul.mubr.f32.gmra.mxu0 %v2696
      %v2885 = vpop.f32.mrf.mxu0
      %v2886 = vadd.f32 0.0, %v2885
      %v2887 = vpop.f32.mrf.mxu0
      %2888 = vmatprep.mubr.f32.mxu0 0.0
      %2889 = vmatmul.mubr.f32.gmra.mxu0 %v2699
      %v2890 = vpop.f32.mrf.mxu0
      %v2891 = vadd.f32 0.0, %v2890
      %v2892 = vpop.f32.mrf.mxu0
      %2893 = vmatprep.mubr.f32.mxu0 0.0
      %2894 = vmatmul.mubr.f32.gmra.mxu0 %v2702
      %v2895 = vpop.f32.mrf.mxu0
      %v2896 = vadd.f32 0.0, %v2895
      %v2897 = vpop.f32.mrf.mxu0
      %2898 = vmatprep.mubr.f32.mxu0 0.0
      %2899 = vmatmul.mubr.f32.gmra.mxu0 %v2705
      %v2900 = vpop.f32.mrf.mxu0
      %v2901 = vadd.f32 0.0, %v2900
      %v2902 = vpop.f32.mrf.mxu0
      %2903 = vmatprep.mubr.f32.mxu0 0.0
      %2904 = vmatmul.mubr.f32.gmra.mxu0 %v2708
      %v2905 = vpop.f32.mrf.mxu0
      %v2906 = vadd.f32 0.0, %v2905
      %v2907 = vpop.f32.mrf.mxu0
      %2908 = vmatprep.mubr.f32.mxu0 0.0
      %2909 = vmatmul.mubr.f32.gmra.mxu0 %v2711
      %v2910 = vpop.f32.mrf.mxu0
      %v2911 = vadd.f32 0.0, %v2910
      %v2912 = vpop.f32.mrf.mxu0
      %2913 = vmatprep.mubr.f32.mxu0 0.0
      %2914 = vmatmul.mubr.f32.gmra.mxu0 %v2714
      %v2915 = vpop.f32.mrf.mxu0
      %v2916 = vadd.f32 0.0, %v2915
      %v2917 = vpop.f32.mrf.mxu0
      %2918 = vmatprep.mubr.f32.mxu0 0.0
      %2919 = vmatmul.mubr.f32.gmra.mxu0 %v2717
      %v2920 = vpop.f32.mrf.mxu0
      %v2921 = vadd.f32 0.0, %v2920
      %v2922 = vpop.f32.mrf.mxu0
      %2923 = vmatprep.mubr.f32.mxu0 0.0
      %2924 = vmatmul.mubr.f32.gmra.mxu0 %v2720
      %v2925 = vpop.f32.mrf.mxu0
      %v2926 = vadd.f32 0.0, %v2925
      %v2927 = vpop.f32.mrf.mxu0
      %2928 = vmatprep.mubr.f32.mxu0 0.0
      %2929 = vmatmul.mubr.f32.gmra.mxu0 %v2723
      %v2930 = vpop.f32.mrf.mxu0
      %v2931 = vadd.f32 0.0, %v2930
      %v2932 = vpop.f32.mrf.mxu0
      %2933 = vmatprep.mubr.f32.mxu0 0.0
      %2934 = vmatmul.mubr.f32.gmra.mxu0 %v2726
      %v2935 = vpop.f32.mrf.mxu0
      %v2936 = vadd.f32 0.0, %v2935
      %v2937 = vpop.f32.mrf.mxu0
      %2938 = vmatprep.mubr.f32.mxu0 0.0
      %2939 = vmatmul.mubr.f32.gmra.mxu0 %v2729
      %v2940 = vpop.f32.mrf.mxu0
      %v2941 = vadd.f32 0.0, %v2940
      %v2942 = vpop.f32.mrf.mxu0
      %2943 = vmatprep.mubr.f32.mxu0 0.0
      %2944 = vmatmul.mubr.f32.gmra.mxu0 %v2732
      %v2945 = vpop.f32.mrf.mxu0
      %v2946 = vadd.f32 0.0, %v2945
      %v2947 = vpop.f32.mrf.mxu0
      %2948 = vmatprep.mubr.f32.mxu0 0.0
      %2949 = vmatmul.mubr.f32.gmra.mxu0 %v2735
      %v2950 = vpop.f32.mrf.mxu0
      %v2951 = vadd.f32 0.0, %v2950
      %v2952 = vpop.f32.mrf.mxu0
      %2953 = vmatprep.mubr.f32.mxu0 0.0
      %2954 = vmatmul.mubr.f32.gmra.mxu0 %v2738
      %v2955 = vpop.f32.mrf.mxu0
      %v2956 = vadd.f32 0.0, %v2955
      %v2957 = vpop.f32.mrf.mxu0
      %2958 = vmatprep.mubr.f32.mxu0 0.0
      %2959 = vmatmul.mubr.f32.gmra.mxu0 %v2741
      %v2960 = vpop.f32.mrf.mxu0
      %v2961 = vadd.f32 0.0, %v2960
      %v2962 = vpop.f32.mrf.mxu0
      %2963 = vmatprep.mubr.f32.mxu0 0.0
      %2964 = vmatmul.mubr.f32.gmra.mxu0 %v2744
      %v2965 = vpop.f32.mrf.mxu0
      %v2966 = vadd.f32 0.0, %v2965
      %v2967 = vpop.f32.mrf.mxu0
      %2968 = vmatprep.mubr.f32.mxu0 0.0
      %2969 = vmatmul.mubr.f32.gmra.mxu0 %v2747
      %v2970 = vpop.f32.mrf.mxu0
      %v2971 = vadd.f32 0.0, %v2970
      %v2972 = vpop.f32.mrf.mxu0
      %2973 = vmatprep.mubr.f32.mxu0 0.0
      %2974 = vmatmul.mubr.f32.gmra.mxu0 %v2750
      %v2975 = vpop.f32.mrf.mxu0
      %v2976 = vadd.f32 0.0, %v2975
      %v2977 = vpop.f32.mrf.mxu0
      %2978 = vmatprep.mubr.f32.mxu0 0.0
      %2979 = vmatmul.mubr.f32.gmra.mxu0 %v2753
      %v2980 = vpop.f32.mrf.mxu0
      %v2981 = vadd.f32 0.0, %v2980
      %v2982 = vpop.f32.mrf.mxu0
      %2983 = vmatprep.mubr.f32.mxu0 0.0
      %2984 = vmatmul.mubr.f32.gmra.mxu0 %v2756
      %v2985 = vpop.f32.mrf.mxu0
      %v2986 = vadd.f32 0.0, %v2985
      %v2987 = vpop.f32.mrf.mxu0
      %2988 = vmatprep.mubr.f32.mxu0 0.0
      %2989 = vmatmul.mubr.f32.gmra.mxu0 %v2759
      %v2990 = vpop.f32.mrf.mxu0
      %v2991 = vadd.f32 0.0, %v2990
      %v2992 = vpop.f32.mrf.mxu0
      %2993 = vmatprep.mubr.f32.mxu0 0.0
      %2994 = vmatmul.mubr.f32.gmra.mxu0 %v2762
      %v2995 = vpop.f32.mrf.mxu0
      %v2996 = vadd.f32 0.0, %v2995
      %v2997 = vpop.f32.mrf.mxu0
      %2998 = vmatprep.mubr.f32.mxu0 0.0
      %2999 = vmatmul.mubr.f32.gmra.mxu0 %v2765
      %v3000 = vpop.f32.mrf.mxu0
      %v3001 = vadd.f32 0.0, %v3000
      %v3002 = vpop.f32.mrf.mxu0
      %3003 = vmatprep.mubr.f32.mxu0 0.0
      %3004 = vmatmul.mubr.f32.gmra.mxu0 %v2768
      %v3005 = vpop.f32.mrf.mxu0
      %v3006 = vadd.f32 0.0, %v3005
      %v3007 = vpop.f32.mrf.mxu0
      %3008 = vmatprep.mubr.f32.mxu0 0.0
      %3009 = vmatmul.mubr.f32.gmra.mxu0 %v2771
      %v3010 = vpop.f32.mrf.mxu0
      %v3011 = vadd.f32 0.0, %v3010
      %v3012 = vpop.f32.mrf.mxu0
      %3013 = vmatprep.mubr.f32.mxu0 0.0
      %3014 = vmatmul.mubr.f32.gmra.mxu0 %v2774
      %v3015 = vpop.f32.mrf.mxu0
      %v3016 = vadd.f32 0.0, %v3015
      %v3017 = vpop.f32.mrf.mxu0
      %3018 = vmatprep.mubr.f32.mxu0 0.0
      %3019 = vmatmul.mubr.f32.gmra.mxu0 %v2777
      %v3020 = vpop.f32.mrf.mxu0
      %v3021 = vadd.f32 0.0, %v3020
      %v3022 = vpop.f32.mrf.mxu0
      %3023 = vmatprep.mubr.f32.mxu0 0.0
      %3024 = vmatmul.mubr.f32.gmra.mxu0 %v2780
      %v3025 = vpop.f32.mrf.mxu0
      %v3026 = vadd.f32 0.0, %v3025
      %v3027 = vpop.f32.mrf.mxu0
      %3028 = vmatprep.mubr.f32.mxu0 0.0
      %3029 = vmatmul.mubr.f32.gmra.mxu0 %v2783
      %v3030 = vpop.f32.mrf.mxu0
      %v3031 = vadd.f32 0.0, %v3030
      %v3032 = vpop.f32.mrf.mxu0
      %3033 = vmatprep.mubr.f32.mxu0 0.0
      %3034 = vmatmul.mubr.f32.gmra.mxu0 %v2786
      %v3035 = vpop.f32.mrf.mxu0
      %v3036 = vadd.f32 0.0, %v3035
      %v3037 = vpop.f32.mrf.mxu0
      %3038 = vmatprep.mubr.f32.mxu0 0.0
      %3039 = vmatmul.mubr.f32.gmra.mxu0 %v2789
      %v3040 = vpop.f32.mrf.mxu0
      %v3041 = vadd.f32 0.0, %v3040
      %v3042 = vpop.f32.mrf.mxu0
      %3043 = vmatprep.mubr.f32.mxu0 0.0
      %3044 = vmatmul.mubr.f32.gmra.mxu0 %v2792
      %v3045 = vpop.f32.mrf.mxu0
      %v3046 = vadd.f32 0.0, %v3045
      %v3047 = vpop.f32.mrf.mxu0
      %3048 = vmatprep.mubr.f32.mxu0 0.0
      %3049 = vmatmul.mubr.f32.gmra.mxu0 %v2795
      %v3050 = vpop.f32.mrf.mxu0
      %v3051 = vadd.f32 0.0, %v3050
      %v3052 = vpop.f32.mrf.mxu0
      %3053 = vmatprep.mubr.f32.mxu0 0.0
      %3054 = vmatmul.mubr.f32.gmra.mxu0 %v2798
      %v3055 = vpop.f32.mrf.mxu0
      %v3056 = vadd.f32 0.0, %v3055
      %v3057 = vpop.f32.mrf.mxu0
      %3058 = vmatprep.mubr.f32.mxu0 0.0
      %3059 = vmatmul.mubr.f32.gmra.mxu0 %v2801
      %v3060 = vpop.f32.mrf.mxu0
      %v3061 = vadd.f32 0.0, %v3060
      %v3062 = vpop.f32.mrf.mxu0
      %3063 = vmatprep.mubr.f32.mxu0 0.0
      %3064 = vmatmul.mubr.f32.gmra.mxu0 %v2804
      %v3065 = vpop.f32.mrf.mxu0
      %v3066 = vadd.f32 0.0, %v3065
      %v3067 = vpop.f32.mrf.mxu0
      %3068 = vmatprep.mubr.f32.mxu0 0.0
      %3069 = vmatmul.mubr.f32.gmra.mxu0 %v2807
      %v3070 = vpop.f32.mrf.mxu0
      %v3071 = vadd.f32 0.0, %v3070
      %v3072 = vpop.f32.mrf.mxu0
      %3073 = vdwg.mxu0
      %v3074 = vadd.f32 %v2606, %v2876
      %v3075 = vadd.f32 %v2607, %v2881
      %v3076 = vadd.f32 %v2608, %v2886
      %v3077 = vadd.f32 %v2609, %v2891
      %v3078 = vadd.f32 %v2610, %v2896
      %v3079 = vadd.f32 %v2611, %v2901
      %v3080 = vadd.f32 %v2612, %v2906
      %v3081 = vadd.f32 %v2613, %v2911
      %v3082 = vadd.f32 %v2614, %v2916
      %v3083 = vadd.f32 %v2615, %v2921
      %v3084 = vadd.f32 %v2616, %v2926
      %v3085 = vadd.f32 %v2617, %v2931
      %v3086 = vadd.f32 %v2618, %v2936
      %v3087 = vadd.f32 %v2619, %v2941
      %v3088 = vadd.f32 %v2620, %v2946
      %v3089 = vadd.f32 %v2621, %v2951
      %v3090 = vadd.f32 %v2622, %v2956
      %v3091 = vadd.f32 %v2623, %v2961
      %v3092 = vadd.f32 %v2624, %v2966
      %v3093 = vadd.f32 %v2625, %v2971
      %v3094 = vadd.f32 %v2626, %v2976
      %v3095 = vadd.f32 %v2627, %v2981
      %v3096 = vadd.f32 %v2628, %v2986
      %v3097 = vadd.f32 %v2629, %v2991
      %v3098 = vadd.f32 %v2630, %v2996
      %v3099 = vadd.f32 %v2631, %v3001
      %v3100 = vadd.f32 %v2632, %v3006
      %v3101 = vadd.f32 %v2633, %v3011
      %v3102 = vadd.f32 %v2634, %v3016
      %v3103 = vadd.f32 %v2635, %v3021
      %v3104 = vadd.f32 %v2636, %v3026
      %v3105 = vadd.f32 %v2637, %v3031
      %v3106 = vadd.f32 %v2638, %v3036
      %v3107 = vadd.f32 %v2639, %v3041
      %v3108 = vadd.f32 %v2640, %v3046
      %v3109 = vadd.f32 %v2641, %v3051
      %v3110 = vadd.f32 %v2642, %v3056
      %v3111 = vadd.f32 %v2643, %v3061
      %v3112 = vadd.f32 %v2644, %v3066
      %v3113 = vadd.f32 %v2645, %v3071
      %v3114 = vld [vmem:[%s4] sm:$0x1]
      %v3116 = vlaneseq
      %v3117 = vshrl.u32 %v3116, 7
      %v3118 = vsub.s32 0, %v3117
      %v3119 = vrot.slane %v3114, %v3118
      %v3121 = vadd.f32 %v3119, %v3074
      %v3122 = vadd.f32 %v3119, %v3075
      %v3123 = vadd.f32 %v3119, %v3076
      %v3124 = vadd.f32 %v3119, %v3077
      %v3125 = vadd.f32 %v3119, %v3078
      %v3126 = vadd.f32 %v3119, %v3079
      %v3127 = vadd.f32 %v3119, %v3080
      %v3128 = vadd.f32 %v3119, %v3081
      %v3129 = vadd.f32 %v3119, %v3082
      %v3130 = vadd.f32 %v3119, %v3083
      %v3131 = vadd.f32 %v3119, %v3084
      %v3132 = vadd.f32 %v3119, %v3085
      %v3133 = vadd.f32 %v3119, %v3086
      %v3134 = vadd.f32 %v3119, %v3087
      %v3135 = vadd.f32 %v3119, %v3088
      %v3136 = vadd.f32 %v3119, %v3089
      %v3137 = vadd.f32 %v3119, %v3090
      %v3138 = vadd.f32 %v3119, %v3091
      %v3139 = vadd.f32 %v3119, %v3092
      %v3140 = vadd.f32 %v3119, %v3093
      %v3141 = vadd.f32 %v3119, %v3094
      %v3142 = vadd.f32 %v3119, %v3095
      %v3143 = vadd.f32 %v3119, %v3096
      %v3144 = vadd.f32 %v3119, %v3097
      %v3145 = vadd.f32 %v3119, %v3098
      %v3146 = vadd.f32 %v3119, %v3099
      %v3147 = vadd.f32 %v3119, %v3100
      %v3148 = vadd.f32 %v3119, %v3101
      %v3149 = vadd.f32 %v3119, %v3102
      %v3150 = vadd.f32 %v3119, %v3103
      %v3151 = vadd.f32 %v3119, %v3104
      %v3152 = vadd.f32 %v3119, %v3105
      %3185 = vrot.lane.b32.xlu0 %v3076, 104
      %v3186 = vpop.permute.xlu0 %3185
      %3187 = vrot.lane.b32.xlu0 %v3077, 104
      %v3188 = vpop.permute.xlu0 %3187
      %3189 = vrot.lane.b32.xlu0 %v3078, 104
      %v3190 = vpop.permute.xlu0 %3189
      %3191 = vrot.lane.b32.xlu0 %v3079, 104
      %v3192 = vpop.permute.xlu0 %3191
      %3193 = vrot.lane.b32.xlu0 %v3080, 104
      %v3194 = vpop.permute.xlu0 %3193
      %3195 = vrot.lane.b32.xlu0 %v3081, 104
      %v3196 = vpop.permute.xlu0 %3195
      %3197 = vrot.lane.b32.xlu0 %v3082, 104
      %v3198 = vpop.permute.xlu0 %3197
      %3199 = vrot.lane.b32.xlu0 %v3083, 104
      %v3200 = vpop.permute.xlu0 %3199
      %3201 = vrot.lane.b32.xlu0 %v3084, 104
      %v3202 = vpop.permute.xlu0 %3201
      %3203 = vrot.lane.b32.xlu0 %v3085, 104
      %v3204 = vpop.permute.xlu0 %3203
      %3205 = vrot.lane.b32.xlu0 %v3086, 104
      %v3206 = vpop.permute.xlu0 %3205
      %3207 = vrot.lane.b32.xlu0 %v3087, 104
      %v3208 = vpop.permute.xlu0 %3207
      %3209 = vrot.lane.b32.xlu0 %v3088, 104
      %v3210 = vpop.permute.xlu0 %3209
      %3211 = vrot.lane.b32.xlu0 %v3089, 104
      %v3212 = vpop.permute.xlu0 %3211
      %3213 = vrot.lane.b32.xlu0 %v3090, 104
      %v3214 = vpop.permute.xlu0 %3213
      %3215 = vrot.lane.b32.xlu0 %v3091, 104
      %v3216 = vpop.permute.xlu0 %3215
      %3217 = vrot.lane.b32.xlu0 %v3092, 104
      %v3218 = vpop.permute.xlu0 %3217
      %3219 = vrot.lane.b32.xlu0 %v3093, 104
      %v3220 = vpop.permute.xlu0 %3219
      %3221 = vrot.lane.b32.xlu0 %v3094, 104
      %v3222 = vpop.permute.xlu0 %3221
      %3223 = vrot.lane.b32.xlu0 %v3095, 104
      %v3224 = vpop.permute.xlu0 %3223
      %3225 = vrot.lane.b32.xlu0 %v3096, 104
      %v3226 = vpop.permute.xlu0 %3225
      %3227 = vrot.lane.b32.xlu0 %v3097, 104
      %v3228 = vpop.permute.xlu0 %3227
      %3229 = vrot.lane.b32.xlu0 %v3098, 104
      %v3230 = vpop.permute.xlu0 %3229
      %3231 = vrot.lane.b32.xlu0 %v3099, 104
      %v3232 = vpop.permute.xlu0 %3231
      %3233 = vrot.lane.b32.xlu0 %v3100, 104
      %v3234 = vpop.permute.xlu0 %3233
      %3235 = vrot.lane.b32.xlu0 %v3101, 104
      %v3236 = vpop.permute.xlu0 %3235
      %3237 = vrot.lane.b32.xlu0 %v3102, 104
      %v3238 = vpop.permute.xlu0 %3237
      %3239 = vrot.lane.b32.xlu0 %v3103, 104
      %v3240 = vpop.permute.xlu0 %3239
      %3241 = vrot.lane.b32.xlu0 %v3104, 104
      %v3242 = vpop.permute.xlu0 %3241
      %3243 = vrot.lane.b32.xlu0 %v3105, 104
      %v3244 = vpop.permute.xlu0 %3243
      %3245 = vrot.lane.b32.xlu0 %v3106, 104
      %v3246 = vpop.permute.xlu0 %3245
      %3247 = vrot.lane.b32.xlu0 %v3107, 104
      %v3248 = vpop.permute.xlu0 %3247
      %v3281 = vadd.f32 %v3121, %v3186
      %v3282 = vadd.f32 %v3122, %v3188
      %v3283 = vadd.f32 %v3123, %v3190
      %v3284 = vadd.f32 %v3124, %v3192
      %v3285 = vadd.f32 %v3125, %v3194
      %v3286 = vadd.f32 %v3126, %v3196
      %v3287 = vadd.f32 %v3127, %v3198
      %v3288 = vadd.f32 %v3128, %v3200
      %v3289 = vadd.f32 %v3129, %v3202
      %v3290 = vadd.f32 %v3130, %v3204
      %v3291 = vadd.f32 %v3131, %v3206
      %v3292 = vadd.f32 %v3132, %v3208
      %v3293 = vadd.f32 %v3133, %v3210
      %v3294 = vadd.f32 %v3134, %v3212
      %v3295 = vadd.f32 %v3135, %v3214
      %v3296 = vadd.f32 %v3136, %v3216
      %v3297 = vadd.f32 %v3137, %v3218
      %v3298 = vadd.f32 %v3138, %v3220
      %v3299 = vadd.f32 %v3139, %v3222
      %v3300 = vadd.f32 %v3140, %v3224
      %v3301 = vadd.f32 %v3141, %v3226
      %v3302 = vadd.f32 %v3142, %v3228
      %v3303 = vadd.f32 %v3143, %v3230
      %v3304 = vadd.f32 %v3144, %v3232
      %v3305 = vadd.f32 %v3145, %v3234
      %v3306 = vadd.f32 %v3146, %v3236
      %v3307 = vadd.f32 %v3147, %v3238
      %v3308 = vadd.f32 %v3148, %v3240
      %v3309 = vadd.f32 %v3149, %v3242
      %v3310 = vadd.f32 %v3150, %v3244
      %v3311 = vadd.f32 %v3151, %v3246
      %v3312 = vadd.f32 %v3152, %v3248
      %3315 = vrot.lane.b32.xlu0 %v3078, 80
      %v3316 = vpop.permute.xlu0 %3315
      %3317 = vrot.lane.b32.xlu0 %v3079, 80
      %v3318 = vpop.permute.xlu0 %3317
      %3319 = vrot.lane.b32.xlu0 %v3080, 80
      %v3320 = vpop.permute.xlu0 %3319
      %3321 = vrot.lane.b32.xlu0 %v3081, 80
      %v3322 = vpop.permute.xlu0 %3321
      %3323 = vrot.lane.b32.xlu0 %v3082, 80
      %v3324 = vpop.permute.xlu0 %3323
      %3325 = vrot.lane.b32.xlu0 %v3083, 80
      %v3326 = vpop.permute.xlu0 %3325
      %3327 = vrot.lane.b32.xlu0 %v3084, 80
      %v3328 = vpop.permute.xlu0 %3327
      %3329 = vrot.lane.b32.xlu0 %v3085, 80
      %v3330 = vpop.permute.xlu0 %3329
      %3331 = vrot.lane.b32.xlu0 %v3086, 80
      %v3332 = vpop.permute.xlu0 %3331
      %3333 = vrot.lane.b32.xlu0 %v3087, 80
      %v3334 = vpop.permute.xlu0 %3333
      %3335 = vrot.lane.b32.xlu0 %v3088, 80
      %v3336 = vpop.permute.xlu0 %3335
      %3337 = vrot.lane.b32.xlu0 %v3089, 80
      %v3338 = vpop.permute.xlu0 %3337
      %3339 = vrot.lane.b32.xlu0 %v3090, 80
      %v3340 = vpop.permute.xlu0 %3339
      %3341 = vrot.lane.b32.xlu0 %v3091, 80
      %v3342 = vpop.permute.xlu0 %3341
      %3343 = vrot.lane.b32.xlu0 %v3092, 80
      %v3344 = vpop.permute.xlu0 %3343
      %3345 = vrot.lane.b32.xlu0 %v3093, 80
      %v3346 = vpop.permute.xlu0 %3345
      %3347 = vrot.lane.b32.xlu0 %v3094, 80
      %v3348 = vpop.permute.xlu0 %3347
      %3349 = vrot.lane.b32.xlu0 %v3095, 80
      %v3350 = vpop.permute.xlu0 %3349
      %3351 = vrot.lane.b32.xlu0 %v3096, 80
      %v3352 = vpop.permute.xlu0 %3351
      %3353 = vrot.lane.b32.xlu0 %v3097, 80
      %v3354 = vpop.permute.xlu0 %3353
      %3355 = vrot.lane.b32.xlu0 %v3098, 80
      %v3356 = vpop.permute.xlu0 %3355
      %3357 = vrot.lane.b32.xlu0 %v3099, 80
      %v3358 = vpop.permute.xlu0 %3357
      %3359 = vrot.lane.b32.xlu0 %v3100, 80
      %v3360 = vpop.permute.xlu0 %3359
      %3361 = vrot.lane.b32.xlu0 %v3101, 80
      %v3362 = vpop.permute.xlu0 %3361
      %3363 = vrot.lane.b32.xlu0 %v3102, 80
      %v3364 = vpop.permute.xlu0 %3363
      %3365 = vrot.lane.b32.xlu0 %v3103, 80
      %v3366 = vpop.permute.xlu0 %3365
      %3367 = vrot.lane.b32.xlu0 %v3104, 80
      %v3368 = vpop.permute.xlu0 %3367
      %3369 = vrot.lane.b32.xlu0 %v3105, 80
      %v3370 = vpop.permute.xlu0 %3369
      %3371 = vrot.lane.b32.xlu0 %v3106, 80
      %v3372 = vpop.permute.xlu0 %3371
      %3373 = vrot.lane.b32.xlu0 %v3107, 80
      %v3374 = vpop.permute.xlu0 %3373
      %3375 = vrot.lane.b32.xlu0 %v3108, 80
      %v3376 = vpop.permute.xlu0 %3375
      %3377 = vrot.lane.b32.xlu0 %v3109, 80
      %v3378 = vpop.permute.xlu0 %3377
      %v3411 = vadd.f32 %v3281, %v3316
      %v3412 = vadd.f32 %v3282, %v3318
      %v3413 = vadd.f32 %v3283, %v3320
      %v3414 = vadd.f32 %v3284, %v3322
      %v3415 = vadd.f32 %v3285, %v3324
      %v3416 = vadd.f32 %v3286, %v3326
      %v3417 = vadd.f32 %v3287, %v3328
      %v3418 = vadd.f32 %v3288, %v3330
      %v3419 = vadd.f32 %v3289, %v3332
      %v3420 = vadd.f32 %v3290, %v3334
      %v3421 = vadd.f32 %v3291, %v3336
      %v3422 = vadd.f32 %v3292, %v3338
      %v3423 = vadd.f32 %v3293, %v3340
      %v3424 = vadd.f32 %v3294, %v3342
      %v3425 = vadd.f32 %v3295, %v3344
      %v3426 = vadd.f32 %v3296, %v3346
      %v3427 = vadd.f32 %v3297, %v3348
      %v3428 = vadd.f32 %v3298, %v3350
      %v3429 = vadd.f32 %v3299, %v3352
      %v3430 = vadd.f32 %v3300, %v3354
      %v3431 = vadd.f32 %v3301, %v3356
      %v3432 = vadd.f32 %v3302, %v3358
      %v3433 = vadd.f32 %v3303, %v3360
      %v3434 = vadd.f32 %v3304, %v3362
      %v3435 = vadd.f32 %v3305, %v3364
      %v3436 = vadd.f32 %v3306, %v3366
      %v3437 = vadd.f32 %v3307, %v3368
      %v3438 = vadd.f32 %v3308, %v3370
      %v3439 = vadd.f32 %v3309, %v3372
      %v3440 = vadd.f32 %v3310, %v3374
      %v3441 = vadd.f32 %v3311, %v3376
      %v3442 = vadd.f32 %v3312, %v3378
      %3445 = vrot.lane.b32.xlu0 %v3080, 56
      %v3446 = vpop.permute.xlu0 %3445
      %3447 = vrot.lane.b32.xlu0 %v3081, 56
      %v3448 = vpop.permute.xlu0 %3447
      %3449 = vrot.lane.b32.xlu0 %v3082, 56
      %v3450 = vpop.permute.xlu0 %3449
      %3451 = vrot.lane.b32.xlu0 %v3083, 56
      %v3452 = vpop.permute.xlu0 %3451
      %3453 = vrot.lane.b32.xlu0 %v3084, 56
      %v3454 = vpop.permute.xlu0 %3453
      %3455 = vrot.lane.b32.xlu0 %v3085, 56
      %v3456 = vpop.permute.xlu0 %3455
      %3457 = vrot.lane.b32.xlu0 %v3086, 56
      %v3458 = vpop.permute.xlu0 %3457
      %3459 = vrot.lane.b32.xlu0 %v3087, 56
      %v3460 = vpop.permute.xlu0 %3459
      %3461 = vrot.lane.b32.xlu0 %v3088, 56
      %v3462 = vpop.permute.xlu0 %3461
      %3463 = vrot.lane.b32.xlu0 %v3089, 56
      %v3464 = vpop.permute.xlu0 %3463
      %3465 = vrot.lane.b32.xlu0 %v3090, 56
      %v3466 = vpop.permute.xlu0 %3465
      %3467 = vrot.lane.b32.xlu0 %v3091, 56
      %v3468 = vpop.permute.xlu0 %3467
      %3469 = vrot.lane.b32.xlu0 %v3092, 56
      %v3470 = vpop.permute.xlu0 %3469
      %3471 = vrot.lane.b32.xlu0 %v3093, 56
      %v3472 = vpop.permute.xlu0 %3471
      %3473 = vrot.lane.b32.xlu0 %v3094, 56
      %v3474 = vpop.permute.xlu0 %3473
      %3475 = vrot.lane.b32.xlu0 %v3095, 56
      %v3476 = vpop.permute.xlu0 %3475
      %3477 = vrot.lane.b32.xlu0 %v3096, 56
      %v3478 = vpop.permute.xlu0 %3477
      %3479 = vrot.lane.b32.xlu0 %v3097, 56
      %v3480 = vpop.permute.xlu0 %3479
      %3481 = vrot.lane.b32.xlu0 %v3098, 56
      %v3482 = vpop.permute.xlu0 %3481
      %3483 = vrot.lane.b32.xlu0 %v3099, 56
      %v3484 = vpop.permute.xlu0 %3483
      %3485 = vrot.lane.b32.xlu0 %v3100, 56
      %v3486 = vpop.permute.xlu0 %3485
      %3487 = vrot.lane.b32.xlu0 %v3101, 56
      %v3488 = vpop.permute.xlu0 %3487
      %3489 = vrot.lane.b32.xlu0 %v3102, 56
      %v3490 = vpop.permute.xlu0 %3489
      %3491 = vrot.lane.b32.xlu0 %v3103, 56
      %v3492 = vpop.permute.xlu0 %3491
      %3493 = vrot.lane.b32.xlu0 %v3104, 56
      %v3494 = vpop.permute.xlu0 %3493
      %3495 = vrot.lane.b32.xlu0 %v3105, 56
      %v3496 = vpop.permute.xlu0 %3495
      %3497 = vrot.lane.b32.xlu0 %v3106, 56
      %v3498 = vpop.permute.xlu0 %3497
      %3499 = vrot.lane.b32.xlu0 %v3107, 56
      %v3500 = vpop.permute.xlu0 %3499
      %3501 = vrot.lane.b32.xlu0 %v3108, 56
      %v3502 = vpop.permute.xlu0 %3501
      %3503 = vrot.lane.b32.xlu0 %v3109, 56
      %v3504 = vpop.permute.xlu0 %3503
      %3505 = vrot.lane.b32.xlu0 %v3110, 56
      %v3506 = vpop.permute.xlu0 %3505
      %3507 = vrot.lane.b32.xlu0 %v3111, 56
      %v3508 = vpop.permute.xlu0 %3507
      %v3541 = vadd.f32 %v3411, %v3446
      %v3542 = vadd.f32 %v3412, %v3448
      %v3543 = vadd.f32 %v3413, %v3450
      %v3544 = vadd.f32 %v3414, %v3452
      %v3545 = vadd.f32 %v3415, %v3454
      %v3546 = vadd.f32 %v3416, %v3456
      %v3547 = vadd.f32 %v3417, %v3458
      %v3548 = vadd.f32 %v3418, %v3460
      %v3549 = vadd.f32 %v3419, %v3462
      %v3550 = vadd.f32 %v3420, %v3464
      %v3551 = vadd.f32 %v3421, %v3466
      %v3552 = vadd.f32 %v3422, %v3468
      %v3553 = vadd.f32 %v3423, %v3470
      %v3554 = vadd.f32 %v3424, %v3472
      %v3555 = vadd.f32 %v3425, %v3474
      %v3556 = vadd.f32 %v3426, %v3476
      %v3557 = vadd.f32 %v3427, %v3478
      %v3558 = vadd.f32 %v3428, %v3480
      %v3559 = vadd.f32 %v3429, %v3482
      %v3560 = vadd.f32 %v3430, %v3484
      %v3561 = vadd.f32 %v3431, %v3486
      %v3562 = vadd.f32 %v3432, %v3488
      %v3563 = vadd.f32 %v3433, %v3490
      %v3564 = vadd.f32 %v3434, %v3492
      %v3565 = vadd.f32 %v3435, %v3494
      %v3566 = vadd.f32 %v3436, %v3496
      %v3567 = vadd.f32 %v3437, %v3498
      %v3568 = vadd.f32 %v3438, %v3500
      %v3569 = vadd.f32 %v3439, %v3502
      %v3570 = vadd.f32 %v3440, %v3504
      %v3571 = vadd.f32 %v3441, %v3506
      %v3572 = vadd.f32 %v3442, %v3508
      %3575 = vrot.lane.b32.xlu0 %v3082, 32
      %v3576 = vpop.permute.xlu0 %3575
      %3577 = vrot.lane.b32.xlu0 %v3083, 32
      %v3578 = vpop.permute.xlu0 %3577
      %3579 = vrot.lane.b32.xlu0 %v3084, 32
      %v3580 = vpop.permute.xlu0 %3579
      %3581 = vrot.lane.b32.xlu0 %v3085, 32
      %v3582 = vpop.permute.xlu0 %3581
      %3583 = vrot.lane.b32.xlu0 %v3086, 32
      %v3584 = vpop.permute.xlu0 %3583
      %3585 = vrot.lane.b32.xlu0 %v3087, 32
      %v3586 = vpop.permute.xlu0 %3585
      %3587 = vrot.lane.b32.xlu0 %v3088, 32
      %v3588 = vpop.permute.xlu0 %3587
      %3589 = vrot.lane.b32.xlu0 %v3089, 32
      %v3590 = vpop.permute.xlu0 %3589
      %3591 = vrot.lane.b32.xlu0 %v3090, 32
      %v3592 = vpop.permute.xlu0 %3591
      %3593 = vrot.lane.b32.xlu0 %v3091, 32
      %v3594 = vpop.permute.xlu0 %3593
      %3595 = vrot.lane.b32.xlu0 %v3092, 32
      %v3596 = vpop.permute.xlu0 %3595
      %3597 = vrot.lane.b32.xlu0 %v3093, 32
      %v3598 = vpop.permute.xlu0 %3597
      %3599 = vrot.lane.b32.xlu0 %v3094, 32
      %v3600 = vpop.permute.xlu0 %3599
      %3601 = vrot.lane.b32.xlu0 %v3095, 32
      %v3602 = vpop.permute.xlu0 %3601
      %3603 = vrot.lane.b32.xlu0 %v3096, 32
      %v3604 = vpop.permute.xlu0 %3603
      %3605 = vrot.lane.b32.xlu0 %v3097, 32
      %v3606 = vpop.permute.xlu0 %3605
      %3607 = vrot.lane.b32.xlu0 %v3098, 32
      %v3608 = vpop.permute.xlu0 %3607
      %3609 = vrot.lane.b32.xlu0 %v3099, 32
      %v3610 = vpop.permute.xlu0 %3609
      %3611 = vrot.lane.b32.xlu0 %v3100, 32
      %v3612 = vpop.permute.xlu0 %3611
      %3613 = vrot.lane.b32.xlu0 %v3101, 32
      %v3614 = vpop.permute.xlu0 %3613
      %3615 = vrot.lane.b32.xlu0 %v3102, 32
      %v3616 = vpop.permute.xlu0 %3615
      %3617 = vrot.lane.b32.xlu0 %v3103, 32
      %v3618 = vpop.permute.xlu0 %3617
      %3619 = vrot.lane.b32.xlu0 %v3104, 32
      %v3620 = vpop.permute.xlu0 %3619
      %3621 = vrot.lane.b32.xlu0 %v3105, 32
      %v3622 = vpop.permute.xlu0 %3621
      %3623 = vrot.lane.b32.xlu0 %v3106, 32
      %v3624 = vpop.permute.xlu0 %3623
      %3625 = vrot.lane.b32.xlu0 %v3107, 32
      %v3626 = vpop.permute.xlu0 %3625
      %3627 = vrot.lane.b32.xlu0 %v3108, 32
      %v3628 = vpop.permute.xlu0 %3627
      %3629 = vrot.lane.b32.xlu0 %v3109, 32
      %v3630 = vpop.permute.xlu0 %3629
      %3631 = vrot.lane.b32.xlu0 %v3110, 32
      %v3632 = vpop.permute.xlu0 %3631
      %3633 = vrot.lane.b32.xlu0 %v3111, 32
      %v3634 = vpop.permute.xlu0 %3633
      %3635 = vrot.lane.b32.xlu0 %v3112, 32
      %v3636 = vpop.permute.xlu0 %3635
      %3637 = vrot.lane.b32.xlu0 %v3113, 32
      %v3638 = vpop.permute.xlu0 %3637
      %v3671 = vadd.f32 %v3541, %v3576
      %v3672 = vadd.f32 %v3542, %v3578
      %v3673 = vadd.f32 %v3543, %v3580
      %v3674 = vadd.f32 %v3544, %v3582
      %v3675 = vadd.f32 %v3545, %v3584
      %v3676 = vadd.f32 %v3546, %v3586
      %v3677 = vadd.f32 %v3547, %v3588
      %v3678 = vadd.f32 %v3548, %v3590
      %v3679 = vadd.f32 %v3549, %v3592
      %v3680 = vadd.f32 %v3550, %v3594
      %v3681 = vadd.f32 %v3551, %v3596
      %v3682 = vadd.f32 %v3552, %v3598
      %v3683 = vadd.f32 %v3553, %v3600
      %v3684 = vadd.f32 %v3554, %v3602
      %v3685 = vadd.f32 %v3555, %v3604
      %v3686 = vadd.f32 %v3556, %v3606
      %v3687 = vadd.f32 %v3557, %v3608
      %v3688 = vadd.f32 %v3558, %v3610
      %v3689 = vadd.f32 %v3559, %v3612
      %v3690 = vadd.f32 %v3560, %v3614
      %v3691 = vadd.f32 %v3561, %v3616
      %v3692 = vadd.f32 %v3562, %v3618
      %v3693 = vadd.f32 %v3563, %v3620
      %v3694 = vadd.f32 %v3564, %v3622
      %v3695 = vadd.f32 %v3565, %v3624
      %v3696 = vadd.f32 %v3566, %v3626
      %v3697 = vadd.f32 %v3567, %v3628
      %v3698 = vadd.f32 %v3568, %v3630
      %v3699 = vadd.f32 %v3569, %v3632
      %v3700 = vadd.f32 %v3570, %v3634
      %v3701 = vadd.f32 %v3571, %v3636
      %v3702 = vadd.f32 %v3572, %v3638
      %3703 = vxpose.xlu0.b32.start [1/16] %v3671, 128
      %3704 = vxpose.xlu0.b32.cont [2/16] %v3672, 128
      %3705 = vxpose.xlu0.b32.cont [3/16] %v3673, 128
      %3706 = vxpose.xlu0.b32.cont [4/16] %v3674, 128
      %3707 = vxpose.xlu0.b32.cont [5/16] %v3675, 128
      %3708 = vxpose.xlu0.b32.cont [6/16] %v3676, 128
      %3709 = vxpose.xlu0.b32.cont [7/16] %v3677, 128
      %3710 = vxpose.xlu0.b32.cont [8/16] %v3678, 128
      %3711 = vxpose.xlu0.b32.cont [9/16] %v3679, 128
      %3712 = vxpose.xlu0.b32.cont [10/16] %v3680, 128
      %3713 = vxpose.xlu0.b32.cont [11/16] %v3681, 128
      %3714 = vxpose.xlu0.b32.cont [12/16] %v3682, 128
      %3715 = vxpose.xlu0.b32.cont [13/16] %v3683, 128
      %3716 = vxpose.xlu0.b32.cont [14/16] %v3684, 128
      %3717 = vxpose.xlu0.b32.cont [15/16] %v3685, 128
      %3718 = vxpose.xlu0.b32.end [16/16] %v3686, 128
      %v3719 = vpop.trf.xlu0
      %v3720 = vpop.trf.xlu0
      %v3721 = vpop.trf.xlu0
      %v3722 = vpop.trf.xlu0
      %v3723 = vpop.trf.xlu0
      %v3724 = vpop.trf.xlu0
      %v3725 = vpop.trf.xlu0
      %v3726 = vpop.trf.xlu0
      %v3727 = vpop.trf.xlu0
      %v3728 = vpop.trf.xlu0
      %v3729 = vpop.trf.xlu0
      %v3730 = vpop.trf.xlu0
      %v3731 = vpop.trf.xlu0
      %v3732 = vpop.trf.xlu0
      %v3733 = vpop.trf.xlu0
      %v3734 = vpop.trf.xlu0
      %3735 = vxpose.xlu0.b32.start [1/16] %v3687, 128
      %3736 = vxpose.xlu0.b32.cont [2/16] %v3688, 128
      %3737 = vxpose.xlu0.b32.cont [3/16] %v3689, 128
      %3738 = vxpose.xlu0.b32.cont [4/16] %v3690, 128
      %3739 = vxpose.xlu0.b32.cont [5/16] %v3691, 128
      %3740 = vxpose.xlu0.b32.cont [6/16] %v3692, 128
      %3741 = vxpose.xlu0.b32.cont [7/16] %v3693, 128
      %3742 = vxpose.xlu0.b32.cont [8/16] %v3694, 128
      %3743 = vxpose.xlu0.b32.cont [9/16] %v3695, 128
      %3744 = vxpose.xlu0.b32.cont [10/16] %v3696, 128
      %3745 = vxpose.xlu0.b32.cont [11/16] %v3697, 128
      %3746 = vxpose.xlu0.b32.cont [12/16] %v3698, 128
      %3747 = vxpose.xlu0.b32.cont [13/16] %v3699, 128
      %3748 = vxpose.xlu0.b32.cont [14/16] %v3700, 128
      %3749 = vxpose.xlu0.b32.cont [15/16] %v3701, 128
      %3750 = vxpose.xlu0.b32.end [16/16] %v3702, 128
      %v3751 = vpop.trf.xlu0
      %v3752 = vpop.trf.xlu0
      %v3753 = vpop.trf.xlu0
      %v3754 = vpop.trf.xlu0
      %v3755 = vpop.trf.xlu0
      %v3756 = vpop.trf.xlu0
      %v3757 = vpop.trf.xlu0
      %v3758 = vpop.trf.xlu0
      %v3759 = vpop.trf.xlu0
      %v3760 = vpop.trf.xlu0
      %v3761 = vpop.trf.xlu0
      %v3762 = vpop.trf.xlu0
      %v3763 = vpop.trf.xlu0
      %v3764 = vpop.trf.xlu0
      %v3765 = vpop.trf.xlu0
      %v3766 = vpop.trf.xlu0
      %3767 = vst [vmem:[%s359 + $0x20] sm:$0xff] %v3719
      %3768 = vst [vmem:[%s359 + $0x28] sm:$0xff] %v3751
      %3769 = vst [vmem:[%s359 + $0x30] sm:$0xff] %v3720
      %3770 = vst [vmem:[%s359 + $0x38] sm:$0xff] %v3752
      %3771 = vst [vmem:[%s359 + $0x40] sm:$0xff] %v3721
      %3772 = vst [vmem:[%s359 + $0x48] sm:$0xff] %v3753
      %3773 = vst.msk [vmem:[#allocation3] sm:$0xff] %vm774, 0.0
      %3774 = vst.msk [vmem:[#allocation3 + $0x8] sm:$0xff] %vm774, 0.0
      %3775 = vst.msk [vmem:[#allocation3 + $0x10] sm:$0x3] %vm790, 0.0
      %s3776 = scalar_lea.vmem [#allocation3], 408
      %3777 = vst.msk [vmem:[%s3776] sm:$0xff] %vm774, 0.0
      %3778 = vst.msk [vmem:[%s3776 + $0x8] sm:$0xff] %vm774, 0.0
      %3779 = vst.msk [vmem:[%s3776 + $0x10] sm:$0x3] %vm790, 0.0
      %s3780 = scalar_lea.vmem [#allocation3], 24
      %vm3781 = vcmask 122880
      %3782 = vst.msk [vmem:[%s3780] sm:$0x1] %vm3781, 0.0
      %3783 = vst.msk [vmem:[%s3780 + $0x18] sm:$0x1] %vm3781, 0.0
      %3784 = vst.msk [vmem:[%s3780 + $0x30] sm:$0x1] %vm3781, 0.0
      %3785 = vst.msk [vmem:[%s3780 + $0x48] sm:$0x1] %vm3781, 0.0
      %3786 = vst.msk [vmem:[%s3780 + $0x60] sm:$0x1] %vm3781, 0.0
      %3787 = vst.msk [vmem:[%s3780 + $0x78] sm:$0x1] %vm3781, 0.0
      %3788 = vst.msk [vmem:[%s3780 + $0x90] sm:$0x1] %vm3781, 0.0
      %3789 = vst.msk [vmem:[%s3780 + $0xa8] sm:$0x1] %vm3781, 0.0
      %3790 = vst.msk [vmem:[%s3780 + $0xc0] sm:$0x1] %vm3781, 0.0
      %3791 = vst.msk [vmem:[%s3780 + $0xd8] sm:$0x1] %vm3781, 0.0
      %3792 = vst.msk [vmem:[%s3780 + $0xf0] sm:$0x1] %vm3781, 0.0
      %3793 = vst.msk [vmem:[%s3780 + $0x108] sm:$0x1] %vm3781, 0.0
      %3794 = vst.msk [vmem:[%s3780 + $0x120] sm:$0x1] %vm3781, 0.0
      %3795 = vst.msk [vmem:[%s3780 + $0x138] sm:$0x1] %vm3781, 0.0
      %3796 = vst.msk [vmem:[%s3780 + $0x150] sm:$0x1] %vm3781, 0.0
      %3797 = vst.msk [vmem:[%s3780 + $0x168] sm:$0x1] %vm3781, 0.0
      %3798 = vst.msk [vmem:[%s3780 + $0x11] sm:$0x1] %vm3781, 0.0
      %3799 = vst.msk [vmem:[%s3780 + $0x29] sm:$0x1] %vm3781, 0.0
      %3800 = vst.msk [vmem:[%s3780 + $0x41] sm:$0x1] %vm3781, 0.0
      %3801 = vst.msk [vmem:[%s3780 + $0x59] sm:$0x1] %vm3781, 0.0
      %3802 = vst.msk [vmem:[%s3780 + $0x71] sm:$0x1] %vm3781, 0.0
      %3803 = vst.msk [vmem:[%s3780 + $0x89] sm:$0x1] %vm3781, 0.0
      %3804 = vst.msk [vmem:[%s3780 + $0xa1] sm:$0x1] %vm3781, 0.0
      %3805 = vst.msk [vmem:[%s3780 + $0xb9] sm:$0x1] %vm3781, 0.0
      %3806 = vst.msk [vmem:[%s3780 + $0xd1] sm:$0x1] %vm3781, 0.0
      %3807 = vst.msk [vmem:[%s3780 + $0xe9] sm:$0x1] %vm3781, 0.0
      %3808 = vst.msk [vmem:[%s3780 + $0x101] sm:$0x1] %vm3781, 0.0
      %3809 = vst.msk [vmem:[%s3780 + $0x119] sm:$0x1] %vm3781, 0.0
      %3810 = vst.msk [vmem:[%s3780 + $0x131] sm:$0x1] %vm3781, 0.0
      %3811 = vst.msk [vmem:[%s3780 + $0x149] sm:$0x1] %vm3781, 0.0
      %3812 = vst.msk [vmem:[%s3780 + $0x161] sm:$0x1] %vm3781, 0.0
      %3813 = vst.msk [vmem:[%s3780 + $0x179] sm:$0x1] %vm3781, 0.0
      %3814 = vst.msk [vmem:[%s3780 + $0x1] sm:$0xff] %vm774, %v662
      %3815 = vst.msk [vmem:[%s3780 + $0x9] sm:$0xff] %vm774, %v663
      %3816 = vst.msk [vmem:[%s3780 + $0x19] sm:$0xff] %vm774, %v664
      %3817 = vst.msk [vmem:[%s3780 + $0x21] sm:$0xff] %vm774, %v665
      %3818 = vst.msk [vmem:[%s3780 + $0x31] sm:$0xff] %vm774, %v666
      %3819 = vst.msk [vmem:[%s3780 + $0x39] sm:$0xff] %vm774, %v667
      %3820 = vst.msk [vmem:[%s3780 + $0x49] sm:$0xff] %vm774, %v668
      %3821 = vst.msk [vmem:[%s3780 + $0x51] sm:$0xff] %vm774, %v669
      %3822 = vst.msk [vmem:[%s3780 + $0x61] sm:$0xff] %vm774, %v670
      %3823 = vst.msk [vmem:[%s3780 + $0x69] sm:$0xff] %vm774, %v671
      %3824 = vst.msk [vmem:[%s3780 + $0x79] sm:$0xff] %vm774, %v672
      %3825 = vst.msk [vmem:[%s3780 + $0x81] sm:$0xff] %vm774, %v673
      %3826 = vst.msk [vmem:[%s3780 + $0x91] sm:$0xff] %vm774, %v674
      %3827 = vst.msk [vmem:[%s3780 + $0x99] sm:$0xff] %vm774, %v675
      %3828 = vst.msk [vmem:[%s3780 + $0xa9] sm:$0xff] %vm774, %v676
      %3829 = vst.msk [vmem:[%s3780 + $0xb1] sm:$0xff] %vm774, %v677
      %3830 = vst.msk [vmem:[%s3780 + $0xc1] sm:$0xff] %vm774, %v694
      %3831 = vst.msk [vmem:[%s3780 + $0xc9] sm:$0xff] %vm774, %v695
      %3832 = vst.msk [vmem:[%s3780 + $0xd9] sm:$0xff] %vm774, %v696
      %3833 = vst.msk [vmem:[%s3780 + $0xe1] sm:$0xff] %vm774, %v697
      %3834 = vst.msk [vmem:[%s3780 + $0xf1] sm:$0xff] %vm774, %v698
      %3835 = vst.msk [vmem:[%s3780 + $0xf9] sm:$0xff] %vm774, %v699
      %3836 = vst.msk [vmem:[%s3780 + $0x109] sm:$0xff] %vm774, %v700
      %3837 = vst.msk [vmem:[%s3780 + $0x111] sm:$0xff] %vm774, %v701
      %3838 = vst.msk [vmem:[%s3780 + $0x121] sm:$0xff] %vm774, %v702
      %3839 = vst.msk [vmem:[%s3780 + $0x129] sm:$0xff] %vm774, %v703
      %3840 = vst.msk [vmem:[%s3780 + $0x139] sm:$0xff] %vm774, %v704
      %3841 = vst.msk [vmem:[%s3780 + $0x141] sm:$0xff] %vm774, %v705
      %3842 = vst.msk [vmem:[%s3780 + $0x151] sm:$0xff] %vm774, %v706
      %3843 = vst.msk [vmem:[%s3780 + $0x159] sm:$0xff] %vm774, %v707
      %3844 = vst.msk [vmem:[%s3780 + $0x169] sm:$0xff] %vm774, %v708
      %3845 = vst.msk [vmem:[%s3780 + $0x171] sm:$0xff] %vm774, %v709
      %v3846 = vld [vmem:[#allocation3] sm:$0xff]
      %v3847 = vld [vmem:[#allocation3 + $0x8] sm:$0xff]
      %v3848 = vld [vmem:[#allocation3 + $0x18] sm:$0xff]
      %v3849 = vld [vmem:[#allocation3 + $0x20] sm:$0xff]
      %v3850 = vld [vmem:[#allocation3 + $0x30] sm:$0xff]
      %v3851 = vld [vmem:[#allocation3 + $0x38] sm:$0xff]
      %v3852 = vld [vmem:[#allocation3 + $0x48] sm:$0xff]
      %v3853 = vld [vmem:[#allocation3 + $0x50] sm:$0xff]
      %v3854 = vld [vmem:[#allocation3 + $0x60] sm:$0xff]
      %v3855 = vld [vmem:[#allocation3 + $0x68] sm:$0xff]
      %v3856 = vld [vmem:[#allocation3 + $0x78] sm:$0xff]
      %v3857 = vld [vmem:[#allocation3 + $0x80] sm:$0xff]
      %v3858 = vld [vmem:[#allocation3 + $0x90] sm:$0xff]
      %v3859 = vld [vmem:[#allocation3 + $0x98] sm:$0xff]
      %v3860 = vld [vmem:[#allocation3 + $0xa8] sm:$0xff]
      %v3861 = vld [vmem:[#allocation3 + $0xb0] sm:$0xff]
      %v3862 = vld [vmem:[#allocation3 + $0xc0] sm:$0xff]
      %v3863 = vld [vmem:[#allocation3 + $0xc8] sm:$0xff]
      %v3864 = vld [vmem:[#allocation3 + $0xd8] sm:$0xff]
      %v3865 = vld [vmem:[#allocation3 + $0xe0] sm:$0xff]
      %v3866 = vld [vmem:[#allocation3 + $0xf0] sm:$0xff]
      %v3867 = vld [vmem:[#allocation3 + $0xf8] sm:$0xff]
      %v3868 = vld [vmem:[#allocation3 + $0x108] sm:$0xff]
      %v3869 = vld [vmem:[#allocation3 + $0x110] sm:$0xff]
      %v3870 = vld [vmem:[#allocation3 + $0x120] sm:$0xff]
      %v3871 = vld [vmem:[#allocation3 + $0x128] sm:$0xff]
      %v3872 = vld [vmem:[#allocation3 + $0x138] sm:$0xff]
      %v3873 = vld [vmem:[#allocation3 + $0x140] sm:$0xff]
      %v3874 = vld [vmem:[#allocation3 + $0x150] sm:$0xff]
      %v3875 = vld [vmem:[#allocation3 + $0x158] sm:$0xff]
      %v3876 = vld [vmem:[#allocation3 + $0x168] sm:$0xff]
      %v3877 = vld [vmem:[#allocation3 + $0x170] sm:$0xff]
      %v3878 = vld [vmem:[#allocation3 + $0x180] sm:$0xff]
      %v3879 = vld [vmem:[#allocation3 + $0x188] sm:$0xff]
      %v3880 = vld [vmem:[#allocation3 + $0x198] sm:$0xff]
      %v3881 = vld [vmem:[#allocation3 + $0x1a0] sm:$0xff]
      %v3882 = vld [vmem:[%s5] sm:$0xff]
      %v3883 = vld [vmem:[%s5 + $0x8] sm:$0xff]
      %v3884 = vld [vmem:[#allocation3 + $0x1] sm:$0xff]
      %v3885 = vld [vmem:[#allocation3 + $0x9] sm:$0xff]
      %v3886 = vld [vmem:[#allocation3 + $0x19] sm:$0xff]
      %v3887 = vld [vmem:[#allocation3 + $0x21] sm:$0xff]
      %v3888 = vld [vmem:[#allocation3 + $0x31] sm:$0xff]
      %v3889 = vld [vmem:[#allocation3 + $0x39] sm:$0xff]
      %v3890 = vld [vmem:[#allocation3 + $0x49] sm:$0xff]
      %v3891 = vld [vmem:[#allocation3 + $0x51] sm:$0xff]
      %v3892 = vld [vmem:[#allocation3 + $0x61] sm:$0xff]
      %v3893 = vld [vmem:[#allocation3 + $0x69] sm:$0xff]
      %v3894 = vld [vmem:[#allocation3 + $0x79] sm:$0xff]
      %v3895 = vld [vmem:[#allocation3 + $0x81] sm:$0xff]
      %v3896 = vld [vmem:[#allocation3 + $0x91] sm:$0xff]
      %v3897 = vld [vmem:[#allocation3 + $0x99] sm:$0xff]
      %v3898 = vld [vmem:[#allocation3 + $0xa9] sm:$0xff]
      %v3899 = vld [vmem:[#allocation3 + $0xb1] sm:$0xff]
      %v3900 = vld [vmem:[#allocation3 + $0xc1] sm:$0xff]
      %v3901 = vld [vmem:[#allocation3 + $0xc9] sm:$0xff]
      %v3902 = vld [vmem:[#allocation3 + $0xd9] sm:$0xff]
      %v3903 = vld [vmem:[#allocation3 + $0xe1] sm:$0xff]
      %v3904 = vld [vmem:[#allocation3 + $0xf1] sm:$0xff]
      %v3905 = vld [vmem:[#allocation3 + $0xf9] sm:$0xff]
      %v3906 = vld [vmem:[#allocation3 + $0x109] sm:$0xff]
      %v3907 = vld [vmem:[#allocation3 + $0x111] sm:$0xff]
      %v3908 = vld [vmem:[#allocation3 + $0x121] sm:$0xff]
      %v3909 = vld [vmem:[#allocation3 + $0x129] sm:$0xff]
      %v3910 = vld [vmem:[#allocation3 + $0x139] sm:$0xff]
      %v3911 = vld [vmem:[#allocation3 + $0x141] sm:$0xff]
      %v3912 = vld [vmem:[#allocation3 + $0x151] sm:$0xff]
      %v3913 = vld [vmem:[#allocation3 + $0x159] sm:$0xff]
      %v3914 = vld [vmem:[#allocation3 + $0x169] sm:$0xff]
      %v3915 = vld [vmem:[#allocation3 + $0x171] sm:$0xff]
      %v3916 = vld [vmem:[#allocation3 + $0x181] sm:$0xff]
      %v3917 = vld [vmem:[#allocation3 + $0x189] sm:$0xff]
      %v3918 = vld [vmem:[#allocation3 + $0x199] sm:$0xff]
      %v3919 = vld [vmem:[#allocation3 + $0x1a1] sm:$0xff]
      %s3920 = scalar_lea.vmem %s5, 16
      %v3921 = vld [vmem:[%s3920] sm:$0xff]
      %v3922 = vld [vmem:[%s3920 + $0x8] sm:$0xff]
      %v3924 = vsel %vm774, %v3884, 0
      %v3927 = vsel %vm774, %v3885, 0
      %v3930 = vsel %vm774, %v3886, 0
      %v3933 = vsel %vm774, %v3887, 0
      %v3936 = vsel %vm774, %v3888, 0
      %v3939 = vsel %vm774, %v3889, 0
      %v3942 = vsel %vm774, %v3890, 0
      %v3945 = vsel %vm774, %v3891, 0
      %v3948 = vsel %vm774, %v3892, 0
      %v3951 = vsel %vm774, %v3893, 0
      %v3954 = vsel %vm774, %v3894, 0
      %v3957 = vsel %vm774, %v3895, 0
      %v3960 = vsel %vm774, %v3896, 0
      %v3963 = vsel %vm774, %v3897, 0
      %v3966 = vsel %vm774, %v3898, 0
      %v3969 = vsel %vm774, %v3899, 0
      %v3972 = vsel %vm774, %v3900, 0
      %v3975 = vsel %vm774, %v3901, 0
      %v3978 = vsel %vm774, %v3902, 0
      %v3981 = vsel %vm774, %v3903, 0
      %v3984 = vsel %vm774, %v3904, 0
      %v3987 = vsel %vm774, %v3905, 0
      %v3990 = vsel %vm774, %v3906, 0
      %v3993 = vsel %vm774, %v3907, 0
      %v3996 = vsel %vm774, %v3908, 0
      %v3999 = vsel %vm774, %v3909, 0
      %v4002 = vsel %vm774, %v3910, 0
      %v4005 = vsel %vm774, %v3911, 0
      %v4008 = vsel %vm774, %v3912, 0
      %v4011 = vsel %vm774, %v3913, 0
      %v4014 = vsel %vm774, %v3914, 0
      %v4017 = vsel %vm774, %v3915, 0
      %v4020 = vsel %vm774, %v3916, 0
      %v4023 = vsel %vm774, %v3917, 0
      %v4026 = vsel %vm774, %v3918, 0
      %v4029 = vsel %vm774, %v3919, 0
      %4031 = vmatprep.subr.mxu0 0.0
      %4032 = vmatpush1.msra.mxu0 0.0
      %4033 = vmatprep.subr.mxu0 0.0
      %4034 = vmatpush1.msra.mxu0 0.0
      %4035 = vmatprep.subr.mxu0 0.0
      %4036 = vmatpush1.msra.mxu0 0.0
      %4037 = vmatprep.subr.mxu0 0.0
      %4038 = vmatpush1.msra.mxu0 0.0
      %4039 = vmatprep.subr.mxu0 0.0
      %4040 = vmatpush1.msra.mxu0 0.0
      %4041 = vmatprep.subr.mxu0 0.0
      %4042 = vmatpush1.msra.mxu0 0.0
      %4043 = vmatprep.subr.mxu0 0.0
      %4044 = vmatpush1.msra.mxu0 0.0
      %4045 = vmatprep.subr.mxu0 0.0
      %4046 = vmatpush1.msra.mxu0 0.0
      %4047 = vmatprep.subr.mxu0 0.0
      %4048 = vmatpush1.msra.mxu0 0.0
      %4049 = vmatprep.subr.mxu0 0.0
      %4050 = vmatpush1.msra.mxu0 0.0
      %4051 = vmatprep.subr.mxu0 0.0
      %4052 = vmatpush1.msra.mxu0 0.0
      %4053 = vmatprep.subr.mxu0 0.0
      %4054 = vmatpush1.msra.mxu0 0.0
      %4055 = vmatprep.subr.mxu0 0.0
      %4056 = vmatpush1.msra.mxu0 0.0
      %4057 = vmatprep.subr.mxu0 0.0
      %4058 = vmatpush1.msra.mxu0 0.0
      %4059 = vmatprep.subr.mxu0 0.0
      %4060 = vmatpush1.msra.mxu0 %v3922
      %4061 = vmatprep.subr.mxu0 0.0
      %4062 = vmatpush1.msra.mxu0 %v3921
      %4063 = vmatprep.subr.mxu0 0.0
      %4064 = vmatpush2.msra.mxu0 0.0
      %4065 = vmatprep.subr.mxu0 0.0
      %4066 = vmatpush2.msra.mxu0 0.0
      %4067 = vmatprep.subr.mxu0 0.0
      %4068 = vmatpush2.msra.mxu0 0.0
      %4069 = vmatprep.subr.mxu0 0.0
      %4070 = vmatpush2.msra.mxu0 0.0
      %4071 = vmatprep.subr.mxu0 0.0
      %4072 = vmatpush2.msra.mxu0 0.0
      %4073 = vmatprep.subr.mxu0 0.0
      %4074 = vmatpush2.msra.mxu0 0.0
      %4075 = vmatprep.subr.mxu0 0.0
      %4076 = vmatpush2.msra.mxu0 0.0
      %4077 = vmatprep.subr.mxu0 0.0
      %4078 = vmatpush2.msra.mxu0 0.0
      %4079 = vmatprep.subr.mxu0 0.0
      %4080 = vmatpush2.msra.mxu0 0.0
      %4081 = vmatprep.subr.mxu0 0.0
      %4082 = vmatpush2.msra.mxu0 0.0
      %4083 = vmatprep.subr.mxu0 0.0
      %4084 = vmatpush2.msra.mxu0 0.0
      %4085 = vmatprep.subr.mxu0 0.0
      %4086 = vmatpush2.msra.mxu0 0.0
      %4087 = vmatprep.subr.mxu0 0.0
      %4088 = vmatpush2.msra.mxu0 0.0
      %4089 = vmatprep.subr.mxu0 0.0
      %4090 = vmatpush2.msra.mxu0 0.0
      %4091 = vmatprep.subr.mxu0 0.0
      %4092 = vmatpush2.msra.mxu0 0.0
      %4093 = vmatprep.subr.mxu0 0.0
      %4094 = vmatpush2.msra.mxu0 0.0
      %4095 = vmatprep.mubr.f32.mxu0 0.0
      %4096 = vmatmul.mubr.f32.gmra.mxu0 %v3924
      %v4097 = vpop.f32.mrf.mxu0
      %v4098 = vadd.f32 0.0, %v4097
      %v4099 = vpop.f32.mrf.mxu0
      %4100 = vmatprep.mubr.f32.mxu0 0.0
      %4101 = vmatmul.mubr.f32.gmra.mxu0 %v3927
      %v4102 = vpop.f32.mrf.mxu0
      %v4103 = vadd.f32 0.0, %v4102
      %v4104 = vpop.f32.mrf.mxu0
      %4105 = vmatprep.mubr.f32.mxu0 0.0
      %4106 = vmatmul.mubr.f32.gmra.mxu0 %v3930
      %v4107 = vpop.f32.mrf.mxu0
      %v4108 = vadd.f32 0.0, %v4107
      %v4109 = vpop.f32.mrf.mxu0
      %4110 = vmatprep.mubr.f32.mxu0 0.0
      %4111 = vmatmul.mubr.f32.gmra.mxu0 %v3933
      %v4112 = vpop.f32.mrf.mxu0
      %v4113 = vadd.f32 0.0, %v4112
      %v4114 = vpop.f32.mrf.mxu0
      %4115 = vmatprep.mubr.f32.mxu0 0.0
      %4116 = vmatmul.mubr.f32.gmra.mxu0 %v3936
      %v4117 = vpop.f32.mrf.mxu0
      %v4118 = vadd.f32 0.0, %v4117
      %v4119 = vpop.f32.mrf.mxu0
      %4120 = vmatprep.mubr.f32.mxu0 0.0
      %4121 = vmatmul.mubr.f32.gmra.mxu0 %v3939
      %v4122 = vpop.f32.mrf.mxu0
      %v4123 = vadd.f32 0.0, %v4122
      %v4124 = vpop.f32.mrf.mxu0
      %4125 = vmatprep.mubr.f32.mxu0 0.0
      %4126 = vmatmul.mubr.f32.gmra.mxu0 %v3942
      %v4127 = vpop.f32.mrf.mxu0
      %v4128 = vadd.f32 0.0, %v4127
      %v4129 = vpop.f32.mrf.mxu0
      %4130 = vmatprep.mubr.f32.mxu0 0.0
      %4131 = vmatmul.mubr.f32.gmra.mxu0 %v3945
      %v4132 = vpop.f32.mrf.mxu0
      %v4133 = vadd.f32 0.0, %v4132
      %v4134 = vpop.f32.mrf.mxu0
      %4135 = vmatprep.mubr.f32.mxu0 0.0
      %4136 = vmatmul.mubr.f32.gmra.mxu0 %v3948
      %v4137 = vpop.f32.mrf.mxu0
      %v4138 = vadd.f32 0.0, %v4137
      %v4139 = vpop.f32.mrf.mxu0
      %4140 = vmatprep.mubr.f32.mxu0 0.0
      %4141 = vmatmul.mubr.f32.gmra.mxu0 %v3951
      %v4142 = vpop.f32.mrf.mxu0
      %v4143 = vadd.f32 0.0, %v4142
      %v4144 = vpop.f32.mrf.mxu0
      %4145 = vmatprep.mubr.f32.mxu0 0.0
      %4146 = vmatmul.mubr.f32.gmra.mxu0 %v3954
      %v4147 = vpop.f32.mrf.mxu0
      %v4148 = vadd.f32 0.0, %v4147
      %v4149 = vpop.f32.mrf.mxu0
      %4150 = vmatprep.mubr.f32.mxu0 0.0
      %4151 = vmatmul.mubr.f32.gmra.mxu0 %v3957
      %v4152 = vpop.f32.mrf.mxu0
      %v4153 = vadd.f32 0.0, %v4152
      %v4154 = vpop.f32.mrf.mxu0
      %4155 = vmatprep.mubr.f32.mxu0 0.0
      %4156 = vmatmul.mubr.f32.gmra.mxu0 %v3960
      %v4157 = vpop.f32.mrf.mxu0
      %v4158 = vadd.f32 0.0, %v4157
      %v4159 = vpop.f32.mrf.mxu0
      %4160 = vmatprep.mubr.f32.mxu0 0.0
      %4161 = vmatmul.mubr.f32.gmra.mxu0 %v3963
      %v4162 = vpop.f32.mrf.mxu0
      %v4163 = vadd.f32 0.0, %v4162
      %v4164 = vpop.f32.mrf.mxu0
      %4165 = vmatprep.mubr.f32.mxu0 0.0
      %4166 = vmatmul.mubr.f32.gmra.mxu0 %v3966
      %v4167 = vpop.f32.mrf.mxu0
      %v4168 = vadd.f32 0.0, %v4167
      %v4169 = vpop.f32.mrf.mxu0
      %4170 = vmatprep.mubr.f32.mxu0 0.0
      %4171 = vmatmul.mubr.f32.gmra.mxu0 %v3969
      %v4172 = vpop.f32.mrf.mxu0
      %v4173 = vadd.f32 0.0, %v4172
      %v4174 = vpop.f32.mrf.mxu0
      %4175 = vmatprep.mubr.f32.mxu0 0.0
      %4176 = vmatmul.mubr.f32.gmra.mxu0 %v3972
      %v4177 = vpop.f32.mrf.mxu0
      %v4178 = vadd.f32 0.0, %v4177
      %v4179 = vpop.f32.mrf.mxu0
      %4180 = vmatprep.mubr.f32.mxu0 0.0
      %4181 = vmatmul.mubr.f32.gmra.mxu0 %v3975
      %v4182 = vpop.f32.mrf.mxu0
      %v4183 = vadd.f32 0.0, %v4182
      %v4184 = vpop.f32.mrf.mxu0
      %4185 = vmatprep.mubr.f32.mxu0 0.0
      %4186 = vmatmul.mubr.f32.gmra.mxu0 %v3978
      %v4187 = vpop.f32.mrf.mxu0
      %v4188 = vadd.f32 0.0, %v4187
      %v4189 = vpop.f32.mrf.mxu0
      %4190 = vmatprep.mubr.f32.mxu0 0.0
      %4191 = vmatmul.mubr.f32.gmra.mxu0 %v3981
      %v4192 = vpop.f32.mrf.mxu0
      %v4193 = vadd.f32 0.0, %v4192
      %v4194 = vpop.f32.mrf.mxu0
      %4195 = vmatprep.mubr.f32.mxu0 0.0
      %4196 = vmatmul.mubr.f32.gmra.mxu0 %v3984
      %v4197 = vpop.f32.mrf.mxu0
      %v4198 = vadd.f32 0.0, %v4197
      %v4199 = vpop.f32.mrf.mxu0
      %4200 = vmatprep.mubr.f32.mxu0 0.0
      %4201 = vmatmul.mubr.f32.gmra.mxu0 %v3987
      %v4202 = vpop.f32.mrf.mxu0
      %v4203 = vadd.f32 0.0, %v4202
      %v4204 = vpop.f32.mrf.mxu0
      %4205 = vmatprep.mubr.f32.mxu0 0.0
      %4206 = vmatmul.mubr.f32.gmra.mxu0 %v3990
      %v4207 = vpop.f32.mrf.mxu0
      %v4208 = vadd.f32 0.0, %v4207
      %v4209 = vpop.f32.mrf.mxu0
      %4210 = vmatprep.mubr.f32.mxu0 0.0
      %4211 = vmatmul.mubr.f32.gmra.mxu0 %v3993
      %v4212 = vpop.f32.mrf.mxu0
      %v4213 = vadd.f32 0.0, %v4212
      %v4214 = vpop.f32.mrf.mxu0
      %4215 = vmatprep.mubr.f32.mxu0 0.0
      %4216 = vmatmul.mubr.f32.gmra.mxu0 %v3996
      %v4217 = vpop.f32.mrf.mxu0
      %v4218 = vadd.f32 0.0, %v4217
      %v4219 = vpop.f32.mrf.mxu0
      %4220 = vmatprep.mubr.f32.mxu0 0.0
      %4221 = vmatmul.mubr.f32.gmra.mxu0 %v3999
      %v4222 = vpop.f32.mrf.mxu0
      %v4223 = vadd.f32 0.0, %v4222
      %v4224 = vpop.f32.mrf.mxu0
      %4225 = vmatprep.mubr.f32.mxu0 0.0
      %4226 = vmatmul.mubr.f32.gmra.mxu0 %v4002
      %v4227 = vpop.f32.mrf.mxu0
      %v4228 = vadd.f32 0.0, %v4227
      %v4229 = vpop.f32.mrf.mxu0
      %4230 = vmatprep.mubr.f32.mxu0 0.0
      %4231 = vmatmul.mubr.f32.gmra.mxu0 %v4005
      %v4232 = vpop.f32.mrf.mxu0
      %v4233 = vadd.f32 0.0, %v4232
      %v4234 = vpop.f32.mrf.mxu0
      %4235 = vmatprep.mubr.f32.mxu0 0.0
      %4236 = vmatmul.mubr.f32.gmra.mxu0 %v4008
      %v4237 = vpop.f32.mrf.mxu0
      %v4238 = vadd.f32 0.0, %v4237
      %v4239 = vpop.f32.mrf.mxu0
      %4240 = vmatprep.mubr.f32.mxu0 0.0
      %4241 = vmatmul.mubr.f32.gmra.mxu0 %v4011
      %v4242 = vpop.f32.mrf.mxu0
      %v4243 = vadd.f32 0.0, %v4242
      %v4244 = vpop.f32.mrf.mxu0
      %4245 = vmatprep.mubr.f32.mxu0 0.0
      %4246 = vmatmul.mubr.f32.gmra.mxu0 %v4014
      %v4247 = vpop.f32.mrf.mxu0
      %v4248 = vadd.f32 0.0, %v4247
      %v4249 = vpop.f32.mrf.mxu0
      %4250 = vmatprep.mubr.f32.mxu0 0.0
      %4251 = vmatmul.mubr.f32.gmra.mxu0 %v4017
      %v4252 = vpop.f32.mrf.mxu0
      %v4253 = vadd.f32 0.0, %v4252
      %v4254 = vpop.f32.mrf.mxu0
      %4255 = vmatprep.mubr.f32.mxu0 0.0
      %4256 = vmatmul.mubr.f32.gmra.mxu0 %v4020
      %v4257 = vpop.f32.mrf.mxu0
      %v4258 = vadd.f32 0.0, %v4257
      %v4259 = vpop.f32.mrf.mxu0
      %4260 = vmatprep.mubr.f32.mxu0 0.0
      %4261 = vmatmul.mubr.f32.gmra.mxu0 %v4023
      %v4262 = vpop.f32.mrf.mxu0
      %v4263 = vadd.f32 0.0, %v4262
      %v4264 = vpop.f32.mrf.mxu0
      %4265 = vmatprep.mubr.f32.mxu0 0.0
      %4266 = vmatmul.mubr.f32.gmra.mxu0 %v4026
      %v4267 = vpop.f32.mrf.mxu0
      %v4268 = vadd.f32 0.0, %v4267
      %v4269 = vpop.f32.mrf.mxu0
      %4270 = vmatprep.mubr.f32.mxu0 0.0
      %4271 = vmatmul.mubr.f32.gmra.mxu0 %v4029
      %v4272 = vpop.f32.mrf.mxu0
      %v4273 = vadd.f32 0.0, %v4272
      %v4274 = vpop.f32.mrf.mxu0
      %4275 = vdwg.mxu0
      %v4277 = vsel %vm774, %v3846, 0
      %v4280 = vsel %vm774, %v3847, 0
      %v4283 = vsel %vm774, %v3848, 0
      %v4286 = vsel %vm774, %v3849, 0
      %v4289 = vsel %vm774, %v3850, 0
      %v4292 = vsel %vm774, %v3851, 0
      %v4295 = vsel %vm774, %v3852, 0
      %v4298 = vsel %vm774, %v3853, 0
      %v4301 = vsel %vm774, %v3854, 0
      %v4304 = vsel %vm774, %v3855, 0
      %v4307 = vsel %vm774, %v3856, 0
      %v4310 = vsel %vm774, %v3857, 0
      %v4313 = vsel %vm774, %v3858, 0
      %v4316 = vsel %vm774, %v3859, 0
      %v4319 = vsel %vm774, %v3860, 0
      %v4322 = vsel %vm774, %v3861, 0
      %v4325 = vsel %vm774, %v3862, 0
      %v4328 = vsel %vm774, %v3863, 0
      %v4331 = vsel %vm774, %v3864, 0
      %v4334 = vsel %vm774, %v3865, 0
      %v4337 = vsel %vm774, %v3866, 0
      %v4340 = vsel %vm774, %v3867, 0
      %v4343 = vsel %vm774, %v3868, 0
      %v4346 = vsel %vm774, %v3869, 0
      %v4349 = vsel %vm774, %v3870, 0
      %v4352 = vsel %vm774, %v3871, 0
      %v4355 = vsel %vm774, %v3872, 0
      %v4358 = vsel %vm774, %v3873, 0
      %v4361 = vsel %vm774, %v3874, 0
      %v4364 = vsel %vm774, %v3875, 0
      %v4367 = vsel %vm774, %v3876, 0
      %v4370 = vsel %vm774, %v3877, 0
      %v4373 = vsel %vm774, %v3878, 0
      %v4376 = vsel %vm774, %v3879, 0
      %v4379 = vsel %vm774, %v3880, 0
      %v4382 = vsel %vm774, %v3881, 0
      %4384 = vmatprep.subr.mxu0 0.0
      %4385 = vmatpush1.msra.mxu0 0.0
      %4386 = vmatprep.subr.mxu0 0.0
      %4387 = vmatpush1.msra.mxu0 0.0
      %4388 = vmatprep.subr.mxu0 0.0
      %4389 = vmatpush1.msra.mxu0 0.0
      %4390 = vmatprep.subr.mxu0 0.0
      %4391 = vmatpush1.msra.mxu0 0.0
      %4392 = vmatprep.subr.mxu0 0.0
      %4393 = vmatpush1.msra.mxu0 0.0
      %4394 = vmatprep.subr.mxu0 0.0
      %4395 = vmatpush1.msra.mxu0 0.0
      %4396 = vmatprep.subr.mxu0 0.0
      %4397 = vmatpush1.msra.mxu0 0.0
      %4398 = vmatprep.subr.mxu0 0.0
      %4399 = vmatpush1.msra.mxu0 0.0
      %4400 = vmatprep.subr.mxu0 0.0
      %4401 = vmatpush1.msra.mxu0 0.0
      %4402 = vmatprep.subr.mxu0 0.0
      %4403 = vmatpush1.msra.mxu0 0.0
      %4404 = vmatprep.subr.mxu0 0.0
      %4405 = vmatpush1.msra.mxu0 0.0
      %4406 = vmatprep.subr.mxu0 0.0
      %4407 = vmatpush1.msra.mxu0 0.0
      %4408 = vmatprep.subr.mxu0 0.0
      %4409 = vmatpush1.msra.mxu0 0.0
      %4410 = vmatprep.subr.mxu0 0.0
      %4411 = vmatpush1.msra.mxu0 0.0
      %4412 = vmatprep.subr.mxu0 0.0
      %4413 = vmatpush1.msra.mxu0 %v3883
      %4414 = vmatprep.subr.mxu0 0.0
      %4415 = vmatpush1.msra.mxu0 %v3882
      %4416 = vmatprep.subr.mxu0 0.0
      %4417 = vmatpush2.msra.mxu0 0.0
      %4418 = vmatprep.subr.mxu0 0.0
      %4419 = vmatpush2.msra.mxu0 0.0
      %4420 = vmatprep.subr.mxu0 0.0
      %4421 = vmatpush2.msra.mxu0 0.0
      %4422 = vmatprep.subr.mxu0 0.0
      %4423 = vmatpush2.msra.mxu0 0.0
      %4424 = vmatprep.subr.mxu0 0.0
      %4425 = vmatpush2.msra.mxu0 0.0
      %4426 = vmatprep.subr.mxu0 0.0
      %4427 = vmatpush2.msra.mxu0 0.0
      %4428 = vmatprep.subr.mxu0 0.0
      %4429 = vmatpush2.msra.mxu0 0.0
      %4430 = vmatprep.subr.mxu0 0.0
      %4431 = vmatpush2.msra.mxu0 0.0
      %4432 = vmatprep.subr.mxu0 0.0
      %4433 = vmatpush2.msra.mxu0 0.0
      %4434 = vmatprep.subr.mxu0 0.0
      %4435 = vmatpush2.msra.mxu0 0.0
      %4436 = vmatprep.subr.mxu0 0.0
      %4437 = vmatpush2.msra.mxu0 0.0
      %4438 = vmatprep.subr.mxu0 0.0
      %4439 = vmatpush2.msra.mxu0 0.0
      %4440 = vmatprep.subr.mxu0 0.0
      %4441 = vmatpush2.msra.mxu0 0.0
      %4442 = vmatprep.subr.mxu0 0.0
      %4443 = vmatpush2.msra.mxu0 0.0
      %4444 = vmatprep.subr.mxu0 0.0
      %4445 = vmatpush2.msra.mxu0 0.0
      %4446 = vmatprep.subr.mxu0 0.0
      %4447 = vmatpush2.msra.mxu0 0.0
      %4448 = vmatprep.mubr.f32.mxu0 0.0
      %4449 = vmatmul.mubr.f32.gmra.mxu0 %v4277
      %v4450 = vpop.f32.mrf.mxu0
      %v4451 = vadd.f32 %v4098, %v4450
      %v4452 = vpop.f32.mrf.mxu0
      %4453 = vmatprep.mubr.f32.mxu0 0.0
      %4454 = vmatmul.mubr.f32.gmra.mxu0 %v4280
      %v4455 = vpop.f32.mrf.mxu0
      %v4456 = vadd.f32 %v4103, %v4455
      %v4457 = vpop.f32.mrf.mxu0
      %4458 = vmatprep.mubr.f32.mxu0 0.0
      %4459 = vmatmul.mubr.f32.gmra.mxu0 %v4283
      %v4460 = vpop.f32.mrf.mxu0
      %v4461 = vadd.f32 %v4108, %v4460
      %v4462 = vpop.f32.mrf.mxu0
      %4463 = vmatprep.mubr.f32.mxu0 0.0
      %4464 = vmatmul.mubr.f32.gmra.mxu0 %v4286
      %v4465 = vpop.f32.mrf.mxu0
      %v4466 = vadd.f32 %v4113, %v4465
      %v4467 = vpop.f32.mrf.mxu0
      %4468 = vmatprep.mubr.f32.mxu0 0.0
      %4469 = vmatmul.mubr.f32.gmra.mxu0 %v4289
      %v4470 = vpop.f32.mrf.mxu0
      %v4471 = vadd.f32 %v4118, %v4470
      %v4472 = vpop.f32.mrf.mxu0
      %4473 = vmatprep.mubr.f32.mxu0 0.0
      %4474 = vmatmul.mubr.f32.gmra.mxu0 %v4292
      %v4475 = vpop.f32.mrf.mxu0
      %v4476 = vadd.f32 %v4123, %v4475
      %v4477 = vpop.f32.mrf.mxu0
      %4478 = vmatprep.mubr.f32.mxu0 0.0
      %4479 = vmatmul.mubr.f32.gmra.mxu0 %v4295
      %v4480 = vpop.f32.mrf.mxu0
      %v4481 = vadd.f32 %v4128, %v4480
      %v4482 = vpop.f32.mrf.mxu0
      %4483 = vmatprep.mubr.f32.mxu0 0.0
      %4484 = vmatmul.mubr.f32.gmra.mxu0 %v4298
      %v4485 = vpop.f32.mrf.mxu0
      %v4486 = vadd.f32 %v4133, %v4485
      %v4487 = vpop.f32.mrf.mxu0
      %4488 = vmatprep.mubr.f32.mxu0 0.0
      %4489 = vmatmul.mubr.f32.gmra.mxu0 %v4301
      %v4490 = vpop.f32.mrf.mxu0
      %v4491 = vadd.f32 %v4138, %v4490
      %v4492 = vpop.f32.mrf.mxu0
      %4493 = vmatprep.mubr.f32.mxu0 0.0
      %4494 = vmatmul.mubr.f32.gmra.mxu0 %v4304
      %v4495 = vpop.f32.mrf.mxu0
      %v4496 = vadd.f32 %v4143, %v4495
      %v4497 = vpop.f32.mrf.mxu0
      %4498 = vmatprep.mubr.f32.mxu0 0.0
      %4499 = vmatmul.mubr.f32.gmra.mxu0 %v4307
      %v4500 = vpop.f32.mrf.mxu0
      %v4501 = vadd.f32 %v4148, %v4500
      %v4502 = vpop.f32.mrf.mxu0
      %4503 = vmatprep.mubr.f32.mxu0 0.0
      %4504 = vmatmul.mubr.f32.gmra.mxu0 %v4310
      %v4505 = vpop.f32.mrf.mxu0
      %v4506 = vadd.f32 %v4153, %v4505
      %v4507 = vpop.f32.mrf.mxu0
      %4508 = vmatprep.mubr.f32.mxu0 0.0
      %4509 = vmatmul.mubr.f32.gmra.mxu0 %v4313
      %v4510 = vpop.f32.mrf.mxu0
      %v4511 = vadd.f32 %v4158, %v4510
      %v4512 = vpop.f32.mrf.mxu0
      %4513 = vmatprep.mubr.f32.mxu0 0.0
      %4514 = vmatmul.mubr.f32.gmra.mxu0 %v4316
      %v4515 = vpop.f32.mrf.mxu0
      %v4516 = vadd.f32 %v4163, %v4515
      %v4517 = vpop.f32.mrf.mxu0
      %4518 = vmatprep.mubr.f32.mxu0 0.0
      %4519 = vmatmul.mubr.f32.gmra.mxu0 %v4319
      %v4520 = vpop.f32.mrf.mxu0
      %v4521 = vadd.f32 %v4168, %v4520
      %v4522 = vpop.f32.mrf.mxu0
      %4523 = vmatprep.mubr.f32.mxu0 0.0
      %4524 = vmatmul.mubr.f32.gmra.mxu0 %v4322
      %v4525 = vpop.f32.mrf.mxu0
      %v4526 = vadd.f32 %v4173, %v4525
      %v4527 = vpop.f32.mrf.mxu0
      %4528 = vmatprep.mubr.f32.mxu0 0.0
      %4529 = vmatmul.mubr.f32.gmra.mxu0 %v4325
      %v4530 = vpop.f32.mrf.mxu0
      %v4531 = vadd.f32 %v4178, %v4530
      %v4532 = vpop.f32.mrf.mxu0
      %4533 = vmatprep.mubr.f32.mxu0 0.0
      %4534 = vmatmul.mubr.f32.gmra.mxu0 %v4328
      %v4535 = vpop.f32.mrf.mxu0
      %v4536 = vadd.f32 %v4183, %v4535
      %v4537 = vpop.f32.mrf.mxu0
      %4538 = vmatprep.mubr.f32.mxu0 0.0
      %4539 = vmatmul.mubr.f32.gmra.mxu0 %v4331
      %v4540 = vpop.f32.mrf.mxu0
      %v4541 = vadd.f32 %v4188, %v4540
      %v4542 = vpop.f32.mrf.mxu0
      %4543 = vmatprep.mubr.f32.mxu0 0.0
      %4544 = vmatmul.mubr.f32.gmra.mxu0 %v4334
      %v4545 = vpop.f32.mrf.mxu0
      %v4546 = vadd.f32 %v4193, %v4545
      %v4547 = vpop.f32.mrf.mxu0
      %4548 = vmatprep.mubr.f32.mxu0 0.0
      %4549 = vmatmul.mubr.f32.gmra.mxu0 %v4337
      %v4550 = vpop.f32.mrf.mxu0
      %v4551 = vadd.f32 %v4198, %v4550
      %v4552 = vpop.f32.mrf.mxu0
      %4553 = vmatprep.mubr.f32.mxu0 0.0
      %4554 = vmatmul.mubr.f32.gmra.mxu0 %v4340
      %v4555 = vpop.f32.mrf.mxu0
      %v4556 = vadd.f32 %v4203, %v4555
      %v4557 = vpop.f32.mrf.mxu0
      %4558 = vmatprep.mubr.f32.mxu0 0.0
      %4559 = vmatmul.mubr.f32.gmra.mxu0 %v4343
      %v4560 = vpop.f32.mrf.mxu0
      %v4561 = vadd.f32 %v4208, %v4560
      %v4562 = vpop.f32.mrf.mxu0
      %4563 = vmatprep.mubr.f32.mxu0 0.0
      %4564 = vmatmul.mubr.f32.gmra.mxu0 %v4346
      %v4565 = vpop.f32.mrf.mxu0
      %v4566 = vadd.f32 %v4213, %v4565
      %v4567 = vpop.f32.mrf.mxu0
      %4568 = vmatprep.mubr.f32.mxu0 0.0
      %4569 = vmatmul.mubr.f32.gmra.mxu0 %v4349
      %v4570 = vpop.f32.mrf.mxu0
      %v4571 = vadd.f32 %v4218, %v4570
      %v4572 = vpop.f32.mrf.mxu0
      %4573 = vmatprep.mubr.f32.mxu0 0.0
      %4574 = vmatmul.mubr.f32.gmra.mxu0 %v4352
      %v4575 = vpop.f32.mrf.mxu0
      %v4576 = vadd.f32 %v4223, %v4575
      %v4577 = vpop.f32.mrf.mxu0
      %4578 = vmatprep.mubr.f32.mxu0 0.0
      %4579 = vmatmul.mubr.f32.gmra.mxu0 %v4355
      %v4580 = vpop.f32.mrf.mxu0
      %v4581 = vadd.f32 %v4228, %v4580
      %v4582 = vpop.f32.mrf.mxu0
      %4583 = vmatprep.mubr.f32.mxu0 0.0
      %4584 = vmatmul.mubr.f32.gmra.mxu0 %v4358
      %v4585 = vpop.f32.mrf.mxu0
      %v4586 = vadd.f32 %v4233, %v4585
      %v4587 = vpop.f32.mrf.mxu0
      %4588 = vmatprep.mubr.f32.mxu0 0.0
      %4589 = vmatmul.mubr.f32.gmra.mxu0 %v4361
      %v4590 = vpop.f32.mrf.mxu0
      %v4591 = vadd.f32 %v4238, %v4590
      %v4592 = vpop.f32.mrf.mxu0
      %4593 = vmatprep.mubr.f32.mxu0 0.0
      %4594 = vmatmul.mubr.f32.gmra.mxu0 %v4364
      %v4595 = vpop.f32.mrf.mxu0
      %v4596 = vadd.f32 %v4243, %v4595
      %v4597 = vpop.f32.mrf.mxu0
      %4598 = vmatprep.mubr.f32.mxu0 0.0
      %4599 = vmatmul.mubr.f32.gmra.mxu0 %v4367
      %v4600 = vpop.f32.mrf.mxu0
      %v4601 = vadd.f32 %v4248, %v4600
      %v4602 = vpop.f32.mrf.mxu0
      %4603 = vmatprep.mubr.f32.mxu0 0.0
      %4604 = vmatmul.mubr.f32.gmra.mxu0 %v4370
      %v4605 = vpop.f32.mrf.mxu0
      %v4606 = vadd.f32 %v4253, %v4605
      %v4607 = vpop.f32.mrf.mxu0
      %4608 = vmatprep.mubr.f32.mxu0 0.0
      %4609 = vmatmul.mubr.f32.gmra.mxu0 %v4373
      %v4610 = vpop.f32.mrf.mxu0
      %v4611 = vadd.f32 %v4258, %v4610
      %v4612 = vpop.f32.mrf.mxu0
      %4613 = vmatprep.mubr.f32.mxu0 0.0
      %4614 = vmatmul.mubr.f32.gmra.mxu0 %v4376
      %v4615 = vpop.f32.mrf.mxu0
      %v4616 = vadd.f32 %v4263, %v4615
      %v4617 = vpop.f32.mrf.mxu0
      %4618 = vmatprep.mubr.f32.mxu0 0.0
      %4619 = vmatmul.mubr.f32.gmra.mxu0 %v4379
      %v4620 = vpop.f32.mrf.mxu0
      %v4621 = vadd.f32 %v4268, %v4620
      %v4622 = vpop.f32.mrf.mxu0
      %4623 = vmatprep.mubr.f32.mxu0 0.0
      %4624 = vmatmul.mubr.f32.gmra.mxu0 %v4382
      %v4625 = vpop.f32.mrf.mxu0
      %v4626 = vadd.f32 %v4273, %v4625
      %v4627 = vpop.f32.mrf.mxu0
      %4628 = vdwg.mxu0
      %v4629 = vld [vmem:[#allocation3 + $0x2] sm:$0xff]
      %v4630 = vld [vmem:[#allocation3 + $0xa] sm:$0xff]
      %v4631 = vld [vmem:[#allocation3 + $0x1a] sm:$0xff]
      %v4632 = vld [vmem:[#allocation3 + $0x22] sm:$0xff]
      %v4633 = vld [vmem:[#allocation3 + $0x32] sm:$0xff]
      %v4634 = vld [vmem:[#allocation3 + $0x3a] sm:$0xff]
      %v4635 = vld [vmem:[#allocation3 + $0x4a] sm:$0xff]
      %v4636 = vld [vmem:[#allocation3 + $0x52] sm:$0xff]
      %v4637 = vld [vmem:[#allocation3 + $0x62] sm:$0xff]
      %v4638 = vld [vmem:[#allocation3 + $0x6a] sm:$0xff]
      %v4639 = vld [vmem:[#allocation3 + $0x7a] sm:$0xff]
      %v4640 = vld [vmem:[#allocation3 + $0x82] sm:$0xff]
      %v4641 = vld [vmem:[#allocation3 + $0x92] sm:$0xff]
      %v4642 = vld [vmem:[#allocation3 + $0x9a] sm:$0xff]
      %v4643 = vld [vmem:[#allocation3 + $0xaa] sm:$0xff]
      %v4644 = vld [vmem:[#allocation3 + $0xb2] sm:$0xff]
      %v4645 = vld [vmem:[#allocation3 + $0xc2] sm:$0xff]
      %v4646 = vld [vmem:[#allocation3 + $0xca] sm:$0xff]
      %v4647 = vld [vmem:[#allocation3 + $0xda] sm:$0xff]
      %v4648 = vld [vmem:[#allocation3 + $0xe2] sm:$0xff]
      %v4649 = vld [vmem:[#allocation3 + $0xf2] sm:$0xff]
      %v4650 = vld [vmem:[#allocation3 + $0xfa] sm:$0xff]
      %v4651 = vld [vmem:[#allocation3 + $0x10a] sm:$0xff]
      %v4652 = vld [vmem:[#allocation3 + $0x112] sm:$0xff]
      %v4653 = vld [vmem:[#allocation3 + $0x122] sm:$0xff]
      %v4654 = vld [vmem:[#allocation3 + $0x12a] sm:$0xff]
      %v4655 = vld [vmem:[#allocation3 + $0x13a] sm:$0xff]
      %v4656 = vld [vmem:[#allocation3 + $0x142] sm:$0xff]
      %v4657 = vld [vmem:[#allocation3 + $0x152] sm:$0xff]
      %v4658 = vld [vmem:[#allocation3 + $0x15a] sm:$0xff]
      %v4659 = vld [vmem:[#allocation3 + $0x16a] sm:$0xff]
      %v4660 = vld [vmem:[#allocation3 + $0x172] sm:$0xff]
      %v4661 = vld [vmem:[#allocation3 + $0x182] sm:$0xff]
      %v4662 = vld [vmem:[#allocation3 + $0x18a] sm:$0xff]
      %v4663 = vld [vmem:[#allocation3 + $0x19a] sm:$0xff]
      %v4664 = vld [vmem:[#allocation3 + $0x1a2] sm:$0xff]
      %s4665 = scalar_lea.vmem %s5, 32
      %v4666 = vld [vmem:[%s4665] sm:$0xff]
      %v4667 = vld [vmem:[%s4665 + $0x8] sm:$0xff]
      %v4669 = vsel %vm774, %v4629, 0
      %v4672 = vsel %vm774, %v4630, 0
      %v4675 = vsel %vm774, %v4631, 0
      %v4678 = vsel %vm774, %v4632, 0
      %v4681 = vsel %vm774, %v4633, 0
      %v4684 = vsel %vm774, %v4634, 0
      %v4687 = vsel %vm774, %v4635, 0
      %v4690 = vsel %vm774, %v4636, 0
      %v4693 = vsel %vm774, %v4637, 0
      %v4696 = vsel %vm774, %v4638, 0
      %v4699 = vsel %vm774, %v4639, 0
      %v4702 = vsel %vm774, %v4640, 0
      %v4705 = vsel %vm774, %v4641, 0
      %v4708 = vsel %vm774, %v4642, 0
      %v4711 = vsel %vm774, %v4643, 0
      %v4714 = vsel %vm774, %v4644, 0
      %v4717 = vsel %vm774, %v4645, 0
      %v4720 = vsel %vm774, %v4646, 0
      %v4723 = vsel %vm774, %v4647, 0
      %v4726 = vsel %vm774, %v4648, 0
      %v4729 = vsel %vm774, %v4649, 0
      %v4732 = vsel %vm774, %v4650, 0
      %v4735 = vsel %vm774, %v4651, 0
      %v4738 = vsel %vm774, %v4652, 0
      %v4741 = vsel %vm774, %v4653, 0
      %v4744 = vsel %vm774, %v4654, 0
      %v4747 = vsel %vm774, %v4655, 0
      %v4750 = vsel %vm774, %v4656, 0
      %v4753 = vsel %vm774, %v4657, 0
      %v4756 = vsel %vm774, %v4658, 0
      %v4759 = vsel %vm774, %v4659, 0
      %v4762 = vsel %vm774, %v4660, 0
      %v4765 = vsel %vm774, %v4661, 0
      %v4768 = vsel %vm774, %v4662, 0
      %v4771 = vsel %vm774, %v4663, 0
      %v4774 = vsel %vm774, %v4664, 0
      %4776 = vmatprep.subr.mxu0 0.0
      %4777 = vmatpush1.msra.mxu0 0.0
      %4778 = vmatprep.subr.mxu0 0.0
      %4779 = vmatpush1.msra.mxu0 0.0
      %4780 = vmatprep.subr.mxu0 0.0
      %4781 = vmatpush1.msra.mxu0 0.0
      %4782 = vmatprep.subr.mxu0 0.0
      %4783 = vmatpush1.msra.mxu0 0.0
      %4784 = vmatprep.subr.mxu0 0.0
      %4785 = vmatpush1.msra.mxu0 0.0
      %4786 = vmatprep.subr.mxu0 0.0
      %4787 = vmatpush1.msra.mxu0 0.0
      %4788 = vmatprep.subr.mxu0 0.0
      %4789 = vmatpush1.msra.mxu0 0.0
      %4790 = vmatprep.subr.mxu0 0.0
      %4791 = vmatpush1.msra.mxu0 0.0
      %4792 = vmatprep.subr.mxu0 0.0
      %4793 = vmatpush1.msra.mxu0 0.0
      %4794 = vmatprep.subr.mxu0 0.0
      %4795 = vmatpush1.msra.mxu0 0.0
      %4796 = vmatprep.subr.mxu0 0.0
      %4797 = vmatpush1.msra.mxu0 0.0
      %4798 = vmatprep.subr.mxu0 0.0
      %4799 = vmatpush1.msra.mxu0 0.0
      %4800 = vmatprep.subr.mxu0 0.0
      %4801 = vmatpush1.msra.mxu0 0.0
      %4802 = vmatprep.subr.mxu0 0.0
      %4803 = vmatpush1.msra.mxu0 0.0
      %4804 = vmatprep.subr.mxu0 0.0
      %4805 = vmatpush1.msra.mxu0 %v4667
      %4806 = vmatprep.subr.mxu0 0.0
      %4807 = vmatpush1.msra.mxu0 %v4666
      %4808 = vmatprep.subr.mxu0 0.0
      %4809 = vmatpush2.msra.mxu0 0.0
      %4810 = vmatprep.subr.mxu0 0.0
      %4811 = vmatpush2.msra.mxu0 0.0
      %4812 = vmatprep.subr.mxu0 0.0
      %4813 = vmatpush2.msra.mxu0 0.0
      %4814 = vmatprep.subr.mxu0 0.0
      %4815 = vmatpush2.msra.mxu0 0.0
      %4816 = vmatprep.subr.mxu0 0.0
      %4817 = vmatpush2.msra.mxu0 0.0
      %4818 = vmatprep.subr.mxu0 0.0
      %4819 = vmatpush2.msra.mxu0 0.0
      %4820 = vmatprep.subr.mxu0 0.0
      %4821 = vmatpush2.msra.mxu0 0.0
      %4822 = vmatprep.subr.mxu0 0.0
      %4823 = vmatpush2.msra.mxu0 0.0
      %4824 = vmatprep.subr.mxu0 0.0
      %4825 = vmatpush2.msra.mxu0 0.0
      %4826 = vmatprep.subr.mxu0 0.0
      %4827 = vmatpush2.msra.mxu0 0.0
      %4828 = vmatprep.subr.mxu0 0.0
      %4829 = vmatpush2.msra.mxu0 0.0
      %4830 = vmatprep.subr.mxu0 0.0
      %4831 = vmatpush2.msra.mxu0 0.0
      %4832 = vmatprep.subr.mxu0 0.0
      %4833 = vmatpush2.msra.mxu0 0.0
      %4834 = vmatprep.subr.mxu0 0.0
      %4835 = vmatpush2.msra.mxu0 0.0
      %4836 = vmatprep.subr.mxu0 0.0
      %4837 = vmatpush2.msra.mxu0 0.0
      %4838 = vmatprep.subr.mxu0 0.0
      %4839 = vmatpush2.msra.mxu0 0.0
      %4840 = vmatprep.mubr.f32.mxu0 0.0
      %4841 = vmatmul.mubr.f32.gmra.mxu0 %v4669
      %v4842 = vpop.f32.mrf.mxu0
      %v4843 = vadd.f32 0.0, %v4842
      %v4844 = vpop.f32.mrf.mxu0
      %4845 = vmatprep.mubr.f32.mxu0 0.0
      %4846 = vmatmul.mubr.f32.gmra.mxu0 %v4672
      %v4847 = vpop.f32.mrf.mxu0
      %v4848 = vadd.f32 0.0, %v4847
      %v4849 = vpop.f32.mrf.mxu0
      %4850 = vmatprep.mubr.f32.mxu0 0.0
      %4851 = vmatmul.mubr.f32.gmra.mxu0 %v4675
      %v4852 = vpop.f32.mrf.mxu0
      %v4853 = vadd.f32 0.0, %v4852
      %v4854 = vpop.f32.mrf.mxu0
      %4855 = vmatprep.mubr.f32.mxu0 0.0
      %4856 = vmatmul.mubr.f32.gmra.mxu0 %v4678
      %v4857 = vpop.f32.mrf.mxu0
      %v4858 = vadd.f32 0.0, %v4857
      %v4859 = vpop.f32.mrf.mxu0
      %4860 = vmatprep.mubr.f32.mxu0 0.0
      %4861 = vmatmul.mubr.f32.gmra.mxu0 %v4681
      %v4862 = vpop.f32.mrf.mxu0
      %v4863 = vadd.f32 0.0, %v4862
      %v4864 = vpop.f32.mrf.mxu0
      %4865 = vmatprep.mubr.f32.mxu0 0.0
      %4866 = vmatmul.mubr.f32.gmra.mxu0 %v4684
      %v4867 = vpop.f32.mrf.mxu0
      %v4868 = vadd.f32 0.0, %v4867
      %v4869 = vpop.f32.mrf.mxu0
      %4870 = vmatprep.mubr.f32.mxu0 0.0
      %4871 = vmatmul.mubr.f32.gmra.mxu0 %v4687
      %v4872 = vpop.f32.mrf.mxu0
      %v4873 = vadd.f32 0.0, %v4872
      %v4874 = vpop.f32.mrf.mxu0
      %4875 = vmatprep.mubr.f32.mxu0 0.0
      %4876 = vmatmul.mubr.f32.gmra.mxu0 %v4690
      %v4877 = vpop.f32.mrf.mxu0
      %v4878 = vadd.f32 0.0, %v4877
      %v4879 = vpop.f32.mrf.mxu0
      %4880 = vmatprep.mubr.f32.mxu0 0.0
      %4881 = vmatmul.mubr.f32.gmra.mxu0 %v4693
      %v4882 = vpop.f32.mrf.mxu0
      %v4883 = vadd.f32 0.0, %v4882
      %v4884 = vpop.f32.mrf.mxu0
      %4885 = vmatprep.mubr.f32.mxu0 0.0
      %4886 = vmatmul.mubr.f32.gmra.mxu0 %v4696
      %v4887 = vpop.f32.mrf.mxu0
      %v4888 = vadd.f32 0.0, %v4887
      %v4889 = vpop.f32.mrf.mxu0
      %4890 = vmatprep.mubr.f32.mxu0 0.0
      %4891 = vmatmul.mubr.f32.gmra.mxu0 %v4699
      %v4892 = vpop.f32.mrf.mxu0
      %v4893 = vadd.f32 0.0, %v4892
      %v4894 = vpop.f32.mrf.mxu0
      %4895 = vmatprep.mubr.f32.mxu0 0.0
      %4896 = vmatmul.mubr.f32.gmra.mxu0 %v4702
      %v4897 = vpop.f32.mrf.mxu0
      %v4898 = vadd.f32 0.0, %v4897
      %v4899 = vpop.f32.mrf.mxu0
      %4900 = vmatprep.mubr.f32.mxu0 0.0
      %4901 = vmatmul.mubr.f32.gmra.mxu0 %v4705
      %v4902 = vpop.f32.mrf.mxu0
      %v4903 = vadd.f32 0.0, %v4902
      %v4904 = vpop.f32.mrf.mxu0
      %4905 = vmatprep.mubr.f32.mxu0 0.0
      %4906 = vmatmul.mubr.f32.gmra.mxu0 %v4708
      %v4907 = vpop.f32.mrf.mxu0
      %v4908 = vadd.f32 0.0, %v4907
      %v4909 = vpop.f32.mrf.mxu0
      %4910 = vmatprep.mubr.f32.mxu0 0.0
      %4911 = vmatmul.mubr.f32.gmra.mxu0 %v4711
      %v4912 = vpop.f32.mrf.mxu0
      %v4913 = vadd.f32 0.0, %v4912
      %v4914 = vpop.f32.mrf.mxu0
      %4915 = vmatprep.mubr.f32.mxu0 0.0
      %4916 = vmatmul.mubr.f32.gmra.mxu0 %v4714
      %v4917 = vpop.f32.mrf.mxu0
      %v4918 = vadd.f32 0.0, %v4917
      %v4919 = vpop.f32.mrf.mxu0
      %4920 = vmatprep.mubr.f32.mxu0 0.0
      %4921 = vmatmul.mubr.f32.gmra.mxu0 %v4717
      %v4922 = vpop.f32.mrf.mxu0
      %v4923 = vadd.f32 0.0, %v4922
      %v4924 = vpop.f32.mrf.mxu0
      %4925 = vmatprep.mubr.f32.mxu0 0.0
      %4926 = vmatmul.mubr.f32.gmra.mxu0 %v4720
      %v4927 = vpop.f32.mrf.mxu0
      %v4928 = vadd.f32 0.0, %v4927
      %v4929 = vpop.f32.mrf.mxu0
      %4930 = vmatprep.mubr.f32.mxu0 0.0
      %4931 = vmatmul.mubr.f32.gmra.mxu0 %v4723
      %v4932 = vpop.f32.mrf.mxu0
      %v4933 = vadd.f32 0.0, %v4932
      %v4934 = vpop.f32.mrf.mxu0
      %4935 = vmatprep.mubr.f32.mxu0 0.0
      %4936 = vmatmul.mubr.f32.gmra.mxu0 %v4726
      %v4937 = vpop.f32.mrf.mxu0
      %v4938 = vadd.f32 0.0, %v4937
      %v4939 = vpop.f32.mrf.mxu0
      %4940 = vmatprep.mubr.f32.mxu0 0.0
      %4941 = vmatmul.mubr.f32.gmra.mxu0 %v4729
      %v4942 = vpop.f32.mrf.mxu0
      %v4943 = vadd.f32 0.0, %v4942
      %v4944 = vpop.f32.mrf.mxu0
      %4945 = vmatprep.mubr.f32.mxu0 0.0
      %4946 = vmatmul.mubr.f32.gmra.mxu0 %v4732
      %v4947 = vpop.f32.mrf.mxu0
      %v4948 = vadd.f32 0.0, %v4947
      %v4949 = vpop.f32.mrf.mxu0
      %4950 = vmatprep.mubr.f32.mxu0 0.0
      %4951 = vmatmul.mubr.f32.gmra.mxu0 %v4735
      %v4952 = vpop.f32.mrf.mxu0
      %v4953 = vadd.f32 0.0, %v4952
      %v4954 = vpop.f32.mrf.mxu0
      %4955 = vmatprep.mubr.f32.mxu0 0.0
      %4956 = vmatmul.mubr.f32.gmra.mxu0 %v4738
      %v4957 = vpop.f32.mrf.mxu0
      %v4958 = vadd.f32 0.0, %v4957
      %v4959 = vpop.f32.mrf.mxu0
      %4960 = vmatprep.mubr.f32.mxu0 0.0
      %4961 = vmatmul.mubr.f32.gmra.mxu0 %v4741
      %v4962 = vpop.f32.mrf.mxu0
      %v4963 = vadd.f32 0.0, %v4962
      %v4964 = vpop.f32.mrf.mxu0
      %4965 = vmatprep.mubr.f32.mxu0 0.0
      %4966 = vmatmul.mubr.f32.gmra.mxu0 %v4744
      %v4967 = vpop.f32.mrf.mxu0
      %v4968 = vadd.f32 0.0, %v4967
      %v4969 = vpop.f32.mrf.mxu0
      %4970 = vmatprep.mubr.f32.mxu0 0.0
      %4971 = vmatmul.mubr.f32.gmra.mxu0 %v4747
      %v4972 = vpop.f32.mrf.mxu0
      %v4973 = vadd.f32 0.0, %v4972
      %v4974 = vpop.f32.mrf.mxu0
      %4975 = vmatprep.mubr.f32.mxu0 0.0
      %4976 = vmatmul.mubr.f32.gmra.mxu0 %v4750
      %v4977 = vpop.f32.mrf.mxu0
      %v4978 = vadd.f32 0.0, %v4977
      %v4979 = vpop.f32.mrf.mxu0
      %4980 = vmatprep.mubr.f32.mxu0 0.0
      %4981 = vmatmul.mubr.f32.gmra.mxu0 %v4753
      %v4982 = vpop.f32.mrf.mxu0
      %v4983 = vadd.f32 0.0, %v4982
      %v4984 = vpop.f32.mrf.mxu0
      %4985 = vmatprep.mubr.f32.mxu0 0.0
      %4986 = vmatmul.mubr.f32.gmra.mxu0 %v4756
      %v4987 = vpop.f32.mrf.mxu0
      %v4988 = vadd.f32 0.0, %v4987
      %v4989 = vpop.f32.mrf.mxu0
      %4990 = vmatprep.mubr.f32.mxu0 0.0
      %4991 = vmatmul.mubr.f32.gmra.mxu0 %v4759
      %v4992 = vpop.f32.mrf.mxu0
      %v4993 = vadd.f32 0.0, %v4992
      %v4994 = vpop.f32.mrf.mxu0
      %4995 = vmatprep.mubr.f32.mxu0 0.0
      %4996 = vmatmul.mubr.f32.gmra.mxu0 %v4762
      %v4997 = vpop.f32.mrf.mxu0
      %v4998 = vadd.f32 0.0, %v4997
      %v4999 = vpop.f32.mrf.mxu0
      %5000 = vmatprep.mubr.f32.mxu0 0.0
      %5001 = vmatmul.mubr.f32.gmra.mxu0 %v4765
      %v5002 = vpop.f32.mrf.mxu0
      %v5003 = vadd.f32 0.0, %v5002
      %v5004 = vpop.f32.mrf.mxu0
      %5005 = vmatprep.mubr.f32.mxu0 0.0
      %5006 = vmatmul.mubr.f32.gmra.mxu0 %v4768
      %v5007 = vpop.f32.mrf.mxu0
      %v5008 = vadd.f32 0.0, %v5007
      %v5009 = vpop.f32.mrf.mxu0
      %5010 = vmatprep.mubr.f32.mxu0 0.0
      %5011 = vmatmul.mubr.f32.gmra.mxu0 %v4771
      %v5012 = vpop.f32.mrf.mxu0
      %v5013 = vadd.f32 0.0, %v5012
      %v5014 = vpop.f32.mrf.mxu0
      %5015 = vmatprep.mubr.f32.mxu0 0.0
      %5016 = vmatmul.mubr.f32.gmra.mxu0 %v4774
      %v5017 = vpop.f32.mrf.mxu0
      %v5018 = vadd.f32 0.0, %v5017
      %v5019 = vpop.f32.mrf.mxu0
      %5020 = vdwg.mxu0
      %v5021 = vadd.f32 %v4451, %v4843
      %v5022 = vadd.f32 %v4456, %v4848
      %v5023 = vadd.f32 %v4461, %v4853
      %v5024 = vadd.f32 %v4466, %v4858
      %v5025 = vadd.f32 %v4471, %v4863
      %v5026 = vadd.f32 %v4476, %v4868
      %v5027 = vadd.f32 %v4481, %v4873
      %v5028 = vadd.f32 %v4486, %v4878
      %v5029 = vadd.f32 %v4491, %v4883
      %v5030 = vadd.f32 %v4496, %v4888
      %v5031 = vadd.f32 %v4501, %v4893
      %v5032 = vadd.f32 %v4506, %v4898
      %v5033 = vadd.f32 %v4511, %v4903
      %v5034 = vadd.f32 %v4516, %v4908
      %v5035 = vadd.f32 %v4521, %v4913
      %v5036 = vadd.f32 %v4526, %v4918
      %v5037 = vadd.f32 %v4531, %v4923
      %v5038 = vadd.f32 %v4536, %v4928
      %v5039 = vadd.f32 %v4541, %v4933
      %v5040 = vadd.f32 %v4546, %v4938
      %v5041 = vadd.f32 %v4551, %v4943
      %v5042 = vadd.f32 %v4556, %v4948
      %v5043 = vadd.f32 %v4561, %v4953
      %v5044 = vadd.f32 %v4566, %v4958
      %v5045 = vadd.f32 %v4571, %v4963
      %v5046 = vadd.f32 %v4576, %v4968
      %v5047 = vadd.f32 %v4581, %v4973
      %v5048 = vadd.f32 %v4586, %v4978
      %v5049 = vadd.f32 %v4591, %v4983
      %v5050 = vadd.f32 %v4596, %v4988
      %v5051 = vadd.f32 %v4601, %v4993
      %v5052 = vadd.f32 %v4606, %v4998
      %v5053 = vadd.f32 %v4611, %v5003
      %v5054 = vadd.f32 %v4616, %v5008
      %v5055 = vadd.f32 %v4621, %v5013
      %v5056 = vadd.f32 %v4626, %v5018
      %v5057 = vld [vmem:[%s6] sm:$0x1]
      %v5059 = vlaneseq
      %v5060 = vshrl.u32 %v5059, 7
      %v5061 = vsub.s32 0, %v5060
      %v5062 = vrot.slane %v5057, %v5061
      %v5064 = vadd.f32 %v5062, %v5021
      %v5065 = vadd.f32 %v5062, %v5022
      %v5066 = vadd.f32 %v5062, %v5023
      %v5067 = vadd.f32 %v5062, %v5024
      %v5068 = vadd.f32 %v5062, %v5025
      %v5069 = vadd.f32 %v5062, %v5026
      %v5070 = vadd.f32 %v5062, %v5027
      %v5071 = vadd.f32 %v5062, %v5028
      %v5072 = vadd.f32 %v5062, %v5029
      %v5073 = vadd.f32 %v5062, %v5030
      %v5074 = vadd.f32 %v5062, %v5031
      %v5075 = vadd.f32 %v5062, %v5032
      %v5076 = vadd.f32 %v5062, %v5033
      %v5077 = vadd.f32 %v5062, %v5034
      %v5078 = vadd.f32 %v5062, %v5035
      %v5079 = vadd.f32 %v5062, %v5036
      %v5080 = vadd.f32 %v5062, %v5037
      %v5081 = vadd.f32 %v5062, %v5038
      %v5082 = vadd.f32 %v5062, %v5039
      %v5083 = vadd.f32 %v5062, %v5040
      %v5084 = vadd.f32 %v5062, %v5041
      %v5085 = vadd.f32 %v5062, %v5042
      %v5086 = vadd.f32 %v5062, %v5043
      %v5087 = vadd.f32 %v5062, %v5044
      %v5088 = vadd.f32 %v5062, %v5045
      %v5089 = vadd.f32 %v5062, %v5046
      %v5090 = vadd.f32 %v5062, %v5047
      %v5091 = vadd.f32 %v5062, %v5048
      %v5092 = vadd.f32 %v5062, %v5049
      %v5093 = vadd.f32 %v5062, %v5050
      %v5094 = vadd.f32 %v5062, %v5051
      %v5095 = vadd.f32 %v5062, %v5052
      %5128 = vrot.lane.b32.xlu0 %v5023, 104
      %v5129 = vpop.permute.xlu0 %5128
      %5130 = vrot.lane.b32.xlu0 %v5024, 104
      %v5131 = vpop.permute.xlu0 %5130
      %5132 = vrot.lane.b32.xlu0 %v5025, 104
      %v5133 = vpop.permute.xlu0 %5132
      %5134 = vrot.lane.b32.xlu0 %v5026, 104
      %v5135 = vpop.permute.xlu0 %5134
      %5136 = vrot.lane.b32.xlu0 %v5027, 104
      %v5137 = vpop.permute.xlu0 %5136
      %5138 = vrot.lane.b32.xlu0 %v5028, 104
      %v5139 = vpop.permute.xlu0 %5138
      %5140 = vrot.lane.b32.xlu0 %v5029, 104
      %v5141 = vpop.permute.xlu0 %5140
      %5142 = vrot.lane.b32.xlu0 %v5030, 104
      %v5143 = vpop.permute.xlu0 %5142
      %5144 = vrot.lane.b32.xlu0 %v5031, 104
      %v5145 = vpop.permute.xlu0 %5144
      %5146 = vrot.lane.b32.xlu0 %v5032, 104
      %v5147 = vpop.permute.xlu0 %5146
      %5148 = vrot.lane.b32.xlu0 %v5033, 104
      %v5149 = vpop.permute.xlu0 %5148
      %5150 = vrot.lane.b32.xlu0 %v5034, 104
      %v5151 = vpop.permute.xlu0 %5150
      %5152 = vrot.lane.b32.xlu0 %v5035, 104
      %v5153 = vpop.permute.xlu0 %5152
      %5154 = vrot.lane.b32.xlu0 %v5036, 104
      %v5155 = vpop.permute.xlu0 %5154
      %5156 = vrot.lane.b32.xlu0 %v5037, 104
      %v5157 = vpop.permute.xlu0 %5156
      %5158 = vrot.lane.b32.xlu0 %v5038, 104
      %v5159 = vpop.permute.xlu0 %5158
      %5160 = vrot.lane.b32.xlu0 %v5039, 104
      %v5161 = vpop.permute.xlu0 %5160
      %5162 = vrot.lane.b32.xlu0 %v5040, 104
      %v5163 = vpop.permute.xlu0 %5162
      %5164 = vrot.lane.b32.xlu0 %v5041, 104
      %v5165 = vpop.permute.xlu0 %5164
      %5166 = vrot.lane.b32.xlu0 %v5042, 104
      %v5167 = vpop.permute.xlu0 %5166
      %5168 = vrot.lane.b32.xlu0 %v5043, 104
      %v5169 = vpop.permute.xlu0 %5168
      %5170 = vrot.lane.b32.xlu0 %v5044, 104
      %v5171 = vpop.permute.xlu0 %5170
      %5172 = vrot.lane.b32.xlu0 %v5045, 104
      %v5173 = vpop.permute.xlu0 %5172
      %5174 = vrot.lane.b32.xlu0 %v5046, 104
      %v5175 = vpop.permute.xlu0 %5174
      %5176 = vrot.lane.b32.xlu0 %v5047, 104
      %v5177 = vpop.permute.xlu0 %5176
      %5178 = vrot.lane.b32.xlu0 %v5048, 104
      %v5179 = vpop.permute.xlu0 %5178
      %5180 = vrot.lane.b32.xlu0 %v5049, 104
      %v5181 = vpop.permute.xlu0 %5180
      %5182 = vrot.lane.b32.xlu0 %v5050, 104
      %v5183 = vpop.permute.xlu0 %5182
      %5184 = vrot.lane.b32.xlu0 %v5051, 104
      %v5185 = vpop.permute.xlu0 %5184
      %5186 = vrot.lane.b32.xlu0 %v5052, 104
      %v5187 = vpop.permute.xlu0 %5186
      %5188 = vrot.lane.b32.xlu0 %v5053, 104
      %v5189 = vpop.permute.xlu0 %5188
      %5190 = vrot.lane.b32.xlu0 %v5054, 104
      %v5191 = vpop.permute.xlu0 %5190
      %v5224 = vadd.f32 %v5064, %v5129
      %v5225 = vadd.f32 %v5065, %v5131
      %v5226 = vadd.f32 %v5066, %v5133
      %v5227 = vadd.f32 %v5067, %v5135
      %v5228 = vadd.f32 %v5068, %v5137
      %v5229 = vadd.f32 %v5069, %v5139
      %v5230 = vadd.f32 %v5070, %v5141
      %v5231 = vadd.f32 %v5071, %v5143
      %v5232 = vadd.f32 %v5072, %v5145
      %v5233 = vadd.f32 %v5073, %v5147
      %v5234 = vadd.f32 %v5074, %v5149
      %v5235 = vadd.f32 %v5075, %v5151
      %v5236 = vadd.f32 %v5076, %v5153
      %v5237 = vadd.f32 %v5077, %v5155
      %v5238 = vadd.f32 %v5078, %v5157
      %v5239 = vadd.f32 %v5079, %v5159
      %v5240 = vadd.f32 %v5080, %v5161
      %v5241 = vadd.f32 %v5081, %v5163
      %v5242 = vadd.f32 %v5082, %v5165
      %v5243 = vadd.f32 %v5083, %v5167
      %v5244 = vadd.f32 %v5084, %v5169
      %v5245 = vadd.f32 %v5085, %v5171
      %v5246 = vadd.f32 %v5086, %v5173
      %v5247 = vadd.f32 %v5087, %v5175
      %v5248 = vadd.f32 %v5088, %v5177
      %v5249 = vadd.f32 %v5089, %v5179
      %v5250 = vadd.f32 %v5090, %v5181
      %v5251 = vadd.f32 %v5091, %v5183
      %v5252 = vadd.f32 %v5092, %v5185
      %v5253 = vadd.f32 %v5093, %v5187
      %v5254 = vadd.f32 %v5094, %v5189
      %v5255 = vadd.f32 %v5095, %v5191
      %5258 = vrot.lane.b32.xlu0 %v5025, 80
      %v5259 = vpop.permute.xlu0 %5258
      %5260 = vrot.lane.b32.xlu0 %v5026, 80
      %v5261 = vpop.permute.xlu0 %5260
      %5262 = vrot.lane.b32.xlu0 %v5027, 80
      %v5263 = vpop.permute.xlu0 %5262
      %5264 = vrot.lane.b32.xlu0 %v5028, 80
      %v5265 = vpop.permute.xlu0 %5264
      %5266 = vrot.lane.b32.xlu0 %v5029, 80
      %v5267 = vpop.permute.xlu0 %5266
      %5268 = vrot.lane.b32.xlu0 %v5030, 80
      %v5269 = vpop.permute.xlu0 %5268
      %5270 = vrot.lane.b32.xlu0 %v5031, 80
      %v5271 = vpop.permute.xlu0 %5270
      %5272 = vrot.lane.b32.xlu0 %v5032, 80
      %v5273 = vpop.permute.xlu0 %5272
      %5274 = vrot.lane.b32.xlu0 %v5033, 80
      %v5275 = vpop.permute.xlu0 %5274
      %5276 = vrot.lane.b32.xlu0 %v5034, 80
      %v5277 = vpop.permute.xlu0 %5276
      %5278 = vrot.lane.b32.xlu0 %v5035, 80
      %v5279 = vpop.permute.xlu0 %5278
      %5280 = vrot.lane.b32.xlu0 %v5036, 80
      %v5281 = vpop.permute.xlu0 %5280
      %5282 = vrot.lane.b32.xlu0 %v5037, 80
      %v5283 = vpop.permute.xlu0 %5282
      %5284 = vrot.lane.b32.xlu0 %v5038, 80
      %v5285 = vpop.permute.xlu0 %5284
      %5286 = vrot.lane.b32.xlu0 %v5039, 80
      %v5287 = vpop.permute.xlu0 %5286
      %5288 = vrot.lane.b32.xlu0 %v5040, 80
      %v5289 = vpop.permute.xlu0 %5288
      %5290 = vrot.lane.b32.xlu0 %v5041, 80
      %v5291 = vpop.permute.xlu0 %5290
      %5292 = vrot.lane.b32.xlu0 %v5042, 80
      %v5293 = vpop.permute.xlu0 %5292
      %5294 = vrot.lane.b32.xlu0 %v5043, 80
      %v5295 = vpop.permute.xlu0 %5294
      %5296 = vrot.lane.b32.xlu0 %v5044, 80
      %v5297 = vpop.permute.xlu0 %5296
      %5298 = vrot.lane.b32.xlu0 %v5045, 80
      %v5299 = vpop.permute.xlu0 %5298
      %5300 = vrot.lane.b32.xlu0 %v5046, 80
      %v5301 = vpop.permute.xlu0 %5300
      %5302 = vrot.lane.b32.xlu0 %v5047, 80
      %v5303 = vpop.permute.xlu0 %5302
      %5304 = vrot.lane.b32.xlu0 %v5048, 80
      %v5305 = vpop.permute.xlu0 %5304
      %5306 = vrot.lane.b32.xlu0 %v5049, 80
      %v5307 = vpop.permute.xlu0 %5306
      %5308 = vrot.lane.b32.xlu0 %v5050, 80
      %v5309 = vpop.permute.xlu0 %5308
      %5310 = vrot.lane.b32.xlu0 %v5051, 80
      %v5311 = vpop.permute.xlu0 %5310
      %5312 = vrot.lane.b32.xlu0 %v5052, 80
      %v5313 = vpop.permute.xlu0 %5312
      %5314 = vrot.lane.b32.xlu0 %v5053, 80
      %v5315 = vpop.permute.xlu0 %5314
      %5316 = vrot.lane.b32.xlu0 %v5054, 80
      %v5317 = vpop.permute.xlu0 %5316
      %5318 = vrot.lane.b32.xlu0 %v5055, 80
      %v5319 = vpop.permute.xlu0 %5318
      %5320 = vrot.lane.b32.xlu0 %v5056, 80
      %v5321 = vpop.permute.xlu0 %5320
      %v5354 = vadd.f32 %v5224, %v5259
      %v5355 = vadd.f32 %v5225, %v5261
      %v5356 = vadd.f32 %v5226, %v5263
      %v5357 = vadd.f32 %v5227, %v5265
      %v5358 = vadd.f32 %v5228, %v5267
      %v5359 = vadd.f32 %v5229, %v5269
      %v5360 = vadd.f32 %v5230, %v5271
      %v5361 = vadd.f32 %v5231, %v5273
      %v5362 = vadd.f32 %v5232, %v5275
      %v5363 = vadd.f32 %v5233, %v5277
      %v5364 = vadd.f32 %v5234, %v5279
      %v5365 = vadd.f32 %v5235, %v5281
      %v5366 = vadd.f32 %v5236, %v5283
      %v5367 = vadd.f32 %v5237, %v5285
      %v5368 = vadd.f32 %v5238, %v5287
      %v5369 = vadd.f32 %v5239, %v5289
      %v5370 = vadd.f32 %v5240, %v5291
      %v5371 = vadd.f32 %v5241, %v5293
      %v5372 = vadd.f32 %v5242, %v5295
      %v5373 = vadd.f32 %v5243, %v5297
      %v5374 = vadd.f32 %v5244, %v5299
      %v5375 = vadd.f32 %v5245, %v5301
      %v5376 = vadd.f32 %v5246, %v5303
      %v5377 = vadd.f32 %v5247, %v5305
      %v5378 = vadd.f32 %v5248, %v5307
      %v5379 = vadd.f32 %v5249, %v5309
      %v5380 = vadd.f32 %v5250, %v5311
      %v5381 = vadd.f32 %v5251, %v5313
      %v5382 = vadd.f32 %v5252, %v5315
      %v5383 = vadd.f32 %v5253, %v5317
      %v5384 = vadd.f32 %v5254, %v5319
      %v5385 = vadd.f32 %v5255, %v5321
      %vm5386 = vcmask 195584
      %5387 = vst.msk [vmem:[#allocation4] sm:$0xff] %vm5386, 0.0
      %5388 = vst.msk [vmem:[#allocation4 + $0x8] sm:$0xff] %vm5386, 0.0
      %vm5389 = vcmask 189440
      %5390 = vst.msk [vmem:[#allocation4 + $0x10] sm:$0x3] %vm5389, 0.0
      %s5391 = scalar_lea.vmem [#allocation4], 408
      %5392 = vst.msk [vmem:[%s5391] sm:$0xff] %vm5386, 0.0
      %5393 = vst.msk [vmem:[%s5391 + $0x8] sm:$0xff] %vm5386, 0.0
      %5394 = vst.msk [vmem:[%s5391 + $0x10] sm:$0x3] %vm5389, 0.0
      %s5395 = scalar_lea.vmem [#allocation4], 24
      %vm5396 = vcmask 188416
      %5397 = vst.msk [vmem:[%s5395] sm:$0x1] %vm5396, 0.0
      %5398 = vst.msk [vmem:[%s5395 + $0x18] sm:$0x1] %vm5396, 0.0
      %5399 = vst.msk [vmem:[%s5395 + $0x30] sm:$0x1] %vm5396, 0.0
      %5400 = vst.msk [vmem:[%s5395 + $0x48] sm:$0x1] %vm5396, 0.0
      %5401 = vst.msk [vmem:[%s5395 + $0x60] sm:$0x1] %vm5396, 0.0
      %5402 = vst.msk [vmem:[%s5395 + $0x78] sm:$0x1] %vm5396, 0.0
      %5403 = vst.msk [vmem:[%s5395 + $0x90] sm:$0x1] %vm5396, 0.0
      %5404 = vst.msk [vmem:[%s5395 + $0xa8] sm:$0x1] %vm5396, 0.0
      %5405 = vst.msk [vmem:[%s5395 + $0xc0] sm:$0x1] %vm5396, 0.0
      %5406 = vst.msk [vmem:[%s5395 + $0xd8] sm:$0x1] %vm5396, 0.0
      %5407 = vst.msk [vmem:[%s5395 + $0xf0] sm:$0x1] %vm5396, 0.0
      %5408 = vst.msk [vmem:[%s5395 + $0x108] sm:$0x1] %vm5396, 0.0
      %5409 = vst.msk [vmem:[%s5395 + $0x120] sm:$0x1] %vm5396, 0.0
      %5410 = vst.msk [vmem:[%s5395 + $0x138] sm:$0x1] %vm5396, 0.0
      %5411 = vst.msk [vmem:[%s5395 + $0x150] sm:$0x1] %vm5396, 0.0
      %5412 = vst.msk [vmem:[%s5395 + $0x168] sm:$0x1] %vm5396, 0.0
      %5413 = vst.msk [vmem:[%s5395 + $0x11] sm:$0x1] %vm5396, 0.0
      %5414 = vst.msk [vmem:[%s5395 + $0x29] sm:$0x1] %vm5396, 0.0
      %5415 = vst.msk [vmem:[%s5395 + $0x41] sm:$0x1] %vm5396, 0.0
      %5416 = vst.msk [vmem:[%s5395 + $0x59] sm:$0x1] %vm5396, 0.0
      %5417 = vst.msk [vmem:[%s5395 + $0x71] sm:$0x1] %vm5396, 0.0
      %5418 = vst.msk [vmem:[%s5395 + $0x89] sm:$0x1] %vm5396, 0.0
      %5419 = vst.msk [vmem:[%s5395 + $0xa1] sm:$0x1] %vm5396, 0.0
      %5420 = vst.msk [vmem:[%s5395 + $0xb9] sm:$0x1] %vm5396, 0.0
      %5421 = vst.msk [vmem:[%s5395 + $0xd1] sm:$0x1] %vm5396, 0.0
      %5422 = vst.msk [vmem:[%s5395 + $0xe9] sm:$0x1] %vm5396, 0.0
      %5423 = vst.msk [vmem:[%s5395 + $0x101] sm:$0x1] %vm5396, 0.0
      %5424 = vst.msk [vmem:[%s5395 + $0x119] sm:$0x1] %vm5396, 0.0
      %5425 = vst.msk [vmem:[%s5395 + $0x131] sm:$0x1] %vm5396, 0.0
      %5426 = vst.msk [vmem:[%s5395 + $0x149] sm:$0x1] %vm5396, 0.0
      %5427 = vst.msk [vmem:[%s5395 + $0x161] sm:$0x1] %vm5396, 0.0
      %5428 = vst.msk [vmem:[%s5395 + $0x179] sm:$0x1] %vm5396, 0.0
      %5429 = vst.msk [vmem:[%s5395 + $0x1] sm:$0xff] %vm5386, %v5354
      %5430 = vst.msk [vmem:[%s5395 + $0x9] sm:$0xff] %vm5386, %v5355
      %5431 = vst.msk [vmem:[%s5395 + $0x19] sm:$0xff] %vm5386, %v5356
      %5432 = vst.msk [vmem:[%s5395 + $0x21] sm:$0xff] %vm5386, %v5357
      %5433 = vst.msk [vmem:[%s5395 + $0x31] sm:$0xff] %vm5386, %v5358
      %5434 = vst.msk [vmem:[%s5395 + $0x39] sm:$0xff] %vm5386, %v5359
      %5435 = vst.msk [vmem:[%s5395 + $0x49] sm:$0xff] %vm5386, %v5360
      %5436 = vst.msk [vmem:[%s5395 + $0x51] sm:$0xff] %vm5386, %v5361
      %5437 = vst.msk [vmem:[%s5395 + $0x61] sm:$0xff] %vm5386, %v5362
      %5438 = vst.msk [vmem:[%s5395 + $0x69] sm:$0xff] %vm5386, %v5363
      %5439 = vst.msk [vmem:[%s5395 + $0x79] sm:$0xff] %vm5386, %v5364
      %5440 = vst.msk [vmem:[%s5395 + $0x81] sm:$0xff] %vm5386, %v5365
      %5441 = vst.msk [vmem:[%s5395 + $0x91] sm:$0xff] %vm5386, %v5366
      %5442 = vst.msk [vmem:[%s5395 + $0x99] sm:$0xff] %vm5386, %v5367
      %5443 = vst.msk [vmem:[%s5395 + $0xa9] sm:$0xff] %vm5386, %v5368
      %5444 = vst.msk [vmem:[%s5395 + $0xb1] sm:$0xff] %vm5386, %v5369
      %5445 = vst.msk [vmem:[%s5395 + $0xc1] sm:$0xff] %vm5386, %v5370
      %5446 = vst.msk [vmem:[%s5395 + $0xc9] sm:$0xff] %vm5386, %v5371
      %5447 = vst.msk [vmem:[%s5395 + $0xd9] sm:$0xff] %vm5386, %v5372
      %5448 = vst.msk [vmem:[%s5395 + $0xe1] sm:$0xff] %vm5386, %v5373
      %5449 = vst.msk [vmem:[%s5395 + $0xf1] sm:$0xff] %vm5386, %v5374
      %5450 = vst.msk [vmem:[%s5395 + $0xf9] sm:$0xff] %vm5386, %v5375
      %5451 = vst.msk [vmem:[%s5395 + $0x109] sm:$0xff] %vm5386, %v5376
      %5452 = vst.msk [vmem:[%s5395 + $0x111] sm:$0xff] %vm5386, %v5377
      %5453 = vst.msk [vmem:[%s5395 + $0x121] sm:$0xff] %vm5386, %v5378
      %5454 = vst.msk [vmem:[%s5395 + $0x129] sm:$0xff] %vm5386, %v5379
      %5455 = vst.msk [vmem:[%s5395 + $0x139] sm:$0xff] %vm5386, %v5380
      %5456 = vst.msk [vmem:[%s5395 + $0x141] sm:$0xff] %vm5386, %v5381
      %5457 = vst.msk [vmem:[%s5395 + $0x151] sm:$0xff] %vm5386, %v5382
      %5458 = vst.msk [vmem:[%s5395 + $0x159] sm:$0xff] %vm5386, %v5383
      %5459 = vst.msk [vmem:[%s5395 + $0x169] sm:$0xff] %vm5386, %v5384
      %5460 = vst.msk [vmem:[%s5395 + $0x171] sm:$0xff] %vm5386, %v5385
      %v5461 = vld [vmem:[#allocation4] sm:$0xff]
      %v5462 = vld [vmem:[#allocation4 + $0x8] sm:$0xff]
      %v5463 = vld [vmem:[#allocation4 + $0x18] sm:$0xff]
      %v5464 = vld [vmem:[#allocation4 + $0x20] sm:$0xff]
      %v5465 = vld [vmem:[#allocation4 + $0x30] sm:$0xff]
      %v5466 = vld [vmem:[#allocation4 + $0x38] sm:$0xff]
      %v5467 = vld [vmem:[#allocation4 + $0x48] sm:$0xff]
      %v5468 = vld [vmem:[#allocation4 + $0x50] sm:$0xff]
      %v5469 = vld [vmem:[#allocation4 + $0x60] sm:$0xff]
      %v5470 = vld [vmem:[#allocation4 + $0x68] sm:$0xff]
      %v5471 = vld [vmem:[#allocation4 + $0x78] sm:$0xff]
      %v5472 = vld [vmem:[#allocation4 + $0x80] sm:$0xff]
      %v5473 = vld [vmem:[#allocation4 + $0x90] sm:$0xff]
      %v5474 = vld [vmem:[#allocation4 + $0x98] sm:$0xff]
      %v5475 = vld [vmem:[#allocation4 + $0xa8] sm:$0xff]
      %v5476 = vld [vmem:[#allocation4 + $0xb0] sm:$0xff]
      %v5477 = vld [vmem:[#allocation4 + $0xc0] sm:$0xff]
      %v5478 = vld [vmem:[#allocation4 + $0xc8] sm:$0xff]
      %v5479 = vld [vmem:[#allocation4 + $0xd8] sm:$0xff]
      %v5480 = vld [vmem:[#allocation4 + $0xe0] sm:$0xff]
      %v5481 = vld [vmem:[#allocation4 + $0xf0] sm:$0xff]
      %v5482 = vld [vmem:[#allocation4 + $0xf8] sm:$0xff]
      %v5483 = vld [vmem:[#allocation4 + $0x108] sm:$0xff]
      %v5484 = vld [vmem:[#allocation4 + $0x110] sm:$0xff]
      %v5485 = vld [vmem:[#allocation4 + $0x120] sm:$0xff]
      %v5486 = vld [vmem:[#allocation4 + $0x128] sm:$0xff]
      %v5487 = vld [vmem:[#allocation4 + $0x138] sm:$0xff]
      %v5488 = vld [vmem:[#allocation4 + $0x140] sm:$0xff]
      %v5489 = vld [vmem:[#allocation4 + $0x150] sm:$0xff]
      %v5490 = vld [vmem:[#allocation4 + $0x158] sm:$0xff]
      %v5491 = vld [vmem:[#allocation4 + $0x168] sm:$0xff]
      %v5492 = vld [vmem:[#allocation4 + $0x170] sm:$0xff]
      %v5493 = vld [vmem:[#allocation4 + $0x180] sm:$0xff]
      %v5494 = vld [vmem:[#allocation4 + $0x188] sm:$0xff]
      %v5495 = vld [vmem:[#allocation4 + $0x198] sm:$0xff]
      %v5496 = vld [vmem:[#allocation4 + $0x1a0] sm:$0xff]
      %v5497 = vld [vmem:[%s7] sm:$0xff]
      %v5498 = vld [vmem:[%s7 + $0x8] sm:$0xff]
      %v5499 = vld [vmem:[%s7 + $0x10] sm:$0xff]
      %v5500 = vld [vmem:[#allocation4 + $0x1] sm:$0xff]
      %v5501 = vld [vmem:[#allocation4 + $0x9] sm:$0xff]
      %v5502 = vld [vmem:[#allocation4 + $0x19] sm:$0xff]
      %v5503 = vld [vmem:[#allocation4 + $0x21] sm:$0xff]
      %v5504 = vld [vmem:[#allocation4 + $0x31] sm:$0xff]
      %v5505 = vld [vmem:[#allocation4 + $0x39] sm:$0xff]
      %v5506 = vld [vmem:[#allocation4 + $0x49] sm:$0xff]
      %v5507 = vld [vmem:[#allocation4 + $0x51] sm:$0xff]
      %v5508 = vld [vmem:[#allocation4 + $0x61] sm:$0xff]
      %v5509 = vld [vmem:[#allocation4 + $0x69] sm:$0xff]
      %v5510 = vld [vmem:[#allocation4 + $0x79] sm:$0xff]
      %v5511 = vld [vmem:[#allocation4 + $0x81] sm:$0xff]
      %v5512 = vld [vmem:[#allocation4 + $0x91] sm:$0xff]
      %v5513 = vld [vmem:[#allocation4 + $0x99] sm:$0xff]
      %v5514 = vld [vmem:[#allocation4 + $0xa9] sm:$0xff]
      %v5515 = vld [vmem:[#allocation4 + $0xb1] sm:$0xff]
      %v5516 = vld [vmem:[#allocation4 + $0xc1] sm:$0xff]
      %v5517 = vld [vmem:[#allocation4 + $0xc9] sm:$0xff]
      %v5518 = vld [vmem:[#allocation4 + $0xd9] sm:$0xff]
      %v5519 = vld [vmem:[#allocation4 + $0xe1] sm:$0xff]
      %v5520 = vld [vmem:[#allocation4 + $0xf1] sm:$0xff]
      %v5521 = vld [vmem:[#allocation4 + $0xf9] sm:$0xff]
      %v5522 = vld [vmem:[#allocation4 + $0x109] sm:$0xff]
      %v5523 = vld [vmem:[#allocation4 + $0x111] sm:$0xff]
      %v5524 = vld [vmem:[#allocation4 + $0x121] sm:$0xff]
      %v5525 = vld [vmem:[#allocation4 + $0x129] sm:$0xff]
      %v5526 = vld [vmem:[#allocation4 + $0x139] sm:$0xff]
      %v5527 = vld [vmem:[#allocation4 + $0x141] sm:$0xff]
      %v5528 = vld [vmem:[#allocation4 + $0x151] sm:$0xff]
      %v5529 = vld [vmem:[#allocation4 + $0x159] sm:$0xff]
      %v5530 = vld [vmem:[#allocation4 + $0x169] sm:$0xff]
      %v5531 = vld [vmem:[#allocation4 + $0x171] sm:$0xff]
      %v5532 = vld [vmem:[#allocation4 + $0x181] sm:$0xff]
      %v5533 = vld [vmem:[#allocation4 + $0x189] sm:$0xff]
      %v5534 = vld [vmem:[#allocation4 + $0x199] sm:$0xff]
      %v5535 = vld [vmem:[#allocation4 + $0x1a1] sm:$0xff]
      %s5536 = scalar_lea.vmem %s7, 24
      %v5537 = vld [vmem:[%s5536] sm:$0xff]
      %v5538 = vld [vmem:[%s5536 + $0x8] sm:$0xff]
      %v5539 = vld [vmem:[%s5536 + $0x10] sm:$0xff]
      %v5541 = vsel %vm5386, %v5500, 0
      %v5544 = vsel %vm5386, %v5501, 0
      %v5547 = vsel %vm5386, %v5502, 0
      %v5550 = vsel %vm5386, %v5503, 0
      %v5553 = vsel %vm5386, %v5504, 0
      %v5556 = vsel %vm5386, %v5505, 0
      %v5559 = vsel %vm5386, %v5506, 0
      %v5562 = vsel %vm5386, %v5507, 0
      %v5565 = vsel %vm5386, %v5508, 0
      %v5568 = vsel %vm5386, %v5509, 0
      %v5571 = vsel %vm5386, %v5510, 0
      %v5574 = vsel %vm5386, %v5511, 0
      %v5577 = vsel %vm5386, %v5512, 0
      %v5580 = vsel %vm5386, %v5513, 0
      %v5583 = vsel %vm5386, %v5514, 0
      %v5586 = vsel %vm5386, %v5515, 0
      %v5589 = vsel %vm5386, %v5516, 0
      %v5592 = vsel %vm5386, %v5517, 0
      %v5595 = vsel %vm5386, %v5518, 0
      %v5598 = vsel %vm5386, %v5519, 0
      %v5601 = vsel %vm5386, %v5520, 0
      %v5604 = vsel %vm5386, %v5521, 0
      %v5607 = vsel %vm5386, %v5522, 0
      %v5610 = vsel %vm5386, %v5523, 0
      %v5613 = vsel %vm5386, %v5524, 0
      %v5616 = vsel %vm5386, %v5525, 0
      %v5619 = vsel %vm5386, %v5526, 0
      %v5622 = vsel %vm5386, %v5527, 0
      %v5625 = vsel %vm5386, %v5528, 0
      %v5628 = vsel %vm5386, %v5529, 0
      %v5631 = vsel %vm5386, %v5530, 0
      %v5634 = vsel %vm5386, %v5531, 0
      %v5637 = vsel %vm5386, %v5532, 0
      %v5640 = vsel %vm5386, %v5533, 0
      %v5643 = vsel %vm5386, %v5534, 0
      %v5646 = vsel %vm5386, %v5535, 0
      %5648 = vmatprep.subr.mxu0 0.0
      %5649 = vmatpush1.msra.mxu0 0.0
      %5650 = vmatprep.subr.mxu0 0.0
      %5651 = vmatpush1.msra.mxu0 0.0
      %5652 = vmatprep.subr.mxu0 0.0
      %5653 = vmatpush1.msra.mxu0 0.0
      %5654 = vmatprep.subr.mxu0 0.0
      %5655 = vmatpush1.msra.mxu0 0.0
      %5656 = vmatprep.subr.mxu0 0.0
      %5657 = vmatpush1.msra.mxu0 0.0
      %5658 = vmatprep.subr.mxu0 0.0
      %5659 = vmatpush1.msra.mxu0 0.0
      %5660 = vmatprep.subr.mxu0 0.0
      %5661 = vmatpush1.msra.mxu0 0.0
      %5662 = vmatprep.subr.mxu0 0.0
      %5663 = vmatpush1.msra.mxu0 0.0
      %5664 = vmatprep.subr.mxu0 0.0
      %5665 = vmatpush1.msra.mxu0 0.0
      %5666 = vmatprep.subr.mxu0 0.0
      %5667 = vmatpush1.msra.mxu0 0.0
      %5668 = vmatprep.subr.mxu0 0.0
      %5669 = vmatpush1.msra.mxu0 0.0
      %5670 = vmatprep.subr.mxu0 0.0
      %5671 = vmatpush1.msra.mxu0 0.0
      %5672 = vmatprep.subr.mxu0 0.0
      %5673 = vmatpush1.msra.mxu0 0.0
      %5674 = vmatprep.subr.mxu0 0.0
      %5675 = vmatpush1.msra.mxu0 %v5539
      %5676 = vmatprep.subr.mxu0 0.0
      %5677 = vmatpush1.msra.mxu0 %v5538
      %5678 = vmatprep.subr.mxu0 0.0
      %5679 = vmatpush1.msra.mxu0 %v5537
      %5680 = vmatprep.subr.mxu0 0.0
      %5681 = vmatpush2.msra.mxu0 0.0
      %5682 = vmatprep.subr.mxu0 0.0
      %5683 = vmatpush2.msra.mxu0 0.0
      %5684 = vmatprep.subr.mxu0 0.0
      %5685 = vmatpush2.msra.mxu0 0.0
      %5686 = vmatprep.subr.mxu0 0.0
      %5687 = vmatpush2.msra.mxu0 0.0
      %5688 = vmatprep.subr.mxu0 0.0
      %5689 = vmatpush2.msra.mxu0 0.0
      %5690 = vmatprep.subr.mxu0 0.0
      %5691 = vmatpush2.msra.mxu0 0.0
      %5692 = vmatprep.subr.mxu0 0.0
      %5693 = vmatpush2.msra.mxu0 0.0
      %5694 = vmatprep.subr.mxu0 0.0
      %5695 = vmatpush2.msra.mxu0 0.0
      %5696 = vmatprep.subr.mxu0 0.0
      %5697 = vmatpush2.msra.mxu0 0.0
      %5698 = vmatprep.subr.mxu0 0.0
      %5699 = vmatpush2.msra.mxu0 0.0
      %5700 = vmatprep.subr.mxu0 0.0
      %5701 = vmatpush2.msra.mxu0 0.0
      %5702 = vmatprep.subr.mxu0 0.0
      %5703 = vmatpush2.msra.mxu0 0.0
      %5704 = vmatprep.subr.mxu0 0.0
      %5705 = vmatpush2.msra.mxu0 0.0
      %5706 = vmatprep.subr.mxu0 0.0
      %5707 = vmatpush2.msra.mxu0 0.0
      %5708 = vmatprep.subr.mxu0 0.0
      %5709 = vmatpush2.msra.mxu0 0.0
      %5710 = vmatprep.subr.mxu0 0.0
      %5711 = vmatpush2.msra.mxu0 0.0
      %5712 = vmatprep.mubr.f32.mxu0 0.0
      %5713 = vmatmul.mubr.f32.gmra.mxu0 %v5541
      %v5714 = vpop.f32.mrf.mxu0
      %v5715 = vadd.f32 0.0, %v5714
      %v5716 = vpop.f32.mrf.mxu0
      %5717 = vmatprep.mubr.f32.mxu0 0.0
      %5718 = vmatmul.mubr.f32.gmra.mxu0 %v5544
      %v5719 = vpop.f32.mrf.mxu0
      %v5720 = vadd.f32 0.0, %v5719
      %v5721 = vpop.f32.mrf.mxu0
      %5722 = vmatprep.mubr.f32.mxu0 0.0
      %5723 = vmatmul.mubr.f32.gmra.mxu0 %v5547
      %v5724 = vpop.f32.mrf.mxu0
      %v5725 = vadd.f32 0.0, %v5724
      %v5726 = vpop.f32.mrf.mxu0
      %5727 = vmatprep.mubr.f32.mxu0 0.0
      %5728 = vmatmul.mubr.f32.gmra.mxu0 %v5550
      %v5729 = vpop.f32.mrf.mxu0
      %v5730 = vadd.f32 0.0, %v5729
      %v5731 = vpop.f32.mrf.mxu0
      %5732 = vmatprep.mubr.f32.mxu0 0.0
      %5733 = vmatmul.mubr.f32.gmra.mxu0 %v5553
      %v5734 = vpop.f32.mrf.mxu0
      %v5735 = vadd.f32 0.0, %v5734
      %v5736 = vpop.f32.mrf.mxu0
      %5737 = vmatprep.mubr.f32.mxu0 0.0
      %5738 = vmatmul.mubr.f32.gmra.mxu0 %v5556
      %v5739 = vpop.f32.mrf.mxu0
      %v5740 = vadd.f32 0.0, %v5739
      %v5741 = vpop.f32.mrf.mxu0
      %5742 = vmatprep.mubr.f32.mxu0 0.0
      %5743 = vmatmul.mubr.f32.gmra.mxu0 %v5559
      %v5744 = vpop.f32.mrf.mxu0
      %v5745 = vadd.f32 0.0, %v5744
      %v5746 = vpop.f32.mrf.mxu0
      %5747 = vmatprep.mubr.f32.mxu0 0.0
      %5748 = vmatmul.mubr.f32.gmra.mxu0 %v5562
      %v5749 = vpop.f32.mrf.mxu0
      %v5750 = vadd.f32 0.0, %v5749
      %v5751 = vpop.f32.mrf.mxu0
      %5752 = vmatprep.mubr.f32.mxu0 0.0
      %5753 = vmatmul.mubr.f32.gmra.mxu0 %v5565
      %v5754 = vpop.f32.mrf.mxu0
      %v5755 = vadd.f32 0.0, %v5754
      %v5756 = vpop.f32.mrf.mxu0
      %5757 = vmatprep.mubr.f32.mxu0 0.0
      %5758 = vmatmul.mubr.f32.gmra.mxu0 %v5568
      %v5759 = vpop.f32.mrf.mxu0
      %v5760 = vadd.f32 0.0, %v5759
      %v5761 = vpop.f32.mrf.mxu0
      %5762 = vmatprep.mubr.f32.mxu0 0.0
      %5763 = vmatmul.mubr.f32.gmra.mxu0 %v5571
      %v5764 = vpop.f32.mrf.mxu0
      %v5765 = vadd.f32 0.0, %v5764
      %v5766 = vpop.f32.mrf.mxu0
      %5767 = vmatprep.mubr.f32.mxu0 0.0
      %5768 = vmatmul.mubr.f32.gmra.mxu0 %v5574
      %v5769 = vpop.f32.mrf.mxu0
      %v5770 = vadd.f32 0.0, %v5769
      %v5771 = vpop.f32.mrf.mxu0
      %5772 = vmatprep.mubr.f32.mxu0 0.0
      %5773 = vmatmul.mubr.f32.gmra.mxu0 %v5577
      %v5774 = vpop.f32.mrf.mxu0
      %v5775 = vadd.f32 0.0, %v5774
      %v5776 = vpop.f32.mrf.mxu0
      %5777 = vmatprep.mubr.f32.mxu0 0.0
      %5778 = vmatmul.mubr.f32.gmra.mxu0 %v5580
      %v5779 = vpop.f32.mrf.mxu0
      %v5780 = vadd.f32 0.0, %v5779
      %v5781 = vpop.f32.mrf.mxu0
      %5782 = vmatprep.mubr.f32.mxu0 0.0
      %5783 = vmatmul.mubr.f32.gmra.mxu0 %v5583
      %v5784 = vpop.f32.mrf.mxu0
      %v5785 = vadd.f32 0.0, %v5784
      %v5786 = vpop.f32.mrf.mxu0
      %5787 = vmatprep.mubr.f32.mxu0 0.0
      %5788 = vmatmul.mubr.f32.gmra.mxu0 %v5586
      %v5789 = vpop.f32.mrf.mxu0
      %v5790 = vadd.f32 0.0, %v5789
      %v5791 = vpop.f32.mrf.mxu0
      %5792 = vmatprep.mubr.f32.mxu0 0.0
      %5793 = vmatmul.mubr.f32.gmra.mxu0 %v5589
      %v5794 = vpop.f32.mrf.mxu0
      %v5795 = vadd.f32 0.0, %v5794
      %v5796 = vpop.f32.mrf.mxu0
      %5797 = vmatprep.mubr.f32.mxu0 0.0
      %5798 = vmatmul.mubr.f32.gmra.mxu0 %v5592
      %v5799 = vpop.f32.mrf.mxu0
      %v5800 = vadd.f32 0.0, %v5799
      %v5801 = vpop.f32.mrf.mxu0
      %5802 = vmatprep.mubr.f32.mxu0 0.0
      %5803 = vmatmul.mubr.f32.gmra.mxu0 %v5595
      %v5804 = vpop.f32.mrf.mxu0
      %v5805 = vadd.f32 0.0, %v5804
      %v5806 = vpop.f32.mrf.mxu0
      %5807 = vmatprep.mubr.f32.mxu0 0.0
      %5808 = vmatmul.mubr.f32.gmra.mxu0 %v5598
      %v5809 = vpop.f32.mrf.mxu0
      %v5810 = vadd.f32 0.0, %v5809
      %v5811 = vpop.f32.mrf.mxu0
      %5812 = vmatprep.mubr.f32.mxu0 0.0
      %5813 = vmatmul.mubr.f32.gmra.mxu0 %v5601
      %v5814 = vpop.f32.mrf.mxu0
      %v5815 = vadd.f32 0.0, %v5814
      %v5816 = vpop.f32.mrf.mxu0
      %5817 = vmatprep.mubr.f32.mxu0 0.0
      %5818 = vmatmul.mubr.f32.gmra.mxu0 %v5604
      %v5819 = vpop.f32.mrf.mxu0
      %v5820 = vadd.f32 0.0, %v5819
      %v5821 = vpop.f32.mrf.mxu0
      %5822 = vmatprep.mubr.f32.mxu0 0.0
      %5823 = vmatmul.mubr.f32.gmra.mxu0 %v5607
      %v5824 = vpop.f32.mrf.mxu0
      %v5825 = vadd.f32 0.0, %v5824
      %v5826 = vpop.f32.mrf.mxu0
      %5827 = vmatprep.mubr.f32.mxu0 0.0
      %5828 = vmatmul.mubr.f32.gmra.mxu0 %v5610
      %v5829 = vpop.f32.mrf.mxu0
      %v5830 = vadd.f32 0.0, %v5829
      %v5831 = vpop.f32.mrf.mxu0
      %5832 = vmatprep.mubr.f32.mxu0 0.0
      %5833 = vmatmul.mubr.f32.gmra.mxu0 %v5613
      %v5834 = vpop.f32.mrf.mxu0
      %v5835 = vadd.f32 0.0, %v5834
      %v5836 = vpop.f32.mrf.mxu0
      %5837 = vmatprep.mubr.f32.mxu0 0.0
      %5838 = vmatmul.mubr.f32.gmra.mxu0 %v5616
      %v5839 = vpop.f32.mrf.mxu0
      %v5840 = vadd.f32 0.0, %v5839
      %v5841 = vpop.f32.mrf.mxu0
      %5842 = vmatprep.mubr.f32.mxu0 0.0
      %5843 = vmatmul.mubr.f32.gmra.mxu0 %v5619
      %v5844 = vpop.f32.mrf.mxu0
      %v5845 = vadd.f32 0.0, %v5844
      %v5846 = vpop.f32.mrf.mxu0
      %5847 = vmatprep.mubr.f32.mxu0 0.0
      %5848 = vmatmul.mubr.f32.gmra.mxu0 %v5622
      %v5849 = vpop.f32.mrf.mxu0
      %v5850 = vadd.f32 0.0, %v5849
      %v5851 = vpop.f32.mrf.mxu0
      %5852 = vmatprep.mubr.f32.mxu0 0.0
      %5853 = vmatmul.mubr.f32.gmra.mxu0 %v5625
      %v5854 = vpop.f32.mrf.mxu0
      %v5855 = vadd.f32 0.0, %v5854
      %v5856 = vpop.f32.mrf.mxu0
      %5857 = vmatprep.mubr.f32.mxu0 0.0
      %5858 = vmatmul.mubr.f32.gmra.mxu0 %v5628
      %v5859 = vpop.f32.mrf.mxu0
      %v5860 = vadd.f32 0.0, %v5859
      %v5861 = vpop.f32.mrf.mxu0
      %5862 = vmatprep.mubr.f32.mxu0 0.0
      %5863 = vmatmul.mubr.f32.gmra.mxu0 %v5631
      %v5864 = vpop.f32.mrf.mxu0
      %v5865 = vadd.f32 0.0, %v5864
      %v5866 = vpop.f32.mrf.mxu0
      %5867 = vmatprep.mubr.f32.mxu0 0.0
      %5868 = vmatmul.mubr.f32.gmra.mxu0 %v5634
      %v5869 = vpop.f32.mrf.mxu0
      %v5870 = vadd.f32 0.0, %v5869
      %v5871 = vpop.f32.mrf.mxu0
      %5872 = vmatprep.mubr.f32.mxu0 0.0
      %5873 = vmatmul.mubr.f32.gmra.mxu0 %v5637
      %v5874 = vpop.f32.mrf.mxu0
      %v5875 = vadd.f32 0.0, %v5874
      %v5876 = vpop.f32.mrf.mxu0
      %5877 = vmatprep.mubr.f32.mxu0 0.0
      %5878 = vmatmul.mubr.f32.gmra.mxu0 %v5640
      %v5879 = vpop.f32.mrf.mxu0
      %v5880 = vadd.f32 0.0, %v5879
      %v5881 = vpop.f32.mrf.mxu0
      %5882 = vmatprep.mubr.f32.mxu0 0.0
      %5883 = vmatmul.mubr.f32.gmra.mxu0 %v5643
      %v5884 = vpop.f32.mrf.mxu0
      %v5885 = vadd.f32 0.0, %v5884
      %v5886 = vpop.f32.mrf.mxu0
      %5887 = vmatprep.mubr.f32.mxu0 0.0
      %5888 = vmatmul.mubr.f32.gmra.mxu0 %v5646
      %v5889 = vpop.f32.mrf.mxu0
      %v5890 = vadd.f32 0.0, %v5889
      %v5891 = vpop.f32.mrf.mxu0
      %5892 = vdwg.mxu0
      %v5894 = vsel %vm5386, %v5461, 0
      %v5897 = vsel %vm5386, %v5462, 0
      %v5900 = vsel %vm5386, %v5463, 0
      %v5903 = vsel %vm5386, %v5464, 0
      %v5906 = vsel %vm5386, %v5465, 0
      %v5909 = vsel %vm5386, %v5466, 0
      %v5912 = vsel %vm5386, %v5467, 0
      %v5915 = vsel %vm5386, %v5468, 0
      %v5918 = vsel %vm5386, %v5469, 0
      %v5921 = vsel %vm5386, %v5470, 0
      %v5924 = vsel %vm5386, %v5471, 0
      %v5927 = vsel %vm5386, %v5472, 0
      %v5930 = vsel %vm5386, %v5473, 0
      %v5933 = vsel %vm5386, %v5474, 0
      %v5936 = vsel %vm5386, %v5475, 0
      %v5939 = vsel %vm5386, %v5476, 0
      %v5942 = vsel %vm5386, %v5477, 0
      %v5945 = vsel %vm5386, %v5478, 0
      %v5948 = vsel %vm5386, %v5479, 0
      %v5951 = vsel %vm5386, %v5480, 0
      %v5954 = vsel %vm5386, %v5481, 0
      %v5957 = vsel %vm5386, %v5482, 0
      %v5960 = vsel %vm5386, %v5483, 0
      %v5963 = vsel %vm5386, %v5484, 0
      %v5966 = vsel %vm5386, %v5485, 0
      %v5969 = vsel %vm5386, %v5486, 0
      %v5972 = vsel %vm5386, %v5487, 0
      %v5975 = vsel %vm5386, %v5488, 0
      %v5978 = vsel %vm5386, %v5489, 0
      %v5981 = vsel %vm5386, %v5490, 0
      %v5984 = vsel %vm5386, %v5491, 0
      %v5987 = vsel %vm5386, %v5492, 0
      %v5990 = vsel %vm5386, %v5493, 0
      %v5993 = vsel %vm5386, %v5494, 0
      %v5996 = vsel %vm5386, %v5495, 0
      %v5999 = vsel %vm5386, %v5496, 0
      %6001 = vmatprep.subr.mxu0 0.0
      %6002 = vmatpush1.msra.mxu0 0.0
      %6003 = vmatprep.subr.mxu0 0.0
      %6004 = vmatpush1.msra.mxu0 0.0
      %6005 = vmatprep.subr.mxu0 0.0
      %6006 = vmatpush1.msra.mxu0 0.0
      %6007 = vmatprep.subr.mxu0 0.0
      %6008 = vmatpush1.msra.mxu0 0.0
      %6009 = vmatprep.subr.mxu0 0.0
      %6010 = vmatpush1.msra.mxu0 0.0
      %6011 = vmatprep.subr.mxu0 0.0
      %6012 = vmatpush1.msra.mxu0 0.0
      %6013 = vmatprep.subr.mxu0 0.0
      %6014 = vmatpush1.msra.mxu0 0.0
      %6015 = vmatprep.subr.mxu0 0.0
      %6016 = vmatpush1.msra.mxu0 0.0
      %6017 = vmatprep.subr.mxu0 0.0
      %6018 = vmatpush1.msra.mxu0 0.0
      %6019 = vmatprep.subr.mxu0 0.0
      %6020 = vmatpush1.msra.mxu0 0.0
      %6021 = vmatprep.subr.mxu0 0.0
      %6022 = vmatpush1.msra.mxu0 0.0
      %6023 = vmatprep.subr.mxu0 0.0
      %6024 = vmatpush1.msra.mxu0 0.0
      %6025 = vmatprep.subr.mxu0 0.0
      %6026 = vmatpush1.msra.mxu0 0.0
      %6027 = vmatprep.subr.mxu0 0.0
      %6028 = vmatpush1.msra.mxu0 %v5499
      %6029 = vmatprep.subr.mxu0 0.0
      %6030 = vmatpush1.msra.mxu0 %v5498
      %6031 = vmatprep.subr.mxu0 0.0
      %6032 = vmatpush1.msra.mxu0 %v5497
      %6033 = vmatprep.subr.mxu0 0.0
      %6034 = vmatpush2.msra.mxu0 0.0
      %6035 = vmatprep.subr.mxu0 0.0
      %6036 = vmatpush2.msra.mxu0 0.0
      %6037 = vmatprep.subr.mxu0 0.0
      %6038 = vmatpush2.msra.mxu0 0.0
      %6039 = vmatprep.subr.mxu0 0.0
      %6040 = vmatpush2.msra.mxu0 0.0
      %6041 = vmatprep.subr.mxu0 0.0
      %6042 = vmatpush2.msra.mxu0 0.0
      %6043 = vmatprep.subr.mxu0 0.0
      %6044 = vmatpush2.msra.mxu0 0.0
      %6045 = vmatprep.subr.mxu0 0.0
      %6046 = vmatpush2.msra.mxu0 0.0
      %6047 = vmatprep.subr.mxu0 0.0
      %6048 = vmatpush2.msra.mxu0 0.0
      %6049 = vmatprep.subr.mxu0 0.0
      %6050 = vmatpush2.msra.mxu0 0.0
      %6051 = vmatprep.subr.mxu0 0.0
      %6052 = vmatpush2.msra.mxu0 0.0
      %6053 = vmatprep.subr.mxu0 0.0
      %6054 = vmatpush2.msra.mxu0 0.0
      %6055 = vmatprep.subr.mxu0 0.0
      %6056 = vmatpush2.msra.mxu0 0.0
      %6057 = vmatprep.subr.mxu0 0.0
      %6058 = vmatpush2.msra.mxu0 0.0
      %6059 = vmatprep.subr.mxu0 0.0
      %6060 = vmatpush2.msra.mxu0 0.0
      %6061 = vmatprep.subr.mxu0 0.0
      %6062 = vmatpush2.msra.mxu0 0.0
      %6063 = vmatprep.subr.mxu0 0.0
      %6064 = vmatpush2.msra.mxu0 0.0
      %6065 = vmatprep.mubr.f32.mxu0 0.0
      %6066 = vmatmul.mubr.f32.gmra.mxu0 %v5894
      %v6067 = vpop.f32.mrf.mxu0
      %v6068 = vadd.f32 %v5715, %v6067
      %v6069 = vpop.f32.mrf.mxu0
      %6070 = vmatprep.mubr.f32.mxu0 0.0
      %6071 = vmatmul.mubr.f32.gmra.mxu0 %v5897
      %v6072 = vpop.f32.mrf.mxu0
      %v6073 = vadd.f32 %v5720, %v6072
      %v6074 = vpop.f32.mrf.mxu0
      %6075 = vmatprep.mubr.f32.mxu0 0.0
      %6076 = vmatmul.mubr.f32.gmra.mxu0 %v5900
      %v6077 = vpop.f32.mrf.mxu0
      %v6078 = vadd.f32 %v5725, %v6077
      %v6079 = vpop.f32.mrf.mxu0
      %6080 = vmatprep.mubr.f32.mxu0 0.0
      %6081 = vmatmul.mubr.f32.gmra.mxu0 %v5903
      %v6082 = vpop.f32.mrf.mxu0
      %v6083 = vadd.f32 %v5730, %v6082
      %v6084 = vpop.f32.mrf.mxu0
      %6085 = vmatprep.mubr.f32.mxu0 0.0
      %6086 = vmatmul.mubr.f32.gmra.mxu0 %v5906
      %v6087 = vpop.f32.mrf.mxu0
      %v6088 = vadd.f32 %v5735, %v6087
      %v6089 = vpop.f32.mrf.mxu0
      %6090 = vmatprep.mubr.f32.mxu0 0.0
      %6091 = vmatmul.mubr.f32.gmra.mxu0 %v5909
      %v6092 = vpop.f32.mrf.mxu0
      %v6093 = vadd.f32 %v5740, %v6092
      %v6094 = vpop.f32.mrf.mxu0
      %6095 = vmatprep.mubr.f32.mxu0 0.0
      %6096 = vmatmul.mubr.f32.gmra.mxu0 %v5912
      %v6097 = vpop.f32.mrf.mxu0
      %v6098 = vadd.f32 %v5745, %v6097
      %v6099 = vpop.f32.mrf.mxu0
      %6100 = vmatprep.mubr.f32.mxu0 0.0
      %6101 = vmatmul.mubr.f32.gmra.mxu0 %v5915
      %v6102 = vpop.f32.mrf.mxu0
      %v6103 = vadd.f32 %v5750, %v6102
      %v6104 = vpop.f32.mrf.mxu0
      %6105 = vmatprep.mubr.f32.mxu0 0.0
      %6106 = vmatmul.mubr.f32.gmra.mxu0 %v5918
      %v6107 = vpop.f32.mrf.mxu0
      %v6108 = vadd.f32 %v5755, %v6107
      %v6109 = vpop.f32.mrf.mxu0
      %6110 = vmatprep.mubr.f32.mxu0 0.0
      %6111 = vmatmul.mubr.f32.gmra.mxu0 %v5921
      %v6112 = vpop.f32.mrf.mxu0
      %v6113 = vadd.f32 %v5760, %v6112
      %v6114 = vpop.f32.mrf.mxu0
      %6115 = vmatprep.mubr.f32.mxu0 0.0
      %6116 = vmatmul.mubr.f32.gmra.mxu0 %v5924
      %v6117 = vpop.f32.mrf.mxu0
      %v6118 = vadd.f32 %v5765, %v6117
      %v6119 = vpop.f32.mrf.mxu0
      %6120 = vmatprep.mubr.f32.mxu0 0.0
      %6121 = vmatmul.mubr.f32.gmra.mxu0 %v5927
      %v6122 = vpop.f32.mrf.mxu0
      %v6123 = vadd.f32 %v5770, %v6122
      %v6124 = vpop.f32.mrf.mxu0
      %6125 = vmatprep.mubr.f32.mxu0 0.0
      %6126 = vmatmul.mubr.f32.gmra.mxu0 %v5930
      %v6127 = vpop.f32.mrf.mxu0
      %v6128 = vadd.f32 %v5775, %v6127
      %v6129 = vpop.f32.mrf.mxu0
      %6130 = vmatprep.mubr.f32.mxu0 0.0
      %6131 = vmatmul.mubr.f32.gmra.mxu0 %v5933
      %v6132 = vpop.f32.mrf.mxu0
      %v6133 = vadd.f32 %v5780, %v6132
      %v6134 = vpop.f32.mrf.mxu0
      %6135 = vmatprep.mubr.f32.mxu0 0.0
      %6136 = vmatmul.mubr.f32.gmra.mxu0 %v5936
      %v6137 = vpop.f32.mrf.mxu0
      %v6138 = vadd.f32 %v5785, %v6137
      %v6139 = vpop.f32.mrf.mxu0
      %6140 = vmatprep.mubr.f32.mxu0 0.0
      %6141 = vmatmul.mubr.f32.gmra.mxu0 %v5939
      %v6142 = vpop.f32.mrf.mxu0
      %v6143 = vadd.f32 %v5790, %v6142
      %v6144 = vpop.f32.mrf.mxu0
      %6145 = vmatprep.mubr.f32.mxu0 0.0
      %6146 = vmatmul.mubr.f32.gmra.mxu0 %v5942
      %v6147 = vpop.f32.mrf.mxu0
      %v6148 = vadd.f32 %v5795, %v6147
      %v6149 = vpop.f32.mrf.mxu0
      %6150 = vmatprep.mubr.f32.mxu0 0.0
      %6151 = vmatmul.mubr.f32.gmra.mxu0 %v5945
      %v6152 = vpop.f32.mrf.mxu0
      %v6153 = vadd.f32 %v5800, %v6152
      %v6154 = vpop.f32.mrf.mxu0
      %6155 = vmatprep.mubr.f32.mxu0 0.0
      %6156 = vmatmul.mubr.f32.gmra.mxu0 %v5948
      %v6157 = vpop.f32.mrf.mxu0
      %v6158 = vadd.f32 %v5805, %v6157
      %v6159 = vpop.f32.mrf.mxu0
      %6160 = vmatprep.mubr.f32.mxu0 0.0
      %6161 = vmatmul.mubr.f32.gmra.mxu0 %v5951
      %v6162 = vpop.f32.mrf.mxu0
      %v6163 = vadd.f32 %v5810, %v6162
      %v6164 = vpop.f32.mrf.mxu0
      %6165 = vmatprep.mubr.f32.mxu0 0.0
      %6166 = vmatmul.mubr.f32.gmra.mxu0 %v5954
      %v6167 = vpop.f32.mrf.mxu0
      %v6168 = vadd.f32 %v5815, %v6167
      %v6169 = vpop.f32.mrf.mxu0
      %6170 = vmatprep.mubr.f32.mxu0 0.0
      %6171 = vmatmul.mubr.f32.gmra.mxu0 %v5957
      %v6172 = vpop.f32.mrf.mxu0
      %v6173 = vadd.f32 %v5820, %v6172
      %v6174 = vpop.f32.mrf.mxu0
      %6175 = vmatprep.mubr.f32.mxu0 0.0
      %6176 = vmatmul.mubr.f32.gmra.mxu0 %v5960
      %v6177 = vpop.f32.mrf.mxu0
      %v6178 = vadd.f32 %v5825, %v6177
      %v6179 = vpop.f32.mrf.mxu0
      %6180 = vmatprep.mubr.f32.mxu0 0.0
      %6181 = vmatmul.mubr.f32.gmra.mxu0 %v5963
      %v6182 = vpop.f32.mrf.mxu0
      %v6183 = vadd.f32 %v5830, %v6182
      %v6184 = vpop.f32.mrf.mxu0
      %6185 = vmatprep.mubr.f32.mxu0 0.0
      %6186 = vmatmul.mubr.f32.gmra.mxu0 %v5966
      %v6187 = vpop.f32.mrf.mxu0
      %v6188 = vadd.f32 %v5835, %v6187
      %v6189 = vpop.f32.mrf.mxu0
      %6190 = vmatprep.mubr.f32.mxu0 0.0
      %6191 = vmatmul.mubr.f32.gmra.mxu0 %v5969
      %v6192 = vpop.f32.mrf.mxu0
      %v6193 = vadd.f32 %v5840, %v6192
      %v6194 = vpop.f32.mrf.mxu0
      %6195 = vmatprep.mubr.f32.mxu0 0.0
      %6196 = vmatmul.mubr.f32.gmra.mxu0 %v5972
      %v6197 = vpop.f32.mrf.mxu0
      %v6198 = vadd.f32 %v5845, %v6197
      %v6199 = vpop.f32.mrf.mxu0
      %6200 = vmatprep.mubr.f32.mxu0 0.0
      %6201 = vmatmul.mubr.f32.gmra.mxu0 %v5975
      %v6202 = vpop.f32.mrf.mxu0
      %v6203 = vadd.f32 %v5850, %v6202
      %v6204 = vpop.f32.mrf.mxu0
      %6205 = vmatprep.mubr.f32.mxu0 0.0
      %6206 = vmatmul.mubr.f32.gmra.mxu0 %v5978
      %v6207 = vpop.f32.mrf.mxu0
      %v6208 = vadd.f32 %v5855, %v6207
      %v6209 = vpop.f32.mrf.mxu0
      %6210 = vmatprep.mubr.f32.mxu0 0.0
      %6211 = vmatmul.mubr.f32.gmra.mxu0 %v5981
      %v6212 = vpop.f32.mrf.mxu0
      %v6213 = vadd.f32 %v5860, %v6212
      %v6214 = vpop.f32.mrf.mxu0
      %6215 = vmatprep.mubr.f32.mxu0 0.0
      %6216 = vmatmul.mubr.f32.gmra.mxu0 %v5984
      %v6217 = vpop.f32.mrf.mxu0
      %v6218 = vadd.f32 %v5865, %v6217
      %v6219 = vpop.f32.mrf.mxu0
      %6220 = vmatprep.mubr.f32.mxu0 0.0
      %6221 = vmatmul.mubr.f32.gmra.mxu0 %v5987
      %v6222 = vpop.f32.mrf.mxu0
      %v6223 = vadd.f32 %v5870, %v6222
      %v6224 = vpop.f32.mrf.mxu0
      %6225 = vmatprep.mubr.f32.mxu0 0.0
      %6226 = vmatmul.mubr.f32.gmra.mxu0 %v5990
      %v6227 = vpop.f32.mrf.mxu0
      %v6228 = vadd.f32 %v5875, %v6227
      %v6229 = vpop.f32.mrf.mxu0
      %6230 = vmatprep.mubr.f32.mxu0 0.0
      %6231 = vmatmul.mubr.f32.gmra.mxu0 %v5993
      %v6232 = vpop.f32.mrf.mxu0
      %v6233 = vadd.f32 %v5880, %v6232
      %v6234 = vpop.f32.mrf.mxu0
      %6235 = vmatprep.mubr.f32.mxu0 0.0
      %6236 = vmatmul.mubr.f32.gmra.mxu0 %v5996
      %v6237 = vpop.f32.mrf.mxu0
      %v6238 = vadd.f32 %v5885, %v6237
      %v6239 = vpop.f32.mrf.mxu0
      %6240 = vmatprep.mubr.f32.mxu0 0.0
      %6241 = vmatmul.mubr.f32.gmra.mxu0 %v5999
      %v6242 = vpop.f32.mrf.mxu0
      %v6243 = vadd.f32 %v5890, %v6242
      %v6244 = vpop.f32.mrf.mxu0
      %6245 = vdwg.mxu0
      %v6246 = vld [vmem:[#allocation4 + $0x2] sm:$0xff]
      %v6247 = vld [vmem:[#allocation4 + $0xa] sm:$0xff]
      %v6248 = vld [vmem:[#allocation4 + $0x1a] sm:$0xff]
      %v6249 = vld [vmem:[#allocation4 + $0x22] sm:$0xff]
      %v6250 = vld [vmem:[#allocation4 + $0x32] sm:$0xff]
      %v6251 = vld [vmem:[#allocation4 + $0x3a] sm:$0xff]
      %v6252 = vld [vmem:[#allocation4 + $0x4a] sm:$0xff]
      %v6253 = vld [vmem:[#allocation4 + $0x52] sm:$0xff]
      %v6254 = vld [vmem:[#allocation4 + $0x62] sm:$0xff]
      %v6255 = vld [vmem:[#allocation4 + $0x6a] sm:$0xff]
      %v6256 = vld [vmem:[#allocation4 + $0x7a] sm:$0xff]
      %v6257 = vld [vmem:[#allocation4 + $0x82] sm:$0xff]
      %v6258 = vld [vmem:[#allocation4 + $0x92] sm:$0xff]
      %v6259 = vld [vmem:[#allocation4 + $0x9a] sm:$0xff]
      %v6260 = vld [vmem:[#allocation4 + $0xaa] sm:$0xff]
      %v6261 = vld [vmem:[#allocation4 + $0xb2] sm:$0xff]
      %v6262 = vld [vmem:[#allocation4 + $0xc2] sm:$0xff]
      %v6263 = vld [vmem:[#allocation4 + $0xca] sm:$0xff]
      %v6264 = vld [vmem:[#allocation4 + $0xda] sm:$0xff]
      %v6265 = vld [vmem:[#allocation4 + $0xe2] sm:$0xff]
      %v6266 = vld [vmem:[#allocation4 + $0xf2] sm:$0xff]
      %v6267 = vld [vmem:[#allocation4 + $0xfa] sm:$0xff]
      %v6268 = vld [vmem:[#allocation4 + $0x10a] sm:$0xff]
      %v6269 = vld [vmem:[#allocation4 + $0x112] sm:$0xff]
      %v6270 = vld [vmem:[#allocation4 + $0x122] sm:$0xff]
      %v6271 = vld [vmem:[#allocation4 + $0x12a] sm:$0xff]
      %v6272 = vld [vmem:[#allocation4 + $0x13a] sm:$0xff]
      %v6273 = vld [vmem:[#allocation4 + $0x142] sm:$0xff]
      %v6274 = vld [vmem:[#allocation4 + $0x152] sm:$0xff]
      %v6275 = vld [vmem:[#allocation4 + $0x15a] sm:$0xff]
      %v6276 = vld [vmem:[#allocation4 + $0x16a] sm:$0xff]
      %v6277 = vld [vmem:[#allocation4 + $0x172] sm:$0xff]
      %v6278 = vld [vmem:[#allocation4 + $0x182] sm:$0xff]
      %v6279 = vld [vmem:[#allocation4 + $0x18a] sm:$0xff]
      %v6280 = vld [vmem:[#allocation4 + $0x19a] sm:$0xff]
      %v6281 = vld [vmem:[#allocation4 + $0x1a2] sm:$0xff]
      %s6282 = scalar_lea.vmem %s7, 48
      %v6283 = vld [vmem:[%s6282] sm:$0xff]
      %v6284 = vld [vmem:[%s6282 + $0x8] sm:$0xff]
      %v6285 = vld [vmem:[%s6282 + $0x10] sm:$0xff]
      %v6287 = vsel %vm5386, %v6246, 0
      %v6290 = vsel %vm5386, %v6247, 0
      %v6293 = vsel %vm5386, %v6248, 0
      %v6296 = vsel %vm5386, %v6249, 0
      %v6299 = vsel %vm5386, %v6250, 0
      %v6302 = vsel %vm5386, %v6251, 0
      %v6305 = vsel %vm5386, %v6252, 0
      %v6308 = vsel %vm5386, %v6253, 0
      %v6311 = vsel %vm5386, %v6254, 0
      %v6314 = vsel %vm5386, %v6255, 0
      %v6317 = vsel %vm5386, %v6256, 0
      %v6320 = vsel %vm5386, %v6257, 0
      %v6323 = vsel %vm5386, %v6258, 0
      %v6326 = vsel %vm5386, %v6259, 0
      %v6329 = vsel %vm5386, %v6260, 0
      %v6332 = vsel %vm5386, %v6261, 0
      %v6335 = vsel %vm5386, %v6262, 0
      %v6338 = vsel %vm5386, %v6263, 0
      %v6341 = vsel %vm5386, %v6264, 0
      %v6344 = vsel %vm5386, %v6265, 0
      %v6347 = vsel %vm5386, %v6266, 0
      %v6350 = vsel %vm5386, %v6267, 0
      %v6353 = vsel %vm5386, %v6268, 0
      %v6356 = vsel %vm5386, %v6269, 0
      %v6359 = vsel %vm5386, %v6270, 0
      %v6362 = vsel %vm5386, %v6271, 0
      %v6365 = vsel %vm5386, %v6272, 0
      %v6368 = vsel %vm5386, %v6273, 0
      %v6371 = vsel %vm5386, %v6274, 0
      %v6374 = vsel %vm5386, %v6275, 0
      %v6377 = vsel %vm5386, %v6276, 0
      %v6380 = vsel %vm5386, %v6277, 0
      %v6383 = vsel %vm5386, %v6278, 0
      %v6386 = vsel %vm5386, %v6279, 0
      %v6389 = vsel %vm5386, %v6280, 0
      %v6392 = vsel %vm5386, %v6281, 0
      %6394 = vmatprep.subr.mxu0 0.0
      %6395 = vmatpush1.msra.mxu0 0.0
      %6396 = vmatprep.subr.mxu0 0.0
      %6397 = vmatpush1.msra.mxu0 0.0
      %6398 = vmatprep.subr.mxu0 0.0
      %6399 = vmatpush1.msra.mxu0 0.0
      %6400 = vmatprep.subr.mxu0 0.0
      %6401 = vmatpush1.msra.mxu0 0.0
      %6402 = vmatprep.subr.mxu0 0.0
      %6403 = vmatpush1.msra.mxu0 0.0
      %6404 = vmatprep.subr.mxu0 0.0
      %6405 = vmatpush1.msra.mxu0 0.0
      %6406 = vmatprep.subr.mxu0 0.0
      %6407 = vmatpush1.msra.mxu0 0.0
      %6408 = vmatprep.subr.mxu0 0.0
      %6409 = vmatpush1.msra.mxu0 0.0
      %6410 = vmatprep.subr.mxu0 0.0
      %6411 = vmatpush1.msra.mxu0 0.0
      %6412 = vmatprep.subr.mxu0 0.0
      %6413 = vmatpush1.msra.mxu0 0.0
      %6414 = vmatprep.subr.mxu0 0.0
      %6415 = vmatpush1.msra.mxu0 0.0
      %6416 = vmatprep.subr.mxu0 0.0
      %6417 = vmatpush1.msra.mxu0 0.0
      %6418 = vmatprep.subr.mxu0 0.0
      %6419 = vmatpush1.msra.mxu0 0.0
      %6420 = vmatprep.subr.mxu0 0.0
      %6421 = vmatpush1.msra.mxu0 %v6285
      %6422 = vmatprep.subr.mxu0 0.0
      %6423 = vmatpush1.msra.mxu0 %v6284
      %6424 = vmatprep.subr.mxu0 0.0
      %6425 = vmatpush1.msra.mxu0 %v6283
      %6426 = vmatprep.subr.mxu0 0.0
      %6427 = vmatpush2.msra.mxu0 0.0
      %6428 = vmatprep.subr.mxu0 0.0
      %6429 = vmatpush2.msra.mxu0 0.0
      %6430 = vmatprep.subr.mxu0 0.0
      %6431 = vmatpush2.msra.mxu0 0.0
      %6432 = vmatprep.subr.mxu0 0.0
      %6433 = vmatpush2.msra.mxu0 0.0
      %6434 = vmatprep.subr.mxu0 0.0
      %6435 = vmatpush2.msra.mxu0 0.0
      %6436 = vmatprep.subr.mxu0 0.0
      %6437 = vmatpush2.msra.mxu0 0.0
      %6438 = vmatprep.subr.mxu0 0.0
      %6439 = vmatpush2.msra.mxu0 0.0
      %6440 = vmatprep.subr.mxu0 0.0
      %6441 = vmatpush2.msra.mxu0 0.0
      %6442 = vmatprep.subr.mxu0 0.0
      %6443 = vmatpush2.msra.mxu0 0.0
      %6444 = vmatprep.subr.mxu0 0.0
      %6445 = vmatpush2.msra.mxu0 0.0
      %6446 = vmatprep.subr.mxu0 0.0
      %6447 = vmatpush2.msra.mxu0 0.0
      %6448 = vmatprep.subr.mxu0 0.0
      %6449 = vmatpush2.msra.mxu0 0.0
      %6450 = vmatprep.subr.mxu0 0.0
      %6451 = vmatpush2.msra.mxu0 0.0
      %6452 = vmatprep.subr.mxu0 0.0
      %6453 = vmatpush2.msra.mxu0 0.0
      %6454 = vmatprep.subr.mxu0 0.0
      %6455 = vmatpush2.msra.mxu0 0.0
      %6456 = vmatprep.subr.mxu0 0.0
      %6457 = vmatpush2.msra.mxu0 0.0
      %6458 = vmatprep.mubr.f32.mxu0 0.0
      %6459 = vmatmul.mubr.f32.gmra.mxu0 %v6287
      %v6460 = vpop.f32.mrf.mxu0
      %v6461 = vadd.f32 0.0, %v6460
      %v6462 = vpop.f32.mrf.mxu0
      %6463 = vmatprep.mubr.f32.mxu0 0.0
      %6464 = vmatmul.mubr.f32.gmra.mxu0 %v6290
      %v6465 = vpop.f32.mrf.mxu0
      %v6466 = vadd.f32 0.0, %v6465
      %v6467 = vpop.f32.mrf.mxu0
      %6468 = vmatprep.mubr.f32.mxu0 0.0
      %6469 = vmatmul.mubr.f32.gmra.mxu0 %v6293
      %v6470 = vpop.f32.mrf.mxu0
      %v6471 = vadd.f32 0.0, %v6470
      %v6472 = vpop.f32.mrf.mxu0
      %6473 = vmatprep.mubr.f32.mxu0 0.0
      %6474 = vmatmul.mubr.f32.gmra.mxu0 %v6296
      %v6475 = vpop.f32.mrf.mxu0
      %v6476 = vadd.f32 0.0, %v6475
      %v6477 = vpop.f32.mrf.mxu0
      %6478 = vmatprep.mubr.f32.mxu0 0.0
      %6479 = vmatmul.mubr.f32.gmra.mxu0 %v6299
      %v6480 = vpop.f32.mrf.mxu0
      %v6481 = vadd.f32 0.0, %v6480
      %v6482 = vpop.f32.mrf.mxu0
      %6483 = vmatprep.mubr.f32.mxu0 0.0
      %6484 = vmatmul.mubr.f32.gmra.mxu0 %v6302
      %v6485 = vpop.f32.mrf.mxu0
      %v6486 = vadd.f32 0.0, %v6485
      %v6487 = vpop.f32.mrf.mxu0
      %6488 = vmatprep.mubr.f32.mxu0 0.0
      %6489 = vmatmul.mubr.f32.gmra.mxu0 %v6305
      %v6490 = vpop.f32.mrf.mxu0
      %v6491 = vadd.f32 0.0, %v6490
      %v6492 = vpop.f32.mrf.mxu0
      %6493 = vmatprep.mubr.f32.mxu0 0.0
      %6494 = vmatmul.mubr.f32.gmra.mxu0 %v6308
      %v6495 = vpop.f32.mrf.mxu0
      %v6496 = vadd.f32 0.0, %v6495
      %v6497 = vpop.f32.mrf.mxu0
      %6498 = vmatprep.mubr.f32.mxu0 0.0
      %6499 = vmatmul.mubr.f32.gmra.mxu0 %v6311
      %v6500 = vpop.f32.mrf.mxu0
      %v6501 = vadd.f32 0.0, %v6500
      %v6502 = vpop.f32.mrf.mxu0
      %6503 = vmatprep.mubr.f32.mxu0 0.0
      %6504 = vmatmul.mubr.f32.gmra.mxu0 %v6314
      %v6505 = vpop.f32.mrf.mxu0
      %v6506 = vadd.f32 0.0, %v6505
      %v6507 = vpop.f32.mrf.mxu0
      %6508 = vmatprep.mubr.f32.mxu0 0.0
      %6509 = vmatmul.mubr.f32.gmra.mxu0 %v6317
      %v6510 = vpop.f32.mrf.mxu0
      %v6511 = vadd.f32 0.0, %v6510
      %v6512 = vpop.f32.mrf.mxu0
      %6513 = vmatprep.mubr.f32.mxu0 0.0
      %6514 = vmatmul.mubr.f32.gmra.mxu0 %v6320
      %v6515 = vpop.f32.mrf.mxu0
      %v6516 = vadd.f32 0.0, %v6515
      %v6517 = vpop.f32.mrf.mxu0
      %6518 = vmatprep.mubr.f32.mxu0 0.0
      %6519 = vmatmul.mubr.f32.gmra.mxu0 %v6323
      %v6520 = vpop.f32.mrf.mxu0
      %v6521 = vadd.f32 0.0, %v6520
      %v6522 = vpop.f32.mrf.mxu0
      %6523 = vmatprep.mubr.f32.mxu0 0.0
      %6524 = vmatmul.mubr.f32.gmra.mxu0 %v6326
      %v6525 = vpop.f32.mrf.mxu0
      %v6526 = vadd.f32 0.0, %v6525
      %v6527 = vpop.f32.mrf.mxu0
      %6528 = vmatprep.mubr.f32.mxu0 0.0
      %6529 = vmatmul.mubr.f32.gmra.mxu0 %v6329
      %v6530 = vpop.f32.mrf.mxu0
      %v6531 = vadd.f32 0.0, %v6530
      %v6532 = vpop.f32.mrf.mxu0
      %6533 = vmatprep.mubr.f32.mxu0 0.0
      %6534 = vmatmul.mubr.f32.gmra.mxu0 %v6332
      %v6535 = vpop.f32.mrf.mxu0
      %v6536 = vadd.f32 0.0, %v6535
      %v6537 = vpop.f32.mrf.mxu0
      %6538 = vmatprep.mubr.f32.mxu0 0.0
      %6539 = vmatmul.mubr.f32.gmra.mxu0 %v6335
      %v6540 = vpop.f32.mrf.mxu0
      %v6541 = vadd.f32 0.0, %v6540
      %v6542 = vpop.f32.mrf.mxu0
      %6543 = vmatprep.mubr.f32.mxu0 0.0
      %6544 = vmatmul.mubr.f32.gmra.mxu0 %v6338
      %v6545 = vpop.f32.mrf.mxu0
      %v6546 = vadd.f32 0.0, %v6545
      %v6547 = vpop.f32.mrf.mxu0
      %6548 = vmatprep.mubr.f32.mxu0 0.0
      %6549 = vmatmul.mubr.f32.gmra.mxu0 %v6341
      %v6550 = vpop.f32.mrf.mxu0
      %v6551 = vadd.f32 0.0, %v6550
      %v6552 = vpop.f32.mrf.mxu0
      %6553 = vmatprep.mubr.f32.mxu0 0.0
      %6554 = vmatmul.mubr.f32.gmra.mxu0 %v6344
      %v6555 = vpop.f32.mrf.mxu0
      %v6556 = vadd.f32 0.0, %v6555
      %v6557 = vpop.f32.mrf.mxu0
      %6558 = vmatprep.mubr.f32.mxu0 0.0
      %6559 = vmatmul.mubr.f32.gmra.mxu0 %v6347
      %v6560 = vpop.f32.mrf.mxu0
      %v6561 = vadd.f32 0.0, %v6560
      %v6562 = vpop.f32.mrf.mxu0
      %6563 = vmatprep.mubr.f32.mxu0 0.0
      %6564 = vmatmul.mubr.f32.gmra.mxu0 %v6350
      %v6565 = vpop.f32.mrf.mxu0
      %v6566 = vadd.f32 0.0, %v6565
      %v6567 = vpop.f32.mrf.mxu0
      %6568 = vmatprep.mubr.f32.mxu0 0.0
      %6569 = vmatmul.mubr.f32.gmra.mxu0 %v6353
      %v6570 = vpop.f32.mrf.mxu0
      %v6571 = vadd.f32 0.0, %v6570
      %v6572 = vpop.f32.mrf.mxu0
      %6573 = vmatprep.mubr.f32.mxu0 0.0
      %6574 = vmatmul.mubr.f32.gmra.mxu0 %v6356
      %v6575 = vpop.f32.mrf.mxu0
      %v6576 = vadd.f32 0.0, %v6575
      %v6577 = vpop.f32.mrf.mxu0
      %6578 = vmatprep.mubr.f32.mxu0 0.0
      %6579 = vmatmul.mubr.f32.gmra.mxu0 %v6359
      %v6580 = vpop.f32.mrf.mxu0
      %v6581 = vadd.f32 0.0, %v6580
      %v6582 = vpop.f32.mrf.mxu0
      %6583 = vmatprep.mubr.f32.mxu0 0.0
      %6584 = vmatmul.mubr.f32.gmra.mxu0 %v6362
      %v6585 = vpop.f32.mrf.mxu0
      %v6586 = vadd.f32 0.0, %v6585
      %v6587 = vpop.f32.mrf.mxu0
      %6588 = vmatprep.mubr.f32.mxu0 0.0
      %6589 = vmatmul.mubr.f32.gmra.mxu0 %v6365
      %v6590 = vpop.f32.mrf.mxu0
      %v6591 = vadd.f32 0.0, %v6590
      %v6592 = vpop.f32.mrf.mxu0
      %6593 = vmatprep.mubr.f32.mxu0 0.0
      %6594 = vmatmul.mubr.f32.gmra.mxu0 %v6368
      %v6595 = vpop.f32.mrf.mxu0
      %v6596 = vadd.f32 0.0, %v6595
      %v6597 = vpop.f32.mrf.mxu0
      %6598 = vmatprep.mubr.f32.mxu0 0.0
      %6599 = vmatmul.mubr.f32.gmra.mxu0 %v6371
      %v6600 = vpop.f32.mrf.mxu0
      %v6601 = vadd.f32 0.0, %v6600
      %v6602 = vpop.f32.mrf.mxu0
      %6603 = vmatprep.mubr.f32.mxu0 0.0
      %6604 = vmatmul.mubr.f32.gmra.mxu0 %v6374
      %v6605 = vpop.f32.mrf.mxu0
      %v6606 = vadd.f32 0.0, %v6605
      %v6607 = vpop.f32.mrf.mxu0
      %6608 = vmatprep.mubr.f32.mxu0 0.0
      %6609 = vmatmul.mubr.f32.gmra.mxu0 %v6377
      %v6610 = vpop.f32.mrf.mxu0
      %v6611 = vadd.f32 0.0, %v6610
      %v6612 = vpop.f32.mrf.mxu0
      %6613 = vmatprep.mubr.f32.mxu0 0.0
      %6614 = vmatmul.mubr.f32.gmra.mxu0 %v6380
      %v6615 = vpop.f32.mrf.mxu0
      %v6616 = vadd.f32 0.0, %v6615
      %v6617 = vpop.f32.mrf.mxu0
      %6618 = vmatprep.mubr.f32.mxu0 0.0
      %6619 = vmatmul.mubr.f32.gmra.mxu0 %v6383
      %v6620 = vpop.f32.mrf.mxu0
      %v6621 = vadd.f32 0.0, %v6620
      %v6622 = vpop.f32.mrf.mxu0
      %6623 = vmatprep.mubr.f32.mxu0 0.0
      %6624 = vmatmul.mubr.f32.gmra.mxu0 %v6386
      %v6625 = vpop.f32.mrf.mxu0
      %v6626 = vadd.f32 0.0, %v6625
      %v6627 = vpop.f32.mrf.mxu0
      %6628 = vmatprep.mubr.f32.mxu0 0.0
      %6629 = vmatmul.mubr.f32.gmra.mxu0 %v6389
      %v6630 = vpop.f32.mrf.mxu0
      %v6631 = vadd.f32 0.0, %v6630
      %v6632 = vpop.f32.mrf.mxu0
      %6633 = vmatprep.mubr.f32.mxu0 0.0
      %6634 = vmatmul.mubr.f32.gmra.mxu0 %v6392
      %v6635 = vpop.f32.mrf.mxu0
      %v6636 = vadd.f32 0.0, %v6635
      %v6637 = vpop.f32.mrf.mxu0
      %6638 = vdwg.mxu0
      %v6639 = vadd.f32 %v6068, %v6461
      %v6640 = vadd.f32 %v6073, %v6466
      %v6641 = vadd.f32 %v6078, %v6471
      %v6642 = vadd.f32 %v6083, %v6476
      %v6643 = vadd.f32 %v6088, %v6481
      %v6644 = vadd.f32 %v6093, %v6486
      %v6645 = vadd.f32 %v6098, %v6491
      %v6646 = vadd.f32 %v6103, %v6496
      %v6647 = vadd.f32 %v6108, %v6501
      %v6648 = vadd.f32 %v6113, %v6506
      %v6649 = vadd.f32 %v6118, %v6511
      %v6650 = vadd.f32 %v6123, %v6516
      %v6651 = vadd.f32 %v6128, %v6521
      %v6652 = vadd.f32 %v6133, %v6526
      %v6653 = vadd.f32 %v6138, %v6531
      %v6654 = vadd.f32 %v6143, %v6536
      %v6655 = vadd.f32 %v6148, %v6541
      %v6656 = vadd.f32 %v6153, %v6546
      %v6657 = vadd.f32 %v6158, %v6551
      %v6658 = vadd.f32 %v6163, %v6556
      %v6659 = vadd.f32 %v6168, %v6561
      %v6660 = vadd.f32 %v6173, %v6566
      %v6661 = vadd.f32 %v6178, %v6571
      %v6662 = vadd.f32 %v6183, %v6576
      %v6663 = vadd.f32 %v6188, %v6581
      %v6664 = vadd.f32 %v6193, %v6586
      %v6665 = vadd.f32 %v6198, %v6591
      %v6666 = vadd.f32 %v6203, %v6596
      %v6667 = vadd.f32 %v6208, %v6601
      %v6668 = vadd.f32 %v6213, %v6606
      %v6669 = vadd.f32 %v6218, %v6611
      %v6670 = vadd.f32 %v6223, %v6616
      %v6671 = vadd.f32 %v6228, %v6621
      %v6672 = vadd.f32 %v6233, %v6626
      %v6673 = vadd.f32 %v6238, %v6631
      %v6674 = vadd.f32 %v6243, %v6636
      %v6675 = vld [vmem:[%s8] sm:$0x1]
      %v6677 = vlaneseq
      %v6678 = vshrl.u32 %v6677, 7
      %v6679 = vsub.s32 0, %v6678
      %v6680 = vrot.slane %v6675, %v6679
      %v6682 = vadd.f32 %v6680, %v6639
      %v6683 = vadd.f32 %v6680, %v6640
      %v6684 = vadd.f32 %v6680, %v6641
      %v6685 = vadd.f32 %v6680, %v6642
      %v6686 = vadd.f32 %v6680, %v6643
      %v6687 = vadd.f32 %v6680, %v6644
      %v6688 = vadd.f32 %v6680, %v6645
      %v6689 = vadd.f32 %v6680, %v6646
      %v6690 = vadd.f32 %v6680, %v6647
      %v6691 = vadd.f32 %v6680, %v6648
      %v6692 = vadd.f32 %v6680, %v6649
      %v6693 = vadd.f32 %v6680, %v6650
      %v6694 = vadd.f32 %v6680, %v6651
      %v6695 = vadd.f32 %v6680, %v6652
      %v6696 = vadd.f32 %v6680, %v6653
      %v6697 = vadd.f32 %v6680, %v6654
      %v6698 = vadd.f32 %v6680, %v6655
      %v6699 = vadd.f32 %v6680, %v6656
      %v6700 = vadd.f32 %v6680, %v6657
      %v6701 = vadd.f32 %v6680, %v6658
      %v6702 = vadd.f32 %v6680, %v6659
      %v6703 = vadd.f32 %v6680, %v6660
      %v6704 = vadd.f32 %v6680, %v6661
      %v6705 = vadd.f32 %v6680, %v6662
      %v6706 = vadd.f32 %v6680, %v6663
      %v6707 = vadd.f32 %v6680, %v6664
      %v6708 = vadd.f32 %v6680, %v6665
      %v6709 = vadd.f32 %v6680, %v6666
      %v6710 = vadd.f32 %v6680, %v6667
      %v6711 = vadd.f32 %v6680, %v6668
      %v6712 = vadd.f32 %v6680, %v6669
      %v6713 = vadd.f32 %v6680, %v6670
      %6746 = vrot.lane.b32.xlu0 %v6641, 104
      %v6747 = vpop.permute.xlu0 %6746
      %6748 = vrot.lane.b32.xlu0 %v6642, 104
      %v6749 = vpop.permute.xlu0 %6748
      %6750 = vrot.lane.b32.xlu0 %v6643, 104
      %v6751 = vpop.permute.xlu0 %6750
      %6752 = vrot.lane.b32.xlu0 %v6644, 104
      %v6753 = vpop.permute.xlu0 %6752
      %6754 = vrot.lane.b32.xlu0 %v6645, 104
      %v6755 = vpop.permute.xlu0 %6754
      %6756 = vrot.lane.b32.xlu0 %v6646, 104
      %v6757 = vpop.permute.xlu0 %6756
      %6758 = vrot.lane.b32.xlu0 %v6647, 104
      %v6759 = vpop.permute.xlu0 %6758
      %6760 = vrot.lane.b32.xlu0 %v6648, 104
      %v6761 = vpop.permute.xlu0 %6760
      %6762 = vrot.lane.b32.xlu0 %v6649, 104
      %v6763 = vpop.permute.xlu0 %6762
      %6764 = vrot.lane.b32.xlu0 %v6650, 104
      %v6765 = vpop.permute.xlu0 %6764
      %6766 = vrot.lane.b32.xlu0 %v6651, 104
      %v6767 = vpop.permute.xlu0 %6766
      %6768 = vrot.lane.b32.xlu0 %v6652, 104
      %v6769 = vpop.permute.xlu0 %6768
      %6770 = vrot.lane.b32.xlu0 %v6653, 104
      %v6771 = vpop.permute.xlu0 %6770
      %6772 = vrot.lane.b32.xlu0 %v6654, 104
      %v6773 = vpop.permute.xlu0 %6772
      %6774 = vrot.lane.b32.xlu0 %v6655, 104
      %v6775 = vpop.permute.xlu0 %6774
      %6776 = vrot.lane.b32.xlu0 %v6656, 104
      %v6777 = vpop.permute.xlu0 %6776
      %6778 = vrot.lane.b32.xlu0 %v6657, 104
      %v6779 = vpop.permute.xlu0 %6778
      %6780 = vrot.lane.b32.xlu0 %v6658, 104
      %v6781 = vpop.permute.xlu0 %6780
      %6782 = vrot.lane.b32.xlu0 %v6659, 104
      %v6783 = vpop.permute.xlu0 %6782
      %6784 = vrot.lane.b32.xlu0 %v6660, 104
      %v6785 = vpop.permute.xlu0 %6784
      %6786 = vrot.lane.b32.xlu0 %v6661, 104
      %v6787 = vpop.permute.xlu0 %6786
      %6788 = vrot.lane.b32.xlu0 %v6662, 104
      %v6789 = vpop.permute.xlu0 %6788
      %6790 = vrot.lane.b32.xlu0 %v6663, 104
      %v6791 = vpop.permute.xlu0 %6790
      %6792 = vrot.lane.b32.xlu0 %v6664, 104
      %v6793 = vpop.permute.xlu0 %6792
      %6794 = vrot.lane.b32.xlu0 %v6665, 104
      %v6795 = vpop.permute.xlu0 %6794
      %6796 = vrot.lane.b32.xlu0 %v6666, 104
      %v6797 = vpop.permute.xlu0 %6796
      %6798 = vrot.lane.b32.xlu0 %v6667, 104
      %v6799 = vpop.permute.xlu0 %6798
      %6800 = vrot.lane.b32.xlu0 %v6668, 104
      %v6801 = vpop.permute.xlu0 %6800
      %6802 = vrot.lane.b32.xlu0 %v6669, 104
      %v6803 = vpop.permute.xlu0 %6802
      %6804 = vrot.lane.b32.xlu0 %v6670, 104
      %v6805 = vpop.permute.xlu0 %6804
      %6806 = vrot.lane.b32.xlu0 %v6671, 104
      %v6807 = vpop.permute.xlu0 %6806
      %6808 = vrot.lane.b32.xlu0 %v6672, 104
      %v6809 = vpop.permute.xlu0 %6808
      %v6842 = vadd.f32 %v6682, %v6747
      %v6843 = vadd.f32 %v6683, %v6749
      %v6844 = vadd.f32 %v6684, %v6751
      %v6845 = vadd.f32 %v6685, %v6753
      %v6846 = vadd.f32 %v6686, %v6755
      %v6847 = vadd.f32 %v6687, %v6757
      %v6848 = vadd.f32 %v6688, %v6759
      %v6849 = vadd.f32 %v6689, %v6761
      %v6850 = vadd.f32 %v6690, %v6763
      %v6851 = vadd.f32 %v6691, %v6765
      %v6852 = vadd.f32 %v6692, %v6767
      %v6853 = vadd.f32 %v6693, %v6769
      %v6854 = vadd.f32 %v6694, %v6771
      %v6855 = vadd.f32 %v6695, %v6773
      %v6856 = vadd.f32 %v6696, %v6775
      %v6857 = vadd.f32 %v6697, %v6777
      %v6858 = vadd.f32 %v6698, %v6779
      %v6859 = vadd.f32 %v6699, %v6781
      %v6860 = vadd.f32 %v6700, %v6783
      %v6861 = vadd.f32 %v6701, %v6785
      %v6862 = vadd.f32 %v6702, %v6787
      %v6863 = vadd.f32 %v6703, %v6789
      %v6864 = vadd.f32 %v6704, %v6791
      %v6865 = vadd.f32 %v6705, %v6793
      %v6866 = vadd.f32 %v6706, %v6795
      %v6867 = vadd.f32 %v6707, %v6797
      %v6868 = vadd.f32 %v6708, %v6799
      %v6869 = vadd.f32 %v6709, %v6801
      %v6870 = vadd.f32 %v6710, %v6803
      %v6871 = vadd.f32 %v6711, %v6805
      %v6872 = vadd.f32 %v6712, %v6807
      %v6873 = vadd.f32 %v6713, %v6809
      %6876 = vrot.lane.b32.xlu0 %v6643, 80
      %v6877 = vpop.permute.xlu0 %6876
      %6878 = vrot.lane.b32.xlu0 %v6644, 80
      %v6879 = vpop.permute.xlu0 %6878
      %6880 = vrot.lane.b32.xlu0 %v6645, 80
      %v6881 = vpop.permute.xlu0 %6880
      %6882 = vrot.lane.b32.xlu0 %v6646, 80
      %v6883 = vpop.permute.xlu0 %6882
      %6884 = vrot.lane.b32.xlu0 %v6647, 80
      %v6885 = vpop.permute.xlu0 %6884
      %6886 = vrot.lane.b32.xlu0 %v6648, 80
      %v6887 = vpop.permute.xlu0 %6886
      %6888 = vrot.lane.b32.xlu0 %v6649, 80
      %v6889 = vpop.permute.xlu0 %6888
      %6890 = vrot.lane.b32.xlu0 %v6650, 80
      %v6891 = vpop.permute.xlu0 %6890
      %6892 = vrot.lane.b32.xlu0 %v6651, 80
      %v6893 = vpop.permute.xlu0 %6892
      %6894 = vrot.lane.b32.xlu0 %v6652, 80
      %v6895 = vpop.permute.xlu0 %6894
      %6896 = vrot.lane.b32.xlu0 %v6653, 80
      %v6897 = vpop.permute.xlu0 %6896
      %6898 = vrot.lane.b32.xlu0 %v6654, 80
      %v6899 = vpop.permute.xlu0 %6898
      %6900 = vrot.lane.b32.xlu0 %v6655, 80
      %v6901 = vpop.permute.xlu0 %6900
      %6902 = vrot.lane.b32.xlu0 %v6656, 80
      %v6903 = vpop.permute.xlu0 %6902
      %6904 = vrot.lane.b32.xlu0 %v6657, 80
      %v6905 = vpop.permute.xlu0 %6904
      %6906 = vrot.lane.b32.xlu0 %v6658, 80
      %v6907 = vpop.permute.xlu0 %6906
      %6908 = vrot.lane.b32.xlu0 %v6659, 80
      %v6909 = vpop.permute.xlu0 %6908
      %6910 = vrot.lane.b32.xlu0 %v6660, 80
      %v6911 = vpop.permute.xlu0 %6910
      %6912 = vrot.lane.b32.xlu0 %v6661, 80
      %v6913 = vpop.permute.xlu0 %6912
      %6914 = vrot.lane.b32.xlu0 %v6662, 80
      %v6915 = vpop.permute.xlu0 %6914
      %6916 = vrot.lane.b32.xlu0 %v6663, 80
      %v6917 = vpop.permute.xlu0 %6916
      %6918 = vrot.lane.b32.xlu0 %v6664, 80
      %v6919 = vpop.permute.xlu0 %6918
      %6920 = vrot.lane.b32.xlu0 %v6665, 80
      %v6921 = vpop.permute.xlu0 %6920
      %6922 = vrot.lane.b32.xlu0 %v6666, 80
      %v6923 = vpop.permute.xlu0 %6922
      %6924 = vrot.lane.b32.xlu0 %v6667, 80
      %v6925 = vpop.permute.xlu0 %6924
      %6926 = vrot.lane.b32.xlu0 %v6668, 80
      %v6927 = vpop.permute.xlu0 %6926
      %6928 = vrot.lane.b32.xlu0 %v6669, 80
      %v6929 = vpop.permute.xlu0 %6928
      %6930 = vrot.lane.b32.xlu0 %v6670, 80
      %v6931 = vpop.permute.xlu0 %6930
      %6932 = vrot.lane.b32.xlu0 %v6671, 80
      %v6933 = vpop.permute.xlu0 %6932
      %6934 = vrot.lane.b32.xlu0 %v6672, 80
      %v6935 = vpop.permute.xlu0 %6934
      %6936 = vrot.lane.b32.xlu0 %v6673, 80
      %v6937 = vpop.permute.xlu0 %6936
      %6938 = vrot.lane.b32.xlu0 %v6674, 80
      %v6939 = vpop.permute.xlu0 %6938
      %v6972 = vadd.f32 %v6842, %v6877
      %v6973 = vadd.f32 %v6843, %v6879
      %v6974 = vadd.f32 %v6844, %v6881
      %v6975 = vadd.f32 %v6845, %v6883
      %v6976 = vadd.f32 %v6846, %v6885
      %v6977 = vadd.f32 %v6847, %v6887
      %v6978 = vadd.f32 %v6848, %v6889
      %v6979 = vadd.f32 %v6849, %v6891
      %v6980 = vadd.f32 %v6850, %v6893
      %v6981 = vadd.f32 %v6851, %v6895
      %v6982 = vadd.f32 %v6852, %v6897
      %v6983 = vadd.f32 %v6853, %v6899
      %v6984 = vadd.f32 %v6854, %v6901
      %v6985 = vadd.f32 %v6855, %v6903
      %v6986 = vadd.f32 %v6856, %v6905
      %v6987 = vadd.f32 %v6857, %v6907
      %v6988 = vadd.f32 %v6858, %v6909
      %v6989 = vadd.f32 %v6859, %v6911
      %v6990 = vadd.f32 %v6860, %v6913
      %v6991 = vadd.f32 %v6861, %v6915
      %v6992 = vadd.f32 %v6862, %v6917
      %v6993 = vadd.f32 %v6863, %v6919
      %v6994 = vadd.f32 %v6864, %v6921
      %v6995 = vadd.f32 %v6865, %v6923
      %v6996 = vadd.f32 %v6866, %v6925
      %v6997 = vadd.f32 %v6867, %v6927
      %v6998 = vadd.f32 %v6868, %v6929
      %v6999 = vadd.f32 %v6869, %v6931
      %v7000 = vadd.f32 %v6870, %v6933
      %v7001 = vadd.f32 %v6871, %v6935
      %v7002 = vadd.f32 %v6872, %v6937
      %v7003 = vadd.f32 %v6873, %v6939
      %7004 = vxpose.xlu0.b32.start [1/16] %v6972, 128
      %7005 = vxpose.xlu0.b32.cont [2/16] %v6973, 128
      %7006 = vxpose.xlu0.b32.cont [3/16] %v6974, 128
      %7007 = vxpose.xlu0.b32.cont [4/16] %v6975, 128
      %7008 = vxpose.xlu0.b32.cont [5/16] %v6976, 128
      %7009 = vxpose.xlu0.b32.cont [6/16] %v6977, 128
      %7010 = vxpose.xlu0.b32.cont [7/16] %v6978, 128
      %7011 = vxpose.xlu0.b32.cont [8/16] %v6979, 128
      %7012 = vxpose.xlu0.b32.cont [9/16] %v6980, 128
      %7013 = vxpose.xlu0.b32.cont [10/16] %v6981, 128
      %7014 = vxpose.xlu0.b32.cont [11/16] %v6982, 128
      %7015 = vxpose.xlu0.b32.cont [12/16] %v6983, 128
      %7016 = vxpose.xlu0.b32.cont [13/16] %v6984, 128
      %7017 = vxpose.xlu0.b32.cont [14/16] %v6985, 128
      %7018 = vxpose.xlu0.b32.cont [15/16] %v6986, 128
      %7019 = vxpose.xlu0.b32.end [16/16] %v6987, 128
      %v7020 = vpop.trf.xlu0
      %v7021 = vpop.trf.xlu0
      %v7022 = vpop.trf.xlu0
      %v7023 = vpop.trf.xlu0
      %v7024 = vpop.trf.xlu0
      %v7025 = vpop.trf.xlu0
      %v7026 = vpop.trf.xlu0
      %v7027 = vpop.trf.xlu0
      %v7028 = vpop.trf.xlu0
      %v7029 = vpop.trf.xlu0
      %v7030 = vpop.trf.xlu0
      %v7031 = vpop.trf.xlu0
      %v7032 = vpop.trf.xlu0
      %v7033 = vpop.trf.xlu0
      %v7034 = vpop.trf.xlu0
      %v7035 = vpop.trf.xlu0
      %7036 = vxpose.xlu0.b32.start [1/16] %v6988, 128
      %7037 = vxpose.xlu0.b32.cont [2/16] %v6989, 128
      %7038 = vxpose.xlu0.b32.cont [3/16] %v6990, 128
      %7039 = vxpose.xlu0.b32.cont [4/16] %v6991, 128
      %7040 = vxpose.xlu0.b32.cont [5/16] %v6992, 128
      %7041 = vxpose.xlu0.b32.cont [6/16] %v6993, 128
      %7042 = vxpose.xlu0.b32.cont [7/16] %v6994, 128
      %7043 = vxpose.xlu0.b32.cont [8/16] %v6995, 128
      %7044 = vxpose.xlu0.b32.cont [9/16] %v6996, 128
      %7045 = vxpose.xlu0.b32.cont [10/16] %v6997, 128
      %7046 = vxpose.xlu0.b32.cont [11/16] %v6998, 128
      %7047 = vxpose.xlu0.b32.cont [12/16] %v6999, 128
      %7048 = vxpose.xlu0.b32.cont [13/16] %v7000, 128
      %7049 = vxpose.xlu0.b32.cont [14/16] %v7001, 128
      %7050 = vxpose.xlu0.b32.cont [15/16] %v7002, 128
      %7051 = vxpose.xlu0.b32.end [16/16] %v7003, 128
      %v7052 = vpop.trf.xlu0
      %v7053 = vpop.trf.xlu0
      %v7054 = vpop.trf.xlu0
      %v7055 = vpop.trf.xlu0
      %v7056 = vpop.trf.xlu0
      %v7057 = vpop.trf.xlu0
      %v7058 = vpop.trf.xlu0
      %v7059 = vpop.trf.xlu0
      %v7060 = vpop.trf.xlu0
      %v7061 = vpop.trf.xlu0
      %v7062 = vpop.trf.xlu0
      %v7063 = vpop.trf.xlu0
      %v7064 = vpop.trf.xlu0
      %v7065 = vpop.trf.xlu0
      %v7066 = vpop.trf.xlu0
      %v7067 = vpop.trf.xlu0
      %7068 = vst [vmem:[%s359 + $0x50] sm:$0xff] %v7020
      %7069 = vst [vmem:[%s359 + $0x58] sm:$0xff] %v7052
      %7070 = vst [vmem:[%s359 + $0x60] sm:$0xff] %v7021
      %7071 = vst [vmem:[%s359 + $0x68] sm:$0xff] %v7053
      %7072 = vst [vmem:[%s359 + $0x70] sm:$0xff] %v7022
      %7073 = vst [vmem:[%s359 + $0x78] sm:$0xff] %v7054
      %7074 = vst.msk [vmem:[#allocation5] sm:$0xff] %vm5386, 0.0
      %7075 = vst.msk [vmem:[#allocation5 + $0x8] sm:$0xff] %vm5386, 0.0
      %7076 = vst.msk [vmem:[#allocation5 + $0x10] sm:$0x3] %vm5389, 0.0
      %s7077 = scalar_lea.vmem [#allocation5], 408
      %7078 = vst.msk [vmem:[%s7077] sm:$0xff] %vm5386, 0.0
      %7079 = vst.msk [vmem:[%s7077 + $0x8] sm:$0xff] %vm5386, 0.0
      %7080 = vst.msk [vmem:[%s7077 + $0x10] sm:$0x3] %vm5389, 0.0
      %s7081 = scalar_lea.vmem [#allocation5], 24
      %7082 = vst.msk [vmem:[%s7081] sm:$0x1] %vm5396, 0.0
      %7083 = vst.msk [vmem:[%s7081 + $0x18] sm:$0x1] %vm5396, 0.0
      %7084 = vst.msk [vmem:[%s7081 + $0x30] sm:$0x1] %vm5396, 0.0
      %7085 = vst.msk [vmem:[%s7081 + $0x48] sm:$0x1] %vm5396, 0.0
      %7086 = vst.msk [vmem:[%s7081 + $0x60] sm:$0x1] %vm5396, 0.0
      %7087 = vst.msk [vmem:[%s7081 + $0x78] sm:$0x1] %vm5396, 0.0
      %7088 = vst.msk [vmem:[%s7081 + $0x90] sm:$0x1] %vm5396, 0.0
      %7089 = vst.msk [vmem:[%s7081 + $0xa8] sm:$0x1] %vm5396, 0.0
      %7090 = vst.msk [vmem:[%s7081 + $0xc0] sm:$0x1] %vm5396, 0.0
      %7091 = vst.msk [vmem:[%s7081 + $0xd8] sm:$0x1] %vm5396, 0.0
      %7092 = vst.msk [vmem:[%s7081 + $0xf0] sm:$0x1] %vm5396, 0.0
      %7093 = vst.msk [vmem:[%s7081 + $0x108] sm:$0x1] %vm5396, 0.0
      %7094 = vst.msk [vmem:[%s7081 + $0x120] sm:$0x1] %vm5396, 0.0
      %7095 = vst.msk [vmem:[%s7081 + $0x138] sm:$0x1] %vm5396, 0.0
      %7096 = vst.msk [vmem:[%s7081 + $0x150] sm:$0x1] %vm5396, 0.0
      %7097 = vst.msk [vmem:[%s7081 + $0x168] sm:$0x1] %vm5396, 0.0
      %7098 = vst.msk [vmem:[%s7081 + $0x11] sm:$0x1] %vm5396, 0.0
      %7099 = vst.msk [vmem:[%s7081 + $0x29] sm:$0x1] %vm5396, 0.0
      %7100 = vst.msk [vmem:[%s7081 + $0x41] sm:$0x1] %vm5396, 0.0
      %7101 = vst.msk [vmem:[%s7081 + $0x59] sm:$0x1] %vm5396, 0.0
      %7102 = vst.msk [vmem:[%s7081 + $0x71] sm:$0x1] %vm5396, 0.0
      %7103 = vst.msk [vmem:[%s7081 + $0x89] sm:$0x1] %vm5396, 0.0
      %7104 = vst.msk [vmem:[%s7081 + $0xa1] sm:$0x1] %vm5396, 0.0
      %7105 = vst.msk [vmem:[%s7081 + $0xb9] sm:$0x1] %vm5396, 0.0
      %7106 = vst.msk [vmem:[%s7081 + $0xd1] sm:$0x1] %vm5396, 0.0
      %7107 = vst.msk [vmem:[%s7081 + $0xe9] sm:$0x1] %vm5396, 0.0
      %7108 = vst.msk [vmem:[%s7081 + $0x101] sm:$0x1] %vm5396, 0.0
      %7109 = vst.msk [vmem:[%s7081 + $0x119] sm:$0x1] %vm5396, 0.0
      %7110 = vst.msk [vmem:[%s7081 + $0x131] sm:$0x1] %vm5396, 0.0
      %7111 = vst.msk [vmem:[%s7081 + $0x149] sm:$0x1] %vm5396, 0.0
      %7112 = vst.msk [vmem:[%s7081 + $0x161] sm:$0x1] %vm5396, 0.0
      %7113 = vst.msk [vmem:[%s7081 + $0x179] sm:$0x1] %vm5396, 0.0
      %7114 = vst.msk [vmem:[%s7081 + $0x1] sm:$0xff] %vm5386, %v726
      %7115 = vst.msk [vmem:[%s7081 + $0x9] sm:$0xff] %vm5386, %v727
      %7116 = vst.msk [vmem:[%s7081 + $0x19] sm:$0xff] %vm5386, %v728
      %7117 = vst.msk [vmem:[%s7081 + $0x21] sm:$0xff] %vm5386, %v729
      %7118 = vst.msk [vmem:[%s7081 + $0x31] sm:$0xff] %vm5386, %v730
      %7119 = vst.msk [vmem:[%s7081 + $0x39] sm:$0xff] %vm5386, %v731
      %7120 = vst.msk [vmem:[%s7081 + $0x49] sm:$0xff] %vm5386, %v732
      %7121 = vst.msk [vmem:[%s7081 + $0x51] sm:$0xff] %vm5386, %v733
      %7122 = vst.msk [vmem:[%s7081 + $0x61] sm:$0xff] %vm5386, %v734
      %7123 = vst.msk [vmem:[%s7081 + $0x69] sm:$0xff] %vm5386, %v735
      %7124 = vst.msk [vmem:[%s7081 + $0x79] sm:$0xff] %vm5386, %v736
      %7125 = vst.msk [vmem:[%s7081 + $0x81] sm:$0xff] %vm5386, %v737
      %7126 = vst.msk [vmem:[%s7081 + $0x91] sm:$0xff] %vm5386, %v738
      %7127 = vst.msk [vmem:[%s7081 + $0x99] sm:$0xff] %vm5386, %v739
      %7128 = vst.msk [vmem:[%s7081 + $0xa9] sm:$0xff] %vm5386, %v740
      %7129 = vst.msk [vmem:[%s7081 + $0xb1] sm:$0xff] %vm5386, %v741
      %7130 = vst.msk [vmem:[%s7081 + $0xc1] sm:$0xff] %vm5386, %v758
      %7131 = vst.msk [vmem:[%s7081 + $0xc9] sm:$0xff] %vm5386, %v759
      %7132 = vst.msk [vmem:[%s7081 + $0xd9] sm:$0xff] %vm5386, %v760
      %7133 = vst.msk [vmem:[%s7081 + $0xe1] sm:$0xff] %vm5386, %v761
      %7134 = vst.msk [vmem:[%s7081 + $0xf1] sm:$0xff] %vm5386, %v762
      %7135 = vst.msk [vmem:[%s7081 + $0xf9] sm:$0xff] %vm5386, %v763
      %7136 = vst.msk [vmem:[%s7081 + $0x109] sm:$0xff] %vm5386, %v764
      %7137 = vst.msk [vmem:[%s7081 + $0x111] sm:$0xff] %vm5386, %v765
      %7138 = vst.msk [vmem:[%s7081 + $0x121] sm:$0xff] %vm5386, %v766
      %7139 = vst.msk [vmem:[%s7081 + $0x129] sm:$0xff] %vm5386, %v767
      %7140 = vst.msk [vmem:[%s7081 + $0x139] sm:$0xff] %vm5386, %v768
      %7141 = vst.msk [vmem:[%s7081 + $0x141] sm:$0xff] %vm5386, %v769
      %7142 = vst.msk [vmem:[%s7081 + $0x151] sm:$0xff] %vm5386, %v770
      %7143 = vst.msk [vmem:[%s7081 + $0x159] sm:$0xff] %vm5386, %v771
      %7144 = vst.msk [vmem:[%s7081 + $0x169] sm:$0xff] %vm5386, %v772
      %7145 = vst.msk [vmem:[%s7081 + $0x171] sm:$0xff] %vm5386, %v773
      %v7146 = vld [vmem:[#allocation5] sm:$0xff]
      %v7147 = vld [vmem:[#allocation5 + $0x8] sm:$0xff]
      %v7148 = vld [vmem:[#allocation5 + $0x10] sm:$0x3]
      %v7149 = vld [vmem:[#allocation5 + $0x18] sm:$0xff]
      %v7150 = vld [vmem:[#allocation5 + $0x20] sm:$0xff]
      %v7151 = vld [vmem:[#allocation5 + $0x28] sm:$0x3]
      %v7152 = vld [vmem:[#allocation5 + $0x30] sm:$0xff]
      %v7153 = vld [vmem:[#allocation5 + $0x38] sm:$0xff]
      %v7154 = vld [vmem:[#allocation5 + $0x40] sm:$0x3]
      %v7155 = vld [vmem:[#allocation5 + $0x48] sm:$0xff]
      %v7156 = vld [vmem:[#allocation5 + $0x50] sm:$0xff]
      %v7157 = vld [vmem:[#allocation5 + $0x58] sm:$0x3]
      %v7158 = vld [vmem:[#allocation5 + $0x60] sm:$0xff]
      %v7159 = vld [vmem:[#allocation5 + $0x68] sm:$0xff]
      %v7160 = vld [vmem:[#allocation5 + $0x70] sm:$0x3]
      %v7161 = vld [vmem:[#allocation5 + $0x78] sm:$0xff]
      %v7162 = vld [vmem:[#allocation5 + $0x80] sm:$0xff]
      %v7163 = vld [vmem:[#allocation5 + $0x88] sm:$0x3]
      %v7164 = vld [vmem:[#allocation5 + $0x90] sm:$0xff]
      %v7165 = vld [vmem:[#allocation5 + $0x98] sm:$0xff]
      %v7166 = vld [vmem:[#allocation5 + $0xa0] sm:$0x3]
      %v7167 = vld [vmem:[#allocation5 + $0xa8] sm:$0xff]
      %v7168 = vld [vmem:[#allocation5 + $0xb0] sm:$0xff]
      %v7169 = vld [vmem:[#allocation5 + $0xb8] sm:$0x3]
      %v7170 = vld [vmem:[#allocation5 + $0xc0] sm:$0xff]
      %v7171 = vld [vmem:[#allocation5 + $0xc8] sm:$0xff]
      %v7172 = vld [vmem:[#allocation5 + $0xd0] sm:$0x3]
      %v7173 = vld [vmem:[#allocation5 + $0xd8] sm:$0xff]
      %v7174 = vld [vmem:[#allocation5 + $0xe0] sm:$0xff]
      %v7175 = vld [vmem:[#allocation5 + $0xe8] sm:$0x3]
      %v7176 = vld [vmem:[#allocation5 + $0xf0] sm:$0xff]
      %v7177 = vld [vmem:[#allocation5 + $0xf8] sm:$0xff]
      %v7178 = vld [vmem:[#allocation5 + $0x100] sm:$0x3]
      %v7179 = vld [vmem:[#allocation5 + $0x108] sm:$0xff]
      %v7180 = vld [vmem:[#allocation5 + $0x110] sm:$0xff]
      %v7181 = vld [vmem:[#allocation5 + $0x118] sm:$0x3]
      %v7182 = vld [vmem:[#allocation5 + $0x120] sm:$0xff]
      %v7183 = vld [vmem:[#allocation5 + $0x128] sm:$0xff]
      %v7184 = vld [vmem:[#allocation5 + $0x130] sm:$0x3]
      %v7185 = vld [vmem:[#allocation5 + $0x138] sm:$0xff]
      %v7186 = vld [vmem:[#allocation5 + $0x140] sm:$0xff]
      %v7187 = vld [vmem:[#allocation5 + $0x148] sm:$0x3]
      %v7188 = vld [vmem:[#allocation5 + $0x150] sm:$0xff]
      %v7189 = vld [vmem:[#allocation5 + $0x158] sm:$0xff]
      %v7190 = vld [vmem:[#allocation5 + $0x160] sm:$0x3]
      %v7191 = vld [vmem:[#allocation5 + $0x168] sm:$0xff]
      %v7192 = vld [vmem:[#allocation5 + $0x170] sm:$0xff]
      %v7193 = vld [vmem:[#allocation5 + $0x178] sm:$0x3]
      %v7194 = vld [vmem:[%s7081] sm:$0xff]
      %v7195 = vld [vmem:[%s7081 + $0x8] sm:$0xff]
      %v7196 = vld [vmem:[%s7081 + $0x10] sm:$0x3]
      %v7197 = vld [vmem:[%s7081 + $0x18] sm:$0xff]
      %v7198 = vld [vmem:[%s7081 + $0x20] sm:$0xff]
      %v7199 = vld [vmem:[%s7081 + $0x28] sm:$0x3]
      %v7200 = vld [vmem:[%s7081 + $0x30] sm:$0xff]
      %v7201 = vld [vmem:[%s7081 + $0x38] sm:$0xff]
      %v7202 = vld [vmem:[%s7081 + $0x40] sm:$0x3]
      %v7203 = vld [vmem:[%s7081 + $0x48] sm:$0xff]
      %v7204 = vld [vmem:[%s7081 + $0x50] sm:$0xff]
      %v7205 = vld [vmem:[%s7081 + $0x58] sm:$0x3]
      %v7206 = vld [vmem:[%s7081 + $0x60] sm:$0xff]
      %v7207 = vld [vmem:[%s7081 + $0x68] sm:$0xff]
      %v7208 = vld [vmem:[%s7081 + $0x70] sm:$0x3]
      %v7209 = vld [vmem:[%s7081 + $0x78] sm:$0xff]
      %v7210 = vld [vmem:[%s7081 + $0x80] sm:$0xff]
      %v7211 = vld [vmem:[%s7081 + $0x88] sm:$0x3]
      %v7212 = vld [vmem:[%s7081 + $0x90] sm:$0xff]
      %v7213 = vld [vmem:[%s7081 + $0x98] sm:$0xff]
      %v7214 = vld [vmem:[%s7081 + $0xa0] sm:$0x3]
      %v7215 = vld [vmem:[%s7081 + $0xa8] sm:$0xff]
      %v7216 = vld [vmem:[%s7081 + $0xb0] sm:$0xff]
      %v7217 = vld [vmem:[%s7081 + $0xb8] sm:$0x3]
      %v7218 = vld [vmem:[%s7081 + $0xc0] sm:$0xff]
      %v7219 = vld [vmem:[%s7081 + $0xc8] sm:$0xff]
      %v7220 = vld [vmem:[%s7081 + $0xd0] sm:$0x3]
      %v7221 = vld [vmem:[%s7081 + $0xd8] sm:$0xff]
      %v7222 = vld [vmem:[%s7081 + $0xe0] sm:$0xff]
      %v7223 = vld [vmem:[%s7081 + $0xe8] sm:$0x3]
      %v7224 = vld [vmem:[%s7081 + $0xf0] sm:$0xff]
      %v7225 = vld [vmem:[%s7081 + $0xf8] sm:$0xff]
      %v7226 = vld [vmem:[%s7081 + $0x100] sm:$0x3]
      %v7227 = vld [vmem:[%s7081 + $0x108] sm:$0xff]
      %v7228 = vld [vmem:[%s7081 + $0x110] sm:$0xff]
      %v7229 = vld [vmem:[%s7081 + $0x118] sm:$0x3]
      %v7230 = vld [vmem:[%s7081 + $0x120] sm:$0xff]
      %v7231 = vld [vmem:[%s7081 + $0x128] sm:$0xff]
      %v7232 = vld [vmem:[%s7081 + $0x130] sm:$0x3]
      %v7233 = vld [vmem:[%s7081 + $0x138] sm:$0xff]
      %v7234 = vld [vmem:[%s7081 + $0x140] sm:$0xff]
      %v7235 = vld [vmem:[%s7081 + $0x148] sm:$0x3]
      %v7236 = vld [vmem:[%s7081 + $0x150] sm:$0xff]
      %v7237 = vld [vmem:[%s7081 + $0x158] sm:$0xff]
      %v7238 = vld [vmem:[%s7081 + $0x160] sm:$0x3]
      %v7239 = vld [vmem:[%s7081 + $0x168] sm:$0xff]
      %v7240 = vld [vmem:[%s7081 + $0x170] sm:$0xff]
      %v7241 = vld [vmem:[%s7081 + $0x178] sm:$0x3]
      %v7242 = vadd.f32 %v7146, %v7194
      %v7243 = vadd.f32 %v7147, %v7195
      %v7244 = vadd.f32 %v7148, %v7196
      %v7245 = vadd.f32 %v7149, %v7197
      %v7246 = vadd.f32 %v7150, %v7198
      %v7247 = vadd.f32 %v7151, %v7199
      %v7248 = vadd.f32 %v7152, %v7200
      %v7249 = vadd.f32 %v7153, %v7201
      %v7250 = vadd.f32 %v7154, %v7202
      %v7251 = vadd.f32 %v7155, %v7203
      %v7252 = vadd.f32 %v7156, %v7204
      %v7253 = vadd.f32 %v7157, %v7205
      %v7254 = vadd.f32 %v7158, %v7206
      %v7255 = vadd.f32 %v7159, %v7207
      %v7256 = vadd.f32 %v7160, %v7208
      %v7257 = vadd.f32 %v7161, %v7209
      %v7258 = vadd.f32 %v7162, %v7210
      %v7259 = vadd.f32 %v7163, %v7211
      %v7260 = vadd.f32 %v7164, %v7212
      %v7261 = vadd.f32 %v7165, %v7213
      %v7262 = vadd.f32 %v7166, %v7214
      %v7263 = vadd.f32 %v7167, %v7215
      %v7264 = vadd.f32 %v7168, %v7216
      %v7265 = vadd.f32 %v7169, %v7217
      %v7266 = vadd.f32 %v7170, %v7218
      %v7267 = vadd.f32 %v7171, %v7219
      %v7268 = vadd.f32 %v7172, %v7220
      %v7269 = vadd.f32 %v7173, %v7221
      %v7270 = vadd.f32 %v7174, %v7222
      %v7271 = vadd.f32 %v7175, %v7223
      %v7272 = vadd.f32 %v7176, %v7224
      %v7273 = vadd.f32 %v7177, %v7225
      %v7274 = vadd.f32 %v7178, %v7226
      %v7275 = vadd.f32 %v7179, %v7227
      %v7276 = vadd.f32 %v7180, %v7228
      %v7277 = vadd.f32 %v7181, %v7229
      %v7278 = vadd.f32 %v7182, %v7230
      %v7279 = vadd.f32 %v7183, %v7231
      %v7280 = vadd.f32 %v7184, %v7232
      %v7281 = vadd.f32 %v7185, %v7233
      %v7282 = vadd.f32 %v7186, %v7234
      %v7283 = vadd.f32 %v7187, %v7235
      %v7284 = vadd.f32 %v7188, %v7236
      %v7285 = vadd.f32 %v7189, %v7237
      %v7286 = vadd.f32 %v7190, %v7238
      %v7287 = vadd.f32 %v7191, %v7239
      %v7288 = vadd.f32 %v7192, %v7240
      %v7289 = vadd.f32 %v7193, %v7241
      %s7290 = scalar_lea.vmem [#allocation5], 48
      %v7291 = vld [vmem:[%s7290] sm:$0xff]
      %v7292 = vld [vmem:[%s7290 + $0x8] sm:$0xff]
      %v7293 = vld [vmem:[%s7290 + $0x10] sm:$0x3]
      %v7294 = vld [vmem:[%s7290 + $0x18] sm:$0xff]
      %v7295 = vld [vmem:[%s7290 + $0x20] sm:$0xff]
      %v7296 = vld [vmem:[%s7290 + $0x28] sm:$0x3]
      %v7297 = vld [vmem:[%s7290 + $0x30] sm:$0xff]
      %v7298 = vld [vmem:[%s7290 + $0x38] sm:$0xff]
      %v7299 = vld [vmem:[%s7290 + $0x40] sm:$0x3]
      %v7300 = vld [vmem:[%s7290 + $0x48] sm:$0xff]
      %v7301 = vld [vmem:[%s7290 + $0x50] sm:$0xff]
      %v7302 = vld [vmem:[%s7290 + $0x58] sm:$0x3]
      %v7303 = vld [vmem:[%s7290 + $0x60] sm:$0xff]
      %v7304 = vld [vmem:[%s7290 + $0x68] sm:$0xff]
      %v7305 = vld [vmem:[%s7290 + $0x70] sm:$0x3]
      %v7306 = vld [vmem:[%s7290 + $0x78] sm:$0xff]
      %v7307 = vld [vmem:[%s7290 + $0x80] sm:$0xff]
      %v7308 = vld [vmem:[%s7290 + $0x88] sm:$0x3]
      %v7309 = vld [vmem:[%s7290 + $0x90] sm:$0xff]
      %v7310 = vld [vmem:[%s7290 + $0x98] sm:$0xff]
      %v7311 = vld [vmem:[%s7290 + $0xa0] sm:$0x3]
      %v7312 = vld [vmem:[%s7290 + $0xa8] sm:$0xff]
      %v7313 = vld [vmem:[%s7290 + $0xb0] sm:$0xff]
      %v7314 = vld [vmem:[%s7290 + $0xb8] sm:$0x3]
      %v7315 = vld [vmem:[%s7290 + $0xc0] sm:$0xff]
      %v7316 = vld [vmem:[%s7290 + $0xc8] sm:$0xff]
      %v7317 = vld [vmem:[%s7290 + $0xd0] sm:$0x3]
      %v7318 = vld [vmem:[%s7290 + $0xd8] sm:$0xff]
      %v7319 = vld [vmem:[%s7290 + $0xe0] sm:$0xff]
      %v7320 = vld [vmem:[%s7290 + $0xe8] sm:$0x3]
      %v7321 = vld [vmem:[%s7290 + $0xf0] sm:$0xff]
      %v7322 = vld [vmem:[%s7290 + $0xf8] sm:$0xff]
      %v7323 = vld [vmem:[%s7290 + $0x100] sm:$0x3]
      %v7324 = vld [vmem:[%s7290 + $0x108] sm:$0xff]
      %v7325 = vld [vmem:[%s7290 + $0x110] sm:$0xff]
      %v7326 = vld [vmem:[%s7290 + $0x118] sm:$0x3]
      %v7327 = vld [vmem:[%s7290 + $0x120] sm:$0xff]
      %v7328 = vld [vmem:[%s7290 + $0x128] sm:$0xff]
      %v7329 = vld [vmem:[%s7290 + $0x130] sm:$0x3]
      %v7330 = vld [vmem:[%s7290 + $0x138] sm:$0xff]
      %v7331 = vld [vmem:[%s7290 + $0x140] sm:$0xff]
      %v7332 = vld [vmem:[%s7290 + $0x148] sm:$0x3]
      %v7333 = vld [vmem:[%s7290 + $0x150] sm:$0xff]
      %v7334 = vld [vmem:[%s7290 + $0x158] sm:$0xff]
      %v7335 = vld [vmem:[%s7290 + $0x160] sm:$0x3]
      %v7336 = vld [vmem:[%s7290 + $0x168] sm:$0xff]
      %v7337 = vld [vmem:[%s7290 + $0x170] sm:$0xff]
      %v7338 = vld [vmem:[%s7290 + $0x178] sm:$0x3]
      %v7339 = vadd.f32 %v7242, %v7291
      %v7340 = vadd.f32 %v7243, %v7292
      %v7341 = vadd.f32 %v7244, %v7293
      %v7342 = vadd.f32 %v7245, %v7294
      %v7343 = vadd.f32 %v7246, %v7295
      %v7344 = vadd.f32 %v7247, %v7296
      %v7345 = vadd.f32 %v7248, %v7297
      %v7346 = vadd.f32 %v7249, %v7298
      %v7347 = vadd.f32 %v7250, %v7299
      %v7348 = vadd.f32 %v7251, %v7300
      %v7349 = vadd.f32 %v7252, %v7301
      %v7350 = vadd.f32 %v7253, %v7302
      %v7351 = vadd.f32 %v7254, %v7303
      %v7352 = vadd.f32 %v7255, %v7304
      %v7353 = vadd.f32 %v7256, %v7305
      %v7354 = vadd.f32 %v7257, %v7306
      %v7355 = vadd.f32 %v7258, %v7307
      %v7356 = vadd.f32 %v7259, %v7308
      %v7357 = vadd.f32 %v7260, %v7309
      %v7358 = vadd.f32 %v7261, %v7310
      %v7359 = vadd.f32 %v7262, %v7311
      %v7360 = vadd.f32 %v7263, %v7312
      %v7361 = vadd.f32 %v7264, %v7313
      %v7362 = vadd.f32 %v7265, %v7314
      %v7363 = vadd.f32 %v7266, %v7315
      %v7364 = vadd.f32 %v7267, %v7316
      %v7365 = vadd.f32 %v7268, %v7317
      %v7366 = vadd.f32 %v7269, %v7318
      %v7367 = vadd.f32 %v7270, %v7319
      %v7368 = vadd.f32 %v7271, %v7320
      %v7369 = vadd.f32 %v7272, %v7321
      %v7370 = vadd.f32 %v7273, %v7322
      %v7371 = vadd.f32 %v7274, %v7323
      %v7372 = vadd.f32 %v7275, %v7324
      %v7373 = vadd.f32 %v7276, %v7325
      %v7374 = vadd.f32 %v7277, %v7326
      %v7375 = vadd.f32 %v7278, %v7327
      %v7376 = vadd.f32 %v7279, %v7328
      %v7377 = vadd.f32 %v7280, %v7329
      %v7378 = vadd.f32 %v7281, %v7330
      %v7379 = vadd.f32 %v7282, %v7331
      %v7380 = vadd.f32 %v7283, %v7332
      %v7381 = vadd.f32 %v7284, %v7333
      %v7382 = vadd.f32 %v7285, %v7334
      %v7383 = vadd.f32 %v7286, %v7335
      %v7384 = vadd.f32 %v7287, %v7336
      %v7385 = vadd.f32 %v7288, %v7337
      %v7386 = vadd.f32 %v7289, %v7338
      %vm7435 = vcmask 1046528
      %v7436 = vrot.slane %v7339, 1
      %v7437 = vrot.slane %v7340, 1
      %v7438 = vsel %vm7435, %v7436, %v7437
      %v7439 = vrot.slane %v7341, 1
      %v7440 = vsel %vm7435, %v7437, %v7439
      %v7441 = vrot.slane %v7342, 1
      %v7442 = vrot.slane %v7343, 1
      %v7443 = vsel %vm7435, %v7441, %v7442
      %v7444 = vrot.slane %v7344, 1
      %v7445 = vsel %vm7435, %v7442, %v7444
      %v7446 = vrot.slane %v7345, 1
      %v7447 = vrot.slane %v7346, 1
      %v7448 = vsel %vm7435, %v7446, %v7447
      %v7449 = vrot.slane %v7347, 1
      %v7450 = vsel %vm7435, %v7447, %v7449
      %v7451 = vrot.slane %v7348, 1
      %v7452 = vrot.slane %v7349, 1
      %v7453 = vsel %vm7435, %v7451, %v7452
      %v7454 = vrot.slane %v7350, 1
      %v7455 = vsel %vm7435, %v7452, %v7454
      %v7456 = vrot.slane %v7351, 1
      %v7457 = vrot.slane %v7352, 1
      %v7458 = vsel %vm7435, %v7456, %v7457
      %v7459 = vrot.slane %v7353, 1
      %v7460 = vsel %vm7435, %v7457, %v7459
      %v7461 = vrot.slane %v7354, 1
      %v7462 = vrot.slane %v7355, 1
      %v7463 = vsel %vm7435, %v7461, %v7462
      %v7464 = vrot.slane %v7356, 1
      %v7465 = vsel %vm7435, %v7462, %v7464
      %v7466 = vrot.slane %v7357, 1
      %v7467 = vrot.slane %v7358, 1
      %v7468 = vsel %vm7435, %v7466, %v7467
      %v7469 = vrot.slane %v7359, 1
      %v7470 = vsel %vm7435, %v7467, %v7469
      %v7471 = vrot.slane %v7360, 1
      %v7472 = vrot.slane %v7361, 1
      %v7473 = vsel %vm7435, %v7471, %v7472
      %v7474 = vrot.slane %v7362, 1
      %v7475 = vsel %vm7435, %v7472, %v7474
      %v7476 = vrot.slane %v7363, 1
      %v7477 = vrot.slane %v7364, 1
      %v7478 = vsel %vm7435, %v7476, %v7477
      %v7479 = vrot.slane %v7365, 1
      %v7480 = vsel %vm7435, %v7477, %v7479
      %v7481 = vrot.slane %v7366, 1
      %v7482 = vrot.slane %v7367, 1
      %v7483 = vsel %vm7435, %v7481, %v7482
      %v7484 = vrot.slane %v7368, 1
      %v7485 = vsel %vm7435, %v7482, %v7484
      %v7486 = vrot.slane %v7369, 1
      %v7487 = vrot.slane %v7370, 1
      %v7488 = vsel %vm7435, %v7486, %v7487
      %v7489 = vrot.slane %v7371, 1
      %v7490 = vsel %vm7435, %v7487, %v7489
      %v7491 = vrot.slane %v7372, 1
      %v7492 = vrot.slane %v7373, 1
      %v7493 = vsel %vm7435, %v7491, %v7492
      %v7494 = vrot.slane %v7374, 1
      %v7495 = vsel %vm7435, %v7492, %v7494
      %v7496 = vrot.slane %v7375, 1
      %v7497 = vrot.slane %v7376, 1
      %v7498 = vsel %vm7435, %v7496, %v7497
      %v7499 = vrot.slane %v7377, 1
      %v7500 = vsel %vm7435, %v7497, %v7499
      %v7501 = vrot.slane %v7378, 1
      %v7502 = vrot.slane %v7379, 1
      %v7503 = vsel %vm7435, %v7501, %v7502
      %v7504 = vrot.slane %v7380, 1
      %v7505 = vsel %vm7435, %v7502, %v7504
      %v7506 = vrot.slane %v7381, 1
      %v7507 = vrot.slane %v7382, 1
      %v7508 = vsel %vm7435, %v7506, %v7507
      %v7509 = vrot.slane %v7383, 1
      %v7510 = vsel %vm7435, %v7507, %v7509
      %v7511 = vrot.slane %v7384, 1
      %v7512 = vrot.slane %v7385, 1
      %v7513 = vsel %vm7435, %v7511, %v7512
      %v7514 = vrot.slane %v7386, 1
      %v7515 = vsel %vm7435, %v7512, %v7514
      %v7548 = vadd.f32 %v7339, %v7438
      %v7549 = vadd.f32 %v7340, %v7440
      %v7550 = vadd.f32 %v7342, %v7443
      %v7551 = vadd.f32 %v7343, %v7445
      %v7552 = vadd.f32 %v7345, %v7448
      %v7553 = vadd.f32 %v7346, %v7450
      %v7554 = vadd.f32 %v7348, %v7453
      %v7555 = vadd.f32 %v7349, %v7455
      %v7556 = vadd.f32 %v7351, %v7458
      %v7557 = vadd.f32 %v7352, %v7460
      %v7558 = vadd.f32 %v7354, %v7463
      %v7559 = vadd.f32 %v7355, %v7465
      %v7560 = vadd.f32 %v7357, %v7468
      %v7561 = vadd.f32 %v7358, %v7470
      %v7562 = vadd.f32 %v7360, %v7473
      %v7563 = vadd.f32 %v7361, %v7475
      %v7564 = vadd.f32 %v7363, %v7478
      %v7565 = vadd.f32 %v7364, %v7480
      %v7566 = vadd.f32 %v7366, %v7483
      %v7567 = vadd.f32 %v7367, %v7485
      %v7568 = vadd.f32 %v7369, %v7488
      %v7569 = vadd.f32 %v7370, %v7490
      %v7570 = vadd.f32 %v7372, %v7493
      %v7571 = vadd.f32 %v7373, %v7495
      %v7572 = vadd.f32 %v7375, %v7498
      %v7573 = vadd.f32 %v7376, %v7500
      %v7574 = vadd.f32 %v7378, %v7503
      %v7575 = vadd.f32 %v7379, %v7505
      %v7576 = vadd.f32 %v7381, %v7508
      %v7577 = vadd.f32 %v7382, %v7510
      %v7578 = vadd.f32 %v7384, %v7513
      %v7579 = vadd.f32 %v7385, %v7515
      %vm7580 = vcmask 1045504
      %v7581 = vrot.slane %v7339, 2
      %v7582 = vrot.slane %v7340, 2
      %v7583 = vsel %vm7580, %v7581, %v7582
      %v7584 = vrot.slane %v7341, 2
      %v7585 = vsel %vm7580, %v7582, %v7584
      %v7586 = vrot.slane %v7342, 2
      %v7587 = vrot.slane %v7343, 2
      %v7588 = vsel %vm7580, %v7586, %v7587
      %v7589 = vrot.slane %v7344, 2
      %v7590 = vsel %vm7580, %v7587, %v7589
      %v7591 = vrot.slane %v7345, 2
      %v7592 = vrot.slane %v7346, 2
      %v7593 = vsel %vm7580, %v7591, %v7592
      %v7594 = vrot.slane %v7347, 2
      %v7595 = vsel %vm7580, %v7592, %v7594
      %v7596 = vrot.slane %v7348, 2
      %v7597 = vrot.slane %v7349, 2
      %v7598 = vsel %vm7580, %v7596, %v7597
      %v7599 = vrot.slane %v7350, 2
      %v7600 = vsel %vm7580, %v7597, %v7599
      %v7601 = vrot.slane %v7351, 2
      %v7602 = vrot.slane %v7352, 2
      %v7603 = vsel %vm7580, %v7601, %v7602
      %v7604 = vrot.slane %v7353, 2
      %v7605 = vsel %vm7580, %v7602, %v7604
      %v7606 = vrot.slane %v7354, 2
      %v7607 = vrot.slane %v7355, 2
      %v7608 = vsel %vm7580, %v7606, %v7607
      %v7609 = vrot.slane %v7356, 2
      %v7610 = vsel %vm7580, %v7607, %v7609
      %v7611 = vrot.slane %v7357, 2
      %v7612 = vrot.slane %v7358, 2
      %v7613 = vsel %vm7580, %v7611, %v7612
      %v7614 = vrot.slane %v7359, 2
      %v7615 = vsel %vm7580, %v7612, %v7614
      %v7616 = vrot.slane %v7360, 2
      %v7617 = vrot.slane %v7361, 2
      %v7618 = vsel %vm7580, %v7616, %v7617
      %v7619 = vrot.slane %v7362, 2
      %v7620 = vsel %vm7580, %v7617, %v7619
      %v7621 = vrot.slane %v7363, 2
      %v7622 = vrot.slane %v7364, 2
      %v7623 = vsel %vm7580, %v7621, %v7622
      %v7624 = vrot.slane %v7365, 2
      %v7625 = vsel %vm7580, %v7622, %v7624
      %v7626 = vrot.slane %v7366, 2
      %v7627 = vrot.slane %v7367, 2
      %v7628 = vsel %vm7580, %v7626, %v7627
      %v7629 = vrot.slane %v7368, 2
      %v7630 = vsel %vm7580, %v7627, %v7629
      %v7631 = vrot.slane %v7369, 2
      %v7632 = vrot.slane %v7370, 2
      %v7633 = vsel %vm7580, %v7631, %v7632
      %v7634 = vrot.slane %v7371, 2
      %v7635 = vsel %vm7580, %v7632, %v7634
      %v7636 = vrot.slane %v7372, 2
      %v7637 = vrot.slane %v7373, 2
      %v7638 = vsel %vm7580, %v7636, %v7637
      %v7639 = vrot.slane %v7374, 2
      %v7640 = vsel %vm7580, %v7637, %v7639
      %v7641 = vrot.slane %v7375, 2
      %v7642 = vrot.slane %v7376, 2
      %v7643 = vsel %vm7580, %v7641, %v7642
      %v7644 = vrot.slane %v7377, 2
      %v7645 = vsel %vm7580, %v7642, %v7644
      %v7646 = vrot.slane %v7378, 2
      %v7647 = vrot.slane %v7379, 2
      %v7648 = vsel %vm7580, %v7646, %v7647
      %v7649 = vrot.slane %v7380, 2
      %v7650 = vsel %vm7580, %v7647, %v7649
      %v7651 = vrot.slane %v7381, 2
      %v7652 = vrot.slane %v7382, 2
      %v7653 = vsel %vm7580, %v7651, %v7652
      %v7654 = vrot.slane %v7383, 2
      %v7655 = vsel %vm7580, %v7652, %v7654
      %v7656 = vrot.slane %v7384, 2
      %v7657 = vrot.slane %v7385, 2
      %v7658 = vsel %vm7580, %v7656, %v7657
      %v7659 = vrot.slane %v7386, 2
      %v7660 = vsel %vm7580, %v7657, %v7659
      %v7693 = vadd.f32 %v7548, %v7583
      %v7694 = vadd.f32 %v7549, %v7585
      %v7695 = vadd.f32 %v7550, %v7588
      %v7696 = vadd.f32 %v7551, %v7590
      %v7697 = vadd.f32 %v7552, %v7593
      %v7698 = vadd.f32 %v7553, %v7595
      %v7699 = vadd.f32 %v7554, %v7598
      %v7700 = vadd.f32 %v7555, %v7600
      %v7701 = vadd.f32 %v7556, %v7603
      %v7702 = vadd.f32 %v7557, %v7605
      %v7703 = vadd.f32 %v7558, %v7608
      %v7704 = vadd.f32 %v7559, %v7610
      %v7705 = vadd.f32 %v7560, %v7613
      %v7706 = vadd.f32 %v7561, %v7615
      %v7707 = vadd.f32 %v7562, %v7618
      %v7708 = vadd.f32 %v7563, %v7620
      %v7709 = vadd.f32 %v7564, %v7623
      %v7710 = vadd.f32 %v7565, %v7625
      %v7711 = vadd.f32 %v7566, %v7628
      %v7712 = vadd.f32 %v7567, %v7630
      %v7713 = vadd.f32 %v7568, %v7633
      %v7714 = vadd.f32 %v7569, %v7635
      %v7715 = vadd.f32 %v7570, %v7638
      %v7716 = vadd.f32 %v7571, %v7640
      %v7717 = vadd.f32 %v7572, %v7643
      %v7718 = vadd.f32 %v7573, %v7645
      %v7719 = vadd.f32 %v7574, %v7648
      %v7720 = vadd.f32 %v7575, %v7650
      %v7721 = vadd.f32 %v7576, %v7653
      %v7722 = vadd.f32 %v7577, %v7655
      %v7723 = vadd.f32 %v7578, %v7658
      %v7724 = vadd.f32 %v7579, %v7660
      %v7725 = vld [vmem:[%s9] sm:$0x1]
      %v7727 = vlaneseq
      %v7728 = vshrl.u32 %v7727, 7
      %v7729 = vsub.s32 0, %v7728
      %v7730 = vrot.slane %v7725, %v7729
      %v7732 = vadd.f32 %v7693, %v7730
      %v7733 = vadd.f32 %v7694, %v7730
      %v7734 = vadd.f32 %v7695, %v7730
      %v7735 = vadd.f32 %v7696, %v7730
      %v7736 = vadd.f32 %v7697, %v7730
      %v7737 = vadd.f32 %v7698, %v7730
      %v7738 = vadd.f32 %v7699, %v7730
      %v7739 = vadd.f32 %v7700, %v7730
      %v7740 = vadd.f32 %v7701, %v7730
      %v7741 = vadd.f32 %v7702, %v7730
      %v7742 = vadd.f32 %v7703, %v7730
      %v7743 = vadd.f32 %v7704, %v7730
      %v7744 = vadd.f32 %v7705, %v7730
      %v7745 = vadd.f32 %v7706, %v7730
      %v7746 = vadd.f32 %v7707, %v7730
      %v7747 = vadd.f32 %v7708, %v7730
      %v7748 = vadd.f32 %v7709, %v7730
      %v7749 = vadd.f32 %v7710, %v7730
      %v7750 = vadd.f32 %v7711, %v7730
      %v7751 = vadd.f32 %v7712, %v7730
      %v7752 = vadd.f32 %v7713, %v7730
      %v7753 = vadd.f32 %v7714, %v7730
      %v7754 = vadd.f32 %v7715, %v7730
      %v7755 = vadd.f32 %v7716, %v7730
      %v7756 = vadd.f32 %v7717, %v7730
      %v7757 = vadd.f32 %v7718, %v7730
      %v7758 = vadd.f32 %v7719, %v7730
      %v7759 = vadd.f32 %v7720, %v7730
      %v7760 = vadd.f32 %v7721, %v7730
      %v7761 = vadd.f32 %v7722, %v7730
      %v7762 = vadd.f32 %v7723, %v7730
      %v7763 = vadd.f32 %v7724, %v7730
      %7764 = vxpose.xlu0.b32.start [1/16] %v7732, 128
      %7765 = vxpose.xlu0.b32.cont [2/16] %v7733, 128
      %7766 = vxpose.xlu0.b32.cont [3/16] %v7734, 128
      %7767 = vxpose.xlu0.b32.cont [4/16] %v7735, 128
      %7768 = vxpose.xlu0.b32.cont [5/16] %v7736, 128
      %7769 = vxpose.xlu0.b32.cont [6/16] %v7737, 128
      %7770 = vxpose.xlu0.b32.cont [7/16] %v7738, 128
      %7771 = vxpose.xlu0.b32.cont [8/16] %v7739, 128
      %7772 = vxpose.xlu0.b32.cont [9/16] %v7740, 128
      %7773 = vxpose.xlu0.b32.cont [10/16] %v7741, 128
      %7774 = vxpose.xlu0.b32.cont [11/16] %v7742, 128
      %7775 = vxpose.xlu0.b32.cont [12/16] %v7743, 128
      %7776 = vxpose.xlu0.b32.cont [13/16] %v7744, 128
      %7777 = vxpose.xlu0.b32.cont [14/16] %v7745, 128
      %7778 = vxpose.xlu0.b32.cont [15/16] %v7746, 128
      %7779 = vxpose.xlu0.b32.end [16/16] %v7747, 128
      %v7780 = vpop.trf.xlu0
      %v7781 = vpop.trf.xlu0
      %v7782 = vpop.trf.xlu0
      %v7783 = vpop.trf.xlu0
      %v7784 = vpop.trf.xlu0
      %v7785 = vpop.trf.xlu0
      %v7786 = vpop.trf.xlu0
      %v7787 = vpop.trf.xlu0
      %v7788 = vpop.trf.xlu0
      %v7789 = vpop.trf.xlu0
      %v7790 = vpop.trf.xlu0
      %v7791 = vpop.trf.xlu0
      %v7792 = vpop.trf.xlu0
      %v7793 = vpop.trf.xlu0
      %v7794 = vpop.trf.xlu0
      %v7795 = vpop.trf.xlu0
      %7796 = vxpose.xlu0.b32.start [1/16] %v7748, 128
      %7797 = vxpose.xlu0.b32.cont [2/16] %v7749, 128
      %7798 = vxpose.xlu0.b32.cont [3/16] %v7750, 128
      %7799 = vxpose.xlu0.b32.cont [4/16] %v7751, 128
      %7800 = vxpose.xlu0.b32.cont [5/16] %v7752, 128
      %7801 = vxpose.xlu0.b32.cont [6/16] %v7753, 128
      %7802 = vxpose.xlu0.b32.cont [7/16] %v7754, 128
      %7803 = vxpose.xlu0.b32.cont [8/16] %v7755, 128
      %7804 = vxpose.xlu0.b32.cont [9/16] %v7756, 128
      %7805 = vxpose.xlu0.b32.cont [10/16] %v7757, 128
      %7806 = vxpose.xlu0.b32.cont [11/16] %v7758, 128
      %7807 = vxpose.xlu0.b32.cont [12/16] %v7759, 128
      %7808 = vxpose.xlu0.b32.cont [13/16] %v7760, 128
      %7809 = vxpose.xlu0.b32.cont [14/16] %v7761, 128
      %7810 = vxpose.xlu0.b32.cont [15/16] %v7762, 128
      %7811 = vxpose.xlu0.b32.end [16/16] %v7763, 128
      %v7812 = vpop.trf.xlu0
      %v7813 = vpop.trf.xlu0
      %v7814 = vpop.trf.xlu0
      %v7815 = vpop.trf.xlu0
      %v7816 = vpop.trf.xlu0
      %v7817 = vpop.trf.xlu0
      %v7818 = vpop.trf.xlu0
      %v7819 = vpop.trf.xlu0
      %v7820 = vpop.trf.xlu0
      %v7821 = vpop.trf.xlu0
      %v7822 = vpop.trf.xlu0
      %v7823 = vpop.trf.xlu0
      %v7824 = vpop.trf.xlu0
      %v7825 = vpop.trf.xlu0
      %v7826 = vpop.trf.xlu0
      %v7827 = vpop.trf.xlu0
      %7828 = vst [vmem:[%s359 + $0x80] sm:$0xff] %v7780
      %7829 = vst [vmem:[%s359 + $0x88] sm:$0xff] %v7812
      %7830 = vst [vmem:[%s359 + $0x90] sm:$0xff] %v7781
      %7831 = vst [vmem:[%s359 + $0x98] sm:$0xff] %v7813
      %7832 = vst [vmem:[%s359 + $0xa0] sm:$0xff] %v7782
      %7833 = vst [vmem:[%s359 + $0xa8] sm:$0xff] %v7814
      %p7834 = scmp.lt.s32.totalorder %s21, 1
      %s7835 = scalar_select %p7834, %s21, 1
      %s7836 = smul.addr %s7835, 22
      %s7837 = smul.addr %s7836, 8
      %s7838 = scalar_lea.vmem %s10, %s7837
      // Predicated region
      $region61: #{inception_a_forward.1} parent=59 // pred_check
        %p7839 = pneg %p254
      $region62: #{inception_a_forward.1} parent=59 // pred_check_branch
        %7841 = sbr.rel (%p7839) target = $region64
      $region63: #{inception_a_forward.1} parent=59 // pred_region
        _
      $region64: #{inception_a_forward.1} parent=59 // pred_fallthru
        _
    $region60: #{inception_a_forward.1} parent=5 // pred_fallthru
      _
    %p7842 = scmp.le.s32.totalorder 2, %s16
    // Predicated region
    $region65: #{inception_a_forward.1} parent=5 // pred_check
      %p7843 = pneg %p7842
    $region66: #{inception_a_forward.1} parent=5 // pred_check_branch
      %7845 = sbr.rel (%p7843) target = $region68
    $region67: #{inception_a_forward.1} parent=5 // pred_region
      %s7846 = ssub.s32 %s16, 2
      // Predicated region
      $region69: #{inception_a_forward.1} parent=67 // pred_check
        %p7847 = pneg %p260
      $region70: #{inception_a_forward.1} parent=67 // pred_check_branch
        %7849 = sbr.rel (%p7847) target = $region72
      $region71: #{inception_a_forward.1} parent=67 // pred_region
        %p7850 = scmp.lt.s32.totalorder %s22, 1
        %s7851 = scalar_select %p7850, %s22, 1
        %s7852 = smul.addr %s7851, 22
        %s7853 = smul.addr %s7852, 8
        %s7854 = scalar_lea.vmem %s10, %s7853
      $region72: #{inception_a_forward.1} parent=67 // pred_fallthru
        _
    $region68: #{inception_a_forward.1} parent=5 // pred_fallthru
      _
  $region6: #{inception_a_forward.1} parent=0 // loop_footer
    %s20 = sadd.s32 1, %s16
  $region7: #{inception_a_forward.1} parent=0 // loop_footer_branch
    %15 = sbr.rel target = $region3
  $region8: #{inception_a_forward.1} parent=0 // loop_exit
    _

</llo_original>
